<compile_context>
chip_gen: v6e
topology: v6e:2x2x1
jax: 0.10.0
libtpu: 0.0.40
codegen_flags: <defaults>
</compile_context>

<pallas_src>
import numpy as np
import jax
import jax.numpy as jnp
from jax.experimental import pallas as pl
from jax.experimental.pallas import tpu as pltpu

# ---------------- configuration (small synthetic shapes) ----------------
VOCAB = 10                          # vocabSize
TOPN = 6                            # attention_net(vocabSize, 6)
NHID = 32                           # nHid (kept small)
C_IN = 3                            # image channels
H_IMG = 16
W_IMG = 16
D_FEAT = 32                         # backbone feature channels (stand-in for 2048)
FEAT_DIM = D_FEAT * (TOPN + 1)      # 224 == cnn.concat_net.in_features analogue
N_BATCH = 2                         # n
T_SEQ = 4                           # t

PC = 9 * C_IN                       # im2col patch width (27)
PC_PAD = ((PC + 7) // 8) * 8        # padded to 32 for MXU-friendly K
VPAD = 128                          # lane-dense output width
G3 = 3 * NHID                       # fused GRU gate width (r | z | n) = 96

# column layout of the fused CNN output slab ("mix"):
MIX_RAW = 0 * VPAD                  # raw_logits      (VOCAB valid lanes)
MIX_CAT = 1 * VPAD                  # concat_logits   (VOCAB valid lanes)
MIX_XGF = 2 * VPAD                  # fwd GRU x-proj  (G3 valid lanes)
MIX_XGB = 3 * VPAD                  # bwd GRU x-proj  (G3 valid lanes)
MIX_DIM = 4 * VPAD                  # 512 (multiple of 128 -> dense stores)

_VMEM = pl.BlockSpec(memory_space=pltpu.MemorySpace.VMEM)


# ============================ CNN head kernel ============================
def _cnn_kernel(patches_ref, region_ref, w_conv_ref, b_conv_ref,
                w_mix_ref, b_mix_ref, w_pp_ref, b_pp_ref,
                mix_ref, pp_ref):
    bt = mix_ref.shape[0]
    # 3x3 conv over every frame as ONE tall matmul: (bt*HW, 9C) @ (9C, D)
    conv = jnp.dot(patches_ref[...], w_conv_ref[...],
                   preferred_element_type=jnp.float32) + b_conv_ref[...]
    conv = jnp.maximum(conv, 0.0)                                    # (bt*HW, D)

    # batched region pooling: one matmul against a block-structured mask
    pooled = jnp.dot(region_ref[...], conv,
                     preferred_element_type=jnp.float32)             # (bt*(1+TOPN), D)
    gfeat = pooled[0:bt]                                             # (bt, D) global
    parts = pooled[bt:]                                              # (TOPN*bt, D), row k*bt+b
    topn = parts.shape[0] // bt
    d = gfeat.shape[-1]

    # part logits + proposal score: one lane-dense slab, one dense store
    pp_ref[...] = jnp.dot(parts, w_pp_ref[...],
                          preferred_element_type=jnp.float32) + b_pp_ref[...]

    # concat_feature = [part_0 | ... | part_{TOPN-1} | global]; instead of
    # materialising it we contract each D-wide block against the matching
    # row-block of the fused weight (pure register accumulation).
    w_mix = w_mix_ref[...]                                           # (FEAT_DIM, MIX_DIM)
    mix = jnp.dot(gfeat, w_mix[topn * d:], preferred_element_type=jnp.float32)
    for k in range(topn):
        mix = mix + jnp.dot(parts[k * bt:(k + 1) * bt],
                            w_mix[k * d:(k + 1) * d],
                            preferred_element_type=jnp.float32)
    mix_ref[...] = mix + b_mix_ref[...]                              # (bt, 512) dense


def cnn_forward(patches, region_mat, kp):
    bt = region_mat.shape[0] // (TOPN + 1)
    return pl.pallas_call(
        _cnn_kernel,
        in_specs=[_VMEM] * 8,
        out_specs=(_VMEM, _VMEM),
        out_shape=(jax.ShapeDtypeStruct((bt, MIX_DIM), jnp.float32),      # fused slab
                   jax.ShapeDtypeStruct((TOPN * bt, VPAD), jnp.float32)),  # part/prop slab
    )(patches, region_mat,
      kp['w_conv'], kp['b_conv'], kp['w_mix'], kp['b_mix'],
      kp['w_pp'], kp['b_pp'])


# ===================== bidirectional GRU + head kernel =====================
def _rnn_head_kernel(xg_f_ref, xg_b_ref, whh_f_ref, bhh_f_ref,
                     whh_b_ref, bhh_b_ref, w_out_ref, b_out_ref, y_ref):
    t_len, n_b, _ = xg_f_ref.shape
    h_dim = whh_f_ref.shape[0]
    whh_f = whh_f_ref[...]
    bhh_f = bhh_f_ref[...]
    whh_b = whh_b_ref[...]
    bhh_b = bhh_b_ref[...]
    w_out = w_out_ref[...]
    b_out = b_out_ref[...]

    def gru_step(h_prev, xg, whh, bhh):
        # fused gates: one (N, H) @ (H, 3H) matmul per step; PyTorch order r, z, n.
        # xg already contains x @ W_ih + b_ih (hoisted into the CNN kernel).
        g = jnp.dot(h_prev, whh, preferred_element_type=jnp.float32) + bhh
        r = jax.nn.sigmoid(xg[:, 0:h_dim] + g[:, 0:h_dim])
        z = jax.nn.sigmoid(xg[:, h_dim:2 * h_dim] + g[:, h_dim:2 * h_dim])
        n = jnp.tanh(xg[:, 2 * h_dim:3 * h_dim] + r * g[:, 2 * h_dim:3 * h_dim])
        return (1.0 - z) * n + z * h_prev

    # forward direction (T fully unrolled, hidden state stays in registers)
    h = jnp.zeros((n_b, h_dim), jnp.float32)
    h_fwd = []
    for t in range(t_len):
        h = gru_step(h, xg_f_ref[t], whh_f, bhh_f)
        h_fwd.append(h)

    # backward direction + fused Linear + log_softmax head
    h = jnp.zeros((n_b, h_dim), jnp.float32)
    for t in range(t_len - 1, -1, -1):
        h = gru_step(h, xg_b_ref[t], whh_b, bhh_b)
        # out = [h_fwd | h_bwd] @ W_out + b_out, decomposed to avoid a lane concat
        logits = (jnp.dot(h_fwd[t], w_out[0:h_dim], preferred_element_type=jnp.float32)
                  + jnp.dot(h, w_out[h_dim:2 * h_dim], preferred_element_type=jnp.float32)
                  + b_out)                                            # (N, 128)
        m = jnp.max(logits, axis=-1, keepdims=True)
        s = logits - m
        lse = jnp.log(jnp.sum(jnp.exp(s), axis=-1, keepdims=True))
        y_ref[t] = s - lse              # padded lanes carry bias -1e30 -> ignored


def rnn_head_forward(xg_f, xg_b, kp):
    t_len, n_b, _ = xg_f.shape
    return pl.pallas_call(
        _rnn_head_kernel,
        in_specs=[_VMEM] * 8,
        out_specs=_VMEM,
        out_shape=jax.ShapeDtypeStruct((t_len, n_b, VPAD), jnp.float32),
    )(xg_f, xg_b, kp['whh_f'], kp['bhh_f'], kp['whh_b'], kp['bhh_b'],
      kp['w_out'], kp['b_out'])


# ============================ glue / wrapper ============================
def build_region_matrix(bt):
    """Block-structured pooling matrix (bt*(1+TOPN), bt*HW).

    Row b               -> global average of frame b.
    Row bt + k*bt + b   -> average over part-region k of frame b.
    """
    hw = H_IMG * W_IMG
    base = np.zeros((TOPN + 1, H_IMG, W_IMG), np.float32)
    base[0] = 1.0 / hw
    row_b = [0, H_IMG // 2, H_IMG]
    col_b = [0, W_IMG // 3, 2 * W_IMG // 3, W_IMG]
    k = 1
    for i in range(2):
        for j in range(3):
            r0, r1 = row_b[i], row_b[i + 1]
            c0, c1 = col_b[j], col_b[j + 1]
            base[k, r0:r1, c0:c1] = 1.0 / ((r1 - r0) * (c1 - c0))
            k += 1
    base = base.reshape(TOPN + 1, hw)
    mat = np.zeros((bt * (TOPN + 1), bt * hw), np.float32)
    for b in range(bt):
        mat[b, b * hw:(b + 1) * hw] = base[0]
        for k in range(TOPN):
            mat[bt + k * bt + b, b * hw:(b + 1) * hw] = base[1 + k]
    return jnp.asarray(mat)


def init_params(key):
    ks = jax.random.split(key, 16)
    s = 0.1
    rn = lambda k, shape: jax.random.normal(k, shape, jnp.float32) * s
    return {
        'w_conv': rn(ks[0], (PC, D_FEAT)),
        'b_conv': jnp.zeros((1, D_FEAT), jnp.float32),
        'w_raw': rn(ks[1], (D_FEAT, VOCAB)),
        'b_raw': jnp.zeros((1, VOCAB), jnp.float32),
        'w_concat': rn(ks[2], (FEAT_DIM, VOCAB)),
        'b_concat': jnp.zeros((1, VOCAB), jnp.float32),
        'w_part': rn(ks[3], (D_FEAT, VOCAB)),
        'b_part': jnp.zeros((1, VOCAB), jnp.float32),
        'w_prop': rn(ks[4], (D_FEAT, 1)),
        'b_prop': jnp.zeros((1, 1), jnp.float32),
        # bidirectional GRU, fused gate order (r | z | n) along the last dim
        'wih_f': rn(ks[5], (FEAT_DIM, G3)),
        'whh_f': rn(ks[6], (NHID, G3)),
        'bih_f': rn(ks[7], (1, G3)),
        'bhh_f': rn(ks[8], (1, G3)),
        'wih_b': rn(ks[9], (FEAT_DIM, G3)),
        'whh_b': rn(ks[10], (NHID, G3)),
        'bih_b': rn(ks[11], (1, G3)),
        'bhh_b': rn(ks[12], (1, G3)),
        'w_out': rn(ks[13], (2 * NHID, VOCAB + 1)),
        'b_out': jnp.zeros((1, VOCAB + 1), jnp.float32),
    }


def pack_params(p):
    """Fuse/pad the logical parameters into lane-dense kernel operands."""
    def padc(a, width):                       # zero-pad columns to `width`
        return jnp.pad(a, ((0, 0), (0, width - a.shape[1])))

    # raw_logits only sees the global block (last D_FEAT rows of concat_feature)
    w_raw_ext = jnp.concatenate(
        [jnp.zeros((TOPN * D_FEAT, VOCAB), jnp.float32), p['w_raw']], axis=0)
    w_mix = jnp.concatenate([padc(w_raw_ext, VPAD),
                             padc(p['w_concat'], VPAD),
                             padc(p['wih_f'], VPAD),
                             padc(p['wih_b'], VPAD)], axis=1)         # (FEAT_DIM, 512)
    b_mix = jnp.concatenate([padc(p['b_raw'], VPAD),
                             padc(p['b_concat'], VPAD),
                             padc(p['bih_f'], VPAD),
                             padc(p['bih_b'], VPAD)], axis=1)         # (1, 512)
    w_pp = padc(jnp.concatenate([p['w_part'], p['w_prop']], axis=1), VPAD)   # (D, 128)
    b_pp = padc(jnp.concatenate([p['b_part'], p['b_prop']], axis=1), VPAD)   # (1, 128)
    # output head: zero-pad weights; pad bias with -1e30 so log_softmax ignores pad
    w_out = padc(p['w_out'], VPAD)
    b_out = jnp.concatenate(
        [p['b_out'], jnp.full((1, VPAD - (VOCAB + 1)), -1e30, jnp.float32)], axis=1)
    # pad the conv weight K-dim (27 -> 32)
    w_conv = jnp.pad(p['w_conv'], ((0, PC_PAD - PC), (0, 0)))
    return {'w_conv': w_conv, 'b_conv': p['b_conv'],
            'w_mix': w_mix, 'b_mix': b_mix, 'w_pp': w_pp, 'b_pp': b_pp,
            'whh_f': p['whh_f'], 'bhh_f': p['bhh_f'],
            'whh_b': p['whh_b'], 'bhh_b': p['bhh_b'],
            'w_out': w_out, 'b_out': b_out}


def fine_grained_cnn_rnn_forward(x, kp, region_mat):
    # x: (n, t, c, h, w) PyTorch-style input
    n, t, c, h, w = x.shape
    bt = n * t
    xi = x.reshape(bt, c, h, w).transpose(0, 2, 3, 1)            # NCHW -> NHWC
    # 3x3 SAME im2col (XLA glue); the conv matmul itself runs in the kernel
    xp = jnp.pad(xi, ((0, 0), (1, 1), (1, 1), (0, 0)))
    patches = jnp.concatenate(
        [xp[:, i:i + h, j:j + w, :] for i in range(3) for j in range(3)], axis=-1)
    patches = patches.reshape(bt * h * w, PC)
    patches = jnp.pad(patches, ((0, 0), (0, PC_PAD - PC)))       # K-dim 27 -> 32

    mix, pp = cnn_forward(patches, region_mat, kp)

    raw_logits = mix[:, MIX_RAW:MIX_RAW + VOCAB]
    concat_logits = mix[:, MIX_CAT:MIX_CAT + VOCAB]
    part_logits = pp[:, :VOCAB].reshape(TOPN, bt, VOCAB).transpose(1, 0, 2)
    top_n_prob = pp[:, VOCAB].reshape(TOPN, bt).transpose(1, 0)

    # GRU input projections were computed inside the CNN kernel; arrange (T, N, 3H)
    xg_f = mix[:, MIX_XGF:MIX_XGF + G3].reshape(n, t, G3).transpose(1, 0, 2)
    xg_b = mix[:, MIX_XGB:MIX_XGB + G3].reshape(n, t, G3).transpose(1, 0, 2)

    y_pad = rnn_head_forward(xg_f, xg_b, kp)                     # (t, n, 128)
    y = y_pad[:, :, :VOCAB + 1]                                  # log_softmax output
    return [raw_logits, concat_logits, part_logits, top_n_prob, y]


if __name__ == "__main__":
    key = jax.random.PRNGKey(0)
    k_x, k_p = jax.random.split(key)
    params = init_params(k_p)
    kp = pack_params(params)
    region_mat = build_region_matrix(N_BATCH * T_SEQ)
    x = jax.random.normal(k_x, (N_BATCH, T_SEQ, C_IN, H_IMG, W_IMG), jnp.float32)

    fwd = jax.jit(fine_grained_cnn_rnn_forward)
    outs = jax.block_until_ready(fwd(x, kp, region_mat))

    raw_logits, concat_logits, part_logits, top_n_prob, y = outs
    assert raw_logits.shape == (N_BATCH * T_SEQ, VOCAB)
    assert concat_logits.shape == (N_BATCH * T_SEQ, VOCAB)
    assert part_logits.shape == (N_BATCH * T_SEQ, TOPN, VOCAB)
    assert top_n_prob.shape == (N_BATCH * T_SEQ, TOPN)
    assert y.shape == (T_SEQ, N_BATCH, VOCAB + 1)
    # log_softmax rows must sum to ~1 in prob space
    assert bool(jnp.allclose(jnp.sum(jnp.exp(y), axis=-1), 1.0, atol=1e-4))
    print("KERNEL_OK")
</pallas_src>

<mosaic_0001>
module attributes {stable_mosaic.version = 11 : i64} {
  func.func @_cnn_kernel(%arg0: memref<2048x32xf32, #tpu.memory_space<vmem>>, %arg1: memref<56x2048xf32, #tpu.memory_space<vmem>>, %arg2: memref<32x32xf32, #tpu.memory_space<vmem>>, %arg3: memref<1x32xf32, #tpu.memory_space<vmem>>, %arg4: memref<224x512xf32, #tpu.memory_space<vmem>>, %arg5: memref<1x512xf32, #tpu.memory_space<vmem>>, %arg6: memref<32x128xf32, #tpu.memory_space<vmem>>, %arg7: memref<1x128xf32, #tpu.memory_space<vmem>>, %arg8: memref<8x512xf32, #tpu.memory_space<vmem>>, %arg9: memref<48x128xf32, #tpu.memory_space<vmem>>) attributes {dimension_semantics = [], scalar_prefetch = 0 : i64, scratch_operands = 0 : i64, tpu.core_type = #tpu.core_type<tc>} {
    %c0 = arith.constant 0 : index
    %c0_0 = arith.constant 0 : index
    %0 = vector.load %arg0[%c0, %c0_0] : memref<2048x32xf32, #tpu.memory_space<vmem>>, vector<2048x32xf32>
    %c0_1 = arith.constant 0 : index
    %c0_2 = arith.constant 0 : index
    %1 = vector.load %arg2[%c0_1, %c0_2] : memref<32x32xf32, #tpu.memory_space<vmem>>, vector<32x32xf32>
    %cst = arith.constant dense<0.000000e+00> : vector<2048x32xf32>
    %2 = tpu.matmul %0, %1, %cst {dimension_numbers = #tpu.dot_dimension_numbers<[1], [0], [0], [1], [0, 0, 1, 1], [], []>} : vector<2048x32xf32>, vector<32x32xf32>, vector<2048x32xf32> -> vector<2048x32xf32>
    %c0_3 = arith.constant 0 : index
    %c0_4 = arith.constant 0 : index
    %3 = vector.load %arg3[%c0_3, %c0_4] : memref<1x32xf32, #tpu.memory_space<vmem>>, vector<1x32xf32>
    %4 = vector.broadcast %3 : vector<1x32xf32> to vector<2048x32xf32>
    %5 = arith.addf %2, %4 : vector<2048x32xf32>
    %cst_5 = arith.constant 0.000000e+00 : f32
    %6 = vector.broadcast %cst_5 : f32 to vector<2048x32xf32>
    %7 = arith.maximumf %5, %6 : vector<2048x32xf32>
    %c0_6 = arith.constant 0 : index
    %c0_7 = arith.constant 0 : index
    %8 = vector.load %arg1[%c0_6, %c0_7] : memref<56x2048xf32, #tpu.memory_space<vmem>>, vector<56x2048xf32>
    %cst_8 = arith.constant dense<0.000000e+00> : vector<56x32xf32>
    %9 = tpu.matmul %8, %7, %cst_8 {dimension_numbers = #tpu.dot_dimension_numbers<[1], [0], [0], [1], [0, 0, 1, 1], [], []>} : vector<56x2048xf32>, vector<2048x32xf32>, vector<56x32xf32> -> vector<56x32xf32>
    %10 = vector.extract_strided_slice %9 {offsets = [0, 0], sizes = [8, 32], strides = [1, 1]} : vector<56x32xf32> to vector<8x32xf32>
    %11 = vector.extract_strided_slice %9 {offsets = [8, 0], sizes = [48, 32], strides = [1, 1]} : vector<56x32xf32> to vector<48x32xf32>
    %c0_9 = arith.constant 0 : index
    %c0_10 = arith.constant 0 : index
    %12 = vector.load %arg6[%c0_9, %c0_10] : memref<32x128xf32, #tpu.memory_space<vmem>>, vector<32x128xf32>
    %cst_11 = arith.constant dense<0.000000e+00> : vector<48x128xf32>
    %13 = tpu.matmul %11, %12, %cst_11 {dimension_numbers = #tpu.dot_dimension_numbers<[1], [0], [0], [1], [0, 0, 1, 1], [], []>} : vector<48x32xf32>, vector<32x128xf32>, vector<48x128xf32> -> vector<48x128xf32>
    %c0_12 = arith.constant 0 : index
    %c0_13 = arith.constant 0 : index
    %14 = vector.load %arg7[%c0_12, %c0_13] : memref<1x128xf32, #tpu.memory_space<vmem>>, vector<1x128xf32>
    %15 = vector.broadcast %14 : vector<1x128xf32> to vector<48x128xf32>
    %16 = arith.addf %13, %15 : vector<48x128xf32>
    %c0_14 = arith.constant 0 : index
    %c0_15 = arith.constant 0 : index
    %17 = vector.load %arg9[%c0_14, %c0_15] : memref<48x128xf32, #tpu.memory_space<vmem>>, vector<48x128xf32>
    tpu.vector_store %arg9[%c0_14, %c0_15], %16 {strides = array<i32>} : memref<48x128xf32, #tpu.memory_space<vmem>>, vector<48x128xf32>,
    %c0_16 = arith.constant 0 : index
    %c0_17 = arith.constant 0 : index
    %18 = vector.load %arg4[%c0_16, %c0_17] : memref<224x512xf32, #tpu.memory_space<vmem>>, vector<224x512xf32>
    %19 = vector.extract_strided_slice %18 {offsets = [192, 0], sizes = [32, 512], strides = [1, 1]} : vector<224x512xf32> to vector<32x512xf32>
    %cst_18 = arith.constant dense<0.000000e+00> : vector<8x512xf32>
    %20 = tpu.matmul %10, %19, %cst_18 {dimension_numbers = #tpu.dot_dimension_numbers<[1], [0], [0], [1], [0, 0, 1, 1], [], []>} : vector<8x32xf32>, vector<32x512xf32>, vector<8x512xf32> -> vector<8x512xf32>
    %21 = vector.extract_strided_slice %11 {offsets = [0, 0], sizes = [8, 32], strides = [1, 1]} : vector<48x32xf32> to vector<8x32xf32>
    %22 = vector.extract_strided_slice %18 {offsets = [0, 0], sizes = [32, 512], strides = [1, 1]} : vector<224x512xf32> to vector<32x512xf32>
    %cst_19 = arith.constant dense<0.000000e+00> : vector<8x512xf32>
    %23 = tpu.matmul %21, %22, %cst_19 {dimension_numbers = #tpu.dot_dimension_numbers<[1], [0], [0], [1], [0, 0, 1, 1], [], []>} : vector<8x32xf32>, vector<32x512xf32>, vector<8x512xf32> -> vector<8x512xf32>
    %24 = arith.addf %20, %23 : vector<8x512xf32>
    %25 = vector.extract_strided_slice %11 {offsets = [8, 0], sizes = [8, 32], strides = [1, 1]} : vector<48x32xf32> to vector<8x32xf32>
    %26 = vector.extract_strided_slice %18 {offsets = [32, 0], sizes = [32, 512], strides = [1, 1]} : vector<224x512xf32> to vector<32x512xf32>
    %cst_20 = arith.constant dense<0.000000e+00> : vector<8x512xf32>
    %27 = tpu.matmul %25, %26, %cst_20 {dimension_numbers = #tpu.dot_dimension_numbers<[1], [0], [0], [1], [0, 0, 1, 1], [], []>} : vector<8x32xf32>, vector<32x512xf32>, vector<8x512xf32> -> vector<8x512xf32>
    %28 = arith.addf %24, %27 : vector<8x512xf32>
    %29 = vector.extract_strided_slice %11 {offsets = [16, 0], sizes = [8, 32], strides = [1, 1]} : vector<48x32xf32> to vector<8x32xf32>
    %30 = vector.extract_strided_slice %18 {offsets = [64, 0], sizes = [32, 512], strides = [1, 1]} : vector<224x512xf32> to vector<32x512xf32>
    %cst_21 = arith.constant dense<0.000000e+00> : vector<8x512xf32>
    %31 = tpu.matmul %29, %30, %cst_21 {dimension_numbers = #tpu.dot_dimension_numbers<[1], [0], [0], [1], [0, 0, 1, 1], [], []>} : vector<8x32xf32>, vector<32x512xf32>, vector<8x512xf32> -> vector<8x512xf32>
    %32 = arith.addf %28, %31 : vector<8x512xf32>
    %33 = vector.extract_strided_slice %11 {offsets = [24, 0], sizes = [8, 32], strides = [1, 1]} : vector<48x32xf32> to vector<8x32xf32>
    %34 = vector.extract_strided_slice %18 {offsets = [96, 0], sizes = [32, 512], strides = [1, 1]} : vector<224x512xf32> to vector<32x512xf32>
    %cst_22 = arith.constant dense<0.000000e+00> : vector<8x512xf32>
    %35 = tpu.matmul %33, %34, %cst_22 {dimension_numbers = #tpu.dot_dimension_numbers<[1], [0], [0], [1], [0, 0, 1, 1], [], []>} : vector<8x32xf32>, vector<32x512xf32>, vector<8x512xf32> -> vector<8x512xf32>
    %36 = arith.addf %32, %35 : vector<8x512xf32>
    %37 = vector.extract_strided_slice %11 {offsets = [32, 0], sizes = [8, 32], strides = [1, 1]} : vector<48x32xf32> to vector<8x32xf32>
    %38 = vector.extract_strided_slice %18 {offsets = [128, 0], sizes = [32, 512], strides = [1, 1]} : vector<224x512xf32> to vector<32x512xf32>
    %cst_23 = arith.constant dense<0.000000e+00> : vector<8x512xf32>
    %39 = tpu.matmul %37, %38, %cst_23 {dimension_numbers = #tpu.dot_dimension_numbers<[1], [0], [0], [1], [0, 0, 1, 1], [], []>} : vector<8x32xf32>, vector<32x512xf32>, vector<8x512xf32> -> vector<8x512xf32>
    %40 = arith.addf %36, %39 : vector<8x512xf32>
    %41 = vector.extract_strided_slice %11 {offsets = [40, 0], sizes = [8, 32], strides = [1, 1]} : vector<48x32xf32> to vector<8x32xf32>
    %42 = vector.extract_strided_slice %18 {offsets = [160, 0], sizes = [32, 512], strides = [1, 1]} : vector<224x512xf32> to vector<32x512xf32>
    %cst_24 = arith.constant dense<0.000000e+00> : vector<8x512xf32>
    %43 = tpu.matmul %41, %42, %cst_24 {dimension_numbers = #tpu.dot_dimension_numbers<[1], [0], [0], [1], [0, 0, 1, 1], [], []>} : vector<8x32xf32>, vector<32x512xf32>, vector<8x512xf32> -> vector<8x512xf32>
    %44 = arith.addf %40, %43 : vector<8x512xf32>
    %c0_25 = arith.constant 0 : index
    %c0_26 = arith.constant 0 : index
    %45 = vector.load %arg5[%c0_25, %c0_26] : memref<1x512xf32, #tpu.memory_space<vmem>>, vector<1x512xf32>
    %46 = vector.broadcast %45 : vector<1x512xf32> to vector<8x512xf32>
    %47 = arith.addf %44, %46 : vector<8x512xf32>
    %c0_27 = arith.constant 0 : index
    %c0_28 = arith.constant 0 : index
    %48 = vector.load %arg8[%c0_27, %c0_28] : memref<8x512xf32, #tpu.memory_space<vmem>>, vector<8x512xf32>
    tpu.vector_store %arg8[%c0_27, %c0_28], %47 {strides = array<i32>} : memref<8x512xf32, #tpu.memory_space<vmem>>, vector<8x512xf32>,
    return
  }
}

module attributes {stable_mosaic.version = 11 : i64} {
  func.func @_rnn_head_kernel(%arg0: memref<4x2x96xf32, #tpu.memory_space<vmem>>, %arg1: memref<4x2x96xf32, #tpu.memory_space<vmem>>, %arg2: memref<32x96xf32, #tpu.memory_space<vmem>>, %arg3: memref<1x96xf32, #tpu.memory_space<vmem>>, %arg4: memref<32x96xf32, #tpu.memory_space<vmem>>, %arg5: memref<1x96xf32, #tpu.memory_space<vmem>>, %arg6: memref<64x128xf32, #tpu.memory_space<vmem>>, %arg7: memref<1x128xf32, #tpu.memory_space<vmem>>, %arg8: memref<4x2x128xf32, #tpu.memory_space<vmem>>) attributes {dimension_semantics = [], scalar_prefetch = 0 : i64, scratch_operands = 0 : i64, tpu.core_type = #tpu.core_type<tc>} {
    %c0 = arith.constant 0 : index
    %c0_0 = arith.constant 0 : index
    %0 = vector.load %arg2[%c0, %c0_0] : memref<32x96xf32, #tpu.memory_space<vmem>>, vector<32x96xf32>
    %c0_1 = arith.constant 0 : index
    %c0_2 = arith.constant 0 : index
    %1 = vector.load %arg3[%c0_1, %c0_2] : memref<1x96xf32, #tpu.memory_space<vmem>>, vector<1x96xf32>
    %c0_3 = arith.constant 0 : index
    %c0_4 = arith.constant 0 : index
    %2 = vector.load %arg4[%c0_3, %c0_4] : memref<32x96xf32, #tpu.memory_space<vmem>>, vector<32x96xf32>
    %c0_5 = arith.constant 0 : index
    %c0_6 = arith.constant 0 : index
    %3 = vector.load %arg5[%c0_5, %c0_6] : memref<1x96xf32, #tpu.memory_space<vmem>>, vector<1x96xf32>
    %c0_7 = arith.constant 0 : index
    %c0_8 = arith.constant 0 : index
    %4 = vector.load %arg6[%c0_7, %c0_8] : memref<64x128xf32, #tpu.memory_space<vmem>>, vector<64x128xf32>
    %c0_9 = arith.constant 0 : index
    %c0_10 = arith.constant 0 : index
    %5 = vector.load %arg7[%c0_9, %c0_10] : memref<1x128xf32, #tpu.memory_space<vmem>>, vector<1x128xf32>
    %cst = arith.constant 0.000000e+00 : f32
    %6 = vector.broadcast %cst : f32 to vector<2x32xf32>
    %c0_11 = arith.constant 0 : index
    %c0_12 = arith.constant 0 : index
    %c0_13 = arith.constant 0 : index
    %7 = vector.load %arg0[%c0_11, %c0_12, %c0_13] : memref<4x2x96xf32, #tpu.memory_space<vmem>>, vector<1x2x96xf32>
    %8 = vector.shape_cast %7 : vector<1x2x96xf32> to vector<2x96xf32>
    %cst_14 = arith.constant dense<0.000000e+00> : vector<2x96xf32>
    %9 = tpu.matmul %6, %0, %cst_14 {dimension_numbers = #tpu.dot_dimension_numbers<[1], [0], [0], [1], [0, 0, 1, 1], [], []>} : vector<2x32xf32>, vector<32x96xf32>, vector<2x96xf32> -> vector<2x96xf32>
    %10 = vector.broadcast %1 : vector<1x96xf32> to vector<2x96xf32>
    %11 = arith.addf %9, %10 : vector<2x96xf32>
    %12 = vector.extract_strided_slice %8 {offsets = [0, 0], sizes = [2, 32], strides = [1, 1]} : vector<2x96xf32> to vector<2x32xf32>
    %13 = vector.extract_strided_slice %11 {offsets = [0, 0], sizes = [2, 32], strides = [1, 1]} : vector<2x96xf32> to vector<2x32xf32>
    %14 = arith.addf %12, %13 : vector<2x32xf32>
    %15 = arith.negf %14 : vector<2x32xf32>
    %16 = math.exp %15 : vector<2x32xf32>
    %cst_15 = arith.constant 1.000000e+00 : f32
    %17 = vector.broadcast %cst_15 : f32 to vector<2x32xf32>
    %18 = arith.addf %17, %16 : vector<2x32xf32>
    %19 = arith.divf %17, %18 : vector<2x32xf32>
    %20 = vector.extract_strided_slice %8 {offsets = [0, 32], sizes = [2, 32], strides = [1, 1]} : vector<2x96xf32> to vector<2x32xf32>
    %21 = vector.extract_strided_slice %11 {offsets = [0, 32], sizes = [2, 32], strides = [1, 1]} : vector<2x96xf32> to vector<2x32xf32>
    %22 = arith.addf %20, %21 : vector<2x32xf32>
    %23 = arith.negf %22 : vector<2x32xf32>
    %24 = math.exp %23 : vector<2x32xf32>
    %cst_16 = arith.constant 1.000000e+00 : f32
    %25 = vector.broadcast %cst_16 : f32 to vector<2x32xf32>
    %26 = arith.addf %25, %24 : vector<2x32xf32>
    %27 = arith.divf %25, %26 : vector<2x32xf32>
    %28 = vector.extract_strided_slice %8 {offsets = [0, 64], sizes = [2, 32], strides = [1, 1]} : vector<2x96xf32> to vector<2x32xf32>
    %29 = vector.extract_strided_slice %11 {offsets = [0, 64], sizes = [2, 32], strides = [1, 1]} : vector<2x96xf32> to vector<2x32xf32>
    %30 = arith.mulf %19, %29 : vector<2x32xf32>
    %31 = arith.addf %28, %30 : vector<2x32xf32>
    %32 = math.tanh %31 : vector<2x32xf32>
    %cst_17 = arith.constant 1.000000e+00 : f32
    %33 = vector.broadcast %cst_17 : f32 to vector<2x32xf32>
    %34 = arith.subf %33, %27 : vector<2x32xf32>
    %35 = arith.mulf %34, %32 : vector<2x32xf32>
    %36 = arith.mulf %27, %6 : vector<2x32xf32>
    %37 = arith.addf %35, %36 : vector<2x32xf32>
    %c1 = arith.constant 1 : index
    %c0_18 = arith.constant 0 : index
    %c0_19 = arith.constant 0 : index
    %38 = vector.load %arg0[%c1, %c0_18, %c0_19] : memref<4x2x96xf32, #tpu.memory_space<vmem>>, vector<1x2x96xf32>
    %39 = vector.shape_cast %38 : vector<1x2x96xf32> to vector<2x96xf32>
    %cst_20 = arith.constant dense<0.000000e+00> : vector<2x96xf32>
    %40 = tpu.matmul %37, %0, %cst_20 {dimension_numbers = #tpu.dot_dimension_numbers<[1], [0], [0], [1], [0, 0, 1, 1], [], []>} : vector<2x32xf32>, vector<32x96xf32>, vector<2x96xf32> -> vector<2x96xf32>
    %41 = vector.broadcast %1 : vector<1x96xf32> to vector<2x96xf32>
    %42 = arith.addf %40, %41 : vector<2x96xf32>
    %43 = vector.extract_strided_slice %39 {offsets = [0, 0], sizes = [2, 32], strides = [1, 1]} : vector<2x96xf32> to vector<2x32xf32>
    %44 = vector.extract_strided_slice %42 {offsets = [0, 0], sizes = [2, 32], strides = [1, 1]} : vector<2x96xf32> to vector<2x32xf32>
    %45 = arith.addf %43, %44 : vector<2x32xf32>
    %46 = arith.negf %45 : vector<2x32xf32>
    %47 = math.exp %46 : vector<2x32xf32>
    %cst_21 = arith.constant 1.000000e+00 : f32
    %48 = vector.broadcast %cst_21 : f32 to vector<2x32xf32>
    %49 = arith.addf %48, %47 : vector<2x32xf32>
    %50 = arith.divf %48, %49 : vector<2x32xf32>
    %51 = vector.extract_strided_slice %39 {offsets = [0, 32], sizes = [2, 32], strides = [1, 1]} : vector<2x96xf32> to vector<2x32xf32>
    %52 = vector.extract_strided_slice %42 {offsets = [0, 32], sizes = [2, 32], strides = [1, 1]} : vector<2x96xf32> to vector<2x32xf32>
    %53 = arith.addf %51, %52 : vector<2x32xf32>
    %54 = arith.negf %53 : vector<2x32xf32>
    %55 = math.exp %54 : vector<2x32xf32>
    %cst_22 = arith.constant 1.000000e+00 : f32
    %56 = vector.broadcast %cst_22 : f32 to vector<2x32xf32>
    %57 = arith.addf %56, %55 : vector<2x32xf32>
    %58 = arith.divf %56, %57 : vector<2x32xf32>
    %59 = vector.extract_strided_slice %39 {offsets = [0, 64], sizes = [2, 32], strides = [1, 1]} : vector<2x96xf32> to vector<2x32xf32>
    %60 = vector.extract_strided_slice %42 {offsets = [0, 64], sizes = [2, 32], strides = [1, 1]} : vector<2x96xf32> to vector<2x32xf32>
    %61 = arith.mulf %50, %60 : vector<2x32xf32>
    %62 = arith.addf %59, %61 : vector<2x32xf32>
    %63 = math.tanh %62 : vector<2x32xf32>
    %cst_23 = arith.constant 1.000000e+00 : f32
    %64 = vector.broadcast %cst_23 : f32 to vector<2x32xf32>
    %65 = arith.subf %64, %58 : vector<2x32xf32>
    %66 = arith.mulf %65, %63 : vector<2x32xf32>
    %67 = arith.mulf %58, %37 : vector<2x32xf32>
    %68 = arith.addf %66, %67 : vector<2x32xf32>
    %c2 = arith.constant 2 : index
    %c0_24 = arith.constant 0 : index
    %c0_25 = arith.constant 0 : index
    %69 = vector.load %arg0[%c2, %c0_24, %c0_25] : memref<4x2x96xf32, #tpu.memory_space<vmem>>, vector<1x2x96xf32>
    %70 = vector.shape_cast %69 : vector<1x2x96xf32> to vector<2x96xf32>
    %cst_26 = arith.constant dense<0.000000e+00> : vector<2x96xf32>
    %71 = tpu.matmul %68, %0, %cst_26 {dimension_numbers = #tpu.dot_dimension_numbers<[1], [0], [0], [1], [0, 0, 1, 1], [], []>} : vector<2x32xf32>, vector<32x96xf32>, vector<2x96xf32> -> vector<2x96xf32>
    %72 = vector.broadcast %1 : vector<1x96xf32> to vector<2x96xf32>
    %73 = arith.addf %71, %72 : vector<2x96xf32>
    %74 = vector.extract_strided_slice %70 {offsets = [0, 0], sizes = [2, 32], strides = [1, 1]} : vector<2x96xf32> to vector<2x32xf32>
    %75 = vector.extract_strided_slice %73 {offsets = [0, 0], sizes = [2, 32], strides = [1, 1]} : vector<2x96xf32> to vector<2x32xf32>
    %76 = arith.addf %74, %75 : vector<2x32xf32>
    %77 = arith.negf %76 : vector<2x32xf32>
    %78 = math.exp %77 : vector<2x32xf32>
    %cst_27 = arith.constant 1.000000e+00 : f32
    %79 = vector.broadcast %cst_27 : f32 to vector<2x32xf32>
    %80 = arith.addf %79, %78 : vector<2x32xf32>
    %81 = arith.divf %79, %80 : vector<2x32xf32>
    %82 = vector.extract_strided_slice %70 {offsets = [0, 32], sizes = [2, 32], strides = [1, 1]} : vector<2x96xf32> to vector<2x32xf32>
    %83 = vector.extract_strided_slice %73 {offsets = [0, 32], sizes = [2, 32], strides = [1, 1]} : vector<2x96xf32> to vector<2x32xf32>
    %84 = arith.addf %82, %83 : vector<2x32xf32>
    %85 = arith.negf %84 : vector<2x32xf32>
    %86 = math.exp %85 : vector<2x32xf32>
    %cst_28 = arith.constant 1.000000e+00 : f32
    %87 = vector.broadcast %cst_28 : f32 to vector<2x32xf32>
    %88 = arith.addf %87, %86 : vector<2x32xf32>
    %89 = arith.divf %87, %88 : vector<2x32xf32>
    %90 = vector.extract_strided_slice %70 {offsets = [0, 64], sizes = [2, 32], strides = [1, 1]} : vector<2x96xf32> to vector<2x32xf32>
    %91 = vector.extract_strided_slice %73 {offsets = [0, 64], sizes = [2, 32], strides = [1, 1]} : vector<2x96xf32> to vector<2x32xf32>
    %92 = arith.mulf %81, %91 : vector<2x32xf32>
    %93 = arith.addf %90, %92 : vector<2x32xf32>
    %94 = math.tanh %93 : vector<2x32xf32>
    %cst_29 = arith.constant 1.000000e+00 : f32
    %95 = vector.broadcast %cst_29 : f32 to vector<2x32xf32>
    %96 = arith.subf %95, %89 : vector<2x32xf32>
    %97 = arith.mulf %96, %94 : vector<2x32xf32>
    %98 = arith.mulf %89, %68 : vector<2x32xf32>
    %99 = arith.addf %97, %98 : vector<2x32xf32>
    %c3 = arith.constant 3 : index
    %c0_30 = arith.constant 0 : index
    %c0_31 = arith.constant 0 : index
    %100 = vector.load %arg0[%c3, %c0_30, %c0_31] : memref<4x2x96xf32, #tpu.memory_space<vmem>>, vector<1x2x96xf32>
    %101 = vector.shape_cast %100 : vector<1x2x96xf32> to vector<2x96xf32>
    %cst_32 = arith.constant dense<0.000000e+00> : vector<2x96xf32>
    %102 = tpu.matmul %99, %0, %cst_32 {dimension_numbers = #tpu.dot_dimension_numbers<[1], [0], [0], [1], [0, 0, 1, 1], [], []>} : vector<2x32xf32>, vector<32x96xf32>, vector<2x96xf32> -> vector<2x96xf32>
    %103 = vector.broadcast %1 : vector<1x96xf32> to vector<2x96xf32>
    %104 = arith.addf %102, %103 : vector<2x96xf32>
    %105 = vector.extract_strided_slice %101 {offsets = [0, 0], sizes = [2, 32], strides = [1, 1]} : vector<2x96xf32> to vector<2x32xf32>
    %106 = vector.extract_strided_slice %104 {offsets = [0, 0], sizes = [2, 32], strides = [1, 1]} : vector<2x96xf32> to vector<2x32xf32>
    %107 = arith.addf %105, %106 : vector<2x32xf32>
    %108 = arith.negf %107 : vector<2x32xf32>
    %109 = math.exp %108 : vector<2x32xf32>
    %cst_33 = arith.constant 1.000000e+00 : f32
    %110 = vector.broadcast %cst_33 : f32 to vector<2x32xf32>
    %111 = arith.addf %110, %109 : vector<2x32xf32>
    %112 = arith.divf %110, %111 : vector<2x32xf32>
    %113 = vector.extract_strided_slice %101 {offsets = [0, 32], sizes = [2, 32], strides = [1, 1]} : vector<2x96xf32> to vector<2x32xf32>
    %114 = vector.extract_strided_slice %104 {offsets = [0, 32], sizes = [2, 32], strides = [1, 1]} : vector<2x96xf32> to vector<2x32xf32>
    %115 = arith.addf %113, %114 : vector<2x32xf32>
    %116 = arith.negf %115 : vector<2x32xf32>
    %117 = math.exp %116 : vector<2x32xf32>
    %cst_34 = arith.constant 1.000000e+00 : f32
    %118 = vector.broadcast %cst_34 : f32 to vector<2x32xf32>
    %119 = arith.addf %118, %117 : vector<2x32xf32>
    %120 = arith.divf %118, %119 : vector<2x32xf32>
    %121 = vector.extract_strided_slice %101 {offsets = [0, 64], sizes = [2, 32], strides = [1, 1]} : vector<2x96xf32> to vector<2x32xf32>
    %122 = vector.extract_strided_slice %104 {offsets = [0, 64], sizes = [2, 32], strides = [1, 1]} : vector<2x96xf32> to vector<2x32xf32>
    %123 = arith.mulf %112, %122 : vector<2x32xf32>
    %124 = arith.addf %121, %123 : vector<2x32xf32>
    %125 = math.tanh %124 : vector<2x32xf32>
    %cst_35 = arith.constant 1.000000e+00 : f32
    %126 = vector.broadcast %cst_35 : f32 to vector<2x32xf32>
    %127 = arith.subf %126, %120 : vector<2x32xf32>
    %128 = arith.mulf %127, %125 : vector<2x32xf32>
    %129 = arith.mulf %120, %99 : vector<2x32xf32>
    %130 = arith.addf %128, %129 : vector<2x32xf32>
    %cst_36 = arith.constant 0.000000e+00 : f32
    %131 = vector.broadcast %cst_36 : f32 to vector<2x32xf32>
    %c3_37 = arith.constant 3 : index
    %c0_38 = arith.constant 0 : index
    %c0_39 = arith.constant 0 : index
    %132 = vector.load %arg1[%c3_37, %c0_38, %c0_39] : memref<4x2x96xf32, #tpu.memory_space<vmem>>, vector<1x2x96xf32>
    %133 = vector.shape_cast %132 : vector<1x2x96xf32> to vector<2x96xf32>
    %cst_40 = arith.constant dense<0.000000e+00> : vector<2x96xf32>
    %134 = tpu.matmul %131, %2, %cst_40 {dimension_numbers = #tpu.dot_dimension_numbers<[1], [0], [0], [1], [0, 0, 1, 1], [], []>} : vector<2x32xf32>, vector<32x96xf32>, vector<2x96xf32> -> vector<2x96xf32>
    %135 = vector.broadcast %3 : vector<1x96xf32> to vector<2x96xf32>
    %136 = arith.addf %134, %135 : vector<2x96xf32>
    %137 = vector.extract_strided_slice %133 {offsets = [0, 0], sizes = [2, 32], strides = [1, 1]} : vector<2x96xf32> to vector<2x32xf32>
    %138 = vector.extract_strided_slice %136 {offsets = [0, 0], sizes = [2, 32], strides = [1, 1]} : vector<2x96xf32> to vector<2x32xf32>
    %139 = arith.addf %137, %138 : vector<2x32xf32>
    %140 = arith.negf %139 : vector<2x32xf32>
    %141 = math.exp %140 : vector<2x32xf32>
    %cst_41 = arith.constant 1.000000e+00 : f32
    %142 = vector.broadcast %cst_41 : f32 to vector<2x32xf32>
    %143 = arith.addf %142, %141 : vector<2x32xf32>
    %144 = arith.divf %142, %143 : vector<2x32xf32>
    %145 = vector.extract_strided_slice %133 {offsets = [0, 32], sizes = [2, 32], strides = [1, 1]} : vector<2x96xf32> to vector<2x32xf32>
    %146 = vector.extract_strided_slice %136 {offsets = [0, 32], sizes = [2, 32], strides = [1, 1]} : vector<2x96xf32> to vector<2x32xf32>
    %147 = arith.addf %145, %146 : vector<2x32xf32>
    %148 = arith.negf %147 : vector<2x32xf32>
    %149 = math.exp %148 : vector<2x32xf32>
    %cst_42 = arith.constant 1.000000e+00 : f32
    %150 = vector.broadcast %cst_42 : f32 to vector<2x32xf32>
    %151 = arith.addf %150, %149 : vector<2x32xf32>
    %152 = arith.divf %150, %151 : vector<2x32xf32>
    %153 = vector.extract_strided_slice %133 {offsets = [0, 64], sizes = [2, 32], strides = [1, 1]} : vector<2x96xf32> to vector<2x32xf32>
    %154 = vector.extract_strided_slice %136 {offsets = [0, 64], sizes = [2, 32], strides = [1, 1]} : vector<2x96xf32> to vector<2x32xf32>
    %155 = arith.mulf %144, %154 : vector<2x32xf32>
    %156 = arith.addf %153, %155 : vector<2x32xf32>
    %157 = math.tanh %156 : vector<2x32xf32>
    %cst_43 = arith.constant 1.000000e+00 : f32
    %158 = vector.broadcast %cst_43 : f32 to vector<2x32xf32>
    %159 = arith.subf %158, %152 : vector<2x32xf32>
    %160 = arith.mulf %159, %157 : vector<2x32xf32>
    %161 = arith.mulf %152, %131 : vector<2x32xf32>
    %162 = arith.addf %160, %161 : vector<2x32xf32>
    %163 = vector.extract_strided_slice %4 {offsets = [0, 0], sizes = [32, 128], strides = [1, 1]} : vector<64x128xf32> to vector<32x128xf32>
    %cst_44 = arith.constant dense<0.000000e+00> : vector<2x128xf32>
    %164 = tpu.matmul %130, %163, %cst_44 {dimension_numbers = #tpu.dot_dimension_numbers<[1], [0], [0], [1], [0, 0, 1, 1], [], []>} : vector<2x32xf32>, vector<32x128xf32>, vector<2x128xf32> -> vector<2x128xf32>
    %165 = vector.extract_strided_slice %4 {offsets = [32, 0], sizes = [32, 128], strides = [1, 1]} : vector<64x128xf32> to vector<32x128xf32>
    %cst_45 = arith.constant dense<0.000000e+00> : vector<2x128xf32>
    %166 = tpu.matmul %162, %165, %cst_45 {dimension_numbers = #tpu.dot_dimension_numbers<[1], [0], [0], [1], [0, 0, 1, 1], [], []>} : vector<2x32xf32>, vector<32x128xf32>, vector<2x128xf32> -> vector<2x128xf32>
    %167 = arith.addf %164, %166 : vector<2x128xf32>
    %168 = vector.broadcast %5 : vector<1x128xf32> to vector<2x128xf32>
    %169 = arith.addf %167, %168 : vector<2x128xf32>
    %cst_46 = arith.constant dense<0xFF800000> : vector<2xf32>
    %170 = vector.multi_reduction <maximumf>, %169, %cst_46 [1] : vector<2x128xf32> to vector<2xf32>
    %171 = vector.shape_cast %170 : vector<2xf32> to vector<2x1xf32>
    %172 = vector.broadcast %171 : vector<2x1xf32> to vector<2x128xf32>
    %173 = arith.subf %169, %172 : vector<2x128xf32>
    %174 = math.exp %173 : vector<2x128xf32>
    %cst_47 = arith.constant dense<0.000000e+00> : vector<2xf32>
    %175 = vector.multi_reduction <add>, %174, %cst_47 [1] : vector<2x128xf32> to vector<2xf32>
    %176 = vector.shape_cast %175 : vector<2xf32> to vector<2x1xf32>
    %177 = math.log %176 : vector<2x1xf32>
    %178 = vector.broadcast %177 : vector<2x1xf32> to vector<2x128xf32>
    %179 = arith.subf %173, %178 : vector<2x128xf32>
    %c3_48 = arith.constant 3 : index
    %c0_49 = arith.constant 0 : index
    %c0_50 = arith.constant 0 : index
    %180 = vector.load %arg8[%c3_48, %c0_49, %c0_50] : memref<4x2x128xf32, #tpu.memory_space<vmem>>, vector<1x2x128xf32>
    %181 = vector.shape_cast %180 : vector<1x2x128xf32> to vector<2x128xf32>
    %182 = vector.shape_cast %179 : vector<2x128xf32> to vector<1x2x128xf32>
    tpu.vector_store %arg8[%c3_48, %c0_49, %c0_50], %182 {strides = array<i32>} : memref<4x2x128xf32, #tpu.memory_space<vmem>>, vector<1x2x128xf32>,
    %c2_51 = arith.constant 2 : index
    %c0_52 = arith.constant 0 : index
    %c0_53 = arith.constant 0 : index
    %183 = vector.load %arg1[%c2_51, %c0_52, %c0_53] : memref<4x2x96xf32, #tpu.memory_space<vmem>>, vector<1x2x96xf32>
    %184 = vector.shape_cast %183 : vector<1x2x96xf32> to vector<2x96xf32>
    %cst_54 = arith.constant dense<0.000000e+00> : vector<2x96xf32>
    %185 = tpu.matmul %162, %2, %cst_54 {dimension_numbers = #tpu.dot_dimension_numbers<[1], [0], [0], [1], [0, 0, 1, 1], [], []>} : vector<2x32xf32>, vector<32x96xf32>, vector<2x96xf32> -> vector<2x96xf32>
    %186 = vector.broadcast %3 : vector<1x96xf32> to vector<2x96xf32>
    %187 = arith.addf %185, %186 : vector<2x96xf32>
    %188 = vector.extract_strided_slice %184 {offsets = [0, 0], sizes = [2, 32], strides = [1, 1]} : vector<2x96xf32> to vector<2x32xf32>
    %189 = vector.extract_strided_slice %187 {offsets = [0, 0], sizes = [2, 32], strides = [1, 1]} : vector<2x96xf32> to vector<2x32xf32>
    %190 = arith.addf %188, %189 : vector<2x32xf32>
    %191 = arith.negf %190 : vector<2x32xf32>
    %192 = math.exp %191 : vector<2x32xf32>
    %cst_55 = arith.constant 1.000000e+00 : f32
    %193 = vector.broadcast %cst_55 : f32 to vector<2x32xf32>
    %194 = arith.addf %193, %192 : vector<2x32xf32>
    %195 = arith.divf %193, %194 : vector<2x32xf32>
    %196 = vector.extract_strided_slice %184 {offsets = [0, 32], sizes = [2, 32], strides = [1, 1]} : vector<2x96xf32> to vector<2x32xf32>
    %197 = vector.extract_strided_slice %187 {offsets = [0, 32], sizes = [2, 32], strides = [1, 1]} : vector<2x96xf32> to vector<2x32xf32>
    %198 = arith.addf %196, %197 : vector<2x32xf32>
    %199 = arith.negf %198 : vector<2x32xf32>
    %200 = math.exp %199 : vector<2x32xf32>
    %cst_56 = arith.constant 1.000000e+00 : f32
    %201 = vector.broadcast %cst_56 : f32 to vector<2x32xf32>
    %202 = arith.addf %201, %200 : vector<2x32xf32>
    %203 = arith.divf %201, %202 : vector<2x32xf32>
    %204 = vector.extract_strided_slice %184 {offsets = [0, 64], sizes = [2, 32], strides = [1, 1]} : vector<2x96xf32> to vector<2x32xf32>
    %205 = vector.extract_strided_slice %187 {offsets = [0, 64], sizes = [2, 32], strides = [1, 1]} : vector<2x96xf32> to vector<2x32xf32>
    %206 = arith.mulf %195, %205 : vector<2x32xf32>
    %207 = arith.addf %204, %206 : vector<2x32xf32>
    %208 = math.tanh %207 : vector<2x32xf32>
    %cst_57 = arith.constant 1.000000e+00 : f32
    %209 = vector.broadcast %cst_57 : f32 to vector<2x32xf32>
    %210 = arith.subf %209, %203 : vector<2x32xf32>
    %211 = arith.mulf %210, %208 : vector<2x32xf32>
    %212 = arith.mulf %203, %162 : vector<2x32xf32>
    %213 = arith.addf %211, %212 : vector<2x32xf32>
    %214 = vector.extract_strided_slice %4 {offsets = [0, 0], sizes = [32, 128], strides = [1, 1]} : vector<64x128xf32> to vector<32x128xf32>
    %cst_58 = arith.constant dense<0.000000e+00> : vector<2x128xf32>
    %215 = tpu.matmul %99, %214, %cst_58 {dimension_numbers = #tpu.dot_dimension_numbers<[1], [0], [0], [1], [0, 0, 1, 1], [], []>} : vector<2x32xf32>, vector<32x128xf32>, vector<2x128xf32> -> vector<2x128xf32>
    %216 = vector.extract_strided_slice %4 {offsets = [32, 0], sizes = [32, 128], strides = [1, 1]} : vector<64x128xf32> to vector<32x128xf32>
    %cst_59 = arith.constant dense<0.000000e+00> : vector<2x128xf32>
    %217 = tpu.matmul %213, %216, %cst_59 {dimension_numbers = #tpu.dot_dimension_numbers<[1], [0], [0], [1], [0, 0, 1, 1], [], []>} : vector<2x32xf32>, vector<32x128xf32>, vector<2x128xf32> -> vector<2x128xf32>
    %218 = arith.addf %215, %217 : vector<2x128xf32>
    %219 = vector.broadcast %5 : vector<1x128xf32> to vector<2x128xf32>
    %220 = arith.addf %218, %219 : vector<2x128xf32>
    %cst_60 = arith.constant dense<0xFF800000> : vector<2xf32>
    %221 = vector.multi_reduction <maximumf>, %220, %cst_60 [1] : vector<2x128xf32> to vector<2xf32>
    %222 = vector.shape_cast %221 : vector<2xf32> to vector<2x1xf32>
    %223 = vector.broadcast %222 : vector<2x1xf32> to vector<2x128xf32>
    %224 = arith.subf %220, %223 : vector<2x128xf32>
    %225 = math.exp %224 : vector<2x128xf32>
    %cst_61 = arith.constant dense<0.000000e+00> : vector<2xf32>
    %226 = vector.multi_reduction <add>, %225, %cst_61 [1] : vector<2x128xf32> to vector<2xf32>
    %227 = vector.shape_cast %226 : vector<2xf32> to vector<2x1xf32>
    %228 = math.log %227 : vector<2x1xf32>
    %229 = vector.broadcast %228 : vector<2x1xf32> to vector<2x128xf32>
    %230 = arith.subf %224, %229 : vector<2x128xf32>
    %c2_62 = arith.constant 2 : index
    %c0_63 = arith.constant 0 : index
    %c0_64 = arith.constant 0 : index
    %231 = vector.load %arg8[%c2_62, %c0_63, %c0_64] : memref<4x2x128xf32, #tpu.memory_space<vmem>>, vector<1x2x128xf32>
    %232 = vector.shape_cast %231 : vector<1x2x128xf32> to vector<2x128xf32>
    %233 = vector.shape_cast %230 : vector<2x128xf32> to vector<1x2x128xf32>
    tpu.vector_store %arg8[%c2_62, %c0_63, %c0_64], %233 {strides = array<i32>} : memref<4x2x128xf32, #tpu.memory_space<vmem>>, vector<1x2x128xf32>,
    %c1_65 = arith.constant 1 : index
    %c0_66 = arith.constant 0 : index
    %c0_67 = arith.constant 0 : index
    %234 = vector.load %arg1[%c1_65, %c0_66, %c0_67] : memref<4x2x96xf32, #tpu.memory_space<vmem>>, vector<1x2x96xf32>
    %235 = vector.shape_cast %234 : vector<1x2x96xf32> to vector<2x96xf32>
    %cst_68 = arith.constant dense<0.000000e+00> : vector<2x96xf32>
    %236 = tpu.matmul %213, %2, %cst_68 {dimension_numbers = #tpu.dot_dimension_numbers<[1], [0], [0], [1], [0, 0, 1, 1], [], []>} : vector<2x32xf32>, vector<32x96xf32>, vector<2x96xf32> -> vector<2x96xf32>
    %237 = vector.broadcast %3 : vector<1x96xf32> to vector<2x96xf32>
    %238 = arith.addf %236, %237 : vector<2x96xf32>
    %239 = vector.extract_strided_slice %235 {offsets = [0, 0], sizes = [2, 32], strides = [1, 1]} : vector<2x96xf32> to vector<2x32xf32>
    %240 = vector.extract_strided_slice %238 {offsets = [0, 0], sizes = [2, 32], strides = [1, 1]} : vector<2x96xf32> to vector<2x32xf32>
    %241 = arith.addf %239, %240 : vector<2x32xf32>
    %242 = arith.negf %241 : vector<2x32xf32>
    %243 = math.exp %242 : vector<2x32xf32>
    %cst_69 = arith.constant 1.000000e+00 : f32
    %244 = vector.broadcast %cst_69 : f32 to vector<2x32xf32>
    %245 = arith.addf %244, %243 : vector<2x32xf32>
    %246 = arith.divf %244, %245 : vector<2x32xf32>
    %247 = vector.extract_strided_slice %235 {offsets = [0, 32], sizes = [2, 32], strides = [1, 1]} : vector<2x96xf32> to vector<2x32xf32>
    %248 = vector.extract_strided_slice %238 {offsets = [0, 32], sizes = [2, 32], strides = [1, 1]} : vector<2x96xf32> to vector<2x32xf32>
    %249 = arith.addf %247, %248 : vector<2x32xf32>
    %250 = arith.negf %249 : vector<2x32xf32>
    %251 = math.exp %250 : vector<2x32xf32>
    %cst_70 = arith.constant 1.000000e+00 : f32
    %252 = vector.broadcast %cst_70 : f32 to vector<2x32xf32>
    %253 = arith.addf %252, %251 : vector<2x32xf32>
    %254 = arith.divf %252, %253 : vector<2x32xf32>
    %255 = vector.extract_strided_slice %235 {offsets = [0, 64], sizes = [2, 32], strides = [1, 1]} : vector<2x96xf32> to vector<2x32xf32>
    %256 = vector.extract_strided_slice %238 {offsets = [0, 64], sizes = [2, 32], strides = [1, 1]} : vector<2x96xf32> to vector<2x32xf32>
    %257 = arith.mulf %246, %256 : vector<2x32xf32>
    %258 = arith.addf %255, %257 : vector<2x32xf32>
    %259 = math.tanh %258 : vector<2x32xf32>
    %cst_71 = arith.constant 1.000000e+00 : f32
    %260 = vector.broadcast %cst_71 : f32 to vector<2x32xf32>
    %261 = arith.subf %260, %254 : vector<2x32xf32>
    %262 = arith.mulf %261, %259 : vector<2x32xf32>
    %263 = arith.mulf %254, %213 : vector<2x32xf32>
    %264 = arith.addf %262, %263 : vector<2x32xf32>
    %265 = vector.extract_strided_slice %4 {offsets = [0, 0], sizes = [32, 128], strides = [1, 1]} : vector<64x128xf32> to vector<32x128xf32>
    %cst_72 = arith.constant dense<0.000000e+00> : vector<2x128xf32>
    %266 = tpu.matmul %68, %265, %cst_72 {dimension_numbers = #tpu.dot_dimension_numbers<[1], [0], [0], [1], [0, 0, 1, 1], [], []>} : vector<2x32xf32>, vector<32x128xf32>, vector<2x128xf32> -> vector<2x128xf32>
    %267 = vector.extract_strided_slice %4 {offsets = [32, 0], sizes = [32, 128], strides = [1, 1]} : vector<64x128xf32> to vector<32x128xf32>
    %cst_73 = arith.constant dense<0.000000e+00> : vector<2x128xf32>
    %268 = tpu.matmul %264, %267, %cst_73 {dimension_numbers = #tpu.dot_dimension_numbers<[1], [0], [0], [1], [0, 0, 1, 1], [], []>} : vector<2x32xf32>, vector<32x128xf32>, vector<2x128xf32> -> vector<2x128xf32>
    %269 = arith.addf %266, %268 : vector<2x128xf32>
    %270 = vector.broadcast %5 : vector<1x128xf32> to vector<2x128xf32>
    %271 = arith.addf %269, %270 : vector<2x128xf32>
    %cst_74 = arith.constant dense<0xFF800000> : vector<2xf32>
    %272 = vector.multi_reduction <maximumf>, %271, %cst_74 [1] : vector<2x128xf32> to vector<2xf32>
    %273 = vector.shape_cast %272 : vector<2xf32> to vector<2x1xf32>
    %274 = vector.broadcast %273 : vector<2x1xf32> to vector<2x128xf32>
    %275 = arith.subf %271, %274 : vector<2x128xf32>
    %276 = math.exp %275 : vector<2x128xf32>
    %cst_75 = arith.constant dense<0.000000e+00> : vector<2xf32>
    %277 = vector.multi_reduction <add>, %276, %cst_75 [1] : vector<2x128xf32> to vector<2xf32>
    %278 = vector.shape_cast %277 : vector<2xf32> to vector<2x1xf32>
    %279 = math.log %278 : vector<2x1xf32>
    %280 = vector.broadcast %279 : vector<2x1xf32> to vector<2x128xf32>
    %281 = arith.subf %275, %280 : vector<2x128xf32>
    %c1_76 = arith.constant 1 : index
    %c0_77 = arith.constant 0 : index
    %c0_78 = arith.constant 0 : index
    %282 = vector.load %arg8[%c1_76, %c0_77, %c0_78] : memref<4x2x128xf32, #tpu.memory_space<vmem>>, vector<1x2x128xf32>
    %283 = vector.shape_cast %282 : vector<1x2x128xf32> to vector<2x128xf32>
    %284 = vector.shape_cast %281 : vector<2x128xf32> to vector<1x2x128xf32>
    tpu.vector_store %arg8[%c1_76, %c0_77, %c0_78], %284 {strides = array<i32>} : memref<4x2x128xf32, #tpu.memory_space<vmem>>, vector<1x2x128xf32>,
    %c0_79 = arith.constant 0 : index
    %c0_80 = arith.constant 0 : index
    %c0_81 = arith.constant 0 : index
    %285 = vector.load %arg1[%c0_79, %c0_80, %c0_81] : memref<4x2x96xf32, #tpu.memory_space<vmem>>, vector<1x2x96xf32>
    %286 = vector.shape_cast %285 : vector<1x2x96xf32> to vector<2x96xf32>
    %cst_82 = arith.constant dense<0.000000e+00> : vector<2x96xf32>
    %287 = tpu.matmul %264, %2, %cst_82 {dimension_numbers = #tpu.dot_dimension_numbers<[1], [0], [0], [1], [0, 0, 1, 1], [], []>} : vector<2x32xf32>, vector<32x96xf32>, vector<2x96xf32> -> vector<2x96xf32>
    %288 = vector.broadcast %3 : vector<1x96xf32> to vector<2x96xf32>
    %289 = arith.addf %287, %288 : vector<2x96xf32>
    %290 = vector.extract_strided_slice %286 {offsets = [0, 0], sizes = [2, 32], strides = [1, 1]} : vector<2x96xf32> to vector<2x32xf32>
    %291 = vector.extract_strided_slice %289 {offsets = [0, 0], sizes = [2, 32], strides = [1, 1]} : vector<2x96xf32> to vector<2x32xf32>
    %292 = arith.addf %290, %291 : vector<2x32xf32>
    %293 = arith.negf %292 : vector<2x32xf32>
    %294 = math.exp %293 : vector<2x32xf32>
    %cst_83 = arith.constant 1.000000e+00 : f32
    %295 = vector.broadcast %cst_83 : f32 to vector<2x32xf32>
    %296 = arith.addf %295, %294 : vector<2x32xf32>
    %297 = arith.divf %295, %296 : vector<2x32xf32>
    %298 = vector.extract_strided_slice %286 {offsets = [0, 32], sizes = [2, 32], strides = [1, 1]} : vector<2x96xf32> to vector<2x32xf32>
    %299 = vector.extract_strided_slice %289 {offsets = [0, 32], sizes = [2, 32], strides = [1, 1]} : vector<2x96xf32> to vector<2x32xf32>
    %300 = arith.addf %298, %299 : vector<2x32xf32>
    %301 = arith.negf %300 : vector<2x32xf32>
    %302 = math.exp %301 : vector<2x32xf32>
    %cst_84 = arith.constant 1.000000e+00 : f32
    %303 = vector.broadcast %cst_84 : f32 to vector<2x32xf32>
    %304 = arith.addf %303, %302 : vector<2x32xf32>
    %305 = arith.divf %303, %304 : vector<2x32xf32>
    %306 = vector.extract_strided_slice %286 {offsets = [0, 64], sizes = [2, 32], strides = [1, 1]} : vector<2x96xf32> to vector<2x32xf32>
    %307 = vector.extract_strided_slice %289 {offsets = [0, 64], sizes = [2, 32], strides = [1, 1]} : vector<2x96xf32> to vector<2x32xf32>
    %308 = arith.mulf %297, %307 : vector<2x32xf32>
    %309 = arith.addf %306, %308 : vector<2x32xf32>
    %310 = math.tanh %309 : vector<2x32xf32>
    %cst_85 = arith.constant 1.000000e+00 : f32
    %311 = vector.broadcast %cst_85 : f32 to vector<2x32xf32>
    %312 = arith.subf %311, %305 : vector<2x32xf32>
    %313 = arith.mulf %312, %310 : vector<2x32xf32>
    %314 = arith.mulf %305, %264 : vector<2x32xf32>
    %315 = arith.addf %313, %314 : vector<2x32xf32>
    %316 = vector.extract_strided_slice %4 {offsets = [0, 0], sizes = [32, 128], strides = [1, 1]} : vector<64x128xf32> to vector<32x128xf32>
    %cst_86 = arith.constant dense<0.000000e+00> : vector<2x128xf32>
    %317 = tpu.matmul %37, %316, %cst_86 {dimension_numbers = #tpu.dot_dimension_numbers<[1], [0], [0], [1], [0, 0, 1, 1], [], []>} : vector<2x32xf32>, vector<32x128xf32>, vector<2x128xf32> -> vector<2x128xf32>
    %318 = vector.extract_strided_slice %4 {offsets = [32, 0], sizes = [32, 128], strides = [1, 1]} : vector<64x128xf32> to vector<32x128xf32>
    %cst_87 = arith.constant dense<0.000000e+00> : vector<2x128xf32>
    %319 = tpu.matmul %315, %318, %cst_87 {dimension_numbers = #tpu.dot_dimension_numbers<[1], [0], [0], [1], [0, 0, 1, 1], [], []>} : vector<2x32xf32>, vector<32x128xf32>, vector<2x128xf32> -> vector<2x128xf32>
    %320 = arith.addf %317, %319 : vector<2x128xf32>
    %321 = vector.broadcast %5 : vector<1x128xf32> to vector<2x128xf32>
    %322 = arith.addf %320, %321 : vector<2x128xf32>
    %cst_88 = arith.constant dense<0xFF800000> : vector<2xf32>
    %323 = vector.multi_reduction <maximumf>, %322, %cst_88 [1] : vector<2x128xf32> to vector<2xf32>
    %324 = vector.shape_cast %323 : vector<2xf32> to vector<2x1xf32>
    %325 = vector.broadcast %324 : vector<2x1xf32> to vector<2x128xf32>
    %326 = arith.subf %322, %325 : vector<2x128xf32>
    %327 = math.exp %326 : vector<2x128xf32>
    %cst_89 = arith.constant dense<0.000000e+00> : vector<2xf32>
    %328 = vector.multi_reduction <add>, %327, %cst_89 [1] : vector<2x128xf32> to vector<2xf32>
    %329 = vector.shape_cast %328 : vector<2xf32> to vector<2x1xf32>
    %330 = math.log %329 : vector<2x1xf32>
    %331 = vector.broadcast %330 : vector<2x1xf32> to vector<2x128xf32>
    %332 = arith.subf %326, %331 : vector<2x128xf32>
    %c0_90 = arith.constant 0 : index
    %c0_91 = arith.constant 0 : index
    %c0_92 = arith.constant 0 : index
    %333 = vector.load %arg8[%c0_90, %c0_91, %c0_92] : memref<4x2x128xf32, #tpu.memory_space<vmem>>, vector<1x2x128xf32>
    %334 = vector.shape_cast %333 : vector<1x2x128xf32> to vector<2x128xf32>
    %335 = vector.shape_cast %332 : vector<2x128xf32> to vector<1x2x128xf32>
    tpu.vector_store %arg8[%c0_90, %c0_91, %c0_92], %335 {strides = array<i32>} : memref<4x2x128xf32, #tpu.memory_space<vmem>>, vector<1x2x128xf32>,
    return
  }
}

</mosaic_0001>

<llo_original>
// kernel: squeeze.1
$region0: #{squeeze.1}
  %s0 = inlined_call_operand.vmem [shape: f32[48], index: 0, kind: input, shape index: {}]
  %s1 = inlined_call_operand.vmem [shape: f32[6,8], index: 1, kind: output, shape index: {}]
  $region1: #{squeeze.1} parent=0
    #allocation0 [shape = 'u8[4096]{0}', space=vmem, size = 0x1000, scoped, tag = 'scoped mem for input reshape']
    %s3 = sshll.u32 1, 1
    %s4 = ssub.s32 %s3, 1
    %v5 = vld [vmem:[%s0] sm:%s4]
    %6 = vst [vmem:[#allocation0] sm:%s4] %v5
    %v7 = vld [vmem:[#allocation0] sm:$0x1]
    %vm8 = vcmask 64512
    %9 = vst.msk [vmem:[%s1] sm:$0x1] %vm8, %v7
    %v10 = vld [vmem:[#allocation0] sm:$0x1]
    %11 = vrot.lane.b32.xlu0 %v10, 120
    %v12 = vpop.permute.xlu0 %11
    %vm13 = vcmask 64512
    %s14 = scalar_lea.vmem %s1, 1
    %15 = vst.msk [vmem:[%s14] sm:$0x1] %vm13, %v12
    %v16 = vld [vmem:[#allocation0] sm:$0x1]
    %17 = vrot.lane.b32.xlu0 %v16, 112
    %v18 = vpop.permute.xlu0 %17
    %vm19 = vcmask 64512
    %s20 = scalar_lea.vmem %s1, 2
    %21 = vst.msk [vmem:[%s20] sm:$0x1] %vm19, %v18
    %v22 = vld [vmem:[#allocation0] sm:$0x1]
    %23 = vrot.lane.b32.xlu0 %v22, 104
    %v24 = vpop.permute.xlu0 %23
    %vm25 = vcmask 64512
    %s26 = scalar_lea.vmem %s1, 3
    %27 = vst.msk [vmem:[%s26] sm:$0x1] %vm25, %v24
    %v28 = vld [vmem:[#allocation0] sm:$0x1]
    %29 = vrot.lane.b32.xlu0 %v28, 96
    %v30 = vpop.permute.xlu0 %29
    %vm31 = vcmask 64512
    %s32 = scalar_lea.vmem %s1, 4
    %33 = vst.msk [vmem:[%s32] sm:$0x1] %vm31, %v30
    %v34 = vld [vmem:[#allocation0] sm:$0x1]
    %35 = vrot.lane.b32.xlu0 %v34, 88
    %v36 = vpop.permute.xlu0 %35
    %vm37 = vcmask 64512
    %s38 = scalar_lea.vmem %s1, 5
    %39 = vst.msk [vmem:[%s38] sm:$0x1] %vm37, %v36

// kernel: fine_grained_cnn_rnn_forward.3
$region0: #{fine_grained_cnn_rnn_forward.3}
  #allocation0 [shape = 'u32[]', space=smem, size = 0x4, offset = 0x4, fixed_abs, tag = 'smem constant byte address 0x4 - core index']
  #allocation1 [shape = 'u32[144,128]{1,0:T(1,128)}', space=vmem, size = 0x12000, scoped, tag = 'internal scratch']
  %s0 = inlined_call_operand.vmem [shape: f32[4,2,96], index: 0, kind: input, shape index: {}]
  %s1 = inlined_call_operand.vmem [shape: f32[4,2,96], index: 1, kind: input, shape index: {}]
  %s2 = inlined_call_operand.vmem [shape: f32[32,96], index: 2, kind: input, shape index: {}]
  %s3 = inlined_call_operand.vmem [shape: f32[1,96], index: 3, kind: input, shape index: {}]
  %s4 = inlined_call_operand.vmem [shape: f32[32,96], index: 4, kind: input, shape index: {}]
  %s5 = inlined_call_operand.vmem [shape: f32[1,96], index: 5, kind: input, shape index: {}]
  %s6 = inlined_call_operand.vmem [shape: f32[64,128], index: 6, kind: input, shape index: {}]
  %s7 = inlined_call_operand.vmem [shape: f32[1,128], index: 7, kind: input, shape index: {}]
  %s8 = inlined_call_operand.hbm [shape: f32[4,2,128], index: 8, kind: output, shape index: {}]
  %s9 = sld [smem:[#allocation0]]
  $region42: #{fine_grained_cnn_rnn_forward.3} parent=0
    _
  %s11 = ssub.s32 1, %s9
  %s12 = scalar_select 0, %s11, %s9
  $region1: #{fine_grained_cnn_rnn_forward.3} parent=0
    #allocation2 [shape = 'u8[4096]{0}', space=vmem, size = 0x1000, scoped, tag = 'output window, operand 0, single buffered']
    #allocation3 [shape = 's32[1]{0}', space=sflag, size = 0x4, scoped, tag = 'scoped memory for fine_grained_cnn_rnn_forward.3']
    %13 = vsyncpa [#allocation3], 0
    // Predicated region
    $region2: #{fine_grained_cnn_rnn_forward.3} parent=1 // pred_check
      _
    $region3: #{fine_grained_cnn_rnn_forward.3} parent=1 // pred_check_branch
      %15 = sbr.rel (0) target = $region5
    $region4: #{fine_grained_cnn_rnn_forward.3} parent=1 // pred_region
      _
    $region5: #{fine_grained_cnn_rnn_forward.3} parent=1 // pred_fallthru
      _
    // Predicated region
    $region6: #{fine_grained_cnn_rnn_forward.3} parent=1 // pred_check
      _
    $region7: #{fine_grained_cnn_rnn_forward.3} parent=1 // pred_check_branch
      %17 = sbr.rel (0) target = $region9
    $region8: #{fine_grained_cnn_rnn_forward.3} parent=1 // pred_region
      _
    $region9: #{fine_grained_cnn_rnn_forward.3} parent=1 // pred_fallthru
      _
    // Predicated region
    $region10: #{fine_grained_cnn_rnn_forward.3} parent=1 // pred_check
      _
    $region11: #{fine_grained_cnn_rnn_forward.3} parent=1 // pred_check_branch
      %19 = sbr.rel (0) target = $region13
    $region12: #{fine_grained_cnn_rnn_forward.3} parent=1 // pred_region
      _
    $region13: #{fine_grained_cnn_rnn_forward.3} parent=1 // pred_fallthru
      _
    // Predicated region
    $region14: #{fine_grained_cnn_rnn_forward.3} parent=1 // pred_check
      _
    $region15: #{fine_grained_cnn_rnn_forward.3} parent=1 // pred_check_branch
      %21 = sbr.rel (0) target = $region17
    $region16: #{fine_grained_cnn_rnn_forward.3} parent=1 // pred_region
      _
    $region17: #{fine_grained_cnn_rnn_forward.3} parent=1 // pred_fallthru
      _
    // Predicated region
    $region18: #{fine_grained_cnn_rnn_forward.3} parent=1 // pred_check
      _
    $region19: #{fine_grained_cnn_rnn_forward.3} parent=1 // pred_check_branch
      %23 = sbr.rel (0) target = $region21
    $region20: #{fine_grained_cnn_rnn_forward.3} parent=1 // pred_region
      _
    $region21: #{fine_grained_cnn_rnn_forward.3} parent=1 // pred_fallthru
      _
    // Predicated region
    $region22: #{fine_grained_cnn_rnn_forward.3} parent=1 // pred_check
      _
    $region23: #{fine_grained_cnn_rnn_forward.3} parent=1 // pred_check_branch
      %25 = sbr.rel (0) target = $region25
    $region24: #{fine_grained_cnn_rnn_forward.3} parent=1 // pred_region
      _
    $region25: #{fine_grained_cnn_rnn_forward.3} parent=1 // pred_fallthru
      _
    // Predicated region
    $region26: #{fine_grained_cnn_rnn_forward.3} parent=1 // pred_check
      _
    $region27: #{fine_grained_cnn_rnn_forward.3} parent=1 // pred_check_branch
      %27 = sbr.rel (0) target = $region29
    $region28: #{fine_grained_cnn_rnn_forward.3} parent=1 // pred_region
      _
    $region29: #{fine_grained_cnn_rnn_forward.3} parent=1 // pred_fallthru
      _
    // Predicated region
    $region30: #{fine_grained_cnn_rnn_forward.3} parent=1 // pred_check
      _
    $region31: #{fine_grained_cnn_rnn_forward.3} parent=1 // pred_check_branch
      %29 = sbr.rel (0) target = $region33
    $region32: #{fine_grained_cnn_rnn_forward.3} parent=1 // pred_region
      _
    $region33: #{fine_grained_cnn_rnn_forward.3} parent=1 // pred_fallthru
      _
    %v30 = vld [vmem:[%s2] sm:$0xff]
    %v31 = vld [vmem:[%s2 + $0x8] sm:$0xff]
    %v32 = vld [vmem:[%s2 + $0x10] sm:$0xff]
    %v33 = vld [vmem:[%s2 + $0x18] sm:$0xff]
    %v34 = vld [vmem:[%s3] sm:$0x1]
    %v35 = vld [vmem:[%s4] sm:$0xff]
    %v36 = vld [vmem:[%s4 + $0x8] sm:$0xff]
    %v37 = vld [vmem:[%s4 + $0x10] sm:$0xff]
    %v38 = vld [vmem:[%s4 + $0x18] sm:$0xff]
    %v39 = vld [vmem:[%s5] sm:$0x1]
    %v40 = vld [vmem:[%s6] sm:$0xff]
    %v41 = vld [vmem:[%s6 + $0x8] sm:$0xff]
    %v42 = vld [vmem:[%s6 + $0x10] sm:$0xff]
    %v43 = vld [vmem:[%s6 + $0x18] sm:$0xff]
    %v44 = vld [vmem:[%s6 + $0x20] sm:$0xff]
    %v45 = vld [vmem:[%s6 + $0x28] sm:$0xff]
    %v46 = vld [vmem:[%s6 + $0x30] sm:$0xff]
    %v47 = vld [vmem:[%s6 + $0x38] sm:$0xff]
    %v48 = vld [vmem:[%s7] sm:$0x1]
    %v49 = vld [vmem:[%s0] sm:$0x3]
    %v51 = vlaneseq
    %v52 = vshrl.u32 %v51, 7
    %v53 = vsub.s32 0, %v52
    %v54 = vrot.slane %v34, %v53
    %vm56 = vcmask 261120
    %v58 = vsel %vm56, 0.0, 0
    %60 = vmatprep.subr.mxu0 0.0
    %61 = vmatpush1.msra.mxu0 0.0
    %62 = vmatprep.subr.mxu0 0.0
    %63 = vmatpush1.msra.mxu0 0.0
    %64 = vmatprep.subr.mxu0 0.0
    %65 = vmatpush1.msra.mxu0 0.0
    %66 = vmatprep.subr.mxu0 0.0
    %67 = vmatpush1.msra.mxu0 0.0
    %68 = vmatprep.subr.mxu0 0.0
    %69 = vmatpush1.msra.mxu0 0.0
    %70 = vmatprep.subr.mxu0 0.0
    %71 = vmatpush1.msra.mxu0 0.0
    %72 = vmatprep.subr.mxu0 0.0
    %73 = vmatpush1.msra.mxu0 0.0
    %74 = vmatprep.subr.mxu0 0.0
    %75 = vmatpush1.msra.mxu0 0.0
    %76 = vmatprep.subr.mxu0 0.0
    %77 = vmatpush1.msra.mxu0 0.0
    %78 = vmatprep.subr.mxu0 0.0
    %79 = vmatpush1.msra.mxu0 0.0
    %80 = vmatprep.subr.mxu0 0.0
    %81 = vmatpush1.msra.mxu0 0.0
    %82 = vmatprep.subr.mxu0 0.0
    %83 = vmatpush1.msra.mxu0 0.0
    %84 = vmatprep.subr.mxu0 0.0
    %85 = vmatpush1.msra.mxu0 %v33
    %86 = vmatprep.subr.mxu0 0.0
    %87 = vmatpush1.msra.mxu0 %v32
    %88 = vmatprep.subr.mxu0 0.0
    %89 = vmatpush1.msra.mxu0 %v31
    %90 = vmatprep.subr.mxu0 0.0
    %91 = vmatpush1.msra.mxu0 %v30
    %92 = vmatprep.subr.mxu0 0.0
    %93 = vmatpush2.msra.mxu0 0.0
    %94 = vmatprep.subr.mxu0 0.0
    %95 = vmatpush2.msra.mxu0 0.0
    %96 = vmatprep.subr.mxu0 0.0
    %97 = vmatpush2.msra.mxu0 0.0
    %98 = vmatprep.subr.mxu0 0.0
    %99 = vmatpush2.msra.mxu0 0.0
    %100 = vmatprep.subr.mxu0 0.0
    %101 = vmatpush2.msra.mxu0 0.0
    %102 = vmatprep.subr.mxu0 0.0
    %103 = vmatpush2.msra.mxu0 0.0
    %104 = vmatprep.subr.mxu0 0.0
    %105 = vmatpush2.msra.mxu0 0.0
    %106 = vmatprep.subr.mxu0 0.0
    %107 = vmatpush2.msra.mxu0 0.0
    %108 = vmatprep.subr.mxu0 0.0
    %109 = vmatpush2.msra.mxu0 0.0
    %110 = vmatprep.subr.mxu0 0.0
    %111 = vmatpush2.msra.mxu0 0.0
    %112 = vmatprep.subr.mxu0 0.0
    %113 = vmatpush2.msra.mxu0 0.0
    %114 = vmatprep.subr.mxu0 0.0
    %115 = vmatpush2.msra.mxu0 0.0
    %116 = vmatprep.subr.mxu0 0.0
    %117 = vmatpush2.msra.mxu0 0.0
    %118 = vmatprep.subr.mxu0 0.0
    %119 = vmatpush2.msra.mxu0 0.0
    %120 = vmatprep.subr.mxu0 0.0
    %121 = vmatpush2.msra.mxu0 0.0
    %122 = vmatprep.subr.mxu0 0.0
    %123 = vmatpush2.msra.mxu0 0.0
    %124 = vmatprep.mubr.f32.mxu0 0.0
    %125 = vmatmul.mubr.f32.gmra.mxu0 %v58
    %v126 = vpop.f32.mrf.mxu0
    %v127 = vadd.f32 %v54, %v126
    %v128 = vpop.f32.mrf.mxu0
    %129 = vdwg.mxu0
    %v130 = vadd.f32 %v49, %v127
    %v131 = vxor.u32 %v130, 2147483648
    %v132 = vmul.f32 %v131, 1.442695
    %v133 = vpow.pop %v132
    %v134 = vadd.f32 %v133, 1.0
    %v135 = vrcp.pop %v134
    %v136 = vmul.f32 1.0, %v135
    %138 = vrot.lane.b32.xlu0 %v127, 64
    %v139 = vpop.permute.xlu0 %138
    %v141 = vmul.f32 %v136, %v139
    %143 = vrot.lane.b32.xlu0 %v141, 64
    %v144 = vpop.permute.xlu0 %143
    %v146 = vadd.f32 %v49, %v144
    %v147 = vtanh.pop %v146
    %v148 = vsub.f32 1.0, %v136
    %150 = vrot.lane.b32.xlu0 %v147, 96
    %v151 = vpop.permute.xlu0 %150
    %v153 = vmul.f32 %v148, %v151
    %v154 = vmul.f32 %v136, 0.0
    %v155 = vadd.f32 %v153, %v154
    %s156 = scalar_lea.vmem %s0, 2
    %v157 = vld [vmem:[%s156] sm:$0x3]
    %159 = vrot.lane.b32.xlu0 %v155, 96
    %v160 = vpop.permute.xlu0 %159
    %v161 = vsel %vm56, %v160, 0
    %163 = vmatprep.subr.mxu0 0.0
    %164 = vmatpush1.msra.mxu0 0.0
    %165 = vmatprep.subr.mxu0 0.0
    %166 = vmatpush1.msra.mxu0 0.0
    %167 = vmatprep.subr.mxu0 0.0
    %168 = vmatpush1.msra.mxu0 0.0
    %169 = vmatprep.subr.mxu0 0.0
    %170 = vmatpush1.msra.mxu0 0.0
    %171 = vmatprep.subr.mxu0 0.0
    %172 = vmatpush1.msra.mxu0 0.0
    %173 = vmatprep.subr.mxu0 0.0
    %174 = vmatpush1.msra.mxu0 0.0
    %175 = vmatprep.subr.mxu0 0.0
    %176 = vmatpush1.msra.mxu0 0.0
    %177 = vmatprep.subr.mxu0 0.0
    %178 = vmatpush1.msra.mxu0 0.0
    %179 = vmatprep.subr.mxu0 0.0
    %180 = vmatpush1.msra.mxu0 0.0
    %181 = vmatprep.subr.mxu0 0.0
    %182 = vmatpush1.msra.mxu0 0.0
    %183 = vmatprep.subr.mxu0 0.0
    %184 = vmatpush1.msra.mxu0 0.0
    %185 = vmatprep.subr.mxu0 0.0
    %186 = vmatpush1.msra.mxu0 0.0
    %187 = vmatprep.subr.mxu0 0.0
    %188 = vmatpush1.msra.mxu0 %v33
    %189 = vmatprep.subr.mxu0 0.0
    %190 = vmatpush1.msra.mxu0 %v32
    %191 = vmatprep.subr.mxu0 0.0
    %192 = vmatpush1.msra.mxu0 %v31
    %193 = vmatprep.subr.mxu0 0.0
    %194 = vmatpush1.msra.mxu0 %v30
    %195 = vmatprep.subr.mxu0 0.0
    %196 = vmatpush2.msra.mxu0 0.0
    %197 = vmatprep.subr.mxu0 0.0
    %198 = vmatpush2.msra.mxu0 0.0
    %199 = vmatprep.subr.mxu0 0.0
    %200 = vmatpush2.msra.mxu0 0.0
    %201 = vmatprep.subr.mxu0 0.0
    %202 = vmatpush2.msra.mxu0 0.0
    %203 = vmatprep.subr.mxu0 0.0
    %204 = vmatpush2.msra.mxu0 0.0
    %205 = vmatprep.subr.mxu0 0.0
    %206 = vmatpush2.msra.mxu0 0.0
    %207 = vmatprep.subr.mxu0 0.0
    %208 = vmatpush2.msra.mxu0 0.0
    %209 = vmatprep.subr.mxu0 0.0
    %210 = vmatpush2.msra.mxu0 0.0
    %211 = vmatprep.subr.mxu0 0.0
    %212 = vmatpush2.msra.mxu0 0.0
    %213 = vmatprep.subr.mxu0 0.0
    %214 = vmatpush2.msra.mxu0 0.0
    %215 = vmatprep.subr.mxu0 0.0
    %216 = vmatpush2.msra.mxu0 0.0
    %217 = vmatprep.subr.mxu0 0.0
    %218 = vmatpush2.msra.mxu0 0.0
    %219 = vmatprep.subr.mxu0 0.0
    %220 = vmatpush2.msra.mxu0 0.0
    %221 = vmatprep.subr.mxu0 0.0
    %222 = vmatpush2.msra.mxu0 0.0
    %223 = vmatprep.subr.mxu0 0.0
    %224 = vmatpush2.msra.mxu0 0.0
    %225 = vmatprep.subr.mxu0 0.0
    %226 = vmatpush2.msra.mxu0 0.0
    %227 = vmatprep.mubr.f32.mxu0 0.0
    %228 = vmatmul.mubr.f32.gmra.mxu0 %v161
    %v229 = vpop.f32.mrf.mxu0
    %v230 = vadd.f32 %v54, %v229
    %v231 = vpop.f32.mrf.mxu0
    %232 = vdwg.mxu0
    %v233 = vadd.f32 %v157, %v230
    %v234 = vxor.u32 %v233, 2147483648
    %v235 = vmul.f32 %v234, 1.442695
    %v236 = vpow.pop %v235
    %v237 = vadd.f32 %v236, 1.0
    %v238 = vrcp.pop %v237
    %v239 = vmul.f32 1.0, %v238
    %241 = vrot.lane.b32.xlu0 %v230, 64
    %v242 = vpop.permute.xlu0 %241
    %v244 = vmul.f32 %v239, %v242
    %246 = vrot.lane.b32.xlu0 %v244, 64
    %v247 = vpop.permute.xlu0 %246
    %v249 = vadd.f32 %v157, %v247
    %v250 = vtanh.pop %v249
    %v251 = vsub.f32 1.0, %v239
    %253 = vrot.lane.b32.xlu0 %v250, 96
    %v254 = vpop.permute.xlu0 %253
    %v256 = vmul.f32 %v251, %v254
    %v257 = vmul.f32 %v239, %v155
    %v258 = vadd.f32 %v256, %v257
    %s259 = scalar_lea.vmem %s0, 4
    %v260 = vld [vmem:[%s259] sm:$0x3]
    %262 = vrot.lane.b32.xlu0 %v258, 96
    %v263 = vpop.permute.xlu0 %262
    %v264 = vsel %vm56, %v263, 0
    %266 = vmatprep.subr.mxu0 0.0
    %267 = vmatpush1.msra.mxu0 0.0
    %268 = vmatprep.subr.mxu0 0.0
    %269 = vmatpush1.msra.mxu0 0.0
    %270 = vmatprep.subr.mxu0 0.0
    %271 = vmatpush1.msra.mxu0 0.0
    %272 = vmatprep.subr.mxu0 0.0
    %273 = vmatpush1.msra.mxu0 0.0
    %274 = vmatprep.subr.mxu0 0.0
    %275 = vmatpush1.msra.mxu0 0.0
    %276 = vmatprep.subr.mxu0 0.0
    %277 = vmatpush1.msra.mxu0 0.0
    %278 = vmatprep.subr.mxu0 0.0
    %279 = vmatpush1.msra.mxu0 0.0
    %280 = vmatprep.subr.mxu0 0.0
    %281 = vmatpush1.msra.mxu0 0.0
    %282 = vmatprep.subr.mxu0 0.0
    %283 = vmatpush1.msra.mxu0 0.0
    %284 = vmatprep.subr.mxu0 0.0
    %285 = vmatpush1.msra.mxu0 0.0
    %286 = vmatprep.subr.mxu0 0.0
    %287 = vmatpush1.msra.mxu0 0.0
    %288 = vmatprep.subr.mxu0 0.0
    %289 = vmatpush1.msra.mxu0 0.0
    %290 = vmatprep.subr.mxu0 0.0
    %291 = vmatpush1.msra.mxu0 %v33
    %292 = vmatprep.subr.mxu0 0.0
    %293 = vmatpush1.msra.mxu0 %v32
    %294 = vmatprep.subr.mxu0 0.0
    %295 = vmatpush1.msra.mxu0 %v31
    %296 = vmatprep.subr.mxu0 0.0
    %297 = vmatpush1.msra.mxu0 %v30
    %298 = vmatprep.subr.mxu0 0.0
    %299 = vmatpush2.msra.mxu0 0.0
    %300 = vmatprep.subr.mxu0 0.0
    %301 = vmatpush2.msra.mxu0 0.0
    %302 = vmatprep.subr.mxu0 0.0
    %303 = vmatpush2.msra.mxu0 0.0
    %304 = vmatprep.subr.mxu0 0.0
    %305 = vmatpush2.msra.mxu0 0.0
    %306 = vmatprep.subr.mxu0 0.0
    %307 = vmatpush2.msra.mxu0 0.0
    %308 = vmatprep.subr.mxu0 0.0
    %309 = vmatpush2.msra.mxu0 0.0
    %310 = vmatprep.subr.mxu0 0.0
    %311 = vmatpush2.msra.mxu0 0.0
    %312 = vmatprep.subr.mxu0 0.0
    %313 = vmatpush2.msra.mxu0 0.0
    %314 = vmatprep.subr.mxu0 0.0
    %315 = vmatpush2.msra.mxu0 0.0
    %316 = vmatprep.subr.mxu0 0.0
    %317 = vmatpush2.msra.mxu0 0.0
    %318 = vmatprep.subr.mxu0 0.0
    %319 = vmatpush2.msra.mxu0 0.0
    %320 = vmatprep.subr.mxu0 0.0
    %321 = vmatpush2.msra.mxu0 0.0
    %322 = vmatprep.subr.mxu0 0.0
    %323 = vmatpush2.msra.mxu0 0.0
    %324 = vmatprep.subr.mxu0 0.0
    %325 = vmatpush2.msra.mxu0 0.0
    %326 = vmatprep.subr.mxu0 0.0
    %327 = vmatpush2.msra.mxu0 0.0
    %328 = vmatprep.subr.mxu0 0.0
    %329 = vmatpush2.msra.mxu0 0.0
    %330 = vmatprep.mubr.f32.mxu0 0.0
    %331 = vmatmul.mubr.f32.gmra.mxu0 %v264
    %v332 = vpop.f32.mrf.mxu0
    %v333 = vadd.f32 %v54, %v332
    %v334 = vpop.f32.mrf.mxu0
    %335 = vdwg.mxu0
    %v336 = vadd.f32 %v260, %v333
    %v337 = vxor.u32 %v336, 2147483648
    %v338 = vmul.f32 %v337, 1.442695
    %v339 = vpow.pop %v338
    %v340 = vadd.f32 %v339, 1.0
    %v341 = vrcp.pop %v340
    %v342 = vmul.f32 1.0, %v341
    %344 = vrot.lane.b32.xlu0 %v333, 64
    %v345 = vpop.permute.xlu0 %344
    %v347 = vmul.f32 %v342, %v345
    %349 = vrot.lane.b32.xlu0 %v347, 64
    %v350 = vpop.permute.xlu0 %349
    %v352 = vadd.f32 %v260, %v350
    %v353 = vtanh.pop %v352
    %v354 = vsub.f32 1.0, %v342
    %356 = vrot.lane.b32.xlu0 %v353, 96
    %v357 = vpop.permute.xlu0 %356
    %v359 = vmul.f32 %v354, %v357
    %v360 = vmul.f32 %v342, %v258
    %v361 = vadd.f32 %v359, %v360
    %s362 = scalar_lea.vmem %s0, 6
    %v363 = vld [vmem:[%s362] sm:$0x3]
    %365 = vrot.lane.b32.xlu0 %v361, 96
    %v366 = vpop.permute.xlu0 %365
    %v367 = vsel %vm56, %v366, 0
    %369 = vmatprep.subr.mxu0 0.0
    %370 = vmatpush1.msra.mxu0 0.0
    %371 = vmatprep.subr.mxu0 0.0
    %372 = vmatpush1.msra.mxu0 0.0
    %373 = vmatprep.subr.mxu0 0.0
    %374 = vmatpush1.msra.mxu0 0.0
    %375 = vmatprep.subr.mxu0 0.0
    %376 = vmatpush1.msra.mxu0 0.0
    %377 = vmatprep.subr.mxu0 0.0
    %378 = vmatpush1.msra.mxu0 0.0
    %379 = vmatprep.subr.mxu0 0.0
    %380 = vmatpush1.msra.mxu0 0.0
    %381 = vmatprep.subr.mxu0 0.0
    %382 = vmatpush1.msra.mxu0 0.0
    %383 = vmatprep.subr.mxu0 0.0
    %384 = vmatpush1.msra.mxu0 0.0
    %385 = vmatprep.subr.mxu0 0.0
    %386 = vmatpush1.msra.mxu0 0.0
    %387 = vmatprep.subr.mxu0 0.0
    %388 = vmatpush1.msra.mxu0 0.0
    %389 = vmatprep.subr.mxu0 0.0
    %390 = vmatpush1.msra.mxu0 0.0
    %391 = vmatprep.subr.mxu0 0.0
    %392 = vmatpush1.msra.mxu0 0.0
    %393 = vmatprep.subr.mxu0 0.0
    %394 = vmatpush1.msra.mxu0 %v33
    %395 = vmatprep.subr.mxu0 0.0
    %396 = vmatpush1.msra.mxu0 %v32
    %397 = vmatprep.subr.mxu0 0.0
    %398 = vmatpush1.msra.mxu0 %v31
    %399 = vmatprep.subr.mxu0 0.0
    %400 = vmatpush1.msra.mxu0 %v30
    %401 = vmatprep.subr.mxu0 0.0
    %402 = vmatpush2.msra.mxu0 0.0
    %403 = vmatprep.subr.mxu0 0.0
    %404 = vmatpush2.msra.mxu0 0.0
    %405 = vmatprep.subr.mxu0 0.0
    %406 = vmatpush2.msra.mxu0 0.0
    %407 = vmatprep.subr.mxu0 0.0
    %408 = vmatpush2.msra.mxu0 0.0
    %409 = vmatprep.subr.mxu0 0.0
    %410 = vmatpush2.msra.mxu0 0.0
    %411 = vmatprep.subr.mxu0 0.0
    %412 = vmatpush2.msra.mxu0 0.0
    %413 = vmatprep.subr.mxu0 0.0
    %414 = vmatpush2.msra.mxu0 0.0
    %415 = vmatprep.subr.mxu0 0.0
    %416 = vmatpush2.msra.mxu0 0.0
    %417 = vmatprep.subr.mxu0 0.0
    %418 = vmatpush2.msra.mxu0 0.0
    %419 = vmatprep.subr.mxu0 0.0
    %420 = vmatpush2.msra.mxu0 0.0
    %421 = vmatprep.subr.mxu0 0.0
    %422 = vmatpush2.msra.mxu0 0.0
    %423 = vmatprep.subr.mxu0 0.0
    %424 = vmatpush2.msra.mxu0 0.0
    %425 = vmatprep.subr.mxu0 0.0
    %426 = vmatpush2.msra.mxu0 0.0
    %427 = vmatprep.subr.mxu0 0.0
    %428 = vmatpush2.msra.mxu0 0.0
    %429 = vmatprep.subr.mxu0 0.0
    %430 = vmatpush2.msra.mxu0 0.0
    %431 = vmatprep.subr.mxu0 0.0
    %432 = vmatpush2.msra.mxu0 0.0
    %433 = vmatprep.mubr.f32.mxu0 0.0
    %434 = vmatmul.mubr.f32.gmra.mxu0 %v367
    %v435 = vpop.f32.mrf.mxu0
    %v436 = vadd.f32 %v54, %v435
    %v437 = vpop.f32.mrf.mxu0
    %438 = vdwg.mxu0
    %v439 = vadd.f32 %v363, %v436
    %v440 = vxor.u32 %v439, 2147483648
    %v441 = vmul.f32 %v440, 1.442695
    %v442 = vpow.pop %v441
    %v443 = vadd.f32 %v442, 1.0
    %v444 = vrcp.pop %v443
    %v445 = vmul.f32 1.0, %v444
    %447 = vrot.lane.b32.xlu0 %v436, 64
    %v448 = vpop.permute.xlu0 %447
    %v450 = vmul.f32 %v445, %v448
    %452 = vrot.lane.b32.xlu0 %v450, 64
    %v453 = vpop.permute.xlu0 %452
    %v455 = vadd.f32 %v363, %v453
    %v456 = vtanh.pop %v455
    %v457 = vsub.f32 1.0, %v445
    %459 = vrot.lane.b32.xlu0 %v456, 96
    %v460 = vpop.permute.xlu0 %459
    %v462 = vmul.f32 %v457, %v460
    %v463 = vmul.f32 %v445, %v361
    %v464 = vadd.f32 %v462, %v463
    %s465 = scalar_lea.vmem %s1, 6
    %v466 = vld [vmem:[%s465] sm:$0x3]
    %v468 = vlaneseq
    %v469 = vshrl.u32 %v468, 7
    %v470 = vsub.s32 0, %v469
    %v471 = vrot.slane %v39, %v470
    %473 = vmatprep.subr.mxu0 0.0
    %474 = vmatpush1.msra.mxu0 0.0
    %475 = vmatprep.subr.mxu0 0.0
    %476 = vmatpush1.msra.mxu0 0.0
    %477 = vmatprep.subr.mxu0 0.0
    %478 = vmatpush1.msra.mxu0 0.0
    %479 = vmatprep.subr.mxu0 0.0
    %480 = vmatpush1.msra.mxu0 0.0
    %481 = vmatprep.subr.mxu0 0.0
    %482 = vmatpush1.msra.mxu0 0.0
    %483 = vmatprep.subr.mxu0 0.0
    %484 = vmatpush1.msra.mxu0 0.0
    %485 = vmatprep.subr.mxu0 0.0
    %486 = vmatpush1.msra.mxu0 0.0
    %487 = vmatprep.subr.mxu0 0.0
    %488 = vmatpush1.msra.mxu0 0.0
    %489 = vmatprep.subr.mxu0 0.0
    %490 = vmatpush1.msra.mxu0 0.0
    %491 = vmatprep.subr.mxu0 0.0
    %492 = vmatpush1.msra.mxu0 0.0
    %493 = vmatprep.subr.mxu0 0.0
    %494 = vmatpush1.msra.mxu0 0.0
    %495 = vmatprep.subr.mxu0 0.0
    %496 = vmatpush1.msra.mxu0 0.0
    %497 = vmatprep.subr.mxu0 0.0
    %498 = vmatpush1.msra.mxu0 %v38
    %499 = vmatprep.subr.mxu0 0.0
    %500 = vmatpush1.msra.mxu0 %v37
    %501 = vmatprep.subr.mxu0 0.0
    %502 = vmatpush1.msra.mxu0 %v36
    %503 = vmatprep.subr.mxu0 0.0
    %504 = vmatpush1.msra.mxu0 %v35
    %505 = vmatprep.subr.mxu0 0.0
    %506 = vmatpush2.msra.mxu0 0.0
    %507 = vmatprep.subr.mxu0 0.0
    %508 = vmatpush2.msra.mxu0 0.0
    %509 = vmatprep.subr.mxu0 0.0
    %510 = vmatpush2.msra.mxu0 0.0
    %511 = vmatprep.subr.mxu0 0.0
    %512 = vmatpush2.msra.mxu0 0.0
    %513 = vmatprep.subr.mxu0 0.0
    %514 = vmatpush2.msra.mxu0 0.0
    %515 = vmatprep.subr.mxu0 0.0
    %516 = vmatpush2.msra.mxu0 0.0
    %517 = vmatprep.subr.mxu0 0.0
    %518 = vmatpush2.msra.mxu0 0.0
    %519 = vmatprep.subr.mxu0 0.0
    %520 = vmatpush2.msra.mxu0 0.0
    %521 = vmatprep.subr.mxu0 0.0
    %522 = vmatpush2.msra.mxu0 0.0
    %523 = vmatprep.subr.mxu0 0.0
    %524 = vmatpush2.msra.mxu0 0.0
    %525 = vmatprep.subr.mxu0 0.0
    %526 = vmatpush2.msra.mxu0 0.0
    %527 = vmatprep.subr.mxu0 0.0
    %528 = vmatpush2.msra.mxu0 0.0
    %529 = vmatprep.subr.mxu0 0.0
    %530 = vmatpush2.msra.mxu0 0.0
    %531 = vmatprep.subr.mxu0 0.0
    %532 = vmatpush2.msra.mxu0 0.0
    %533 = vmatprep.subr.mxu0 0.0
    %534 = vmatpush2.msra.mxu0 0.0
    %535 = vmatprep.subr.mxu0 0.0
    %536 = vmatpush2.msra.mxu0 0.0
    %537 = vmatprep.mubr.f32.mxu0 0.0
    %538 = vmatmul.mubr.f32.gmra.mxu0 %v58
    %v539 = vpop.f32.mrf.mxu0
    %v540 = vadd.f32 %v471, %v539
    %v541 = vpop.f32.mrf.mxu0
    %542 = vdwg.mxu0
    %v543 = vadd.f32 %v466, %v540
    %v544 = vxor.u32 %v543, 2147483648
    %v545 = vmul.f32 %v544, 1.442695
    %v546 = vpow.pop %v545
    %v547 = vadd.f32 %v546, 1.0
    %v548 = vrcp.pop %v547
    %v549 = vmul.f32 1.0, %v548
    %551 = vrot.lane.b32.xlu0 %v540, 64
    %v552 = vpop.permute.xlu0 %551
    %v554 = vmul.f32 %v549, %v552
    %556 = vrot.lane.b32.xlu0 %v554, 64
    %v557 = vpop.permute.xlu0 %556
    %v559 = vadd.f32 %v466, %v557
    %v560 = vtanh.pop %v559
    %v561 = vsub.f32 1.0, %v549
    %563 = vrot.lane.b32.xlu0 %v560, 96
    %v564 = vpop.permute.xlu0 %563
    %v566 = vmul.f32 %v561, %v564
    %v567 = vmul.f32 %v549, 0.0
    %v568 = vadd.f32 %v566, %v567
    %570 = vrot.lane.b32.xlu0 %v568, 96
    %v571 = vpop.permute.xlu0 %570
    %v572 = vsel %vm56, %v571, 0
    %574 = vmatprep.subr.mxu0 0.0
    %575 = vmatpush1.msra.mxu0 0.0
    %576 = vmatprep.subr.mxu0 0.0
    %577 = vmatpush1.msra.mxu0 0.0
    %578 = vmatprep.subr.mxu0 0.0
    %579 = vmatpush1.msra.mxu0 0.0
    %580 = vmatprep.subr.mxu0 0.0
    %581 = vmatpush1.msra.mxu0 0.0
    %582 = vmatprep.subr.mxu0 0.0
    %583 = vmatpush1.msra.mxu0 0.0
    %584 = vmatprep.subr.mxu0 0.0
    %585 = vmatpush1.msra.mxu0 0.0
    %586 = vmatprep.subr.mxu0 0.0
    %587 = vmatpush1.msra.mxu0 0.0
    %588 = vmatprep.subr.mxu0 0.0
    %589 = vmatpush1.msra.mxu0 0.0
    %590 = vmatprep.subr.mxu0 0.0
    %591 = vmatpush1.msra.mxu0 0.0
    %592 = vmatprep.subr.mxu0 0.0
    %593 = vmatpush1.msra.mxu0 0.0
    %594 = vmatprep.subr.mxu0 0.0
    %595 = vmatpush1.msra.mxu0 0.0
    %596 = vmatprep.subr.mxu0 0.0
    %597 = vmatpush1.msra.mxu0 0.0
    %598 = vmatprep.subr.mxu0 0.0
    %599 = vmatpush1.msra.mxu0 %v47
    %600 = vmatprep.subr.mxu0 0.0
    %601 = vmatpush1.msra.mxu0 %v46
    %602 = vmatprep.subr.mxu0 0.0
    %603 = vmatpush1.msra.mxu0 %v45
    %604 = vmatprep.subr.mxu0 0.0
    %605 = vmatpush1.msra.mxu0 %v44
    %606 = vmatprep.subr.mxu0 0.0
    %607 = vmatpush2.msra.mxu0 0.0
    %608 = vmatprep.subr.mxu0 0.0
    %609 = vmatpush2.msra.mxu0 0.0
    %610 = vmatprep.subr.mxu0 0.0
    %611 = vmatpush2.msra.mxu0 0.0
    %612 = vmatprep.subr.mxu0 0.0
    %613 = vmatpush2.msra.mxu0 0.0
    %614 = vmatprep.subr.mxu0 0.0
    %615 = vmatpush2.msra.mxu0 0.0
    %616 = vmatprep.subr.mxu0 0.0
    %617 = vmatpush2.msra.mxu0 0.0
    %618 = vmatprep.subr.mxu0 0.0
    %619 = vmatpush2.msra.mxu0 0.0
    %620 = vmatprep.subr.mxu0 0.0
    %621 = vmatpush2.msra.mxu0 0.0
    %622 = vmatprep.subr.mxu0 0.0
    %623 = vmatpush2.msra.mxu0 0.0
    %624 = vmatprep.subr.mxu0 0.0
    %625 = vmatpush2.msra.mxu0 0.0
    %626 = vmatprep.subr.mxu0 0.0
    %627 = vmatpush2.msra.mxu0 0.0
    %628 = vmatprep.subr.mxu0 0.0
    %629 = vmatpush2.msra.mxu0 0.0
    %630 = vmatprep.subr.mxu0 0.0
    %631 = vmatpush2.msra.mxu0 0.0
    %632 = vmatprep.subr.mxu0 0.0
    %633 = vmatpush2.msra.mxu0 0.0
    %634 = vmatprep.subr.mxu0 0.0
    %635 = vmatpush2.msra.mxu0 0.0
    %636 = vmatprep.subr.mxu0 0.0
    %637 = vmatpush2.msra.mxu0 0.0
    %638 = vmatprep.mubr.f32.mxu0 0.0
    %639 = vmatmul.mubr.f32.gmra.mxu0 %v572
    %v640 = vpop.f32.mrf.mxu0
    %v641 = vadd.f32 0.0, %v640
    %v642 = vpop.f32.mrf.mxu0
    %643 = vdwg.mxu0
    %645 = vrot.lane.b32.xlu0 %v464, 96
    %v646 = vpop.permute.xlu0 %645
    %v647 = vsel %vm56, %v646, 0
    %649 = vmatprep.subr.mxu0 0.0
    %650 = vmatpush1.msra.mxu0 0.0
    %651 = vmatprep.subr.mxu0 0.0
    %652 = vmatpush1.msra.mxu0 0.0
    %653 = vmatprep.subr.mxu0 0.0
    %654 = vmatpush1.msra.mxu0 0.0
    %655 = vmatprep.subr.mxu0 0.0
    %656 = vmatpush1.msra.mxu0 0.0
    %657 = vmatprep.subr.mxu0 0.0
    %658 = vmatpush1.msra.mxu0 0.0
    %659 = vmatprep.subr.mxu0 0.0
    %660 = vmatpush1.msra.mxu0 0.0
    %661 = vmatprep.subr.mxu0 0.0
    %662 = vmatpush1.msra.mxu0 0.0
    %663 = vmatprep.subr.mxu0 0.0
    %664 = vmatpush1.msra.mxu0 0.0
    %665 = vmatprep.subr.mxu0 0.0
    %666 = vmatpush1.msra.mxu0 0.0
    %667 = vmatprep.subr.mxu0 0.0
    %668 = vmatpush1.msra.mxu0 0.0
    %669 = vmatprep.subr.mxu0 0.0
    %670 = vmatpush1.msra.mxu0 0.0
    %671 = vmatprep.subr.mxu0 0.0
    %672 = vmatpush1.msra.mxu0 0.0
    %673 = vmatprep.subr.mxu0 0.0
    %674 = vmatpush1.msra.mxu0 %v43
    %675 = vmatprep.subr.mxu0 0.0
    %676 = vmatpush1.msra.mxu0 %v42
    %677 = vmatprep.subr.mxu0 0.0
    %678 = vmatpush1.msra.mxu0 %v41
    %679 = vmatprep.subr.mxu0 0.0
    %680 = vmatpush1.msra.mxu0 %v40
    %681 = vmatprep.subr.mxu0 0.0
    %682 = vmatpush2.msra.mxu0 0.0
    %683 = vmatprep.subr.mxu0 0.0
    %684 = vmatpush2.msra.mxu0 0.0
    %685 = vmatprep.subr.mxu0 0.0
    %686 = vmatpush2.msra.mxu0 0.0
    %687 = vmatprep.subr.mxu0 0.0
    %688 = vmatpush2.msra.mxu0 0.0
    %689 = vmatprep.subr.mxu0 0.0
    %690 = vmatpush2.msra.mxu0 0.0
    %691 = vmatprep.subr.mxu0 0.0
    %692 = vmatpush2.msra.mxu0 0.0
    %693 = vmatprep.subr.mxu0 0.0
    %694 = vmatpush2.msra.mxu0 0.0
    %695 = vmatprep.subr.mxu0 0.0
    %696 = vmatpush2.msra.mxu0 0.0
    %697 = vmatprep.subr.mxu0 0.0
    %698 = vmatpush2.msra.mxu0 0.0
    %699 = vmatprep.subr.mxu0 0.0
    %700 = vmatpush2.msra.mxu0 0.0
    %701 = vmatprep.subr.mxu0 0.0
    %702 = vmatpush2.msra.mxu0 0.0
    %703 = vmatprep.subr.mxu0 0.0
    %704 = vmatpush2.msra.mxu0 0.0
    %705 = vmatprep.subr.mxu0 0.0
    %706 = vmatpush2.msra.mxu0 0.0
    %707 = vmatprep.subr.mxu0 0.0
    %708 = vmatpush2.msra.mxu0 0.0
    %709 = vmatprep.subr.mxu0 0.0
    %710 = vmatpush2.msra.mxu0 0.0
    %711 = vmatprep.subr.mxu0 0.0
    %712 = vmatpush2.msra.mxu0 0.0
    %713 = vmatprep.mubr.f32.mxu0 0.0
    %714 = vmatmul.mubr.f32.gmra.mxu0 %v647
    %v715 = vpop.f32.mrf.mxu0
    %v716 = vadd.f32 %v641, %v715
    %v717 = vpop.f32.mrf.mxu0
    %718 = vdwg.mxu0
    %v720 = vlaneseq
    %v721 = vshrl.u32 %v720, 7
    %v722 = vsub.s32 0, %v721
    %v723 = vrot.slane %v48, %v722
    %v725 = vadd.f32 %v716, %v723
    %vm726 = vcmask 1041408
    %v727 = vsel %vm726, %v725, -inf
    %728 = vmax.xlane.f32.xlu0 %v727
    %v729 = vpop.xlane.xlu0 %728
    %v730 = vsub.f32 %v725, %v729
    %v731 = vmul.f32 %v730, 1.442695
    %v732 = vpow.pop %v731
    %v733 = vsel %vm726, %v732, 0.0
    %734 = vadd.xlane.f32.xlu0 %v733
    %v735 = vpop.xlane.xlu0 %734
    %v736 = vlog2.pop %v735
    %v737 = vmul.f32 %v736, 0.6931472
    %v738 = vsub.f32 %v730, %v737
    %s739 = scalar_lea.vmem [#allocation2], 6
    %740 = vst [vmem:[%s739] sm:$0x3] %v738
    %s741 = scalar_lea.vmem %s1, 4
    %v742 = vld [vmem:[%s741] sm:$0x3]
    %743 = vmatprep.subr.mxu0 0.0
    %744 = vmatpush1.msra.mxu0 0.0
    %745 = vmatprep.subr.mxu0 0.0
    %746 = vmatpush1.msra.mxu0 0.0
    %747 = vmatprep.subr.mxu0 0.0
    %748 = vmatpush1.msra.mxu0 0.0
    %749 = vmatprep.subr.mxu0 0.0
    %750 = vmatpush1.msra.mxu0 0.0
    %751 = vmatprep.subr.mxu0 0.0
    %752 = vmatpush1.msra.mxu0 0.0
    %753 = vmatprep.subr.mxu0 0.0
    %754 = vmatpush1.msra.mxu0 0.0
    %755 = vmatprep.subr.mxu0 0.0
    %756 = vmatpush1.msra.mxu0 0.0
    %757 = vmatprep.subr.mxu0 0.0
    %758 = vmatpush1.msra.mxu0 0.0
    %759 = vmatprep.subr.mxu0 0.0
    %760 = vmatpush1.msra.mxu0 0.0
    %761 = vmatprep.subr.mxu0 0.0
    %762 = vmatpush1.msra.mxu0 0.0
    %763 = vmatprep.subr.mxu0 0.0
    %764 = vmatpush1.msra.mxu0 0.0
    %765 = vmatprep.subr.mxu0 0.0
    %766 = vmatpush1.msra.mxu0 0.0
    %767 = vmatprep.subr.mxu0 0.0
    %768 = vmatpush1.msra.mxu0 %v38
    %769 = vmatprep.subr.mxu0 0.0
    %770 = vmatpush1.msra.mxu0 %v37
    %771 = vmatprep.subr.mxu0 0.0
    %772 = vmatpush1.msra.mxu0 %v36
    %773 = vmatprep.subr.mxu0 0.0
    %774 = vmatpush1.msra.mxu0 %v35
    %775 = vmatprep.subr.mxu0 0.0
    %776 = vmatpush2.msra.mxu0 0.0
    %777 = vmatprep.subr.mxu0 0.0
    %778 = vmatpush2.msra.mxu0 0.0
    %779 = vmatprep.subr.mxu0 0.0
    %780 = vmatpush2.msra.mxu0 0.0
    %781 = vmatprep.subr.mxu0 0.0
    %782 = vmatpush2.msra.mxu0 0.0
    %783 = vmatprep.subr.mxu0 0.0
    %784 = vmatpush2.msra.mxu0 0.0
    %785 = vmatprep.subr.mxu0 0.0
    %786 = vmatpush2.msra.mxu0 0.0
    %787 = vmatprep.subr.mxu0 0.0
    %788 = vmatpush2.msra.mxu0 0.0
    %789 = vmatprep.subr.mxu0 0.0
    %790 = vmatpush2.msra.mxu0 0.0
    %791 = vmatprep.subr.mxu0 0.0
    %792 = vmatpush2.msra.mxu0 0.0
    %793 = vmatprep.subr.mxu0 0.0
    %794 = vmatpush2.msra.mxu0 0.0
    %795 = vmatprep.subr.mxu0 0.0
    %796 = vmatpush2.msra.mxu0 0.0
    %797 = vmatprep.subr.mxu0 0.0
    %798 = vmatpush2.msra.mxu0 0.0
    %799 = vmatprep.subr.mxu0 0.0
    %800 = vmatpush2.msra.mxu0 0.0
    %801 = vmatprep.subr.mxu0 0.0
    %802 = vmatpush2.msra.mxu0 0.0
    %803 = vmatprep.subr.mxu0 0.0
    %804 = vmatpush2.msra.mxu0 0.0
    %805 = vmatprep.subr.mxu0 0.0
    %806 = vmatpush2.msra.mxu0 0.0
    %807 = vmatprep.mubr.f32.mxu0 0.0
    %808 = vmatmul.mubr.f32.gmra.mxu0 %v572
    %v809 = vpop.f32.mrf.mxu0
    %v810 = vadd.f32 %v471, %v809
    %v811 = vpop.f32.mrf.mxu0
    %812 = vdwg.mxu0
    %v813 = vadd.f32 %v742, %v810
    %v814 = vxor.u32 %v813, 2147483648
    %v815 = vmul.f32 %v814, 1.442695
    %v816 = vpow.pop %v815
    %v817 = vadd.f32 %v816, 1.0
    %v818 = vrcp.pop %v817
    %v819 = vmul.f32 1.0, %v818
    %821 = vrot.lane.b32.xlu0 %v810, 64
    %v822 = vpop.permute.xlu0 %821
    %v824 = vmul.f32 %v819, %v822
    %826 = vrot.lane.b32.xlu0 %v824, 64
    %v827 = vpop.permute.xlu0 %826
    %v829 = vadd.f32 %v742, %v827
    %v830 = vtanh.pop %v829
    %v831 = vsub.f32 1.0, %v819
    %833 = vrot.lane.b32.xlu0 %v830, 96
    %v834 = vpop.permute.xlu0 %833
    %v836 = vmul.f32 %v831, %v834
    %v837 = vmul.f32 %v819, %v568
    %v838 = vadd.f32 %v836, %v837
    %840 = vrot.lane.b32.xlu0 %v838, 96
    %v841 = vpop.permute.xlu0 %840
    %v842 = vsel %vm56, %v841, 0
    %844 = vmatprep.subr.mxu0 0.0
    %845 = vmatpush1.msra.mxu0 0.0
    %846 = vmatprep.subr.mxu0 0.0
    %847 = vmatpush1.msra.mxu0 0.0
    %848 = vmatprep.subr.mxu0 0.0
    %849 = vmatpush1.msra.mxu0 0.0
    %850 = vmatprep.subr.mxu0 0.0
    %851 = vmatpush1.msra.mxu0 0.0
    %852 = vmatprep.subr.mxu0 0.0
    %853 = vmatpush1.msra.mxu0 0.0
    %854 = vmatprep.subr.mxu0 0.0
    %855 = vmatpush1.msra.mxu0 0.0
    %856 = vmatprep.subr.mxu0 0.0
    %857 = vmatpush1.msra.mxu0 0.0
    %858 = vmatprep.subr.mxu0 0.0
    %859 = vmatpush1.msra.mxu0 0.0
    %860 = vmatprep.subr.mxu0 0.0
    %861 = vmatpush1.msra.mxu0 0.0
    %862 = vmatprep.subr.mxu0 0.0
    %863 = vmatpush1.msra.mxu0 0.0
    %864 = vmatprep.subr.mxu0 0.0
    %865 = vmatpush1.msra.mxu0 0.0
    %866 = vmatprep.subr.mxu0 0.0
    %867 = vmatpush1.msra.mxu0 0.0
    %868 = vmatprep.subr.mxu0 0.0
    %869 = vmatpush1.msra.mxu0 %v47
    %870 = vmatprep.subr.mxu0 0.0
    %871 = vmatpush1.msra.mxu0 %v46
    %872 = vmatprep.subr.mxu0 0.0
    %873 = vmatpush1.msra.mxu0 %v45
    %874 = vmatprep.subr.mxu0 0.0
    %875 = vmatpush1.msra.mxu0 %v44
    %876 = vmatprep.subr.mxu0 0.0
    %877 = vmatpush2.msra.mxu0 0.0
    %878 = vmatprep.subr.mxu0 0.0
    %879 = vmatpush2.msra.mxu0 0.0
    %880 = vmatprep.subr.mxu0 0.0
    %881 = vmatpush2.msra.mxu0 0.0
    %882 = vmatprep.subr.mxu0 0.0
    %883 = vmatpush2.msra.mxu0 0.0
    %884 = vmatprep.subr.mxu0 0.0
    %885 = vmatpush2.msra.mxu0 0.0
    %886 = vmatprep.subr.mxu0 0.0
    %887 = vmatpush2.msra.mxu0 0.0
    %888 = vmatprep.subr.mxu0 0.0
    %889 = vmatpush2.msra.mxu0 0.0
    %890 = vmatprep.subr.mxu0 0.0
    %891 = vmatpush2.msra.mxu0 0.0
    %892 = vmatprep.subr.mxu0 0.0
    %893 = vmatpush2.msra.mxu0 0.0
    %894 = vmatprep.subr.mxu0 0.0
    %895 = vmatpush2.msra.mxu0 0.0
    %896 = vmatprep.subr.mxu0 0.0
    %897 = vmatpush2.msra.mxu0 0.0
    %898 = vmatprep.subr.mxu0 0.0
    %899 = vmatpush2.msra.mxu0 0.0
    %900 = vmatprep.subr.mxu0 0.0
    %901 = vmatpush2.msra.mxu0 0.0
    %902 = vmatprep.subr.mxu0 0.0
    %903 = vmatpush2.msra.mxu0 0.0
    %904 = vmatprep.subr.mxu0 0.0
    %905 = vmatpush2.msra.mxu0 0.0
    %906 = vmatprep.subr.mxu0 0.0
    %907 = vmatpush2.msra.mxu0 0.0
    %908 = vmatprep.mubr.f32.mxu0 0.0
    %909 = vmatmul.mubr.f32.gmra.mxu0 %v842
    %v910 = vpop.f32.mrf.mxu0
    %v911 = vadd.f32 0.0, %v910
    %v912 = vpop.f32.mrf.mxu0
    %913 = vdwg.mxu0
    %914 = vmatprep.subr.mxu0 0.0
    %915 = vmatpush1.msra.mxu0 0.0
    %916 = vmatprep.subr.mxu0 0.0
    %917 = vmatpush1.msra.mxu0 0.0
    %918 = vmatprep.subr.mxu0 0.0
    %919 = vmatpush1.msra.mxu0 0.0
    %920 = vmatprep.subr.mxu0 0.0
    %921 = vmatpush1.msra.mxu0 0.0
    %922 = vmatprep.subr.mxu0 0.0
    %923 = vmatpush1.msra.mxu0 0.0
    %924 = vmatprep.subr.mxu0 0.0
    %925 = vmatpush1.msra.mxu0 0.0
    %926 = vmatprep.subr.mxu0 0.0
    %927 = vmatpush1.msra.mxu0 0.0
    %928 = vmatprep.subr.mxu0 0.0
    %929 = vmatpush1.msra.mxu0 0.0
    %930 = vmatprep.subr.mxu0 0.0
    %931 = vmatpush1.msra.mxu0 0.0
    %932 = vmatprep.subr.mxu0 0.0
    %933 = vmatpush1.msra.mxu0 0.0
    %934 = vmatprep.subr.mxu0 0.0
    %935 = vmatpush1.msra.mxu0 0.0
    %936 = vmatprep.subr.mxu0 0.0
    %937 = vmatpush1.msra.mxu0 0.0
    %938 = vmatprep.subr.mxu0 0.0
    %939 = vmatpush1.msra.mxu0 %v43
    %940 = vmatprep.subr.mxu0 0.0
    %941 = vmatpush1.msra.mxu0 %v42
    %942 = vmatprep.subr.mxu0 0.0
    %943 = vmatpush1.msra.mxu0 %v41
    %944 = vmatprep.subr.mxu0 0.0
    %945 = vmatpush1.msra.mxu0 %v40
    %946 = vmatprep.subr.mxu0 0.0
    %947 = vmatpush2.msra.mxu0 0.0
    %948 = vmatprep.subr.mxu0 0.0
    %949 = vmatpush2.msra.mxu0 0.0
    %950 = vmatprep.subr.mxu0 0.0
    %951 = vmatpush2.msra.mxu0 0.0
    %952 = vmatprep.subr.mxu0 0.0
    %953 = vmatpush2.msra.mxu0 0.0
    %954 = vmatprep.subr.mxu0 0.0
    %955 = vmatpush2.msra.mxu0 0.0
    %956 = vmatprep.subr.mxu0 0.0
    %957 = vmatpush2.msra.mxu0 0.0
    %958 = vmatprep.subr.mxu0 0.0
    %959 = vmatpush2.msra.mxu0 0.0
    %960 = vmatprep.subr.mxu0 0.0
    %961 = vmatpush2.msra.mxu0 0.0
    %962 = vmatprep.subr.mxu0 0.0
    %963 = vmatpush2.msra.mxu0 0.0
    %964 = vmatprep.subr.mxu0 0.0
    %965 = vmatpush2.msra.mxu0 0.0
    %966 = vmatprep.subr.mxu0 0.0
    %967 = vmatpush2.msra.mxu0 0.0
    %968 = vmatprep.subr.mxu0 0.0
    %969 = vmatpush2.msra.mxu0 0.0
    %970 = vmatprep.subr.mxu0 0.0
    %971 = vmatpush2.msra.mxu0 0.0
    %972 = vmatprep.subr.mxu0 0.0
    %973 = vmatpush2.msra.mxu0 0.0
    %974 = vmatprep.subr.mxu0 0.0
    %975 = vmatpush2.msra.mxu0 0.0
    %976 = vmatprep.subr.mxu0 0.0
    %977 = vmatpush2.msra.mxu0 0.0
    %978 = vmatprep.mubr.f32.mxu0 0.0
    %979 = vmatmul.mubr.f32.gmra.mxu0 %v367
    %v980 = vpop.f32.mrf.mxu0
    %v981 = vadd.f32 %v911, %v980
    %v982 = vpop.f32.mrf.mxu0
    %983 = vdwg.mxu0
    %v984 = vadd.f32 %v981, %v723
    %v985 = vsel %vm726, %v984, -inf
    %986 = vmax.xlane.f32.xlu0 %v985
    %v987 = vpop.xlane.xlu0 %986
    %v988 = vsub.f32 %v984, %v987
    %v989 = vmul.f32 %v988, 1.442695
    %v990 = vpow.pop %v989
    %v991 = vsel %vm726, %v990, 0.0
    %992 = vadd.xlane.f32.xlu0 %v991
    %v993 = vpop.xlane.xlu0 %992
    %v994 = vlog2.pop %v993
    %v995 = vmul.f32 %v994, 0.6931472
    %v996 = vsub.f32 %v988, %v995
    %s997 = scalar_lea.vmem [#allocation2], 4
    %998 = vst [vmem:[%s997] sm:$0x3] %v996
    %s999 = scalar_lea.vmem %s1, 2
    %v1000 = vld [vmem:[%s999] sm:$0x3]
    %1001 = vmatprep.subr.mxu0 0.0
    %1002 = vmatpush1.msra.mxu0 0.0
    %1003 = vmatprep.subr.mxu0 0.0
    %1004 = vmatpush1.msra.mxu0 0.0
    %1005 = vmatprep.subr.mxu0 0.0
    %1006 = vmatpush1.msra.mxu0 0.0
    %1007 = vmatprep.subr.mxu0 0.0
    %1008 = vmatpush1.msra.mxu0 0.0
    %1009 = vmatprep.subr.mxu0 0.0
    %1010 = vmatpush1.msra.mxu0 0.0
    %1011 = vmatprep.subr.mxu0 0.0
    %1012 = vmatpush1.msra.mxu0 0.0
    %1013 = vmatprep.subr.mxu0 0.0
    %1014 = vmatpush1.msra.mxu0 0.0
    %1015 = vmatprep.subr.mxu0 0.0
    %1016 = vmatpush1.msra.mxu0 0.0
    %1017 = vmatprep.subr.mxu0 0.0
    %1018 = vmatpush1.msra.mxu0 0.0
    %1019 = vmatprep.subr.mxu0 0.0
    %1020 = vmatpush1.msra.mxu0 0.0
    %1021 = vmatprep.subr.mxu0 0.0
    %1022 = vmatpush1.msra.mxu0 0.0
    %1023 = vmatprep.subr.mxu0 0.0
    %1024 = vmatpush1.msra.mxu0 0.0
    %1025 = vmatprep.subr.mxu0 0.0
    %1026 = vmatpush1.msra.mxu0 %v38
    %1027 = vmatprep.subr.mxu0 0.0
    %1028 = vmatpush1.msra.mxu0 %v37
    %1029 = vmatprep.subr.mxu0 0.0
    %1030 = vmatpush1.msra.mxu0 %v36
    %1031 = vmatprep.subr.mxu0 0.0
    %1032 = vmatpush1.msra.mxu0 %v35
    %1033 = vmatprep.subr.mxu0 0.0
    %1034 = vmatpush2.msra.mxu0 0.0
    %1035 = vmatprep.subr.mxu0 0.0
    %1036 = vmatpush2.msra.mxu0 0.0
    %1037 = vmatprep.subr.mxu0 0.0
    %1038 = vmatpush2.msra.mxu0 0.0
    %1039 = vmatprep.subr.mxu0 0.0
    %1040 = vmatpush2.msra.mxu0 0.0
    %1041 = vmatprep.subr.mxu0 0.0
    %1042 = vmatpush2.msra.mxu0 0.0
    %1043 = vmatprep.subr.mxu0 0.0
    %1044 = vmatpush2.msra.mxu0 0.0
    %1045 = vmatprep.subr.mxu0 0.0
    %1046 = vmatpush2.msra.mxu0 0.0
    %1047 = vmatprep.subr.mxu0 0.0
    %1048 = vmatpush2.msra.mxu0 0.0
    %1049 = vmatprep.subr.mxu0 0.0
    %1050 = vmatpush2.msra.mxu0 0.0
    %1051 = vmatprep.subr.mxu0 0.0
    %1052 = vmatpush2.msra.mxu0 0.0
    %1053 = vmatprep.subr.mxu0 0.0
    %1054 = vmatpush2.msra.mxu0 0.0
    %1055 = vmatprep.subr.mxu0 0.0
    %1056 = vmatpush2.msra.mxu0 0.0
    %1057 = vmatprep.subr.mxu0 0.0
    %1058 = vmatpush2.msra.mxu0 0.0
    %1059 = vmatprep.subr.mxu0 0.0
    %1060 = vmatpush2.msra.mxu0 0.0
    %1061 = vmatprep.subr.mxu0 0.0
    %1062 = vmatpush2.msra.mxu0 0.0
    %1063 = vmatprep.subr.mxu0 0.0
    %1064 = vmatpush2.msra.mxu0 0.0
    %1065 = vmatprep.mubr.f32.mxu0 0.0
    %1066 = vmatmul.mubr.f32.gmra.mxu0 %v842
    %v1067 = vpop.f32.mrf.mxu0
    %v1068 = vadd.f32 %v471, %v1067
    %v1069 = vpop.f32.mrf.mxu0
    %1070 = vdwg.mxu0
    %v1071 = vadd.f32 %v1000, %v1068
    %v1072 = vxor.u32 %v1071, 2147483648
    %v1073 = vmul.f32 %v1072, 1.442695
    %v1074 = vpow.pop %v1073
    %v1075 = vadd.f32 %v1074, 1.0
    %v1076 = vrcp.pop %v1075
    %v1077 = vmul.f32 1.0, %v1076
    %1079 = vrot.lane.b32.xlu0 %v1068, 64
    %v1080 = vpop.permute.xlu0 %1079
    %v1082 = vmul.f32 %v1077, %v1080
    %1084 = vrot.lane.b32.xlu0 %v1082, 64
    %v1085 = vpop.permute.xlu0 %1084
    %v1087 = vadd.f32 %v1000, %v1085
    %v1088 = vtanh.pop %v1087
    %v1089 = vsub.f32 1.0, %v1077
    %1091 = vrot.lane.b32.xlu0 %v1088, 96
    %v1092 = vpop.permute.xlu0 %1091
    %v1094 = vmul.f32 %v1089, %v1092
    %v1095 = vmul.f32 %v1077, %v838
    %v1096 = vadd.f32 %v1094, %v1095
    %1098 = vrot.lane.b32.xlu0 %v1096, 96
    %v1099 = vpop.permute.xlu0 %1098
    %v1100 = vsel %vm56, %v1099, 0
    %1102 = vmatprep.subr.mxu0 0.0
    %1103 = vmatpush1.msra.mxu0 0.0
    %1104 = vmatprep.subr.mxu0 0.0
    %1105 = vmatpush1.msra.mxu0 0.0
    %1106 = vmatprep.subr.mxu0 0.0
    %1107 = vmatpush1.msra.mxu0 0.0
    %1108 = vmatprep.subr.mxu0 0.0
    %1109 = vmatpush1.msra.mxu0 0.0
    %1110 = vmatprep.subr.mxu0 0.0
    %1111 = vmatpush1.msra.mxu0 0.0
    %1112 = vmatprep.subr.mxu0 0.0
    %1113 = vmatpush1.msra.mxu0 0.0
    %1114 = vmatprep.subr.mxu0 0.0
    %1115 = vmatpush1.msra.mxu0 0.0
    %1116 = vmatprep.subr.mxu0 0.0
    %1117 = vmatpush1.msra.mxu0 0.0
    %1118 = vmatprep.subr.mxu0 0.0
    %1119 = vmatpush1.msra.mxu0 0.0
    %1120 = vmatprep.subr.mxu0 0.0
    %1121 = vmatpush1.msra.mxu0 0.0
    %1122 = vmatprep.subr.mxu0 0.0
    %1123 = vmatpush1.msra.mxu0 0.0
    %1124 = vmatprep.subr.mxu0 0.0
    %1125 = vmatpush1.msra.mxu0 0.0
    %1126 = vmatprep.subr.mxu0 0.0
    %1127 = vmatpush1.msra.mxu0 %v47
    %1128 = vmatprep.subr.mxu0 0.0
    %1129 = vmatpush1.msra.mxu0 %v46
    %1130 = vmatprep.subr.mxu0 0.0
    %1131 = vmatpush1.msra.mxu0 %v45
    %1132 = vmatprep.subr.mxu0 0.0
    %1133 = vmatpush1.msra.mxu0 %v44
    %1134 = vmatprep.subr.mxu0 0.0
    %1135 = vmatpush2.msra.mxu0 0.0
    %1136 = vmatprep.subr.mxu0 0.0
    %1137 = vmatpush2.msra.mxu0 0.0
    %1138 = vmatprep.subr.mxu0 0.0
    %1139 = vmatpush2.msra.mxu0 0.0
    %1140 = vmatprep.subr.mxu0 0.0
    %1141 = vmatpush2.msra.mxu0 0.0
    %1142 = vmatprep.subr.mxu0 0.0
    %1143 = vmatpush2.msra.mxu0 0.0
    %1144 = vmatprep.subr.mxu0 0.0
    %1145 = vmatpush2.msra.mxu0 0.0
    %1146 = vmatprep.subr.mxu0 0.0
    %1147 = vmatpush2.msra.mxu0 0.0
    %1148 = vmatprep.subr.mxu0 0.0
    %1149 = vmatpush2.msra.mxu0 0.0
    %1150 = vmatprep.subr.mxu0 0.0
    %1151 = vmatpush2.msra.mxu0 0.0
    %1152 = vmatprep.subr.mxu0 0.0
    %1153 = vmatpush2.msra.mxu0 0.0
    %1154 = vmatprep.subr.mxu0 0.0
    %1155 = vmatpush2.msra.mxu0 0.0
    %1156 = vmatprep.subr.mxu0 0.0
    %1157 = vmatpush2.msra.mxu0 0.0
    %1158 = vmatprep.subr.mxu0 0.0
    %1159 = vmatpush2.msra.mxu0 0.0
    %1160 = vmatprep.subr.mxu0 0.0
    %1161 = vmatpush2.msra.mxu0 0.0
    %1162 = vmatprep.subr.mxu0 0.0
    %1163 = vmatpush2.msra.mxu0 0.0
    %1164 = vmatprep.subr.mxu0 0.0
    %1165 = vmatpush2.msra.mxu0 0.0
    %1166 = vmatprep.mubr.f32.mxu0 0.0
    %1167 = vmatmul.mubr.f32.gmra.mxu0 %v1100
    %v1168 = vpop.f32.mrf.mxu0
    %v1169 = vadd.f32 0.0, %v1168
    %v1170 = vpop.f32.mrf.mxu0
    %1171 = vdwg.mxu0
    %1172 = vmatprep.subr.mxu0 0.0
    %1173 = vmatpush1.msra.mxu0 0.0
    %1174 = vmatprep.subr.mxu0 0.0
    %1175 = vmatpush1.msra.mxu0 0.0
    %1176 = vmatprep.subr.mxu0 0.0
    %1177 = vmatpush1.msra.mxu0 0.0
    %1178 = vmatprep.subr.mxu0 0.0
    %1179 = vmatpush1.msra.mxu0 0.0
    %1180 = vmatprep.subr.mxu0 0.0
    %1181 = vmatpush1.msra.mxu0 0.0
    %1182 = vmatprep.subr.mxu0 0.0
    %1183 = vmatpush1.msra.mxu0 0.0
    %1184 = vmatprep.subr.mxu0 0.0
    %1185 = vmatpush1.msra.mxu0 0.0
    %1186 = vmatprep.subr.mxu0 0.0
    %1187 = vmatpush1.msra.mxu0 0.0
    %1188 = vmatprep.subr.mxu0 0.0
    %1189 = vmatpush1.msra.mxu0 0.0
    %1190 = vmatprep.subr.mxu0 0.0
    %1191 = vmatpush1.msra.mxu0 0.0
    %1192 = vmatprep.subr.mxu0 0.0
    %1193 = vmatpush1.msra.mxu0 0.0
    %1194 = vmatprep.subr.mxu0 0.0
    %1195 = vmatpush1.msra.mxu0 0.0
    %1196 = vmatprep.subr.mxu0 0.0
    %1197 = vmatpush1.msra.mxu0 %v43
    %1198 = vmatprep.subr.mxu0 0.0
    %1199 = vmatpush1.msra.mxu0 %v42
    %1200 = vmatprep.subr.mxu0 0.0
    %1201 = vmatpush1.msra.mxu0 %v41
    %1202 = vmatprep.subr.mxu0 0.0
    %1203 = vmatpush1.msra.mxu0 %v40
    %1204 = vmatprep.subr.mxu0 0.0
    %1205 = vmatpush2.msra.mxu0 0.0
    %1206 = vmatprep.subr.mxu0 0.0
    %1207 = vmatpush2.msra.mxu0 0.0
    %1208 = vmatprep.subr.mxu0 0.0
    %1209 = vmatpush2.msra.mxu0 0.0
    %1210 = vmatprep.subr.mxu0 0.0
    %1211 = vmatpush2.msra.mxu0 0.0
    %1212 = vmatprep.subr.mxu0 0.0
    %1213 = vmatpush2.msra.mxu0 0.0
    %1214 = vmatprep.subr.mxu0 0.0
    %1215 = vmatpush2.msra.mxu0 0.0
    %1216 = vmatprep.subr.mxu0 0.0
    %1217 = vmatpush2.msra.mxu0 0.0
    %1218 = vmatprep.subr.mxu0 0.0
    %1219 = vmatpush2.msra.mxu0 0.0
    %1220 = vmatprep.subr.mxu0 0.0
    %1221 = vmatpush2.msra.mxu0 0.0
    %1222 = vmatprep.subr.mxu0 0.0
    %1223 = vmatpush2.msra.mxu0 0.0
    %1224 = vmatprep.subr.mxu0 0.0
    %1225 = vmatpush2.msra.mxu0 0.0
    %1226 = vmatprep.subr.mxu0 0.0
    %1227 = vmatpush2.msra.mxu0 0.0
    %1228 = vmatprep.subr.mxu0 0.0
    %1229 = vmatpush2.msra.mxu0 0.0
    %1230 = vmatprep.subr.mxu0 0.0
    %1231 = vmatpush2.msra.mxu0 0.0
    %1232 = vmatprep.subr.mxu0 0.0
    %1233 = vmatpush2.msra.mxu0 0.0
    %1234 = vmatprep.subr.mxu0 0.0
    %1235 = vmatpush2.msra.mxu0 0.0
    %1236 = vmatprep.mubr.f32.mxu0 0.0
    %1237 = vmatmul.mubr.f32.gmra.mxu0 %v264
    %v1238 = vpop.f32.mrf.mxu0
    %v1239 = vadd.f32 %v1169, %v1238
    %v1240 = vpop.f32.mrf.mxu0
    %1241 = vdwg.mxu0
    %v1242 = vadd.f32 %v1239, %v723
    %v1243 = vsel %vm726, %v1242, -inf
    %1244 = vmax.xlane.f32.xlu0 %v1243
    %v1245 = vpop.xlane.xlu0 %1244
    %v1246 = vsub.f32 %v1242, %v1245
    %v1247 = vmul.f32 %v1246, 1.442695
    %v1248 = vpow.pop %v1247
    %v1249 = vsel %vm726, %v1248, 0.0
    %1250 = vadd.xlane.f32.xlu0 %v1249
    %v1251 = vpop.xlane.xlu0 %1250
    %v1252 = vlog2.pop %v1251
    %v1253 = vmul.f32 %v1252, 0.6931472
    %v1254 = vsub.f32 %v1246, %v1253
    %s1255 = scalar_lea.vmem [#allocation2], 2
    %1256 = vst [vmem:[%s1255] sm:$0x3] %v1254
    %v1257 = vld [vmem:[%s1] sm:$0x3]
    %1258 = vmatprep.subr.mxu0 0.0
    %1259 = vmatpush1.msra.mxu0 0.0
    %1260 = vmatprep.subr.mxu0 0.0
    %1261 = vmatpush1.msra.mxu0 0.0
    %1262 = vmatprep.subr.mxu0 0.0
    %1263 = vmatpush1.msra.mxu0 0.0
    %1264 = vmatprep.subr.mxu0 0.0
    %1265 = vmatpush1.msra.mxu0 0.0
    %1266 = vmatprep.subr.mxu0 0.0
    %1267 = vmatpush1.msra.mxu0 0.0
    %1268 = vmatprep.subr.mxu0 0.0
    %1269 = vmatpush1.msra.mxu0 0.0
    %1270 = vmatprep.subr.mxu0 0.0
    %1271 = vmatpush1.msra.mxu0 0.0
    %1272 = vmatprep.subr.mxu0 0.0
    %1273 = vmatpush1.msra.mxu0 0.0
    %1274 = vmatprep.subr.mxu0 0.0
    %1275 = vmatpush1.msra.mxu0 0.0
    %1276 = vmatprep.subr.mxu0 0.0
    %1277 = vmatpush1.msra.mxu0 0.0
    %1278 = vmatprep.subr.mxu0 0.0
    %1279 = vmatpush1.msra.mxu0 0.0
    %1280 = vmatprep.subr.mxu0 0.0
    %1281 = vmatpush1.msra.mxu0 0.0
    %1282 = vmatprep.subr.mxu0 0.0
    %1283 = vmatpush1.msra.mxu0 %v38
    %1284 = vmatprep.subr.mxu0 0.0
    %1285 = vmatpush1.msra.mxu0 %v37
    %1286 = vmatprep.subr.mxu0 0.0
    %1287 = vmatpush1.msra.mxu0 %v36
    %1288 = vmatprep.subr.mxu0 0.0
    %1289 = vmatpush1.msra.mxu0 %v35
    %1290 = vmatprep.subr.mxu0 0.0
    %1291 = vmatpush2.msra.mxu0 0.0
    %1292 = vmatprep.subr.mxu0 0.0
    %1293 = vmatpush2.msra.mxu0 0.0
    %1294 = vmatprep.subr.mxu0 0.0
    %1295 = vmatpush2.msra.mxu0 0.0
    %1296 = vmatprep.subr.mxu0 0.0
    %1297 = vmatpush2.msra.mxu0 0.0
    %1298 = vmatprep.subr.mxu0 0.0
    %1299 = vmatpush2.msra.mxu0 0.0
    %1300 = vmatprep.subr.mxu0 0.0
    %1301 = vmatpush2.msra.mxu0 0.0
    %1302 = vmatprep.subr.mxu0 0.0
    %1303 = vmatpush2.msra.mxu0 0.0
    %1304 = vmatprep.subr.mxu0 0.0
    %1305 = vmatpush2.msra.mxu0 0.0
    %1306 = vmatprep.subr.mxu0 0.0
    %1307 = vmatpush2.msra.mxu0 0.0
    %1308 = vmatprep.subr.mxu0 0.0
    %1309 = vmatpush2.msra.mxu0 0.0
    %1310 = vmatprep.subr.mxu0 0.0
    %1311 = vmatpush2.msra.mxu0 0.0
    %1312 = vmatprep.subr.mxu0 0.0
    %1313 = vmatpush2.msra.mxu0 0.0
    %1314 = vmatprep.subr.mxu0 0.0
    %1315 = vmatpush2.msra.mxu0 0.0
    %1316 = vmatprep.subr.mxu0 0.0
    %1317 = vmatpush2.msra.mxu0 0.0
    %1318 = vmatprep.subr.mxu0 0.0
    %1319 = vmatpush2.msra.mxu0 0.0
    %1320 = vmatprep.subr.mxu0 0.0
    %1321 = vmatpush2.msra.mxu0 0.0
    %1322 = vmatprep.mubr.f32.mxu0 0.0
    %1323 = vmatmul.mubr.f32.gmra.mxu0 %v1100
    %v1324 = vpop.f32.mrf.mxu0
    %v1325 = vadd.f32 %v471, %v1324
    %v1326 = vpop.f32.mrf.mxu0
    %1327 = vdwg.mxu0
    %v1328 = vadd.f32 %v1257, %v1325
    %v1329 = vxor.u32 %v1328, 2147483648
    %v1330 = vmul.f32 %v1329, 1.442695
    %v1331 = vpow.pop %v1330
    %v1332 = vadd.f32 %v1331, 1.0
    %v1333 = vrcp.pop %v1332
    %v1334 = vmul.f32 1.0, %v1333
    %1336 = vrot.lane.b32.xlu0 %v1325, 64
    %v1337 = vpop.permute.xlu0 %1336
    %v1339 = vmul.f32 %v1334, %v1337
    %1341 = vrot.lane.b32.xlu0 %v1339, 64
    %v1342 = vpop.permute.xlu0 %1341
    %v1344 = vadd.f32 %v1257, %v1342
    %v1345 = vtanh.pop %v1344
    %v1346 = vsub.f32 1.0, %v1334
    %1348 = vrot.lane.b32.xlu0 %v1345, 96
    %v1349 = vpop.permute.xlu0 %1348
    %v1351 = vmul.f32 %v1346, %v1349
    %v1352 = vmul.f32 %v1334, %v1096
    %v1353 = vadd.f32 %v1351, %v1352
    %1355 = vrot.lane.b32.xlu0 %v1353, 96
    %v1356 = vpop.permute.xlu0 %1355
    %v1357 = vsel %vm56, %v1356, 0
    %1359 = vmatprep.subr.mxu0 0.0
    %1360 = vmatpush1.msra.mxu0 0.0
    %1361 = vmatprep.subr.mxu0 0.0
    %1362 = vmatpush1.msra.mxu0 0.0
    %1363 = vmatprep.subr.mxu0 0.0
    %1364 = vmatpush1.msra.mxu0 0.0
    %1365 = vmatprep.subr.mxu0 0.0
    %1366 = vmatpush1.msra.mxu0 0.0
    %1367 = vmatprep.subr.mxu0 0.0
    %1368 = vmatpush1.msra.mxu0 0.0
    %1369 = vmatprep.subr.mxu0 0.0
    %1370 = vmatpush1.msra.mxu0 0.0
    %1371 = vmatprep.subr.mxu0 0.0
    %1372 = vmatpush1.msra.mxu0 0.0
    %1373 = vmatprep.subr.mxu0 0.0
    %1374 = vmatpush1.msra.mxu0 0.0
    %1375 = vmatprep.subr.mxu0 0.0
    %1376 = vmatpush1.msra.mxu0 0.0
    %1377 = vmatprep.subr.mxu0 0.0
    %1378 = vmatpush1.msra.mxu0 0.0
    %1379 = vmatprep.subr.mxu0 0.0
    %1380 = vmatpush1.msra.mxu0 0.0
    %1381 = vmatprep.subr.mxu0 0.0
    %1382 = vmatpush1.msra.mxu0 0.0
    %1383 = vmatprep.subr.mxu0 0.0
    %1384 = vmatpush1.msra.mxu0 %v47
    %1385 = vmatprep.subr.mxu0 0.0
    %1386 = vmatpush1.msra.mxu0 %v46
    %1387 = vmatprep.subr.mxu0 0.0
    %1388 = vmatpush1.msra.mxu0 %v45
    %1389 = vmatprep.subr.mxu0 0.0
    %1390 = vmatpush1.msra.mxu0 %v44
    %1391 = vmatprep.subr.mxu0 0.0
    %1392 = vmatpush2.msra.mxu0 0.0
    %1393 = vmatprep.subr.mxu0 0.0
    %1394 = vmatpush2.msra.mxu0 0.0
    %1395 = vmatprep.subr.mxu0 0.0
    %1396 = vmatpush2.msra.mxu0 0.0
    %1397 = vmatprep.subr.mxu0 0.0
    %1398 = vmatpush2.msra.mxu0 0.0
    %1399 = vmatprep.subr.mxu0 0.0
    %1400 = vmatpush2.msra.mxu0 0.0
    %1401 = vmatprep.subr.mxu0 0.0
    %1402 = vmatpush2.msra.mxu0 0.0
    %1403 = vmatprep.subr.mxu0 0.0
    %1404 = vmatpush2.msra.mxu0 0.0
    %1405 = vmatprep.subr.mxu0 0.0
    %1406 = vmatpush2.msra.mxu0 0.0
    %1407 = vmatprep.subr.mxu0 0.0
    %1408 = vmatpush2.msra.mxu0 0.0
    %1409 = vmatprep.subr.mxu0 0.0
    %1410 = vmatpush2.msra.mxu0 0.0
    %1411 = vmatprep.subr.mxu0 0.0
    %1412 = vmatpush2.msra.mxu0 0.0
    %1413 = vmatprep.subr.mxu0 0.0
    %1414 = vmatpush2.msra.mxu0 0.0
    %1415 = vmatprep.subr.mxu0 0.0
    %1416 = vmatpush2.msra.mxu0 0.0
    %1417 = vmatprep.subr.mxu0 0.0
    %1418 = vmatpush2.msra.mxu0 0.0
    %1419 = vmatprep.subr.mxu0 0.0
    %1420 = vmatpush2.msra.mxu0 0.0
    %1421 = vmatprep.subr.mxu0 0.0
    %1422 = vmatpush2.msra.mxu0 0.0
    %1423 = vmatprep.mubr.f32.mxu0 0.0
    %1424 = vmatmul.mubr.f32.gmra.mxu0 %v1357
    %v1425 = vpop.f32.mrf.mxu0
    %v1426 = vadd.f32 0.0, %v1425
    %v1427 = vpop.f32.mrf.mxu0
    %1428 = vdwg.mxu0
    %1429 = vmatprep.subr.mxu0 0.0
    %1430 = vmatpush1.msra.mxu0 0.0
    %1431 = vmatprep.subr.mxu0 0.0
    %1432 = vmatpush1.msra.mxu0 0.0
    %1433 = vmatprep.subr.mxu0 0.0
    %1434 = vmatpush1.msra.mxu0 0.0
    %1435 = vmatprep.subr.mxu0 0.0
    %1436 = vmatpush1.msra.mxu0 0.0
    %1437 = vmatprep.subr.mxu0 0.0
    %1438 = vmatpush1.msra.mxu0 0.0
    %1439 = vmatprep.subr.mxu0 0.0
    %1440 = vmatpush1.msra.mxu0 0.0
    %1441 = vmatprep.subr.mxu0 0.0
    %1442 = vmatpush1.msra.mxu0 0.0
    %1443 = vmatprep.subr.mxu0 0.0
    %1444 = vmatpush1.msra.mxu0 0.0
    %1445 = vmatprep.subr.mxu0 0.0
    %1446 = vmatpush1.msra.mxu0 0.0
    %1447 = vmatprep.subr.mxu0 0.0
    %1448 = vmatpush1.msra.mxu0 0.0
    %1449 = vmatprep.subr.mxu0 0.0
    %1450 = vmatpush1.msra.mxu0 0.0
    %1451 = vmatprep.subr.mxu0 0.0
    %1452 = vmatpush1.msra.mxu0 0.0
    %1453 = vmatprep.subr.mxu0 0.0
    %1454 = vmatpush1.msra.mxu0 %v43
    %1455 = vmatprep.subr.mxu0 0.0
    %1456 = vmatpush1.msra.mxu0 %v42
    %1457 = vmatprep.subr.mxu0 0.0
    %1458 = vmatpush1.msra.mxu0 %v41
    %1459 = vmatprep.subr.mxu0 0.0
    %1460 = vmatpush1.msra.mxu0 %v40
    %1461 = vmatprep.subr.mxu0 0.0
    %1462 = vmatpush2.msra.mxu0 0.0
    %1463 = vmatprep.subr.mxu0 0.0
    %1464 = vmatpush2.msra.mxu0 0.0
    %1465 = vmatprep.subr.mxu0 0.0
    %1466 = vmatpush2.msra.mxu0 0.0
    %1467 = vmatprep.subr.mxu0 0.0
    %1468 = vmatpush2.msra.mxu0 0.0
    %1469 = vmatprep.subr.mxu0 0.0
    %1470 = vmatpush2.msra.mxu0 0.0
    %1471 = vmatprep.subr.mxu0 0.0
    %1472 = vmatpush2.msra.mxu0 0.0
    %1473 = vmatprep.subr.mxu0 0.0
    %1474 = vmatpush2.msra.mxu0 0.0
    %1475 = vmatprep.subr.mxu0 0.0
    %1476 = vmatpush2.msra.mxu0 0.0
    %1477 = vmatprep.subr.mxu0 0.0
    %1478 = vmatpush2.msra.mxu0 0.0
    %1479 = vmatprep.subr.mxu0 0.0
    %1480 = vmatpush2.msra.mxu0 0.0
    %1481 = vmatprep.subr.mxu0 0.0
    %1482 = vmatpush2.msra.mxu0 0.0
    %1483 = vmatprep.subr.mxu0 0.0
    %1484 = vmatpush2.msra.mxu0 0.0
    %1485 = vmatprep.subr.mxu0 0.0
    %1486 = vmatpush2.msra.mxu0 0.0
    %1487 = vmatprep.subr.mxu0 0.0
    %1488 = vmatpush2.msra.mxu0 0.0
    %1489 = vmatprep.subr.mxu0 0.0
    %1490 = vmatpush2.msra.mxu0 0.0
    %1491 = vmatprep.subr.mxu0 0.0
    %1492 = vmatpush2.msra.mxu0 0.0
    %1493 = vmatprep.mubr.f32.mxu0 0.0
    %1494 = vmatmul.mubr.f32.gmra.mxu0 %v161
    %v1495 = vpop.f32.mrf.mxu0
    %v1496 = vadd.f32 %v1426, %v1495
    %v1497 = vpop.f32.mrf.mxu0
    %1498 = vdwg.mxu0
    %v1499 = vadd.f32 %v1496, %v723
    %v1500 = vsel %vm726, %v1499, -inf
    %1501 = vmax.xlane.f32.xlu0 %v1500
    %v1502 = vpop.xlane.xlu0 %1501
    %v1503 = vsub.f32 %v1499, %v1502
    %v1504 = vmul.f32 %v1503, 1.442695
    %v1505 = vpow.pop %v1504
    %v1506 = vsel %vm726, %v1505, 0.0
    %1507 = vadd.xlane.f32.xlu0 %v1506
    %v1508 = vpop.xlane.xlu0 %1507
    %v1509 = vlog2.pop %v1508
    %v1510 = vmul.f32 %v1509, 0.6931472
    %v1511 = vsub.f32 %v1503, %v1510
    %1512 = vst [vmem:[#allocation2] sm:$0x3] %v1511
    // Predicated region
    $region34: #{fine_grained_cnn_rnn_forward.3} parent=1 // pred_check
      _
    $region35: #{fine_grained_cnn_rnn_forward.3} parent=1 // pred_check_branch
      %1514 = sbr.rel (0) target = $region37
    $region36: #{fine_grained_cnn_rnn_forward.3} parent=1 // pred_region
      %s1516 = ssub.s32 128, 128
      %1517 = vsyncadd [#allocation3], %s1516
      %s1518 = sshll.u32 [#allocation2], 4
      %s1519 = int_to_ptr.vmem [resolvable:$true] %s1518
      %1524 = dma.vmem_to_hbm [thread:$0]  %s1519, 128, %s8, [#allocation3], 32, 32, 2
    $region37: #{fine_grained_cnn_rnn_forward.3} parent=1 // pred_fallthru
      _
    // Predicated region
    $region38: #{fine_grained_cnn_rnn_forward.3} parent=1 // pred_check
      _
    $region39: #{fine_grained_cnn_rnn_forward.3} parent=1 // pred_check_branch
      %1526 = sbr.rel (0) target = $region41
    $region40: #{fine_grained_cnn_rnn_forward.3} parent=1 // pred_region
      %1527 = dma.done [#allocation3], 128
    $region41: #{fine_grained_cnn_rnn_forward.3} parent=1 // pred_fallthru
      _
    %1528 = vsyncpa [#allocation3], 1

// kernel: fine_grained_cnn_rnn_forward.2
$region0: #{fine_grained_cnn_rnn_forward.2}
  #allocation0 [shape = 'u32[]', space=smem, size = 0x4, offset = 0x4, fixed_abs, tag = 'smem constant byte address 0x4 - core index']
  #allocation1 [shape = 'u32[144,128]{1,0:T(1,128)}', space=vmem, size = 0x12000, scoped, tag = 'internal scratch']
  %s0 = inlined_call_operand.vmem [shape: f32[2048,32], index: 0, kind: input, shape index: {}]
  %s1 = inlined_call_operand.vmem [shape: f32[56,2048], index: 1, kind: input, shape index: {}]
  %s2 = inlined_call_operand.vmem [shape: f32[32,32], index: 2, kind: input, shape index: {}]
  %s3 = inlined_call_operand.vmem [shape: f32[1,32], index: 3, kind: input, shape index: {}]
  %s4 = inlined_call_operand.vmem [shape: f32[224,512], index: 4, kind: input, shape index: {}]
  %s5 = inlined_call_operand.vmem [shape: f32[1,512], index: 5, kind: input, shape index: {}]
  %s6 = inlined_call_operand.vmem [shape: f32[32,128], index: 6, kind: input, shape index: {}]
  %s7 = inlined_call_operand.vmem [shape: f32[1,128], index: 7, kind: input, shape index: {}]
  %s8 = inlined_call_operand.vmem [shape: f32[8,512], index: 8, kind: output, shape index: {0}]
  %s9 = inlined_call_operand.vmem [shape: f32[48,128], index: 9, kind: output, shape index: {1}]
  %10 = xla_tuple %s8, %s9
  %s11 = sld [smem:[#allocation0]]
  $region50: #{fine_grained_cnn_rnn_forward.2} parent=0
    _
  %s13 = ssub.s32 1, %s11
  %s14 = scalar_select 0, %s13, %s11
  // Predicated region
  $region2: #{fine_grained_cnn_rnn_forward.2} parent=0 // pred_check
    _
  $region3: #{fine_grained_cnn_rnn_forward.2} parent=0 // pred_check_branch
    %16 = sbr.rel (0) target = $region5
  $region4: #{fine_grained_cnn_rnn_forward.2} parent=0 // pred_region
    _
  $region5: #{fine_grained_cnn_rnn_forward.2} parent=0 // pred_fallthru
    _
  // Predicated region
  $region6: #{fine_grained_cnn_rnn_forward.2} parent=0 // pred_check
    _
  $region7: #{fine_grained_cnn_rnn_forward.2} parent=0 // pred_check_branch
    %18 = sbr.rel (0) target = $region9
  $region8: #{fine_grained_cnn_rnn_forward.2} parent=0 // pred_region
    _
  $region9: #{fine_grained_cnn_rnn_forward.2} parent=0 // pred_fallthru
    _
  // Predicated region
  $region10: #{fine_grained_cnn_rnn_forward.2} parent=0 // pred_check
    _
  $region11: #{fine_grained_cnn_rnn_forward.2} parent=0 // pred_check_branch
    %20 = sbr.rel (0) target = $region13
  $region12: #{fine_grained_cnn_rnn_forward.2} parent=0 // pred_region
    _
  $region13: #{fine_grained_cnn_rnn_forward.2} parent=0 // pred_fallthru
    _
  // Predicated region
  $region14: #{fine_grained_cnn_rnn_forward.2} parent=0 // pred_check
    _
  $region15: #{fine_grained_cnn_rnn_forward.2} parent=0 // pred_check_branch
    %22 = sbr.rel (0) target = $region17
  $region16: #{fine_grained_cnn_rnn_forward.2} parent=0 // pred_region
    _
  $region17: #{fine_grained_cnn_rnn_forward.2} parent=0 // pred_fallthru
    _
  // Predicated region
  $region18: #{fine_grained_cnn_rnn_forward.2} parent=0 // pred_check
    _
  $region19: #{fine_grained_cnn_rnn_forward.2} parent=0 // pred_check_branch
    %24 = sbr.rel (0) target = $region21
  $region20: #{fine_grained_cnn_rnn_forward.2} parent=0 // pred_region
    _
  $region21: #{fine_grained_cnn_rnn_forward.2} parent=0 // pred_fallthru
    _
  // Predicated region
  $region22: #{fine_grained_cnn_rnn_forward.2} parent=0 // pred_check
    _
  $region23: #{fine_grained_cnn_rnn_forward.2} parent=0 // pred_check_branch
    %26 = sbr.rel (0) target = $region25
  $region24: #{fine_grained_cnn_rnn_forward.2} parent=0 // pred_region
    _
  $region25: #{fine_grained_cnn_rnn_forward.2} parent=0 // pred_fallthru
    _
  // Predicated region
  $region26: #{fine_grained_cnn_rnn_forward.2} parent=0 // pred_check
    _
  $region27: #{fine_grained_cnn_rnn_forward.2} parent=0 // pred_check_branch
    %28 = sbr.rel (0) target = $region29
  $region28: #{fine_grained_cnn_rnn_forward.2} parent=0 // pred_region
    _
  $region29: #{fine_grained_cnn_rnn_forward.2} parent=0 // pred_fallthru
    _
  // Predicated region
  $region30: #{fine_grained_cnn_rnn_forward.2} parent=0 // pred_check
    _
  $region31: #{fine_grained_cnn_rnn_forward.2} parent=0 // pred_check_branch
    %30 = sbr.rel (0) target = $region33
  $region32: #{fine_grained_cnn_rnn_forward.2} parent=0 // pred_region
    _
  $region33: #{fine_grained_cnn_rnn_forward.2} parent=0 // pred_fallthru
    _
  %v31 = vld [vmem:[%s0] sm:$0xff]
  %v32 = vld [vmem:[%s0 + $0x8] sm:$0xff]
  %v33 = vld [vmem:[%s0 + $0x10] sm:$0xff]
  %v34 = vld [vmem:[%s0 + $0x18] sm:$0xff]
  %v35 = vld [vmem:[%s0 + $0x20] sm:$0xff]
  %v36 = vld [vmem:[%s0 + $0x28] sm:$0xff]
  %v37 = vld [vmem:[%s0 + $0x30] sm:$0xff]
  %v38 = vld [vmem:[%s0 + $0x38] sm:$0xff]
  %v39 = vld [vmem:[%s0 + $0x40] sm:$0xff]
  %v40 = vld [vmem:[%s0 + $0x48] sm:$0xff]
  %v41 = vld [vmem:[%s0 + $0x50] sm:$0xff]
  %v42 = vld [vmem:[%s0 + $0x58] sm:$0xff]
  %v43 = vld [vmem:[%s0 + $0x60] sm:$0xff]
  %v44 = vld [vmem:[%s0 + $0x68] sm:$0xff]
  %v45 = vld [vmem:[%s0 + $0x70] sm:$0xff]
  %v46 = vld [vmem:[%s0 + $0x78] sm:$0xff]
  %v47 = vld [vmem:[%s0 + $0x80] sm:$0xff]
  %v48 = vld [vmem:[%s0 + $0x88] sm:$0xff]
  %v49 = vld [vmem:[%s0 + $0x90] sm:$0xff]
  %v50 = vld [vmem:[%s0 + $0x98] sm:$0xff]
  %v51 = vld [vmem:[%s0 + $0xa0] sm:$0xff]
  %v52 = vld [vmem:[%s0 + $0xa8] sm:$0xff]
  %v53 = vld [vmem:[%s0 + $0xb0] sm:$0xff]
  %v54 = vld [vmem:[%s0 + $0xb8] sm:$0xff]
  %v55 = vld [vmem:[%s0 + $0xc0] sm:$0xff]
  %v56 = vld [vmem:[%s0 + $0xc8] sm:$0xff]
  %v57 = vld [vmem:[%s0 + $0xd0] sm:$0xff]
  %v58 = vld [vmem:[%s0 + $0xd8] sm:$0xff]
  %v59 = vld [vmem:[%s0 + $0xe0] sm:$0xff]
  %v60 = vld [vmem:[%s0 + $0xe8] sm:$0xff]
  %v61 = vld [vmem:[%s0 + $0xf0] sm:$0xff]
  %v62 = vld [vmem:[%s0 + $0xf8] sm:$0xff]
  %v63 = vld [vmem:[%s0 + $0x100] sm:$0xff]
  %v64 = vld [vmem:[%s0 + $0x108] sm:$0xff]
  %v65 = vld [vmem:[%s0 + $0x110] sm:$0xff]
  %v66 = vld [vmem:[%s0 + $0x118] sm:$0xff]
  %v67 = vld [vmem:[%s0 + $0x120] sm:$0xff]
  %v68 = vld [vmem:[%s0 + $0x128] sm:$0xff]
  %v69 = vld [vmem:[%s0 + $0x130] sm:$0xff]
  %v70 = vld [vmem:[%s0 + $0x138] sm:$0xff]
  %v71 = vld [vmem:[%s0 + $0x140] sm:$0xff]
  %v72 = vld [vmem:[%s0 + $0x148] sm:$0xff]
  %v73 = vld [vmem:[%s0 + $0x150] sm:$0xff]
  %v74 = vld [vmem:[%s0 + $0x158] sm:$0xff]
  %v75 = vld [vmem:[%s0 + $0x160] sm:$0xff]
  %v76 = vld [vmem:[%s0 + $0x168] sm:$0xff]
  %v77 = vld [vmem:[%s0 + $0x170] sm:$0xff]
  %v78 = vld [vmem:[%s0 + $0x178] sm:$0xff]
  %v79 = vld [vmem:[%s0 + $0x180] sm:$0xff]
  %v80 = vld [vmem:[%s0 + $0x188] sm:$0xff]
  %v81 = vld [vmem:[%s0 + $0x190] sm:$0xff]
  %v82 = vld [vmem:[%s0 + $0x198] sm:$0xff]
  %v83 = vld [vmem:[%s0 + $0x1a0] sm:$0xff]
  %v84 = vld [vmem:[%s0 + $0x1a8] sm:$0xff]
  %v85 = vld [vmem:[%s0 + $0x1b0] sm:$0xff]
  %v86 = vld [vmem:[%s0 + $0x1b8] sm:$0xff]
  %v87 = vld [vmem:[%s0 + $0x1c0] sm:$0xff]
  %v88 = vld [vmem:[%s0 + $0x1c8] sm:$0xff]
  %v89 = vld [vmem:[%s0 + $0x1d0] sm:$0xff]
  %v90 = vld [vmem:[%s0 + $0x1d8] sm:$0xff]
  %v91 = vld [vmem:[%s0 + $0x1e0] sm:$0xff]
  %v92 = vld [vmem:[%s0 + $0x1e8] sm:$0xff]
  %v93 = vld [vmem:[%s0 + $0x1f0] sm:$0xff]
  %v94 = vld [vmem:[%s0 + $0x1f8] sm:$0xff]
  %v95 = vld [vmem:[%s0 + $0x200] sm:$0xff]
  %v96 = vld [vmem:[%s0 + $0x208] sm:$0xff]
  %v97 = vld [vmem:[%s0 + $0x210] sm:$0xff]
  %v98 = vld [vmem:[%s0 + $0x218] sm:$0xff]
  %v99 = vld [vmem:[%s0 + $0x220] sm:$0xff]
  %v100 = vld [vmem:[%s0 + $0x228] sm:$0xff]
  %v101 = vld [vmem:[%s0 + $0x230] sm:$0xff]
  %v102 = vld [vmem:[%s0 + $0x238] sm:$0xff]
  %v103 = vld [vmem:[%s0 + $0x240] sm:$0xff]
  %v104 = vld [vmem:[%s0 + $0x248] sm:$0xff]
  %v105 = vld [vmem:[%s0 + $0x250] sm:$0xff]
  %v106 = vld [vmem:[%s0 + $0x258] sm:$0xff]
  %v107 = vld [vmem:[%s0 + $0x260] sm:$0xff]
  %v108 = vld [vmem:[%s0 + $0x268] sm:$0xff]
  %v109 = vld [vmem:[%s0 + $0x270] sm:$0xff]
  %v110 = vld [vmem:[%s0 + $0x278] sm:$0xff]
  %v111 = vld [vmem:[%s0 + $0x280] sm:$0xff]
  %v112 = vld [vmem:[%s0 + $0x288] sm:$0xff]
  %v113 = vld [vmem:[%s0 + $0x290] sm:$0xff]
  %v114 = vld [vmem:[%s0 + $0x298] sm:$0xff]
  %v115 = vld [vmem:[%s0 + $0x2a0] sm:$0xff]
  %v116 = vld [vmem:[%s0 + $0x2a8] sm:$0xff]
  %v117 = vld [vmem:[%s0 + $0x2b0] sm:$0xff]
  %v118 = vld [vmem:[%s0 + $0x2b8] sm:$0xff]
  %v119 = vld [vmem:[%s0 + $0x2c0] sm:$0xff]
  %v120 = vld [vmem:[%s0 + $0x2c8] sm:$0xff]
  %v121 = vld [vmem:[%s0 + $0x2d0] sm:$0xff]
  %v122 = vld [vmem:[%s0 + $0x2d8] sm:$0xff]
  %v123 = vld [vmem:[%s0 + $0x2e0] sm:$0xff]
  %v124 = vld [vmem:[%s0 + $0x2e8] sm:$0xff]
  %v125 = vld [vmem:[%s0 + $0x2f0] sm:$0xff]
  %v126 = vld [vmem:[%s0 + $0x2f8] sm:$0xff]
  %v127 = vld [vmem:[%s0 + $0x300] sm:$0xff]
  %v128 = vld [vmem:[%s0 + $0x308] sm:$0xff]
  %v129 = vld [vmem:[%s0 + $0x310] sm:$0xff]
  %v130 = vld [vmem:[%s0 + $0x318] sm:$0xff]
  %v131 = vld [vmem:[%s0 + $0x320] sm:$0xff]
  %v132 = vld [vmem:[%s0 + $0x328] sm:$0xff]
  %v133 = vld [vmem:[%s0 + $0x330] sm:$0xff]
  %v134 = vld [vmem:[%s0 + $0x338] sm:$0xff]
  %v135 = vld [vmem:[%s0 + $0x340] sm:$0xff]
  %v136 = vld [vmem:[%s0 + $0x348] sm:$0xff]
  %v137 = vld [vmem:[%s0 + $0x350] sm:$0xff]
  %v138 = vld [vmem:[%s0 + $0x358] sm:$0xff]
  %v139 = vld [vmem:[%s0 + $0x360] sm:$0xff]
  %v140 = vld [vmem:[%s0 + $0x368] sm:$0xff]
  %v141 = vld [vmem:[%s0 + $0x370] sm:$0xff]
  %v142 = vld [vmem:[%s0 + $0x378] sm:$0xff]
  %v143 = vld [vmem:[%s0 + $0x380] sm:$0xff]
  %v144 = vld [vmem:[%s0 + $0x388] sm:$0xff]
  %v145 = vld [vmem:[%s0 + $0x390] sm:$0xff]
  %v146 = vld [vmem:[%s0 + $0x398] sm:$0xff]
  %v147 = vld [vmem:[%s0 + $0x3a0] sm:$0xff]
  %v148 = vld [vmem:[%s0 + $0x3a8] sm:$0xff]
  %v149 = vld [vmem:[%s0 + $0x3b0] sm:$0xff]
  %v150 = vld [vmem:[%s0 + $0x3b8] sm:$0xff]
  %v151 = vld [vmem:[%s0 + $0x3c0] sm:$0xff]
  %v152 = vld [vmem:[%s0 + $0x3c8] sm:$0xff]
  %v153 = vld [vmem:[%s0 + $0x3d0] sm:$0xff]
  %v154 = vld [vmem:[%s0 + $0x3d8] sm:$0xff]
  %v155 = vld [vmem:[%s0 + $0x3e0] sm:$0xff]
  %v156 = vld [vmem:[%s0 + $0x3e8] sm:$0xff]
  %v157 = vld [vmem:[%s0 + $0x3f0] sm:$0xff]
  %v158 = vld [vmem:[%s0 + $0x3f8] sm:$0xff]
  %v159 = vld [vmem:[%s0 + $0x400] sm:$0xff]
  %v160 = vld [vmem:[%s0 + $0x408] sm:$0xff]
  %v161 = vld [vmem:[%s0 + $0x410] sm:$0xff]
  %v162 = vld [vmem:[%s0 + $0x418] sm:$0xff]
  %v163 = vld [vmem:[%s0 + $0x420] sm:$0xff]
  %v164 = vld [vmem:[%s0 + $0x428] sm:$0xff]
  %v165 = vld [vmem:[%s0 + $0x430] sm:$0xff]
  %v166 = vld [vmem:[%s0 + $0x438] sm:$0xff]
  %v167 = vld [vmem:[%s0 + $0x440] sm:$0xff]
  %v168 = vld [vmem:[%s0 + $0x448] sm:$0xff]
  %v169 = vld [vmem:[%s0 + $0x450] sm:$0xff]
  %v170 = vld [vmem:[%s0 + $0x458] sm:$0xff]
  %v171 = vld [vmem:[%s0 + $0x460] sm:$0xff]
  %v172 = vld [vmem:[%s0 + $0x468] sm:$0xff]
  %v173 = vld [vmem:[%s0 + $0x470] sm:$0xff]
  %v174 = vld [vmem:[%s0 + $0x478] sm:$0xff]
  %v175 = vld [vmem:[%s0 + $0x480] sm:$0xff]
  %v176 = vld [vmem:[%s0 + $0x488] sm:$0xff]
  %v177 = vld [vmem:[%s0 + $0x490] sm:$0xff]
  %v178 = vld [vmem:[%s0 + $0x498] sm:$0xff]
  %v179 = vld [vmem:[%s0 + $0x4a0] sm:$0xff]
  %v180 = vld [vmem:[%s0 + $0x4a8] sm:$0xff]
  %v181 = vld [vmem:[%s0 + $0x4b0] sm:$0xff]
  %v182 = vld [vmem:[%s0 + $0x4b8] sm:$0xff]
  %v183 = vld [vmem:[%s0 + $0x4c0] sm:$0xff]
  %v184 = vld [vmem:[%s0 + $0x4c8] sm:$0xff]
  %v185 = vld [vmem:[%s0 + $0x4d0] sm:$0xff]
  %v186 = vld [vmem:[%s0 + $0x4d8] sm:$0xff]
  %v187 = vld [vmem:[%s0 + $0x4e0] sm:$0xff]
  %v188 = vld [vmem:[%s0 + $0x4e8] sm:$0xff]
  %v189 = vld [vmem:[%s0 + $0x4f0] sm:$0xff]
  %v190 = vld [vmem:[%s0 + $0x4f8] sm:$0xff]
  %v191 = vld [vmem:[%s0 + $0x500] sm:$0xff]
  %v192 = vld [vmem:[%s0 + $0x508] sm:$0xff]
  %v193 = vld [vmem:[%s0 + $0x510] sm:$0xff]
  %v194 = vld [vmem:[%s0 + $0x518] sm:$0xff]
  %v195 = vld [vmem:[%s0 + $0x520] sm:$0xff]
  %v196 = vld [vmem:[%s0 + $0x528] sm:$0xff]
  %v197 = vld [vmem:[%s0 + $0x530] sm:$0xff]
  %v198 = vld [vmem:[%s0 + $0x538] sm:$0xff]
  %v199 = vld [vmem:[%s0 + $0x540] sm:$0xff]
  %v200 = vld [vmem:[%s0 + $0x548] sm:$0xff]
  %v201 = vld [vmem:[%s0 + $0x550] sm:$0xff]
  %v202 = vld [vmem:[%s0 + $0x558] sm:$0xff]
  %v203 = vld [vmem:[%s0 + $0x560] sm:$0xff]
  %v204 = vld [vmem:[%s0 + $0x568] sm:$0xff]
  %v205 = vld [vmem:[%s0 + $0x570] sm:$0xff]
  %v206 = vld [vmem:[%s0 + $0x578] sm:$0xff]
  %v207 = vld [vmem:[%s0 + $0x580] sm:$0xff]
  %v208 = vld [vmem:[%s0 + $0x588] sm:$0xff]
  %v209 = vld [vmem:[%s0 + $0x590] sm:$0xff]
  %v210 = vld [vmem:[%s0 + $0x598] sm:$0xff]
  %v211 = vld [vmem:[%s0 + $0x5a0] sm:$0xff]
  %v212 = vld [vmem:[%s0 + $0x5a8] sm:$0xff]
  %v213 = vld [vmem:[%s0 + $0x5b0] sm:$0xff]
  %v214 = vld [vmem:[%s0 + $0x5b8] sm:$0xff]
  %v215 = vld [vmem:[%s0 + $0x5c0] sm:$0xff]
  %v216 = vld [vmem:[%s0 + $0x5c8] sm:$0xff]
  %v217 = vld [vmem:[%s0 + $0x5d0] sm:$0xff]
  %v218 = vld [vmem:[%s0 + $0x5d8] sm:$0xff]
  %v219 = vld [vmem:[%s0 + $0x5e0] sm:$0xff]
  %v220 = vld [vmem:[%s0 + $0x5e8] sm:$0xff]
  %v221 = vld [vmem:[%s0 + $0x5f0] sm:$0xff]
  %v222 = vld [vmem:[%s0 + $0x5f8] sm:$0xff]
  %v223 = vld [vmem:[%s0 + $0x600] sm:$0xff]
  %v224 = vld [vmem:[%s0 + $0x608] sm:$0xff]
  %v225 = vld [vmem:[%s0 + $0x610] sm:$0xff]
  %v226 = vld [vmem:[%s0 + $0x618] sm:$0xff]
  %v227 = vld [vmem:[%s0 + $0x620] sm:$0xff]
  %v228 = vld [vmem:[%s0 + $0x628] sm:$0xff]
  %v229 = vld [vmem:[%s0 + $0x630] sm:$0xff]
  %v230 = vld [vmem:[%s0 + $0x638] sm:$0xff]
  %v231 = vld [vmem:[%s0 + $0x640] sm:$0xff]
  %v232 = vld [vmem:[%s0 + $0x648] sm:$0xff]
  %v233 = vld [vmem:[%s0 + $0x650] sm:$0xff]
  %v234 = vld [vmem:[%s0 + $0x658] sm:$0xff]
  %v235 = vld [vmem:[%s0 + $0x660] sm:$0xff]
  %v236 = vld [vmem:[%s0 + $0x668] sm:$0xff]
  %v237 = vld [vmem:[%s0 + $0x670] sm:$0xff]
  %v238 = vld [vmem:[%s0 + $0x678] sm:$0xff]
  %v239 = vld [vmem:[%s0 + $0x680] sm:$0xff]
  %v240 = vld [vmem:[%s0 + $0x688] sm:$0xff]
  %v241 = vld [vmem:[%s0 + $0x690] sm:$0xff]
  %v242 = vld [vmem:[%s0 + $0x698] sm:$0xff]
  %v243 = vld [vmem:[%s0 + $0x6a0] sm:$0xff]
  %v244 = vld [vmem:[%s0 + $0x6a8] sm:$0xff]
  %v245 = vld [vmem:[%s0 + $0x6b0] sm:$0xff]
  %v246 = vld [vmem:[%s0 + $0x6b8] sm:$0xff]
  %v247 = vld [vmem:[%s0 + $0x6c0] sm:$0xff]
  %v248 = vld [vmem:[%s0 + $0x6c8] sm:$0xff]
  %v249 = vld [vmem:[%s0 + $0x6d0] sm:$0xff]
  %v250 = vld [vmem:[%s0 + $0x6d8] sm:$0xff]
  %v251 = vld [vmem:[%s0 + $0x6e0] sm:$0xff]
  %v252 = vld [vmem:[%s0 + $0x6e8] sm:$0xff]
  %v253 = vld [vmem:[%s0 + $0x6f0] sm:$0xff]
  %v254 = vld [vmem:[%s0 + $0x6f8] sm:$0xff]
  %v255 = vld [vmem:[%s0 + $0x700] sm:$0xff]
  %v256 = vld [vmem:[%s0 + $0x708] sm:$0xff]
  %v257 = vld [vmem:[%s0 + $0x710] sm:$0xff]
  %v258 = vld [vmem:[%s0 + $0x718] sm:$0xff]
  %v259 = vld [vmem:[%s0 + $0x720] sm:$0xff]
  %v260 = vld [vmem:[%s0 + $0x728] sm:$0xff]
  %v261 = vld [vmem:[%s0 + $0x730] sm:$0xff]
  %v262 = vld [vmem:[%s0 + $0x738] sm:$0xff]
  %v263 = vld [vmem:[%s0 + $0x740] sm:$0xff]
  %v264 = vld [vmem:[%s0 + $0x748] sm:$0xff]
  %v265 = vld [vmem:[%s0 + $0x750] sm:$0xff]
  %v266 = vld [vmem:[%s0 + $0x758] sm:$0xff]
  %v267 = vld [vmem:[%s0 + $0x760] sm:$0xff]
  %v268 = vld [vmem:[%s0 + $0x768] sm:$0xff]
  %v269 = vld [vmem:[%s0 + $0x770] sm:$0xff]
  %v270 = vld [vmem:[%s0 + $0x778] sm:$0xff]
  %v271 = vld [vmem:[%s0 + $0x780] sm:$0xff]
  %v272 = vld [vmem:[%s0 + $0x788] sm:$0xff]
  %v273 = vld [vmem:[%s0 + $0x790] sm:$0xff]
  %v274 = vld [vmem:[%s0 + $0x798] sm:$0xff]
  %v275 = vld [vmem:[%s0 + $0x7a0] sm:$0xff]
  %v276 = vld [vmem:[%s0 + $0x7a8] sm:$0xff]
  %v277 = vld [vmem:[%s0 + $0x7b0] sm:$0xff]
  %v278 = vld [vmem:[%s0 + $0x7b8] sm:$0xff]
  %v279 = vld [vmem:[%s0 + $0x7c0] sm:$0xff]
  %v280 = vld [vmem:[%s0 + $0x7c8] sm:$0xff]
  %v281 = vld [vmem:[%s0 + $0x7d0] sm:$0xff]
  %v282 = vld [vmem:[%s0 + $0x7d8] sm:$0xff]
  %v283 = vld [vmem:[%s0 + $0x7e0] sm:$0xff]
  %v284 = vld [vmem:[%s0 + $0x7e8] sm:$0xff]
  %v285 = vld [vmem:[%s0 + $0x7f0] sm:$0xff]
  %v286 = vld [vmem:[%s0 + $0x7f8] sm:$0xff]
  %v287 = vld [vmem:[%s2] sm:$0xff]
  %v288 = vld [vmem:[%s2 + $0x8] sm:$0xff]
  %v289 = vld [vmem:[%s2 + $0x10] sm:$0xff]
  %v290 = vld [vmem:[%s2 + $0x18] sm:$0xff]
  %v291 = vld [vmem:[%s3] sm:$0x1]
  %v293 = vlaneseq
  %v294 = vshrl.u32 %v293, 7
  %v295 = vsub.s32 0, %v294
  %v296 = vrot.slane %v291, %v295
  %vm298 = vcmask 261120
  %v300 = vsel %vm298, %v31, 0
  %v303 = vsel %vm298, %v32, 0
  %v306 = vsel %vm298, %v33, 0
  %v309 = vsel %vm298, %v34, 0
  %v312 = vsel %vm298, %v35, 0
  %v315 = vsel %vm298, %v36, 0
  %v318 = vsel %vm298, %v37, 0
  %v321 = vsel %vm298, %v38, 0
  %v324 = vsel %vm298, %v39, 0
  %v327 = vsel %vm298, %v40, 0
  %v330 = vsel %vm298, %v41, 0
  %v333 = vsel %vm298, %v42, 0
  %v336 = vsel %vm298, %v43, 0
  %v339 = vsel %vm298, %v44, 0
  %v342 = vsel %vm298, %v45, 0
  %v345 = vsel %vm298, %v46, 0
  %v348 = vsel %vm298, %v47, 0
  %v351 = vsel %vm298, %v48, 0
  %v354 = vsel %vm298, %v49, 0
  %v357 = vsel %vm298, %v50, 0
  %v360 = vsel %vm298, %v51, 0
  %v363 = vsel %vm298, %v52, 0
  %v366 = vsel %vm298, %v53, 0
  %v369 = vsel %vm298, %v54, 0
  %v372 = vsel %vm298, %v55, 0
  %v375 = vsel %vm298, %v56, 0
  %v378 = vsel %vm298, %v57, 0
  %v381 = vsel %vm298, %v58, 0
  %v384 = vsel %vm298, %v59, 0
  %v387 = vsel %vm298, %v60, 0
  %v390 = vsel %vm298, %v61, 0
  %v393 = vsel %vm298, %v62, 0
  %v396 = vsel %vm298, %v63, 0
  %v399 = vsel %vm298, %v64, 0
  %v402 = vsel %vm298, %v65, 0
  %v405 = vsel %vm298, %v66, 0
  %v408 = vsel %vm298, %v67, 0
  %v411 = vsel %vm298, %v68, 0
  %v414 = vsel %vm298, %v69, 0
  %v417 = vsel %vm298, %v70, 0
  %v420 = vsel %vm298, %v71, 0
  %v423 = vsel %vm298, %v72, 0
  %v426 = vsel %vm298, %v73, 0
  %v429 = vsel %vm298, %v74, 0
  %v432 = vsel %vm298, %v75, 0
  %v435 = vsel %vm298, %v76, 0
  %v438 = vsel %vm298, %v77, 0
  %v441 = vsel %vm298, %v78, 0
  %v444 = vsel %vm298, %v79, 0
  %v447 = vsel %vm298, %v80, 0
  %v450 = vsel %vm298, %v81, 0
  %v453 = vsel %vm298, %v82, 0
  %v456 = vsel %vm298, %v83, 0
  %v459 = vsel %vm298, %v84, 0
  %v462 = vsel %vm298, %v85, 0
  %v465 = vsel %vm298, %v86, 0
  %v468 = vsel %vm298, %v87, 0
  %v471 = vsel %vm298, %v88, 0
  %v474 = vsel %vm298, %v89, 0
  %v477 = vsel %vm298, %v90, 0
  %v480 = vsel %vm298, %v91, 0
  %v483 = vsel %vm298, %v92, 0
  %v486 = vsel %vm298, %v93, 0
  %v489 = vsel %vm298, %v94, 0
  %v492 = vsel %vm298, %v95, 0
  %v495 = vsel %vm298, %v96, 0
  %v498 = vsel %vm298, %v97, 0
  %v501 = vsel %vm298, %v98, 0
  %v504 = vsel %vm298, %v99, 0
  %v507 = vsel %vm298, %v100, 0
  %v510 = vsel %vm298, %v101, 0
  %v513 = vsel %vm298, %v102, 0
  %v516 = vsel %vm298, %v103, 0
  %v519 = vsel %vm298, %v104, 0
  %v522 = vsel %vm298, %v105, 0
  %v525 = vsel %vm298, %v106, 0
  %v528 = vsel %vm298, %v107, 0
  %v531 = vsel %vm298, %v108, 0
  %v534 = vsel %vm298, %v109, 0
  %v537 = vsel %vm298, %v110, 0
  %v540 = vsel %vm298, %v111, 0
  %v543 = vsel %vm298, %v112, 0
  %v546 = vsel %vm298, %v113, 0
  %v549 = vsel %vm298, %v114, 0
  %v552 = vsel %vm298, %v115, 0
  %v555 = vsel %vm298, %v116, 0
  %v558 = vsel %vm298, %v117, 0
  %v561 = vsel %vm298, %v118, 0
  %v564 = vsel %vm298, %v119, 0
  %v567 = vsel %vm298, %v120, 0
  %v570 = vsel %vm298, %v121, 0
  %v573 = vsel %vm298, %v122, 0
  %v576 = vsel %vm298, %v123, 0
  %v579 = vsel %vm298, %v124, 0
  %v582 = vsel %vm298, %v125, 0
  %v585 = vsel %vm298, %v126, 0
  %v588 = vsel %vm298, %v127, 0
  %v591 = vsel %vm298, %v128, 0
  %v594 = vsel %vm298, %v129, 0
  %v597 = vsel %vm298, %v130, 0
  %v600 = vsel %vm298, %v131, 0
  %v603 = vsel %vm298, %v132, 0
  %v606 = vsel %vm298, %v133, 0
  %v609 = vsel %vm298, %v134, 0
  %v612 = vsel %vm298, %v135, 0
  %v615 = vsel %vm298, %v136, 0
  %v618 = vsel %vm298, %v137, 0
  %v621 = vsel %vm298, %v138, 0
  %v624 = vsel %vm298, %v139, 0
  %v627 = vsel %vm298, %v140, 0
  %v630 = vsel %vm298, %v141, 0
  %v633 = vsel %vm298, %v142, 0
  %v636 = vsel %vm298, %v143, 0
  %v639 = vsel %vm298, %v144, 0
  %v642 = vsel %vm298, %v145, 0
  %v645 = vsel %vm298, %v146, 0
  %v648 = vsel %vm298, %v147, 0
  %v651 = vsel %vm298, %v148, 0
  %v654 = vsel %vm298, %v149, 0
  %v657 = vsel %vm298, %v150, 0
  %v660 = vsel %vm298, %v151, 0
  %v663 = vsel %vm298, %v152, 0
  %v666 = vsel %vm298, %v153, 0
  %v669 = vsel %vm298, %v154, 0
  %v672 = vsel %vm298, %v155, 0
  %v675 = vsel %vm298, %v156, 0
  %v678 = vsel %vm298, %v157, 0
  %v681 = vsel %vm298, %v158, 0
  %v684 = vsel %vm298, %v159, 0
  %v687 = vsel %vm298, %v160, 0
  %v690 = vsel %vm298, %v161, 0
  %v693 = vsel %vm298, %v162, 0
  %v696 = vsel %vm298, %v163, 0
  %v699 = vsel %vm298, %v164, 0
  %v702 = vsel %vm298, %v165, 0
  %v705 = vsel %vm298, %v166, 0
  %v708 = vsel %vm298, %v167, 0
  %v711 = vsel %vm298, %v168, 0
  %v714 = vsel %vm298, %v169, 0
  %v717 = vsel %vm298, %v170, 0
  %v720 = vsel %vm298, %v171, 0
  %v723 = vsel %vm298, %v172, 0
  %v726 = vsel %vm298, %v173, 0
  %v729 = vsel %vm298, %v174, 0
  %v732 = vsel %vm298, %v175, 0
  %v735 = vsel %vm298, %v176, 0
  %v738 = vsel %vm298, %v177, 0
  %v741 = vsel %vm298, %v178, 0
  %v744 = vsel %vm298, %v179, 0
  %v747 = vsel %vm298, %v180, 0
  %v750 = vsel %vm298, %v181, 0
  %v753 = vsel %vm298, %v182, 0
  %v756 = vsel %vm298, %v183, 0
  %v759 = vsel %vm298, %v184, 0
  %v762 = vsel %vm298, %v185, 0
  %v765 = vsel %vm298, %v186, 0
  %v768 = vsel %vm298, %v187, 0
  %v771 = vsel %vm298, %v188, 0
  %v774 = vsel %vm298, %v189, 0
  %v777 = vsel %vm298, %v190, 0
  %v780 = vsel %vm298, %v191, 0
  %v783 = vsel %vm298, %v192, 0
  %v786 = vsel %vm298, %v193, 0
  %v789 = vsel %vm298, %v194, 0
  %v792 = vsel %vm298, %v195, 0
  %v795 = vsel %vm298, %v196, 0
  %v798 = vsel %vm298, %v197, 0
  %v801 = vsel %vm298, %v198, 0
  %v804 = vsel %vm298, %v199, 0
  %v807 = vsel %vm298, %v200, 0
  %v810 = vsel %vm298, %v201, 0
  %v813 = vsel %vm298, %v202, 0
  %v816 = vsel %vm298, %v203, 0
  %v819 = vsel %vm298, %v204, 0
  %v822 = vsel %vm298, %v205, 0
  %v825 = vsel %vm298, %v206, 0
  %v828 = vsel %vm298, %v207, 0
  %v831 = vsel %vm298, %v208, 0
  %v834 = vsel %vm298, %v209, 0
  %v837 = vsel %vm298, %v210, 0
  %v840 = vsel %vm298, %v211, 0
  %v843 = vsel %vm298, %v212, 0
  %v846 = vsel %vm298, %v213, 0
  %v849 = vsel %vm298, %v214, 0
  %v852 = vsel %vm298, %v215, 0
  %v855 = vsel %vm298, %v216, 0
  %v858 = vsel %vm298, %v217, 0
  %v861 = vsel %vm298, %v218, 0
  %v864 = vsel %vm298, %v219, 0
  %v867 = vsel %vm298, %v220, 0
  %v870 = vsel %vm298, %v221, 0
  %v873 = vsel %vm298, %v222, 0
  %v876 = vsel %vm298, %v223, 0
  %v879 = vsel %vm298, %v224, 0
  %v882 = vsel %vm298, %v225, 0
  %v885 = vsel %vm298, %v226, 0
  %v888 = vsel %vm298, %v227, 0
  %v891 = vsel %vm298, %v228, 0
  %v894 = vsel %vm298, %v229, 0
  %v897 = vsel %vm298, %v230, 0
  %v900 = vsel %vm298, %v231, 0
  %v903 = vsel %vm298, %v232, 0
  %v906 = vsel %vm298, %v233, 0
  %v909 = vsel %vm298, %v234, 0
  %v912 = vsel %vm298, %v235, 0
  %v915 = vsel %vm298, %v236, 0
  %v918 = vsel %vm298, %v237, 0
  %v921 = vsel %vm298, %v238, 0
  %v924 = vsel %vm298, %v239, 0
  %v927 = vsel %vm298, %v240, 0
  %v930 = vsel %vm298, %v241, 0
  %v933 = vsel %vm298, %v242, 0
  %v936 = vsel %vm298, %v243, 0
  %v939 = vsel %vm298, %v244, 0
  %v942 = vsel %vm298, %v245, 0
  %v945 = vsel %vm298, %v246, 0
  %v948 = vsel %vm298, %v247, 0
  %v951 = vsel %vm298, %v248, 0
  %v954 = vsel %vm298, %v249, 0
  %v957 = vsel %vm298, %v250, 0
  %v960 = vsel %vm298, %v251, 0
  %v963 = vsel %vm298, %v252, 0
  %v966 = vsel %vm298, %v253, 0
  %v969 = vsel %vm298, %v254, 0
  %v972 = vsel %vm298, %v255, 0
  %v975 = vsel %vm298, %v256, 0
  %v978 = vsel %vm298, %v257, 0
  %v981 = vsel %vm298, %v258, 0
  %v984 = vsel %vm298, %v259, 0
  %v987 = vsel %vm298, %v260, 0
  %v990 = vsel %vm298, %v261, 0
  %v993 = vsel %vm298, %v262, 0
  %v996 = vsel %vm298, %v263, 0
  %v999 = vsel %vm298, %v264, 0
  %v1002 = vsel %vm298, %v265, 0
  %v1005 = vsel %vm298, %v266, 0
  %v1008 = vsel %vm298, %v267, 0
  %v1011 = vsel %vm298, %v268, 0
  %v1014 = vsel %vm298, %v269, 0
  %v1017 = vsel %vm298, %v270, 0
  %v1020 = vsel %vm298, %v271, 0
  %v1023 = vsel %vm298, %v272, 0
  %v1026 = vsel %vm298, %v273, 0
  %v1029 = vsel %vm298, %v274, 0
  %v1032 = vsel %vm298, %v275, 0
  %v1035 = vsel %vm298, %v276, 0
  %v1038 = vsel %vm298, %v277, 0
  %v1041 = vsel %vm298, %v278, 0
  %v1044 = vsel %vm298, %v279, 0
  %v1047 = vsel %vm298, %v280, 0
  %v1050 = vsel %vm298, %v281, 0
  %v1053 = vsel %vm298, %v282, 0
  %v1056 = vsel %vm298, %v283, 0
  %v1059 = vsel %vm298, %v284, 0
  %v1062 = vsel %vm298, %v285, 0
  %v1065 = vsel %vm298, %v286, 0
  %1067 = vmatprep.subr.mxu0 0.0
  %1068 = vmatpush1.msra.mxu0 0.0
  %1069 = vmatprep.subr.mxu0 0.0
  %1070 = vmatpush1.msra.mxu0 0.0
  %1071 = vmatprep.subr.mxu0 0.0
  %1072 = vmatpush1.msra.mxu0 0.0
  %1073 = vmatprep.subr.mxu0 0.0
  %1074 = vmatpush1.msra.mxu0 0.0
  %1075 = vmatprep.subr.mxu0 0.0
  %1076 = vmatpush1.msra.mxu0 0.0
  %1077 = vmatprep.subr.mxu0 0.0
  %1078 = vmatpush1.msra.mxu0 0.0
  %1079 = vmatprep.subr.mxu0 0.0
  %1080 = vmatpush1.msra.mxu0 0.0
  %1081 = vmatprep.subr.mxu0 0.0
  %1082 = vmatpush1.msra.mxu0 0.0
  %1083 = vmatprep.subr.mxu0 0.0
  %1084 = vmatpush1.msra.mxu0 0.0
  %1085 = vmatprep.subr.mxu0 0.0
  %1086 = vmatpush1.msra.mxu0 0.0
  %1087 = vmatprep.subr.mxu0 0.0
  %1088 = vmatpush1.msra.mxu0 0.0
  %1089 = vmatprep.subr.mxu0 0.0
  %1090 = vmatpush1.msra.mxu0 0.0
  %1091 = vmatprep.subr.mxu0 0.0
  %1092 = vmatpush1.msra.mxu0 %v290
  %1093 = vmatprep.subr.mxu0 0.0
  %1094 = vmatpush1.msra.mxu0 %v289
  %1095 = vmatprep.subr.mxu0 0.0
  %1096 = vmatpush1.msra.mxu0 %v288
  %1097 = vmatprep.subr.mxu0 0.0
  %1098 = vmatpush1.msra.mxu0 %v287
  %1099 = vmatprep.subr.mxu0 0.0
  %1100 = vmatpush2.msra.mxu0 0.0
  %1101 = vmatprep.subr.mxu0 0.0
  %1102 = vmatpush2.msra.mxu0 0.0
  %1103 = vmatprep.subr.mxu0 0.0
  %1104 = vmatpush2.msra.mxu0 0.0
  %1105 = vmatprep.subr.mxu0 0.0
  %1106 = vmatpush2.msra.mxu0 0.0
  %1107 = vmatprep.subr.mxu0 0.0
  %1108 = vmatpush2.msra.mxu0 0.0
  %1109 = vmatprep.subr.mxu0 0.0
  %1110 = vmatpush2.msra.mxu0 0.0
  %1111 = vmatprep.subr.mxu0 0.0
  %1112 = vmatpush2.msra.mxu0 0.0
  %1113 = vmatprep.subr.mxu0 0.0
  %1114 = vmatpush2.msra.mxu0 0.0
  %1115 = vmatprep.subr.mxu0 0.0
  %1116 = vmatpush2.msra.mxu0 0.0
  %1117 = vmatprep.subr.mxu0 0.0
  %1118 = vmatpush2.msra.mxu0 0.0
  %1119 = vmatprep.subr.mxu0 0.0
  %1120 = vmatpush2.msra.mxu0 0.0
  %1121 = vmatprep.subr.mxu0 0.0
  %1122 = vmatpush2.msra.mxu0 0.0
  %1123 = vmatprep.subr.mxu0 0.0
  %1124 = vmatpush2.msra.mxu0 0.0
  %1125 = vmatprep.subr.mxu0 0.0
  %1126 = vmatpush2.msra.mxu0 0.0
  %1127 = vmatprep.subr.mxu0 0.0
  %1128 = vmatpush2.msra.mxu0 0.0
  %1129 = vmatprep.subr.mxu0 0.0
  %1130 = vmatpush2.msra.mxu0 0.0
  %1131 = vmatprep.mubr.f32.mxu0 0.0
  %1132 = vmatmul.mubr.f32.gmra.mxu0 %v300
  %v1133 = vpop.f32.mrf.mxu0
  %v1134 = vadd.f32 %v296, %v1133
  %v1135 = vpop.f32.mrf.mxu0
  %1136 = vmatprep.mubr.f32.mxu0 0.0
  %1137 = vmatmul.mubr.f32.gmra.mxu0 %v303
  %v1138 = vpop.f32.mrf.mxu0
  %v1139 = vadd.f32 %v296, %v1138
  %v1140 = vpop.f32.mrf.mxu0
  %1141 = vmatprep.mubr.f32.mxu0 0.0
  %1142 = vmatmul.mubr.f32.gmra.mxu0 %v306
  %v1143 = vpop.f32.mrf.mxu0
  %v1144 = vadd.f32 %v296, %v1143
  %v1145 = vpop.f32.mrf.mxu0
  %1146 = vmatprep.mubr.f32.mxu0 0.0
  %1147 = vmatmul.mubr.f32.gmra.mxu0 %v309
  %v1148 = vpop.f32.mrf.mxu0
  %v1149 = vadd.f32 %v296, %v1148
  %v1150 = vpop.f32.mrf.mxu0
  %1151 = vmatprep.mubr.f32.mxu0 0.0
  %1152 = vmatmul.mubr.f32.gmra.mxu0 %v312
  %v1153 = vpop.f32.mrf.mxu0
  %v1154 = vadd.f32 %v296, %v1153
  %v1155 = vpop.f32.mrf.mxu0
  %1156 = vmatprep.mubr.f32.mxu0 0.0
  %1157 = vmatmul.mubr.f32.gmra.mxu0 %v315
  %v1158 = vpop.f32.mrf.mxu0
  %v1159 = vadd.f32 %v296, %v1158
  %v1160 = vpop.f32.mrf.mxu0
  %1161 = vmatprep.mubr.f32.mxu0 0.0
  %1162 = vmatmul.mubr.f32.gmra.mxu0 %v318
  %v1163 = vpop.f32.mrf.mxu0
  %v1164 = vadd.f32 %v296, %v1163
  %v1165 = vpop.f32.mrf.mxu0
  %1166 = vmatprep.mubr.f32.mxu0 0.0
  %1167 = vmatmul.mubr.f32.gmra.mxu0 %v321
  %v1168 = vpop.f32.mrf.mxu0
  %v1169 = vadd.f32 %v296, %v1168
  %v1170 = vpop.f32.mrf.mxu0
  %1171 = vmatprep.mubr.f32.mxu0 0.0
  %1172 = vmatmul.mubr.f32.gmra.mxu0 %v324
  %v1173 = vpop.f32.mrf.mxu0
  %v1174 = vadd.f32 %v296, %v1173
  %v1175 = vpop.f32.mrf.mxu0
  %1176 = vmatprep.mubr.f32.mxu0 0.0
  %1177 = vmatmul.mubr.f32.gmra.mxu0 %v327
  %v1178 = vpop.f32.mrf.mxu0
  %v1179 = vadd.f32 %v296, %v1178
  %v1180 = vpop.f32.mrf.mxu0
  %1181 = vmatprep.mubr.f32.mxu0 0.0
  %1182 = vmatmul.mubr.f32.gmra.mxu0 %v330
  %v1183 = vpop.f32.mrf.mxu0
  %v1184 = vadd.f32 %v296, %v1183
  %v1185 = vpop.f32.mrf.mxu0
  %1186 = vmatprep.mubr.f32.mxu0 0.0
  %1187 = vmatmul.mubr.f32.gmra.mxu0 %v333
  %v1188 = vpop.f32.mrf.mxu0
  %v1189 = vadd.f32 %v296, %v1188
  %v1190 = vpop.f32.mrf.mxu0
  %1191 = vmatprep.mubr.f32.mxu0 0.0
  %1192 = vmatmul.mubr.f32.gmra.mxu0 %v336
  %v1193 = vpop.f32.mrf.mxu0
  %v1194 = vadd.f32 %v296, %v1193
  %v1195 = vpop.f32.mrf.mxu0
  %1196 = vmatprep.mubr.f32.mxu0 0.0
  %1197 = vmatmul.mubr.f32.gmra.mxu0 %v339
  %v1198 = vpop.f32.mrf.mxu0
  %v1199 = vadd.f32 %v296, %v1198
  %v1200 = vpop.f32.mrf.mxu0
  %1201 = vmatprep.mubr.f32.mxu0 0.0
  %1202 = vmatmul.mubr.f32.gmra.mxu0 %v342
  %v1203 = vpop.f32.mrf.mxu0
  %v1204 = vadd.f32 %v296, %v1203
  %v1205 = vpop.f32.mrf.mxu0
  %1206 = vmatprep.mubr.f32.mxu0 0.0
  %1207 = vmatmul.mubr.f32.gmra.mxu0 %v345
  %v1208 = vpop.f32.mrf.mxu0
  %v1209 = vadd.f32 %v296, %v1208
  %v1210 = vpop.f32.mrf.mxu0
  %1211 = vmatprep.mubr.f32.mxu0 0.0
  %1212 = vmatmul.mubr.f32.gmra.mxu0 %v348
  %v1213 = vpop.f32.mrf.mxu0
  %v1214 = vadd.f32 %v296, %v1213
  %v1215 = vpop.f32.mrf.mxu0
  %1216 = vmatprep.mubr.f32.mxu0 0.0
  %1217 = vmatmul.mubr.f32.gmra.mxu0 %v351
  %v1218 = vpop.f32.mrf.mxu0
  %v1219 = vadd.f32 %v296, %v1218
  %v1220 = vpop.f32.mrf.mxu0
  %1221 = vmatprep.mubr.f32.mxu0 0.0
  %1222 = vmatmul.mubr.f32.gmra.mxu0 %v354
  %v1223 = vpop.f32.mrf.mxu0
  %v1224 = vadd.f32 %v296, %v1223
  %v1225 = vpop.f32.mrf.mxu0
  %1226 = vmatprep.mubr.f32.mxu0 0.0
  %1227 = vmatmul.mubr.f32.gmra.mxu0 %v357
  %v1228 = vpop.f32.mrf.mxu0
  %v1229 = vadd.f32 %v296, %v1228
  %v1230 = vpop.f32.mrf.mxu0
  %1231 = vmatprep.mubr.f32.mxu0 0.0
  %1232 = vmatmul.mubr.f32.gmra.mxu0 %v360
  %v1233 = vpop.f32.mrf.mxu0
  %v1234 = vadd.f32 %v296, %v1233
  %v1235 = vpop.f32.mrf.mxu0
  %1236 = vmatprep.mubr.f32.mxu0 0.0
  %1237 = vmatmul.mubr.f32.gmra.mxu0 %v363
  %v1238 = vpop.f32.mrf.mxu0
  %v1239 = vadd.f32 %v296, %v1238
  %v1240 = vpop.f32.mrf.mxu0
  %1241 = vmatprep.mubr.f32.mxu0 0.0
  %1242 = vmatmul.mubr.f32.gmra.mxu0 %v366
  %v1243 = vpop.f32.mrf.mxu0
  %v1244 = vadd.f32 %v296, %v1243
  %v1245 = vpop.f32.mrf.mxu0
  %1246 = vmatprep.mubr.f32.mxu0 0.0
  %1247 = vmatmul.mubr.f32.gmra.mxu0 %v369
  %v1248 = vpop.f32.mrf.mxu0
  %v1249 = vadd.f32 %v296, %v1248
  %v1250 = vpop.f32.mrf.mxu0
  %1251 = vmatprep.mubr.f32.mxu0 0.0
  %1252 = vmatmul.mubr.f32.gmra.mxu0 %v372
  %v1253 = vpop.f32.mrf.mxu0
  %v1254 = vadd.f32 %v296, %v1253
  %v1255 = vpop.f32.mrf.mxu0
  %1256 = vmatprep.mubr.f32.mxu0 0.0
  %1257 = vmatmul.mubr.f32.gmra.mxu0 %v375
  %v1258 = vpop.f32.mrf.mxu0
  %v1259 = vadd.f32 %v296, %v1258
  %v1260 = vpop.f32.mrf.mxu0
  %1261 = vmatprep.mubr.f32.mxu0 0.0
  %1262 = vmatmul.mubr.f32.gmra.mxu0 %v378
  %v1263 = vpop.f32.mrf.mxu0
  %v1264 = vadd.f32 %v296, %v1263
  %v1265 = vpop.f32.mrf.mxu0
  %1266 = vmatprep.mubr.f32.mxu0 0.0
  %1267 = vmatmul.mubr.f32.gmra.mxu0 %v381
  %v1268 = vpop.f32.mrf.mxu0
  %v1269 = vadd.f32 %v296, %v1268
  %v1270 = vpop.f32.mrf.mxu0
  %1271 = vmatprep.mubr.f32.mxu0 0.0
  %1272 = vmatmul.mubr.f32.gmra.mxu0 %v384
  %v1273 = vpop.f32.mrf.mxu0
  %v1274 = vadd.f32 %v296, %v1273
  %v1275 = vpop.f32.mrf.mxu0
  %1276 = vmatprep.mubr.f32.mxu0 0.0
  %1277 = vmatmul.mubr.f32.gmra.mxu0 %v387
  %v1278 = vpop.f32.mrf.mxu0
  %v1279 = vadd.f32 %v296, %v1278
  %v1280 = vpop.f32.mrf.mxu0
  %1281 = vmatprep.mubr.f32.mxu0 0.0
  %1282 = vmatmul.mubr.f32.gmra.mxu0 %v390
  %v1283 = vpop.f32.mrf.mxu0
  %v1284 = vadd.f32 %v296, %v1283
  %v1285 = vpop.f32.mrf.mxu0
  %1286 = vmatprep.mubr.f32.mxu0 0.0
  %1287 = vmatmul.mubr.f32.gmra.mxu0 %v393
  %v1288 = vpop.f32.mrf.mxu0
  %v1289 = vadd.f32 %v296, %v1288
  %v1290 = vpop.f32.mrf.mxu0
  %1291 = vmatprep.mubr.f32.mxu0 0.0
  %1292 = vmatmul.mubr.f32.gmra.mxu0 %v396
  %v1293 = vpop.f32.mrf.mxu0
  %v1294 = vadd.f32 %v296, %v1293
  %v1295 = vpop.f32.mrf.mxu0
  %1296 = vmatprep.mubr.f32.mxu0 0.0
  %1297 = vmatmul.mubr.f32.gmra.mxu0 %v399
  %v1298 = vpop.f32.mrf.mxu0
  %v1299 = vadd.f32 %v296, %v1298
  %v1300 = vpop.f32.mrf.mxu0
  %1301 = vmatprep.mubr.f32.mxu0 0.0
  %1302 = vmatmul.mubr.f32.gmra.mxu0 %v402
  %v1303 = vpop.f32.mrf.mxu0
  %v1304 = vadd.f32 %v296, %v1303
  %v1305 = vpop.f32.mrf.mxu0
  %1306 = vmatprep.mubr.f32.mxu0 0.0
  %1307 = vmatmul.mubr.f32.gmra.mxu0 %v405
  %v1308 = vpop.f32.mrf.mxu0
  %v1309 = vadd.f32 %v296, %v1308
  %v1310 = vpop.f32.mrf.mxu0
  %1311 = vmatprep.mubr.f32.mxu0 0.0
  %1312 = vmatmul.mubr.f32.gmra.mxu0 %v408
  %v1313 = vpop.f32.mrf.mxu0
  %v1314 = vadd.f32 %v296, %v1313
  %v1315 = vpop.f32.mrf.mxu0
  %1316 = vmatprep.mubr.f32.mxu0 0.0
  %1317 = vmatmul.mubr.f32.gmra.mxu0 %v411
  %v1318 = vpop.f32.mrf.mxu0
  %v1319 = vadd.f32 %v296, %v1318
  %v1320 = vpop.f32.mrf.mxu0
  %1321 = vmatprep.mubr.f32.mxu0 0.0
  %1322 = vmatmul.mubr.f32.gmra.mxu0 %v414
  %v1323 = vpop.f32.mrf.mxu0
  %v1324 = vadd.f32 %v296, %v1323
  %v1325 = vpop.f32.mrf.mxu0
  %1326 = vmatprep.mubr.f32.mxu0 0.0
  %1327 = vmatmul.mubr.f32.gmra.mxu0 %v417
  %v1328 = vpop.f32.mrf.mxu0
  %v1329 = vadd.f32 %v296, %v1328
  %v1330 = vpop.f32.mrf.mxu0
  %1331 = vmatprep.mubr.f32.mxu0 0.0
  %1332 = vmatmul.mubr.f32.gmra.mxu0 %v420
  %v1333 = vpop.f32.mrf.mxu0
  %v1334 = vadd.f32 %v296, %v1333
  %v1335 = vpop.f32.mrf.mxu0
  %1336 = vmatprep.mubr.f32.mxu0 0.0
  %1337 = vmatmul.mubr.f32.gmra.mxu0 %v423
  %v1338 = vpop.f32.mrf.mxu0
  %v1339 = vadd.f32 %v296, %v1338
  %v1340 = vpop.f32.mrf.mxu0
  %1341 = vmatprep.mubr.f32.mxu0 0.0
  %1342 = vmatmul.mubr.f32.gmra.mxu0 %v426
  %v1343 = vpop.f32.mrf.mxu0
  %v1344 = vadd.f32 %v296, %v1343
  %v1345 = vpop.f32.mrf.mxu0
  %1346 = vmatprep.mubr.f32.mxu0 0.0
  %1347 = vmatmul.mubr.f32.gmra.mxu0 %v429
  %v1348 = vpop.f32.mrf.mxu0
  %v1349 = vadd.f32 %v296, %v1348
  %v1350 = vpop.f32.mrf.mxu0
  %1351 = vmatprep.mubr.f32.mxu0 0.0
  %1352 = vmatmul.mubr.f32.gmra.mxu0 %v432
  %v1353 = vpop.f32.mrf.mxu0
  %v1354 = vadd.f32 %v296, %v1353
  %v1355 = vpop.f32.mrf.mxu0
  %1356 = vmatprep.mubr.f32.mxu0 0.0
  %1357 = vmatmul.mubr.f32.gmra.mxu0 %v435
  %v1358 = vpop.f32.mrf.mxu0
  %v1359 = vadd.f32 %v296, %v1358
  %v1360 = vpop.f32.mrf.mxu0
  %1361 = vmatprep.mubr.f32.mxu0 0.0
  %1362 = vmatmul.mubr.f32.gmra.mxu0 %v438
  %v1363 = vpop.f32.mrf.mxu0
  %v1364 = vadd.f32 %v296, %v1363
  %v1365 = vpop.f32.mrf.mxu0
  %1366 = vmatprep.mubr.f32.mxu0 0.0
  %1367 = vmatmul.mubr.f32.gmra.mxu0 %v441
  %v1368 = vpop.f32.mrf.mxu0
  %v1369 = vadd.f32 %v296, %v1368
  %v1370 = vpop.f32.mrf.mxu0
  %1371 = vmatprep.mubr.f32.mxu0 0.0
  %1372 = vmatmul.mubr.f32.gmra.mxu0 %v444
  %v1373 = vpop.f32.mrf.mxu0
  %v1374 = vadd.f32 %v296, %v1373
  %v1375 = vpop.f32.mrf.mxu0
  %1376 = vmatprep.mubr.f32.mxu0 0.0
  %1377 = vmatmul.mubr.f32.gmra.mxu0 %v447
  %v1378 = vpop.f32.mrf.mxu0
  %v1379 = vadd.f32 %v296, %v1378
  %v1380 = vpop.f32.mrf.mxu0
  %1381 = vmatprep.mubr.f32.mxu0 0.0
  %1382 = vmatmul.mubr.f32.gmra.mxu0 %v450
  %v1383 = vpop.f32.mrf.mxu0
  %v1384 = vadd.f32 %v296, %v1383
  %v1385 = vpop.f32.mrf.mxu0
  %1386 = vmatprep.mubr.f32.mxu0 0.0
  %1387 = vmatmul.mubr.f32.gmra.mxu0 %v453
  %v1388 = vpop.f32.mrf.mxu0
  %v1389 = vadd.f32 %v296, %v1388
  %v1390 = vpop.f32.mrf.mxu0
  %1391 = vmatprep.mubr.f32.mxu0 0.0
  %1392 = vmatmul.mubr.f32.gmra.mxu0 %v456
  %v1393 = vpop.f32.mrf.mxu0
  %v1394 = vadd.f32 %v296, %v1393
  %v1395 = vpop.f32.mrf.mxu0
  %1396 = vmatprep.mubr.f32.mxu0 0.0
  %1397 = vmatmul.mubr.f32.gmra.mxu0 %v459
  %v1398 = vpop.f32.mrf.mxu0
  %v1399 = vadd.f32 %v296, %v1398
  %v1400 = vpop.f32.mrf.mxu0
  %1401 = vmatprep.mubr.f32.mxu0 0.0
  %1402 = vmatmul.mubr.f32.gmra.mxu0 %v462
  %v1403 = vpop.f32.mrf.mxu0
  %v1404 = vadd.f32 %v296, %v1403
  %v1405 = vpop.f32.mrf.mxu0
  %1406 = vmatprep.mubr.f32.mxu0 0.0
  %1407 = vmatmul.mubr.f32.gmra.mxu0 %v465
  %v1408 = vpop.f32.mrf.mxu0
  %v1409 = vadd.f32 %v296, %v1408
  %v1410 = vpop.f32.mrf.mxu0
  %1411 = vmatprep.mubr.f32.mxu0 0.0
  %1412 = vmatmul.mubr.f32.gmra.mxu0 %v468
  %v1413 = vpop.f32.mrf.mxu0
  %v1414 = vadd.f32 %v296, %v1413
  %v1415 = vpop.f32.mrf.mxu0
  %1416 = vmatprep.mubr.f32.mxu0 0.0
  %1417 = vmatmul.mubr.f32.gmra.mxu0 %v471
  %v1418 = vpop.f32.mrf.mxu0
  %v1419 = vadd.f32 %v296, %v1418
  %v1420 = vpop.f32.mrf.mxu0
  %1421 = vmatprep.mubr.f32.mxu0 0.0
  %1422 = vmatmul.mubr.f32.gmra.mxu0 %v474
  %v1423 = vpop.f32.mrf.mxu0
  %v1424 = vadd.f32 %v296, %v1423
  %v1425 = vpop.f32.mrf.mxu0
  %1426 = vmatprep.mubr.f32.mxu0 0.0
  %1427 = vmatmul.mubr.f32.gmra.mxu0 %v477
  %v1428 = vpop.f32.mrf.mxu0
  %v1429 = vadd.f32 %v296, %v1428
  %v1430 = vpop.f32.mrf.mxu0
  %1431 = vmatprep.mubr.f32.mxu0 0.0
  %1432 = vmatmul.mubr.f32.gmra.mxu0 %v480
  %v1433 = vpop.f32.mrf.mxu0
  %v1434 = vadd.f32 %v296, %v1433
  %v1435 = vpop.f32.mrf.mxu0
  %1436 = vmatprep.mubr.f32.mxu0 0.0
  %1437 = vmatmul.mubr.f32.gmra.mxu0 %v483
  %v1438 = vpop.f32.mrf.mxu0
  %v1439 = vadd.f32 %v296, %v1438
  %v1440 = vpop.f32.mrf.mxu0
  %1441 = vmatprep.mubr.f32.mxu0 0.0
  %1442 = vmatmul.mubr.f32.gmra.mxu0 %v486
  %v1443 = vpop.f32.mrf.mxu0
  %v1444 = vadd.f32 %v296, %v1443
  %v1445 = vpop.f32.mrf.mxu0
  %1446 = vmatprep.mubr.f32.mxu0 0.0
  %1447 = vmatmul.mubr.f32.gmra.mxu0 %v489
  %v1448 = vpop.f32.mrf.mxu0
  %v1449 = vadd.f32 %v296, %v1448
  %v1450 = vpop.f32.mrf.mxu0
  %1451 = vmatprep.mubr.f32.mxu0 0.0
  %1452 = vmatmul.mubr.f32.gmra.mxu0 %v492
  %v1453 = vpop.f32.mrf.mxu0
  %v1454 = vadd.f32 %v296, %v1453
  %v1455 = vpop.f32.mrf.mxu0
  %1456 = vmatprep.mubr.f32.mxu0 0.0
  %1457 = vmatmul.mubr.f32.gmra.mxu0 %v495
  %v1458 = vpop.f32.mrf.mxu0
  %v1459 = vadd.f32 %v296, %v1458
  %v1460 = vpop.f32.mrf.mxu0
  %1461 = vmatprep.mubr.f32.mxu0 0.0
  %1462 = vmatmul.mubr.f32.gmra.mxu0 %v498
  %v1463 = vpop.f32.mrf.mxu0
  %v1464 = vadd.f32 %v296, %v1463
  %v1465 = vpop.f32.mrf.mxu0
  %1466 = vmatprep.mubr.f32.mxu0 0.0
  %1467 = vmatmul.mubr.f32.gmra.mxu0 %v501
  %v1468 = vpop.f32.mrf.mxu0
  %v1469 = vadd.f32 %v296, %v1468
  %v1470 = vpop.f32.mrf.mxu0
  %1471 = vmatprep.mubr.f32.mxu0 0.0
  %1472 = vmatmul.mubr.f32.gmra.mxu0 %v504
  %v1473 = vpop.f32.mrf.mxu0
  %v1474 = vadd.f32 %v296, %v1473
  %v1475 = vpop.f32.mrf.mxu0
  %1476 = vmatprep.mubr.f32.mxu0 0.0
  %1477 = vmatmul.mubr.f32.gmra.mxu0 %v507
  %v1478 = vpop.f32.mrf.mxu0
  %v1479 = vadd.f32 %v296, %v1478
  %v1480 = vpop.f32.mrf.mxu0
  %1481 = vmatprep.mubr.f32.mxu0 0.0
  %1482 = vmatmul.mubr.f32.gmra.mxu0 %v510
  %v1483 = vpop.f32.mrf.mxu0
  %v1484 = vadd.f32 %v296, %v1483
  %v1485 = vpop.f32.mrf.mxu0
  %1486 = vmatprep.mubr.f32.mxu0 0.0
  %1487 = vmatmul.mubr.f32.gmra.mxu0 %v513
  %v1488 = vpop.f32.mrf.mxu0
  %v1489 = vadd.f32 %v296, %v1488
  %v1490 = vpop.f32.mrf.mxu0
  %1491 = vmatprep.mubr.f32.mxu0 0.0
  %1492 = vmatmul.mubr.f32.gmra.mxu0 %v516
  %v1493 = vpop.f32.mrf.mxu0
  %v1494 = vadd.f32 %v296, %v1493
  %v1495 = vpop.f32.mrf.mxu0
  %1496 = vmatprep.mubr.f32.mxu0 0.0
  %1497 = vmatmul.mubr.f32.gmra.mxu0 %v519
  %v1498 = vpop.f32.mrf.mxu0
  %v1499 = vadd.f32 %v296, %v1498
  %v1500 = vpop.f32.mrf.mxu0
  %1501 = vmatprep.mubr.f32.mxu0 0.0
  %1502 = vmatmul.mubr.f32.gmra.mxu0 %v522
  %v1503 = vpop.f32.mrf.mxu0
  %v1504 = vadd.f32 %v296, %v1503
  %v1505 = vpop.f32.mrf.mxu0
  %1506 = vmatprep.mubr.f32.mxu0 0.0
  %1507 = vmatmul.mubr.f32.gmra.mxu0 %v525
  %v1508 = vpop.f32.mrf.mxu0
  %v1509 = vadd.f32 %v296, %v1508
  %v1510 = vpop.f32.mrf.mxu0
  %1511 = vmatprep.mubr.f32.mxu0 0.0
  %1512 = vmatmul.mubr.f32.gmra.mxu0 %v528
  %v1513 = vpop.f32.mrf.mxu0
  %v1514 = vadd.f32 %v296, %v1513
  %v1515 = vpop.f32.mrf.mxu0
  %1516 = vmatprep.mubr.f32.mxu0 0.0
  %1517 = vmatmul.mubr.f32.gmra.mxu0 %v531
  %v1518 = vpop.f32.mrf.mxu0
  %v1519 = vadd.f32 %v296, %v1518
  %v1520 = vpop.f32.mrf.mxu0
  %1521 = vmatprep.mubr.f32.mxu0 0.0
  %1522 = vmatmul.mubr.f32.gmra.mxu0 %v534
  %v1523 = vpop.f32.mrf.mxu0
  %v1524 = vadd.f32 %v296, %v1523
  %v1525 = vpop.f32.mrf.mxu0
  %1526 = vmatprep.mubr.f32.mxu0 0.0
  %1527 = vmatmul.mubr.f32.gmra.mxu0 %v537
  %v1528 = vpop.f32.mrf.mxu0
  %v1529 = vadd.f32 %v296, %v1528
  %v1530 = vpop.f32.mrf.mxu0
  %1531 = vmatprep.mubr.f32.mxu0 0.0
  %1532 = vmatmul.mubr.f32.gmra.mxu0 %v540
  %v1533 = vpop.f32.mrf.mxu0
  %v1534 = vadd.f32 %v296, %v1533
  %v1535 = vpop.f32.mrf.mxu0
  %1536 = vmatprep.mubr.f32.mxu0 0.0
  %1537 = vmatmul.mubr.f32.gmra.mxu0 %v543
  %v1538 = vpop.f32.mrf.mxu0
  %v1539 = vadd.f32 %v296, %v1538
  %v1540 = vpop.f32.mrf.mxu0
  %1541 = vmatprep.mubr.f32.mxu0 0.0
  %1542 = vmatmul.mubr.f32.gmra.mxu0 %v546
  %v1543 = vpop.f32.mrf.mxu0
  %v1544 = vadd.f32 %v296, %v1543
  %v1545 = vpop.f32.mrf.mxu0
  %1546 = vmatprep.mubr.f32.mxu0 0.0
  %1547 = vmatmul.mubr.f32.gmra.mxu0 %v549
  %v1548 = vpop.f32.mrf.mxu0
  %v1549 = vadd.f32 %v296, %v1548
  %v1550 = vpop.f32.mrf.mxu0
  %1551 = vmatprep.mubr.f32.mxu0 0.0
  %1552 = vmatmul.mubr.f32.gmra.mxu0 %v552
  %v1553 = vpop.f32.mrf.mxu0
  %v1554 = vadd.f32 %v296, %v1553
  %v1555 = vpop.f32.mrf.mxu0
  %1556 = vmatprep.mubr.f32.mxu0 0.0
  %1557 = vmatmul.mubr.f32.gmra.mxu0 %v555
  %v1558 = vpop.f32.mrf.mxu0
  %v1559 = vadd.f32 %v296, %v1558
  %v1560 = vpop.f32.mrf.mxu0
  %1561 = vmatprep.mubr.f32.mxu0 0.0
  %1562 = vmatmul.mubr.f32.gmra.mxu0 %v558
  %v1563 = vpop.f32.mrf.mxu0
  %v1564 = vadd.f32 %v296, %v1563
  %v1565 = vpop.f32.mrf.mxu0
  %1566 = vmatprep.mubr.f32.mxu0 0.0
  %1567 = vmatmul.mubr.f32.gmra.mxu0 %v561
  %v1568 = vpop.f32.mrf.mxu0
  %v1569 = vadd.f32 %v296, %v1568
  %v1570 = vpop.f32.mrf.mxu0
  %1571 = vmatprep.mubr.f32.mxu0 0.0
  %1572 = vmatmul.mubr.f32.gmra.mxu0 %v564
  %v1573 = vpop.f32.mrf.mxu0
  %v1574 = vadd.f32 %v296, %v1573
  %v1575 = vpop.f32.mrf.mxu0
  %1576 = vmatprep.mubr.f32.mxu0 0.0
  %1577 = vmatmul.mubr.f32.gmra.mxu0 %v567
  %v1578 = vpop.f32.mrf.mxu0
  %v1579 = vadd.f32 %v296, %v1578
  %v1580 = vpop.f32.mrf.mxu0
  %1581 = vmatprep.mubr.f32.mxu0 0.0
  %1582 = vmatmul.mubr.f32.gmra.mxu0 %v570
  %v1583 = vpop.f32.mrf.mxu0
  %v1584 = vadd.f32 %v296, %v1583
  %v1585 = vpop.f32.mrf.mxu0
  %1586 = vmatprep.mubr.f32.mxu0 0.0
  %1587 = vmatmul.mubr.f32.gmra.mxu0 %v573
  %v1588 = vpop.f32.mrf.mxu0
  %v1589 = vadd.f32 %v296, %v1588
  %v1590 = vpop.f32.mrf.mxu0
  %1591 = vmatprep.mubr.f32.mxu0 0.0
  %1592 = vmatmul.mubr.f32.gmra.mxu0 %v576
  %v1593 = vpop.f32.mrf.mxu0
  %v1594 = vadd.f32 %v296, %v1593
  %v1595 = vpop.f32.mrf.mxu0
  %1596 = vmatprep.mubr.f32.mxu0 0.0
  %1597 = vmatmul.mubr.f32.gmra.mxu0 %v579
  %v1598 = vpop.f32.mrf.mxu0
  %v1599 = vadd.f32 %v296, %v1598
  %v1600 = vpop.f32.mrf.mxu0
  %1601 = vmatprep.mubr.f32.mxu0 0.0
  %1602 = vmatmul.mubr.f32.gmra.mxu0 %v582
  %v1603 = vpop.f32.mrf.mxu0
  %v1604 = vadd.f32 %v296, %v1603
  %v1605 = vpop.f32.mrf.mxu0
  %1606 = vmatprep.mubr.f32.mxu0 0.0
  %1607 = vmatmul.mubr.f32.gmra.mxu0 %v585
  %v1608 = vpop.f32.mrf.mxu0
  %v1609 = vadd.f32 %v296, %v1608
  %v1610 = vpop.f32.mrf.mxu0
  %1611 = vmatprep.mubr.f32.mxu0 0.0
  %1612 = vmatmul.mubr.f32.gmra.mxu0 %v588
  %v1613 = vpop.f32.mrf.mxu0
  %v1614 = vadd.f32 %v296, %v1613
  %v1615 = vpop.f32.mrf.mxu0
  %1616 = vmatprep.mubr.f32.mxu0 0.0
  %1617 = vmatmul.mubr.f32.gmra.mxu0 %v591
  %v1618 = vpop.f32.mrf.mxu0
  %v1619 = vadd.f32 %v296, %v1618
  %v1620 = vpop.f32.mrf.mxu0
  %1621 = vmatprep.mubr.f32.mxu0 0.0
  %1622 = vmatmul.mubr.f32.gmra.mxu0 %v594
  %v1623 = vpop.f32.mrf.mxu0
  %v1624 = vadd.f32 %v296, %v1623
  %v1625 = vpop.f32.mrf.mxu0
  %1626 = vmatprep.mubr.f32.mxu0 0.0
  %1627 = vmatmul.mubr.f32.gmra.mxu0 %v597
  %v1628 = vpop.f32.mrf.mxu0
  %v1629 = vadd.f32 %v296, %v1628
  %v1630 = vpop.f32.mrf.mxu0
  %1631 = vmatprep.mubr.f32.mxu0 0.0
  %1632 = vmatmul.mubr.f32.gmra.mxu0 %v600
  %v1633 = vpop.f32.mrf.mxu0
  %v1634 = vadd.f32 %v296, %v1633
  %v1635 = vpop.f32.mrf.mxu0
  %1636 = vmatprep.mubr.f32.mxu0 0.0
  %1637 = vmatmul.mubr.f32.gmra.mxu0 %v603
  %v1638 = vpop.f32.mrf.mxu0
  %v1639 = vadd.f32 %v296, %v1638
  %v1640 = vpop.f32.mrf.mxu0
  %1641 = vmatprep.mubr.f32.mxu0 0.0
  %1642 = vmatmul.mubr.f32.gmra.mxu0 %v606
  %v1643 = vpop.f32.mrf.mxu0
  %v1644 = vadd.f32 %v296, %v1643
  %v1645 = vpop.f32.mrf.mxu0
  %1646 = vmatprep.mubr.f32.mxu0 0.0
  %1647 = vmatmul.mubr.f32.gmra.mxu0 %v609
  %v1648 = vpop.f32.mrf.mxu0
  %v1649 = vadd.f32 %v296, %v1648
  %v1650 = vpop.f32.mrf.mxu0
  %1651 = vmatprep.mubr.f32.mxu0 0.0
  %1652 = vmatmul.mubr.f32.gmra.mxu0 %v612
  %v1653 = vpop.f32.mrf.mxu0
  %v1654 = vadd.f32 %v296, %v1653
  %v1655 = vpop.f32.mrf.mxu0
  %1656 = vmatprep.mubr.f32.mxu0 0.0
  %1657 = vmatmul.mubr.f32.gmra.mxu0 %v615
  %v1658 = vpop.f32.mrf.mxu0
  %v1659 = vadd.f32 %v296, %v1658
  %v1660 = vpop.f32.mrf.mxu0
  %1661 = vmatprep.mubr.f32.mxu0 0.0
  %1662 = vmatmul.mubr.f32.gmra.mxu0 %v618
  %v1663 = vpop.f32.mrf.mxu0
  %v1664 = vadd.f32 %v296, %v1663
  %v1665 = vpop.f32.mrf.mxu0
  %1666 = vmatprep.mubr.f32.mxu0 0.0
  %1667 = vmatmul.mubr.f32.gmra.mxu0 %v621
  %v1668 = vpop.f32.mrf.mxu0
  %v1669 = vadd.f32 %v296, %v1668
  %v1670 = vpop.f32.mrf.mxu0
  %1671 = vmatprep.mubr.f32.mxu0 0.0
  %1672 = vmatmul.mubr.f32.gmra.mxu0 %v624
  %v1673 = vpop.f32.mrf.mxu0
  %v1674 = vadd.f32 %v296, %v1673
  %v1675 = vpop.f32.mrf.mxu0
  %1676 = vmatprep.mubr.f32.mxu0 0.0
  %1677 = vmatmul.mubr.f32.gmra.mxu0 %v627
  %v1678 = vpop.f32.mrf.mxu0
  %v1679 = vadd.f32 %v296, %v1678
  %v1680 = vpop.f32.mrf.mxu0
  %1681 = vmatprep.mubr.f32.mxu0 0.0
  %1682 = vmatmul.mubr.f32.gmra.mxu0 %v630
  %v1683 = vpop.f32.mrf.mxu0
  %v1684 = vadd.f32 %v296, %v1683
  %v1685 = vpop.f32.mrf.mxu0
  %1686 = vmatprep.mubr.f32.mxu0 0.0
  %1687 = vmatmul.mubr.f32.gmra.mxu0 %v633
  %v1688 = vpop.f32.mrf.mxu0
  %v1689 = vadd.f32 %v296, %v1688
  %v1690 = vpop.f32.mrf.mxu0
  %1691 = vmatprep.mubr.f32.mxu0 0.0
  %1692 = vmatmul.mubr.f32.gmra.mxu0 %v636
  %v1693 = vpop.f32.mrf.mxu0
  %v1694 = vadd.f32 %v296, %v1693
  %v1695 = vpop.f32.mrf.mxu0
  %1696 = vmatprep.mubr.f32.mxu0 0.0
  %1697 = vmatmul.mubr.f32.gmra.mxu0 %v639
  %v1698 = vpop.f32.mrf.mxu0
  %v1699 = vadd.f32 %v296, %v1698
  %v1700 = vpop.f32.mrf.mxu0
  %1701 = vmatprep.mubr.f32.mxu0 0.0
  %1702 = vmatmul.mubr.f32.gmra.mxu0 %v642
  %v1703 = vpop.f32.mrf.mxu0
  %v1704 = vadd.f32 %v296, %v1703
  %v1705 = vpop.f32.mrf.mxu0
  %1706 = vmatprep.mubr.f32.mxu0 0.0
  %1707 = vmatmul.mubr.f32.gmra.mxu0 %v645
  %v1708 = vpop.f32.mrf.mxu0
  %v1709 = vadd.f32 %v296, %v1708
  %v1710 = vpop.f32.mrf.mxu0
  %1711 = vmatprep.mubr.f32.mxu0 0.0
  %1712 = vmatmul.mubr.f32.gmra.mxu0 %v648
  %v1713 = vpop.f32.mrf.mxu0
  %v1714 = vadd.f32 %v296, %v1713
  %v1715 = vpop.f32.mrf.mxu0
  %1716 = vmatprep.mubr.f32.mxu0 0.0
  %1717 = vmatmul.mubr.f32.gmra.mxu0 %v651
  %v1718 = vpop.f32.mrf.mxu0
  %v1719 = vadd.f32 %v296, %v1718
  %v1720 = vpop.f32.mrf.mxu0
  %1721 = vmatprep.mubr.f32.mxu0 0.0
  %1722 = vmatmul.mubr.f32.gmra.mxu0 %v654
  %v1723 = vpop.f32.mrf.mxu0
  %v1724 = vadd.f32 %v296, %v1723
  %v1725 = vpop.f32.mrf.mxu0
  %1726 = vmatprep.mubr.f32.mxu0 0.0
  %1727 = vmatmul.mubr.f32.gmra.mxu0 %v657
  %v1728 = vpop.f32.mrf.mxu0
  %v1729 = vadd.f32 %v296, %v1728
  %v1730 = vpop.f32.mrf.mxu0
  %1731 = vmatprep.mubr.f32.mxu0 0.0
  %1732 = vmatmul.mubr.f32.gmra.mxu0 %v660
  %v1733 = vpop.f32.mrf.mxu0
  %v1734 = vadd.f32 %v296, %v1733
  %v1735 = vpop.f32.mrf.mxu0
  %1736 = vmatprep.mubr.f32.mxu0 0.0
  %1737 = vmatmul.mubr.f32.gmra.mxu0 %v663
  %v1738 = vpop.f32.mrf.mxu0
  %v1739 = vadd.f32 %v296, %v1738
  %v1740 = vpop.f32.mrf.mxu0
  %1741 = vmatprep.mubr.f32.mxu0 0.0
  %1742 = vmatmul.mubr.f32.gmra.mxu0 %v666
  %v1743 = vpop.f32.mrf.mxu0
  %v1744 = vadd.f32 %v296, %v1743
  %v1745 = vpop.f32.mrf.mxu0
  %1746 = vmatprep.mubr.f32.mxu0 0.0
  %1747 = vmatmul.mubr.f32.gmra.mxu0 %v669
  %v1748 = vpop.f32.mrf.mxu0
  %v1749 = vadd.f32 %v296, %v1748
  %v1750 = vpop.f32.mrf.mxu0
  %1751 = vmatprep.mubr.f32.mxu0 0.0
  %1752 = vmatmul.mubr.f32.gmra.mxu0 %v672
  %v1753 = vpop.f32.mrf.mxu0
  %v1754 = vadd.f32 %v296, %v1753
  %v1755 = vpop.f32.mrf.mxu0
  %1756 = vmatprep.mubr.f32.mxu0 0.0
  %1757 = vmatmul.mubr.f32.gmra.mxu0 %v675
  %v1758 = vpop.f32.mrf.mxu0
  %v1759 = vadd.f32 %v296, %v1758
  %v1760 = vpop.f32.mrf.mxu0
  %1761 = vmatprep.mubr.f32.mxu0 0.0
  %1762 = vmatmul.mubr.f32.gmra.mxu0 %v678
  %v1763 = vpop.f32.mrf.mxu0
  %v1764 = vadd.f32 %v296, %v1763
  %v1765 = vpop.f32.mrf.mxu0
  %1766 = vmatprep.mubr.f32.mxu0 0.0
  %1767 = vmatmul.mubr.f32.gmra.mxu0 %v681
  %v1768 = vpop.f32.mrf.mxu0
  %v1769 = vadd.f32 %v296, %v1768
  %v1770 = vpop.f32.mrf.mxu0
  %1771 = vmatprep.mubr.f32.mxu0 0.0
  %1772 = vmatmul.mubr.f32.gmra.mxu0 %v684
  %v1773 = vpop.f32.mrf.mxu0
  %v1774 = vadd.f32 %v296, %v1773
  %v1775 = vpop.f32.mrf.mxu0
  %1776 = vmatprep.mubr.f32.mxu0 0.0
  %1777 = vmatmul.mubr.f32.gmra.mxu0 %v687
  %v1778 = vpop.f32.mrf.mxu0
  %v1779 = vadd.f32 %v296, %v1778
  %v1780 = vpop.f32.mrf.mxu0
  %1781 = vmatprep.mubr.f32.mxu0 0.0
  %1782 = vmatmul.mubr.f32.gmra.mxu0 %v690
  %v1783 = vpop.f32.mrf.mxu0
  %v1784 = vadd.f32 %v296, %v1783
  %v1785 = vpop.f32.mrf.mxu0
  %1786 = vmatprep.mubr.f32.mxu0 0.0
  %1787 = vmatmul.mubr.f32.gmra.mxu0 %v693
  %v1788 = vpop.f32.mrf.mxu0
  %v1789 = vadd.f32 %v296, %v1788
  %v1790 = vpop.f32.mrf.mxu0
  %1791 = vmatprep.mubr.f32.mxu0 0.0
  %1792 = vmatmul.mubr.f32.gmra.mxu0 %v696
  %v1793 = vpop.f32.mrf.mxu0
  %v1794 = vadd.f32 %v296, %v1793
  %v1795 = vpop.f32.mrf.mxu0
  %1796 = vmatprep.mubr.f32.mxu0 0.0
  %1797 = vmatmul.mubr.f32.gmra.mxu0 %v699
  %v1798 = vpop.f32.mrf.mxu0
  %v1799 = vadd.f32 %v296, %v1798
  %v1800 = vpop.f32.mrf.mxu0
  %1801 = vmatprep.mubr.f32.mxu0 0.0
  %1802 = vmatmul.mubr.f32.gmra.mxu0 %v702
  %v1803 = vpop.f32.mrf.mxu0
  %v1804 = vadd.f32 %v296, %v1803
  %v1805 = vpop.f32.mrf.mxu0
  %1806 = vmatprep.mubr.f32.mxu0 0.0
  %1807 = vmatmul.mubr.f32.gmra.mxu0 %v705
  %v1808 = vpop.f32.mrf.mxu0
  %v1809 = vadd.f32 %v296, %v1808
  %v1810 = vpop.f32.mrf.mxu0
  %1811 = vmatprep.mubr.f32.mxu0 0.0
  %1812 = vmatmul.mubr.f32.gmra.mxu0 %v708
  %v1813 = vpop.f32.mrf.mxu0
  %v1814 = vadd.f32 %v296, %v1813
  %v1815 = vpop.f32.mrf.mxu0
  %1816 = vmatprep.mubr.f32.mxu0 0.0
  %1817 = vmatmul.mubr.f32.gmra.mxu0 %v711
  %v1818 = vpop.f32.mrf.mxu0
  %v1819 = vadd.f32 %v296, %v1818
  %v1820 = vpop.f32.mrf.mxu0
  %1821 = vmatprep.mubr.f32.mxu0 0.0
  %1822 = vmatmul.mubr.f32.gmra.mxu0 %v714
  %v1823 = vpop.f32.mrf.mxu0
  %v1824 = vadd.f32 %v296, %v1823
  %v1825 = vpop.f32.mrf.mxu0
  %1826 = vmatprep.mubr.f32.mxu0 0.0
  %1827 = vmatmul.mubr.f32.gmra.mxu0 %v717
  %v1828 = vpop.f32.mrf.mxu0
  %v1829 = vadd.f32 %v296, %v1828
  %v1830 = vpop.f32.mrf.mxu0
  %1831 = vmatprep.mubr.f32.mxu0 0.0
  %1832 = vmatmul.mubr.f32.gmra.mxu0 %v720
  %v1833 = vpop.f32.mrf.mxu0
  %v1834 = vadd.f32 %v296, %v1833
  %v1835 = vpop.f32.mrf.mxu0
  %1836 = vmatprep.mubr.f32.mxu0 0.0
  %1837 = vmatmul.mubr.f32.gmra.mxu0 %v723
  %v1838 = vpop.f32.mrf.mxu0
  %v1839 = vadd.f32 %v296, %v1838
  %v1840 = vpop.f32.mrf.mxu0
  %1841 = vmatprep.mubr.f32.mxu0 0.0
  %1842 = vmatmul.mubr.f32.gmra.mxu0 %v726
  %v1843 = vpop.f32.mrf.mxu0
  %v1844 = vadd.f32 %v296, %v1843
  %v1845 = vpop.f32.mrf.mxu0
  %1846 = vmatprep.mubr.f32.mxu0 0.0
  %1847 = vmatmul.mubr.f32.gmra.mxu0 %v729
  %v1848 = vpop.f32.mrf.mxu0
  %v1849 = vadd.f32 %v296, %v1848
  %v1850 = vpop.f32.mrf.mxu0
  %1851 = vmatprep.mubr.f32.mxu0 0.0
  %1852 = vmatmul.mubr.f32.gmra.mxu0 %v732
  %v1853 = vpop.f32.mrf.mxu0
  %v1854 = vadd.f32 %v296, %v1853
  %v1855 = vpop.f32.mrf.mxu0
  %1856 = vmatprep.mubr.f32.mxu0 0.0
  %1857 = vmatmul.mubr.f32.gmra.mxu0 %v735
  %v1858 = vpop.f32.mrf.mxu0
  %v1859 = vadd.f32 %v296, %v1858
  %v1860 = vpop.f32.mrf.mxu0
  %1861 = vmatprep.mubr.f32.mxu0 0.0
  %1862 = vmatmul.mubr.f32.gmra.mxu0 %v738
  %v1863 = vpop.f32.mrf.mxu0
  %v1864 = vadd.f32 %v296, %v1863
  %v1865 = vpop.f32.mrf.mxu0
  %1866 = vmatprep.mubr.f32.mxu0 0.0
  %1867 = vmatmul.mubr.f32.gmra.mxu0 %v741
  %v1868 = vpop.f32.mrf.mxu0
  %v1869 = vadd.f32 %v296, %v1868
  %v1870 = vpop.f32.mrf.mxu0
  %1871 = vmatprep.mubr.f32.mxu0 0.0
  %1872 = vmatmul.mubr.f32.gmra.mxu0 %v744
  %v1873 = vpop.f32.mrf.mxu0
  %v1874 = vadd.f32 %v296, %v1873
  %v1875 = vpop.f32.mrf.mxu0
  %1876 = vmatprep.mubr.f32.mxu0 0.0
  %1877 = vmatmul.mubr.f32.gmra.mxu0 %v747
  %v1878 = vpop.f32.mrf.mxu0
  %v1879 = vadd.f32 %v296, %v1878
  %v1880 = vpop.f32.mrf.mxu0
  %1881 = vmatprep.mubr.f32.mxu0 0.0
  %1882 = vmatmul.mubr.f32.gmra.mxu0 %v750
  %v1883 = vpop.f32.mrf.mxu0
  %v1884 = vadd.f32 %v296, %v1883
  %v1885 = vpop.f32.mrf.mxu0
  %1886 = vmatprep.mubr.f32.mxu0 0.0
  %1887 = vmatmul.mubr.f32.gmra.mxu0 %v753
  %v1888 = vpop.f32.mrf.mxu0
  %v1889 = vadd.f32 %v296, %v1888
  %v1890 = vpop.f32.mrf.mxu0
  %1891 = vmatprep.mubr.f32.mxu0 0.0
  %1892 = vmatmul.mubr.f32.gmra.mxu0 %v756
  %v1893 = vpop.f32.mrf.mxu0
  %v1894 = vadd.f32 %v296, %v1893
  %v1895 = vpop.f32.mrf.mxu0
  %1896 = vmatprep.mubr.f32.mxu0 0.0
  %1897 = vmatmul.mubr.f32.gmra.mxu0 %v759
  %v1898 = vpop.f32.mrf.mxu0
  %v1899 = vadd.f32 %v296, %v1898
  %v1900 = vpop.f32.mrf.mxu0
  %1901 = vmatprep.mubr.f32.mxu0 0.0
  %1902 = vmatmul.mubr.f32.gmra.mxu0 %v762
  %v1903 = vpop.f32.mrf.mxu0
  %v1904 = vadd.f32 %v296, %v1903
  %v1905 = vpop.f32.mrf.mxu0
  %1906 = vmatprep.mubr.f32.mxu0 0.0
  %1907 = vmatmul.mubr.f32.gmra.mxu0 %v765
  %v1908 = vpop.f32.mrf.mxu0
  %v1909 = vadd.f32 %v296, %v1908
  %v1910 = vpop.f32.mrf.mxu0
  %1911 = vmatprep.mubr.f32.mxu0 0.0
  %1912 = vmatmul.mubr.f32.gmra.mxu0 %v768
  %v1913 = vpop.f32.mrf.mxu0
  %v1914 = vadd.f32 %v296, %v1913
  %v1915 = vpop.f32.mrf.mxu0
  %1916 = vmatprep.mubr.f32.mxu0 0.0
  %1917 = vmatmul.mubr.f32.gmra.mxu0 %v771
  %v1918 = vpop.f32.mrf.mxu0
  %v1919 = vadd.f32 %v296, %v1918
  %v1920 = vpop.f32.mrf.mxu0
  %1921 = vmatprep.mubr.f32.mxu0 0.0
  %1922 = vmatmul.mubr.f32.gmra.mxu0 %v774
  %v1923 = vpop.f32.mrf.mxu0
  %v1924 = vadd.f32 %v296, %v1923
  %v1925 = vpop.f32.mrf.mxu0
  %1926 = vmatprep.mubr.f32.mxu0 0.0
  %1927 = vmatmul.mubr.f32.gmra.mxu0 %v777
  %v1928 = vpop.f32.mrf.mxu0
  %v1929 = vadd.f32 %v296, %v1928
  %v1930 = vpop.f32.mrf.mxu0
  %1931 = vmatprep.mubr.f32.mxu0 0.0
  %1932 = vmatmul.mubr.f32.gmra.mxu0 %v780
  %v1933 = vpop.f32.mrf.mxu0
  %v1934 = vadd.f32 %v296, %v1933
  %v1935 = vpop.f32.mrf.mxu0
  %1936 = vmatprep.mubr.f32.mxu0 0.0
  %1937 = vmatmul.mubr.f32.gmra.mxu0 %v783
  %v1938 = vpop.f32.mrf.mxu0
  %v1939 = vadd.f32 %v296, %v1938
  %v1940 = vpop.f32.mrf.mxu0
  %1941 = vmatprep.mubr.f32.mxu0 0.0
  %1942 = vmatmul.mubr.f32.gmra.mxu0 %v786
  %v1943 = vpop.f32.mrf.mxu0
  %v1944 = vadd.f32 %v296, %v1943
  %v1945 = vpop.f32.mrf.mxu0
  %1946 = vmatprep.mubr.f32.mxu0 0.0
  %1947 = vmatmul.mubr.f32.gmra.mxu0 %v789
  %v1948 = vpop.f32.mrf.mxu0
  %v1949 = vadd.f32 %v296, %v1948
  %v1950 = vpop.f32.mrf.mxu0
  %1951 = vmatprep.mubr.f32.mxu0 0.0
  %1952 = vmatmul.mubr.f32.gmra.mxu0 %v792
  %v1953 = vpop.f32.mrf.mxu0
  %v1954 = vadd.f32 %v296, %v1953
  %v1955 = vpop.f32.mrf.mxu0
  %1956 = vmatprep.mubr.f32.mxu0 0.0
  %1957 = vmatmul.mubr.f32.gmra.mxu0 %v795
  %v1958 = vpop.f32.mrf.mxu0
  %v1959 = vadd.f32 %v296, %v1958
  %v1960 = vpop.f32.mrf.mxu0
  %1961 = vmatprep.mubr.f32.mxu0 0.0
  %1962 = vmatmul.mubr.f32.gmra.mxu0 %v798
  %v1963 = vpop.f32.mrf.mxu0
  %v1964 = vadd.f32 %v296, %v1963
  %v1965 = vpop.f32.mrf.mxu0
  %1966 = vmatprep.mubr.f32.mxu0 0.0
  %1967 = vmatmul.mubr.f32.gmra.mxu0 %v801
  %v1968 = vpop.f32.mrf.mxu0
  %v1969 = vadd.f32 %v296, %v1968
  %v1970 = vpop.f32.mrf.mxu0
  %1971 = vmatprep.mubr.f32.mxu0 0.0
  %1972 = vmatmul.mubr.f32.gmra.mxu0 %v804
  %v1973 = vpop.f32.mrf.mxu0
  %v1974 = vadd.f32 %v296, %v1973
  %v1975 = vpop.f32.mrf.mxu0
  %1976 = vmatprep.mubr.f32.mxu0 0.0
  %1977 = vmatmul.mubr.f32.gmra.mxu0 %v807
  %v1978 = vpop.f32.mrf.mxu0
  %v1979 = vadd.f32 %v296, %v1978
  %v1980 = vpop.f32.mrf.mxu0
  %1981 = vmatprep.mubr.f32.mxu0 0.0
  %1982 = vmatmul.mubr.f32.gmra.mxu0 %v810
  %v1983 = vpop.f32.mrf.mxu0
  %v1984 = vadd.f32 %v296, %v1983
  %v1985 = vpop.f32.mrf.mxu0
  %1986 = vmatprep.mubr.f32.mxu0 0.0
  %1987 = vmatmul.mubr.f32.gmra.mxu0 %v813
  %v1988 = vpop.f32.mrf.mxu0
  %v1989 = vadd.f32 %v296, %v1988
  %v1990 = vpop.f32.mrf.mxu0
  %1991 = vmatprep.mubr.f32.mxu0 0.0
  %1992 = vmatmul.mubr.f32.gmra.mxu0 %v816
  %v1993 = vpop.f32.mrf.mxu0
  %v1994 = vadd.f32 %v296, %v1993
  %v1995 = vpop.f32.mrf.mxu0
  %1996 = vmatprep.mubr.f32.mxu0 0.0
  %1997 = vmatmul.mubr.f32.gmra.mxu0 %v819
  %v1998 = vpop.f32.mrf.mxu0
  %v1999 = vadd.f32 %v296, %v1998
  %v2000 = vpop.f32.mrf.mxu0
  %2001 = vmatprep.mubr.f32.mxu0 0.0
  %2002 = vmatmul.mubr.f32.gmra.mxu0 %v822
  %v2003 = vpop.f32.mrf.mxu0
  %v2004 = vadd.f32 %v296, %v2003
  %v2005 = vpop.f32.mrf.mxu0
  %2006 = vmatprep.mubr.f32.mxu0 0.0
  %2007 = vmatmul.mubr.f32.gmra.mxu0 %v825
  %v2008 = vpop.f32.mrf.mxu0
  %v2009 = vadd.f32 %v296, %v2008
  %v2010 = vpop.f32.mrf.mxu0
  %2011 = vmatprep.mubr.f32.mxu0 0.0
  %2012 = vmatmul.mubr.f32.gmra.mxu0 %v828
  %v2013 = vpop.f32.mrf.mxu0
  %v2014 = vadd.f32 %v296, %v2013
  %v2015 = vpop.f32.mrf.mxu0
  %2016 = vmatprep.mubr.f32.mxu0 0.0
  %2017 = vmatmul.mubr.f32.gmra.mxu0 %v831
  %v2018 = vpop.f32.mrf.mxu0
  %v2019 = vadd.f32 %v296, %v2018
  %v2020 = vpop.f32.mrf.mxu0
  %2021 = vmatprep.mubr.f32.mxu0 0.0
  %2022 = vmatmul.mubr.f32.gmra.mxu0 %v834
  %v2023 = vpop.f32.mrf.mxu0
  %v2024 = vadd.f32 %v296, %v2023
  %v2025 = vpop.f32.mrf.mxu0
  %2026 = vmatprep.mubr.f32.mxu0 0.0
  %2027 = vmatmul.mubr.f32.gmra.mxu0 %v837
  %v2028 = vpop.f32.mrf.mxu0
  %v2029 = vadd.f32 %v296, %v2028
  %v2030 = vpop.f32.mrf.mxu0
  %2031 = vmatprep.mubr.f32.mxu0 0.0
  %2032 = vmatmul.mubr.f32.gmra.mxu0 %v840
  %v2033 = vpop.f32.mrf.mxu0
  %v2034 = vadd.f32 %v296, %v2033
  %v2035 = vpop.f32.mrf.mxu0
  %2036 = vmatprep.mubr.f32.mxu0 0.0
  %2037 = vmatmul.mubr.f32.gmra.mxu0 %v843
  %v2038 = vpop.f32.mrf.mxu0
  %v2039 = vadd.f32 %v296, %v2038
  %v2040 = vpop.f32.mrf.mxu0
  %2041 = vmatprep.mubr.f32.mxu0 0.0
  %2042 = vmatmul.mubr.f32.gmra.mxu0 %v846
  %v2043 = vpop.f32.mrf.mxu0
  %v2044 = vadd.f32 %v296, %v2043
  %v2045 = vpop.f32.mrf.mxu0
  %2046 = vmatprep.mubr.f32.mxu0 0.0
  %2047 = vmatmul.mubr.f32.gmra.mxu0 %v849
  %v2048 = vpop.f32.mrf.mxu0
  %v2049 = vadd.f32 %v296, %v2048
  %v2050 = vpop.f32.mrf.mxu0
  %2051 = vmatprep.mubr.f32.mxu0 0.0
  %2052 = vmatmul.mubr.f32.gmra.mxu0 %v852
  %v2053 = vpop.f32.mrf.mxu0
  %v2054 = vadd.f32 %v296, %v2053
  %v2055 = vpop.f32.mrf.mxu0
  %2056 = vmatprep.mubr.f32.mxu0 0.0
  %2057 = vmatmul.mubr.f32.gmra.mxu0 %v855
  %v2058 = vpop.f32.mrf.mxu0
  %v2059 = vadd.f32 %v296, %v2058
  %v2060 = vpop.f32.mrf.mxu0
  %2061 = vmatprep.mubr.f32.mxu0 0.0
  %2062 = vmatmul.mubr.f32.gmra.mxu0 %v858
  %v2063 = vpop.f32.mrf.mxu0
  %v2064 = vadd.f32 %v296, %v2063
  %v2065 = vpop.f32.mrf.mxu0
  %2066 = vmatprep.mubr.f32.mxu0 0.0
  %2067 = vmatmul.mubr.f32.gmra.mxu0 %v861
  %v2068 = vpop.f32.mrf.mxu0
  %v2069 = vadd.f32 %v296, %v2068
  %v2070 = vpop.f32.mrf.mxu0
  %2071 = vmatprep.mubr.f32.mxu0 0.0
  %2072 = vmatmul.mubr.f32.gmra.mxu0 %v864
  %v2073 = vpop.f32.mrf.mxu0
  %v2074 = vadd.f32 %v296, %v2073
  %v2075 = vpop.f32.mrf.mxu0
  %2076 = vmatprep.mubr.f32.mxu0 0.0
  %2077 = vmatmul.mubr.f32.gmra.mxu0 %v867
  %v2078 = vpop.f32.mrf.mxu0
  %v2079 = vadd.f32 %v296, %v2078
  %v2080 = vpop.f32.mrf.mxu0
  %2081 = vmatprep.mubr.f32.mxu0 0.0
  %2082 = vmatmul.mubr.f32.gmra.mxu0 %v870
  %v2083 = vpop.f32.mrf.mxu0
  %v2084 = vadd.f32 %v296, %v2083
  %v2085 = vpop.f32.mrf.mxu0
  %2086 = vmatprep.mubr.f32.mxu0 0.0
  %2087 = vmatmul.mubr.f32.gmra.mxu0 %v873
  %v2088 = vpop.f32.mrf.mxu0
  %v2089 = vadd.f32 %v296, %v2088
  %v2090 = vpop.f32.mrf.mxu0
  %2091 = vmatprep.mubr.f32.mxu0 0.0
  %2092 = vmatmul.mubr.f32.gmra.mxu0 %v876
  %v2093 = vpop.f32.mrf.mxu0
  %v2094 = vadd.f32 %v296, %v2093
  %v2095 = vpop.f32.mrf.mxu0
  %2096 = vmatprep.mubr.f32.mxu0 0.0
  %2097 = vmatmul.mubr.f32.gmra.mxu0 %v879
  %v2098 = vpop.f32.mrf.mxu0
  %v2099 = vadd.f32 %v296, %v2098
  %v2100 = vpop.f32.mrf.mxu0
  %2101 = vmatprep.mubr.f32.mxu0 0.0
  %2102 = vmatmul.mubr.f32.gmra.mxu0 %v882
  %v2103 = vpop.f32.mrf.mxu0
  %v2104 = vadd.f32 %v296, %v2103
  %v2105 = vpop.f32.mrf.mxu0
  %2106 = vmatprep.mubr.f32.mxu0 0.0
  %2107 = vmatmul.mubr.f32.gmra.mxu0 %v885
  %v2108 = vpop.f32.mrf.mxu0
  %v2109 = vadd.f32 %v296, %v2108
  %v2110 = vpop.f32.mrf.mxu0
  %2111 = vmatprep.mubr.f32.mxu0 0.0
  %2112 = vmatmul.mubr.f32.gmra.mxu0 %v888
  %v2113 = vpop.f32.mrf.mxu0
  %v2114 = vadd.f32 %v296, %v2113
  %v2115 = vpop.f32.mrf.mxu0
  %2116 = vmatprep.mubr.f32.mxu0 0.0
  %2117 = vmatmul.mubr.f32.gmra.mxu0 %v891
  %v2118 = vpop.f32.mrf.mxu0
  %v2119 = vadd.f32 %v296, %v2118
  %v2120 = vpop.f32.mrf.mxu0
  %2121 = vmatprep.mubr.f32.mxu0 0.0
  %2122 = vmatmul.mubr.f32.gmra.mxu0 %v894
  %v2123 = vpop.f32.mrf.mxu0
  %v2124 = vadd.f32 %v296, %v2123
  %v2125 = vpop.f32.mrf.mxu0
  %2126 = vmatprep.mubr.f32.mxu0 0.0
  %2127 = vmatmul.mubr.f32.gmra.mxu0 %v897
  %v2128 = vpop.f32.mrf.mxu0
  %v2129 = vadd.f32 %v296, %v2128
  %v2130 = vpop.f32.mrf.mxu0
  %2131 = vmatprep.mubr.f32.mxu0 0.0
  %2132 = vmatmul.mubr.f32.gmra.mxu0 %v900
  %v2133 = vpop.f32.mrf.mxu0
  %v2134 = vadd.f32 %v296, %v2133
  %v2135 = vpop.f32.mrf.mxu0
  %2136 = vmatprep.mubr.f32.mxu0 0.0
  %2137 = vmatmul.mubr.f32.gmra.mxu0 %v903
  %v2138 = vpop.f32.mrf.mxu0
  %v2139 = vadd.f32 %v296, %v2138
  %v2140 = vpop.f32.mrf.mxu0
  %2141 = vmatprep.mubr.f32.mxu0 0.0
  %2142 = vmatmul.mubr.f32.gmra.mxu0 %v906
  %v2143 = vpop.f32.mrf.mxu0
  %v2144 = vadd.f32 %v296, %v2143
  %v2145 = vpop.f32.mrf.mxu0
  %2146 = vmatprep.mubr.f32.mxu0 0.0
  %2147 = vmatmul.mubr.f32.gmra.mxu0 %v909
  %v2148 = vpop.f32.mrf.mxu0
  %v2149 = vadd.f32 %v296, %v2148
  %v2150 = vpop.f32.mrf.mxu0
  %2151 = vmatprep.mubr.f32.mxu0 0.0
  %2152 = vmatmul.mubr.f32.gmra.mxu0 %v912
  %v2153 = vpop.f32.mrf.mxu0
  %v2154 = vadd.f32 %v296, %v2153
  %v2155 = vpop.f32.mrf.mxu0
  %2156 = vmatprep.mubr.f32.mxu0 0.0
  %2157 = vmatmul.mubr.f32.gmra.mxu0 %v915
  %v2158 = vpop.f32.mrf.mxu0
  %v2159 = vadd.f32 %v296, %v2158
  %v2160 = vpop.f32.mrf.mxu0
  %2161 = vmatprep.mubr.f32.mxu0 0.0
  %2162 = vmatmul.mubr.f32.gmra.mxu0 %v918
  %v2163 = vpop.f32.mrf.mxu0
  %v2164 = vadd.f32 %v296, %v2163
  %v2165 = vpop.f32.mrf.mxu0
  %2166 = vmatprep.mubr.f32.mxu0 0.0
  %2167 = vmatmul.mubr.f32.gmra.mxu0 %v921
  %v2168 = vpop.f32.mrf.mxu0
  %v2169 = vadd.f32 %v296, %v2168
  %v2170 = vpop.f32.mrf.mxu0
  %2171 = vmatprep.mubr.f32.mxu0 0.0
  %2172 = vmatmul.mubr.f32.gmra.mxu0 %v924
  %v2173 = vpop.f32.mrf.mxu0
  %v2174 = vadd.f32 %v296, %v2173
  %v2175 = vpop.f32.mrf.mxu0
  %2176 = vmatprep.mubr.f32.mxu0 0.0
  %2177 = vmatmul.mubr.f32.gmra.mxu0 %v927
  %v2178 = vpop.f32.mrf.mxu0
  %v2179 = vadd.f32 %v296, %v2178
  %v2180 = vpop.f32.mrf.mxu0
  %2181 = vmatprep.mubr.f32.mxu0 0.0
  %2182 = vmatmul.mubr.f32.gmra.mxu0 %v930
  %v2183 = vpop.f32.mrf.mxu0
  %v2184 = vadd.f32 %v296, %v2183
  %v2185 = vpop.f32.mrf.mxu0
  %2186 = vmatprep.mubr.f32.mxu0 0.0
  %2187 = vmatmul.mubr.f32.gmra.mxu0 %v933
  %v2188 = vpop.f32.mrf.mxu0
  %v2189 = vadd.f32 %v296, %v2188
  %v2190 = vpop.f32.mrf.mxu0
  %2191 = vmatprep.mubr.f32.mxu0 0.0
  %2192 = vmatmul.mubr.f32.gmra.mxu0 %v936
  %v2193 = vpop.f32.mrf.mxu0
  %v2194 = vadd.f32 %v296, %v2193
  %v2195 = vpop.f32.mrf.mxu0
  %2196 = vmatprep.mubr.f32.mxu0 0.0
  %2197 = vmatmul.mubr.f32.gmra.mxu0 %v939
  %v2198 = vpop.f32.mrf.mxu0
  %v2199 = vadd.f32 %v296, %v2198
  %v2200 = vpop.f32.mrf.mxu0
  %2201 = vmatprep.mubr.f32.mxu0 0.0
  %2202 = vmatmul.mubr.f32.gmra.mxu0 %v942
  %v2203 = vpop.f32.mrf.mxu0
  %v2204 = vadd.f32 %v296, %v2203
  %v2205 = vpop.f32.mrf.mxu0
  %2206 = vmatprep.mubr.f32.mxu0 0.0
  %2207 = vmatmul.mubr.f32.gmra.mxu0 %v945
  %v2208 = vpop.f32.mrf.mxu0
  %v2209 = vadd.f32 %v296, %v2208
  %v2210 = vpop.f32.mrf.mxu0
  %2211 = vmatprep.mubr.f32.mxu0 0.0
  %2212 = vmatmul.mubr.f32.gmra.mxu0 %v948
  %v2213 = vpop.f32.mrf.mxu0
  %v2214 = vadd.f32 %v296, %v2213
  %v2215 = vpop.f32.mrf.mxu0
  %2216 = vmatprep.mubr.f32.mxu0 0.0
  %2217 = vmatmul.mubr.f32.gmra.mxu0 %v951
  %v2218 = vpop.f32.mrf.mxu0
  %v2219 = vadd.f32 %v296, %v2218
  %v2220 = vpop.f32.mrf.mxu0
  %2221 = vmatprep.mubr.f32.mxu0 0.0
  %2222 = vmatmul.mubr.f32.gmra.mxu0 %v954
  %v2223 = vpop.f32.mrf.mxu0
  %v2224 = vadd.f32 %v296, %v2223
  %v2225 = vpop.f32.mrf.mxu0
  %2226 = vmatprep.mubr.f32.mxu0 0.0
  %2227 = vmatmul.mubr.f32.gmra.mxu0 %v957
  %v2228 = vpop.f32.mrf.mxu0
  %v2229 = vadd.f32 %v296, %v2228
  %v2230 = vpop.f32.mrf.mxu0
  %2231 = vmatprep.mubr.f32.mxu0 0.0
  %2232 = vmatmul.mubr.f32.gmra.mxu0 %v960
  %v2233 = vpop.f32.mrf.mxu0
  %v2234 = vadd.f32 %v296, %v2233
  %v2235 = vpop.f32.mrf.mxu0
  %2236 = vmatprep.mubr.f32.mxu0 0.0
  %2237 = vmatmul.mubr.f32.gmra.mxu0 %v963
  %v2238 = vpop.f32.mrf.mxu0
  %v2239 = vadd.f32 %v296, %v2238
  %v2240 = vpop.f32.mrf.mxu0
  %2241 = vmatprep.mubr.f32.mxu0 0.0
  %2242 = vmatmul.mubr.f32.gmra.mxu0 %v966
  %v2243 = vpop.f32.mrf.mxu0
  %v2244 = vadd.f32 %v296, %v2243
  %v2245 = vpop.f32.mrf.mxu0
  %2246 = vmatprep.mubr.f32.mxu0 0.0
  %2247 = vmatmul.mubr.f32.gmra.mxu0 %v969
  %v2248 = vpop.f32.mrf.mxu0
  %v2249 = vadd.f32 %v296, %v2248
  %v2250 = vpop.f32.mrf.mxu0
  %2251 = vmatprep.mubr.f32.mxu0 0.0
  %2252 = vmatmul.mubr.f32.gmra.mxu0 %v972
  %v2253 = vpop.f32.mrf.mxu0
  %v2254 = vadd.f32 %v296, %v2253
  %v2255 = vpop.f32.mrf.mxu0
  %2256 = vmatprep.mubr.f32.mxu0 0.0
  %2257 = vmatmul.mubr.f32.gmra.mxu0 %v975
  %v2258 = vpop.f32.mrf.mxu0
  %v2259 = vadd.f32 %v296, %v2258
  %v2260 = vpop.f32.mrf.mxu0
  %2261 = vmatprep.mubr.f32.mxu0 0.0
  %2262 = vmatmul.mubr.f32.gmra.mxu0 %v978
  %v2263 = vpop.f32.mrf.mxu0
  %v2264 = vadd.f32 %v296, %v2263
  %v2265 = vpop.f32.mrf.mxu0
  %2266 = vmatprep.mubr.f32.mxu0 0.0
  %2267 = vmatmul.mubr.f32.gmra.mxu0 %v981
  %v2268 = vpop.f32.mrf.mxu0
  %v2269 = vadd.f32 %v296, %v2268
  %v2270 = vpop.f32.mrf.mxu0
  %2271 = vmatprep.mubr.f32.mxu0 0.0
  %2272 = vmatmul.mubr.f32.gmra.mxu0 %v984
  %v2273 = vpop.f32.mrf.mxu0
  %v2274 = vadd.f32 %v296, %v2273
  %v2275 = vpop.f32.mrf.mxu0
  %2276 = vmatprep.mubr.f32.mxu0 0.0
  %2277 = vmatmul.mubr.f32.gmra.mxu0 %v987
  %v2278 = vpop.f32.mrf.mxu0
  %v2279 = vadd.f32 %v296, %v2278
  %v2280 = vpop.f32.mrf.mxu0
  %2281 = vmatprep.mubr.f32.mxu0 0.0
  %2282 = vmatmul.mubr.f32.gmra.mxu0 %v990
  %v2283 = vpop.f32.mrf.mxu0
  %v2284 = vadd.f32 %v296, %v2283
  %v2285 = vpop.f32.mrf.mxu0
  %2286 = vmatprep.mubr.f32.mxu0 0.0
  %2287 = vmatmul.mubr.f32.gmra.mxu0 %v993
  %v2288 = vpop.f32.mrf.mxu0
  %v2289 = vadd.f32 %v296, %v2288
  %v2290 = vpop.f32.mrf.mxu0
  %2291 = vmatprep.mubr.f32.mxu0 0.0
  %2292 = vmatmul.mubr.f32.gmra.mxu0 %v996
  %v2293 = vpop.f32.mrf.mxu0
  %v2294 = vadd.f32 %v296, %v2293
  %v2295 = vpop.f32.mrf.mxu0
  %2296 = vmatprep.mubr.f32.mxu0 0.0
  %2297 = vmatmul.mubr.f32.gmra.mxu0 %v999
  %v2298 = vpop.f32.mrf.mxu0
  %v2299 = vadd.f32 %v296, %v2298
  %v2300 = vpop.f32.mrf.mxu0
  %2301 = vmatprep.mubr.f32.mxu0 0.0
  %2302 = vmatmul.mubr.f32.gmra.mxu0 %v1002
  %v2303 = vpop.f32.mrf.mxu0
  %v2304 = vadd.f32 %v296, %v2303
  %v2305 = vpop.f32.mrf.mxu0
  %2306 = vmatprep.mubr.f32.mxu0 0.0
  %2307 = vmatmul.mubr.f32.gmra.mxu0 %v1005
  %v2308 = vpop.f32.mrf.mxu0
  %v2309 = vadd.f32 %v296, %v2308
  %v2310 = vpop.f32.mrf.mxu0
  %2311 = vmatprep.mubr.f32.mxu0 0.0
  %2312 = vmatmul.mubr.f32.gmra.mxu0 %v1008
  %v2313 = vpop.f32.mrf.mxu0
  %v2314 = vadd.f32 %v296, %v2313
  %v2315 = vpop.f32.mrf.mxu0
  %2316 = vmatprep.mubr.f32.mxu0 0.0
  %2317 = vmatmul.mubr.f32.gmra.mxu0 %v1011
  %v2318 = vpop.f32.mrf.mxu0
  %v2319 = vadd.f32 %v296, %v2318
  %v2320 = vpop.f32.mrf.mxu0
  %2321 = vmatprep.mubr.f32.mxu0 0.0
  %2322 = vmatmul.mubr.f32.gmra.mxu0 %v1014
  %v2323 = vpop.f32.mrf.mxu0
  %v2324 = vadd.f32 %v296, %v2323
  %v2325 = vpop.f32.mrf.mxu0
  %2326 = vmatprep.mubr.f32.mxu0 0.0
  %2327 = vmatmul.mubr.f32.gmra.mxu0 %v1017
  %v2328 = vpop.f32.mrf.mxu0
  %v2329 = vadd.f32 %v296, %v2328
  %v2330 = vpop.f32.mrf.mxu0
  %2331 = vmatprep.mubr.f32.mxu0 0.0
  %2332 = vmatmul.mubr.f32.gmra.mxu0 %v1020
  %v2333 = vpop.f32.mrf.mxu0
  %v2334 = vadd.f32 %v296, %v2333
  %v2335 = vpop.f32.mrf.mxu0
  %2336 = vmatprep.mubr.f32.mxu0 0.0
  %2337 = vmatmul.mubr.f32.gmra.mxu0 %v1023
  %v2338 = vpop.f32.mrf.mxu0
  %v2339 = vadd.f32 %v296, %v2338
  %v2340 = vpop.f32.mrf.mxu0
  %2341 = vmatprep.mubr.f32.mxu0 0.0
  %2342 = vmatmul.mubr.f32.gmra.mxu0 %v1026
  %v2343 = vpop.f32.mrf.mxu0
  %v2344 = vadd.f32 %v296, %v2343
  %v2345 = vpop.f32.mrf.mxu0
  %2346 = vmatprep.mubr.f32.mxu0 0.0
  %2347 = vmatmul.mubr.f32.gmra.mxu0 %v1029
  %v2348 = vpop.f32.mrf.mxu0
  %v2349 = vadd.f32 %v296, %v2348
  %v2350 = vpop.f32.mrf.mxu0
  %2351 = vmatprep.mubr.f32.mxu0 0.0
  %2352 = vmatmul.mubr.f32.gmra.mxu0 %v1032
  %v2353 = vpop.f32.mrf.mxu0
  %v2354 = vadd.f32 %v296, %v2353
  %v2355 = vpop.f32.mrf.mxu0
  %2356 = vmatprep.mubr.f32.mxu0 0.0
  %2357 = vmatmul.mubr.f32.gmra.mxu0 %v1035
  %v2358 = vpop.f32.mrf.mxu0
  %v2359 = vadd.f32 %v296, %v2358
  %v2360 = vpop.f32.mrf.mxu0
  %2361 = vmatprep.mubr.f32.mxu0 0.0
  %2362 = vmatmul.mubr.f32.gmra.mxu0 %v1038
  %v2363 = vpop.f32.mrf.mxu0
  %v2364 = vadd.f32 %v296, %v2363
  %v2365 = vpop.f32.mrf.mxu0
  %2366 = vmatprep.mubr.f32.mxu0 0.0
  %2367 = vmatmul.mubr.f32.gmra.mxu0 %v1041
  %v2368 = vpop.f32.mrf.mxu0
  %v2369 = vadd.f32 %v296, %v2368
  %v2370 = vpop.f32.mrf.mxu0
  %2371 = vmatprep.mubr.f32.mxu0 0.0
  %2372 = vmatmul.mubr.f32.gmra.mxu0 %v1044
  %v2373 = vpop.f32.mrf.mxu0
  %v2374 = vadd.f32 %v296, %v2373
  %v2375 = vpop.f32.mrf.mxu0
  %2376 = vmatprep.mubr.f32.mxu0 0.0
  %2377 = vmatmul.mubr.f32.gmra.mxu0 %v1047
  %v2378 = vpop.f32.mrf.mxu0
  %v2379 = vadd.f32 %v296, %v2378
  %v2380 = vpop.f32.mrf.mxu0
  %2381 = vmatprep.mubr.f32.mxu0 0.0
  %2382 = vmatmul.mubr.f32.gmra.mxu0 %v1050
  %v2383 = vpop.f32.mrf.mxu0
  %v2384 = vadd.f32 %v296, %v2383
  %v2385 = vpop.f32.mrf.mxu0
  %2386 = vmatprep.mubr.f32.mxu0 0.0
  %2387 = vmatmul.mubr.f32.gmra.mxu0 %v1053
  %v2388 = vpop.f32.mrf.mxu0
  %v2389 = vadd.f32 %v296, %v2388
  %v2390 = vpop.f32.mrf.mxu0
  %2391 = vmatprep.mubr.f32.mxu0 0.0
  %2392 = vmatmul.mubr.f32.gmra.mxu0 %v1056
  %v2393 = vpop.f32.mrf.mxu0
  %v2394 = vadd.f32 %v296, %v2393
  %v2395 = vpop.f32.mrf.mxu0
  %2396 = vmatprep.mubr.f32.mxu0 0.0
  %2397 = vmatmul.mubr.f32.gmra.mxu0 %v1059
  %v2398 = vpop.f32.mrf.mxu0
  %v2399 = vadd.f32 %v296, %v2398
  %v2400 = vpop.f32.mrf.mxu0
  %2401 = vmatprep.mubr.f32.mxu0 0.0
  %2402 = vmatmul.mubr.f32.gmra.mxu0 %v1062
  %v2403 = vpop.f32.mrf.mxu0
  %v2404 = vadd.f32 %v296, %v2403
  %v2405 = vpop.f32.mrf.mxu0
  %2406 = vmatprep.mubr.f32.mxu0 0.0
  %2407 = vmatmul.mubr.f32.gmra.mxu0 %v1065
  %v2408 = vpop.f32.mrf.mxu0
  %v2409 = vadd.f32 %v296, %v2408
  %v2410 = vpop.f32.mrf.mxu0
  %2411 = vdwg.mxu0
  %v2412 = vmax.f32 %v1134, 0.0
  %v2413 = vmax.f32 %v1139, 0.0
  %v2414 = vmax.f32 %v1144, 0.0
  %v2415 = vmax.f32 %v1149, 0.0
  %v2416 = vmax.f32 %v1154, 0.0
  %v2417 = vmax.f32 %v1159, 0.0
  %v2418 = vmax.f32 %v1164, 0.0
  %v2419 = vmax.f32 %v1169, 0.0
  %v2420 = vmax.f32 %v1174, 0.0
  %v2421 = vmax.f32 %v1179, 0.0
  %v2422 = vmax.f32 %v1184, 0.0
  %v2423 = vmax.f32 %v1189, 0.0
  %v2424 = vmax.f32 %v1194, 0.0
  %v2425 = vmax.f32 %v1199, 0.0
  %v2426 = vmax.f32 %v1204, 0.0
  %v2427 = vmax.f32 %v1209, 0.0
  %v2428 = vmax.f32 %v1214, 0.0
  %v2429 = vmax.f32 %v1219, 0.0
  %v2430 = vmax.f32 %v1224, 0.0
  %v2431 = vmax.f32 %v1229, 0.0
  %v2432 = vmax.f32 %v1234, 0.0
  %v2433 = vmax.f32 %v1239, 0.0
  %v2434 = vmax.f32 %v1244, 0.0
  %v2435 = vmax.f32 %v1249, 0.0
  %v2436 = vmax.f32 %v1254, 0.0
  %v2437 = vmax.f32 %v1259, 0.0
  %v2438 = vmax.f32 %v1264, 0.0
  %v2439 = vmax.f32 %v1269, 0.0
  %v2440 = vmax.f32 %v1274, 0.0
  %v2441 = vmax.f32 %v1279, 0.0
  %v2442 = vmax.f32 %v1284, 0.0
  %v2443 = vmax.f32 %v1289, 0.0
  %v2444 = vmax.f32 %v1294, 0.0
  %v2445 = vmax.f32 %v1299, 0.0
  %v2446 = vmax.f32 %v1304, 0.0
  %v2447 = vmax.f32 %v1309, 0.0
  %v2448 = vmax.f32 %v1314, 0.0
  %v2449 = vmax.f32 %v1319, 0.0
  %v2450 = vmax.f32 %v1324, 0.0
  %v2451 = vmax.f32 %v1329, 0.0
  %v2452 = vmax.f32 %v1334, 0.0
  %v2453 = vmax.f32 %v1339, 0.0
  %v2454 = vmax.f32 %v1344, 0.0
  %v2455 = vmax.f32 %v1349, 0.0
  %v2456 = vmax.f32 %v1354, 0.0
  %v2457 = vmax.f32 %v1359, 0.0
  %v2458 = vmax.f32 %v1364, 0.0
  %v2459 = vmax.f32 %v1369, 0.0
  %v2460 = vmax.f32 %v1374, 0.0
  %v2461 = vmax.f32 %v1379, 0.0
  %v2462 = vmax.f32 %v1384, 0.0
  %v2463 = vmax.f32 %v1389, 0.0
  %v2464 = vmax.f32 %v1394, 0.0
  %v2465 = vmax.f32 %v1399, 0.0
  %v2466 = vmax.f32 %v1404, 0.0
  %v2467 = vmax.f32 %v1409, 0.0
  %v2468 = vmax.f32 %v1414, 0.0
  %v2469 = vmax.f32 %v1419, 0.0
  %v2470 = vmax.f32 %v1424, 0.0
  %v2471 = vmax.f32 %v1429, 0.0
  %v2472 = vmax.f32 %v1434, 0.0
  %v2473 = vmax.f32 %v1439, 0.0
  %v2474 = vmax.f32 %v1444, 0.0
  %v2475 = vmax.f32 %v1449, 0.0
  %v2476 = vmax.f32 %v1454, 0.0
  %v2477 = vmax.f32 %v1459, 0.0
  %v2478 = vmax.f32 %v1464, 0.0
  %v2479 = vmax.f32 %v1469, 0.0
  %v2480 = vmax.f32 %v1474, 0.0
  %v2481 = vmax.f32 %v1479, 0.0
  %v2482 = vmax.f32 %v1484, 0.0
  %v2483 = vmax.f32 %v1489, 0.0
  %v2484 = vmax.f32 %v1494, 0.0
  %v2485 = vmax.f32 %v1499, 0.0
  %v2486 = vmax.f32 %v1504, 0.0
  %v2487 = vmax.f32 %v1509, 0.0
  %v2488 = vmax.f32 %v1514, 0.0
  %v2489 = vmax.f32 %v1519, 0.0
  %v2490 = vmax.f32 %v1524, 0.0
  %v2491 = vmax.f32 %v1529, 0.0
  %v2492 = vmax.f32 %v1534, 0.0
  %v2493 = vmax.f32 %v1539, 0.0
  %v2494 = vmax.f32 %v1544, 0.0
  %v2495 = vmax.f32 %v1549, 0.0
  %v2496 = vmax.f32 %v1554, 0.0
  %v2497 = vmax.f32 %v1559, 0.0
  %v2498 = vmax.f32 %v1564, 0.0
  %v2499 = vmax.f32 %v1569, 0.0
  %v2500 = vmax.f32 %v1574, 0.0
  %v2501 = vmax.f32 %v1579, 0.0
  %v2502 = vmax.f32 %v1584, 0.0
  %v2503 = vmax.f32 %v1589, 0.0
  %v2504 = vmax.f32 %v1594, 0.0
  %v2505 = vmax.f32 %v1599, 0.0
  %v2506 = vmax.f32 %v1604, 0.0
  %v2507 = vmax.f32 %v1609, 0.0
  %v2508 = vmax.f32 %v1614, 0.0
  %v2509 = vmax.f32 %v1619, 0.0
  %v2510 = vmax.f32 %v1624, 0.0
  %v2511 = vmax.f32 %v1629, 0.0
  %v2512 = vmax.f32 %v1634, 0.0
  %v2513 = vmax.f32 %v1639, 0.0
  %v2514 = vmax.f32 %v1644, 0.0
  %v2515 = vmax.f32 %v1649, 0.0
  %v2516 = vmax.f32 %v1654, 0.0
  %v2517 = vmax.f32 %v1659, 0.0
  %v2518 = vmax.f32 %v1664, 0.0
  %v2519 = vmax.f32 %v1669, 0.0
  %v2520 = vmax.f32 %v1674, 0.0
  %v2521 = vmax.f32 %v1679, 0.0
  %v2522 = vmax.f32 %v1684, 0.0
  %v2523 = vmax.f32 %v1689, 0.0
  %v2524 = vmax.f32 %v1694, 0.0
  %v2525 = vmax.f32 %v1699, 0.0
  %v2526 = vmax.f32 %v1704, 0.0
  %v2527 = vmax.f32 %v1709, 0.0
  %v2528 = vmax.f32 %v1714, 0.0
  %v2529 = vmax.f32 %v1719, 0.0
  %v2530 = vmax.f32 %v1724, 0.0
  %v2531 = vmax.f32 %v1729, 0.0
  %v2532 = vmax.f32 %v1734, 0.0
  %v2533 = vmax.f32 %v1739, 0.0
  %v2534 = vmax.f32 %v1744, 0.0
  %v2535 = vmax.f32 %v1749, 0.0
  %v2536 = vmax.f32 %v1754, 0.0
  %v2537 = vmax.f32 %v1759, 0.0
  %v2538 = vmax.f32 %v1764, 0.0
  %v2539 = vmax.f32 %v1769, 0.0
  %v2540 = vmax.f32 %v1774, 0.0
  %v2541 = vmax.f32 %v1779, 0.0
  %v2542 = vmax.f32 %v1784, 0.0
  %v2543 = vmax.f32 %v1789, 0.0
  %v2544 = vmax.f32 %v1794, 0.0
  %v2545 = vmax.f32 %v1799, 0.0
  %v2546 = vmax.f32 %v1804, 0.0
  %v2547 = vmax.f32 %v1809, 0.0
  %v2548 = vmax.f32 %v1814, 0.0
  %v2549 = vmax.f32 %v1819, 0.0
  %v2550 = vmax.f32 %v1824, 0.0
  %v2551 = vmax.f32 %v1829, 0.0
  %v2552 = vmax.f32 %v1834, 0.0
  %v2553 = vmax.f32 %v1839, 0.0
  %v2554 = vmax.f32 %v1844, 0.0
  %v2555 = vmax.f32 %v1849, 0.0
  %v2556 = vmax.f32 %v1854, 0.0
  %v2557 = vmax.f32 %v1859, 0.0
  %v2558 = vmax.f32 %v1864, 0.0
  %v2559 = vmax.f32 %v1869, 0.0
  %v2560 = vmax.f32 %v1874, 0.0
  %v2561 = vmax.f32 %v1879, 0.0
  %v2562 = vmax.f32 %v1884, 0.0
  %v2563 = vmax.f32 %v1889, 0.0
  %v2564 = vmax.f32 %v1894, 0.0
  %v2565 = vmax.f32 %v1899, 0.0
  %v2566 = vmax.f32 %v1904, 0.0
  %v2567 = vmax.f32 %v1909, 0.0
  %v2568 = vmax.f32 %v1914, 0.0
  %v2569 = vmax.f32 %v1919, 0.0
  %v2570 = vmax.f32 %v1924, 0.0
  %v2571 = vmax.f32 %v1929, 0.0
  %v2572 = vmax.f32 %v1934, 0.0
  %v2573 = vmax.f32 %v1939, 0.0
  %v2574 = vmax.f32 %v1944, 0.0
  %v2575 = vmax.f32 %v1949, 0.0
  %v2576 = vmax.f32 %v1954, 0.0
  %v2577 = vmax.f32 %v1959, 0.0
  %v2578 = vmax.f32 %v1964, 0.0
  %v2579 = vmax.f32 %v1969, 0.0
  %v2580 = vmax.f32 %v1974, 0.0
  %v2581 = vmax.f32 %v1979, 0.0
  %v2582 = vmax.f32 %v1984, 0.0
  %v2583 = vmax.f32 %v1989, 0.0
  %v2584 = vmax.f32 %v1994, 0.0
  %v2585 = vmax.f32 %v1999, 0.0
  %v2586 = vmax.f32 %v2004, 0.0
  %v2587 = vmax.f32 %v2009, 0.0
  %v2588 = vmax.f32 %v2014, 0.0
  %v2589 = vmax.f32 %v2019, 0.0
  %v2590 = vmax.f32 %v2024, 0.0
  %v2591 = vmax.f32 %v2029, 0.0
  %v2592 = vmax.f32 %v2034, 0.0
  %v2593 = vmax.f32 %v2039, 0.0
  %v2594 = vmax.f32 %v2044, 0.0
  %v2595 = vmax.f32 %v2049, 0.0
  %v2596 = vmax.f32 %v2054, 0.0
  %v2597 = vmax.f32 %v2059, 0.0
  %v2598 = vmax.f32 %v2064, 0.0
  %v2599 = vmax.f32 %v2069, 0.0
  %v2600 = vmax.f32 %v2074, 0.0
  %v2601 = vmax.f32 %v2079, 0.0
  %v2602 = vmax.f32 %v2084, 0.0
  %v2603 = vmax.f32 %v2089, 0.0
  %v2604 = vmax.f32 %v2094, 0.0
  %v2605 = vmax.f32 %v2099, 0.0
  %v2606 = vmax.f32 %v2104, 0.0
  %v2607 = vmax.f32 %v2109, 0.0
  %v2608 = vmax.f32 %v2114, 0.0
  %v2609 = vmax.f32 %v2119, 0.0
  %v2610 = vmax.f32 %v2124, 0.0
  %v2611 = vmax.f32 %v2129, 0.0
  %v2612 = vmax.f32 %v2134, 0.0
  %v2613 = vmax.f32 %v2139, 0.0
  %v2614 = vmax.f32 %v2144, 0.0
  %v2615 = vmax.f32 %v2149, 0.0
  %v2616 = vmax.f32 %v2154, 0.0
  %v2617 = vmax.f32 %v2159, 0.0
  %v2618 = vmax.f32 %v2164, 0.0
  %v2619 = vmax.f32 %v2169, 0.0
  %v2620 = vmax.f32 %v2174, 0.0
  %v2621 = vmax.f32 %v2179, 0.0
  %v2622 = vmax.f32 %v2184, 0.0
  %v2623 = vmax.f32 %v2189, 0.0
  %v2624 = vmax.f32 %v2194, 0.0
  %v2625 = vmax.f32 %v2199, 0.0
  %v2626 = vmax.f32 %v2204, 0.0
  %v2627 = vmax.f32 %v2209, 0.0
  %v2628 = vmax.f32 %v2214, 0.0
  %v2629 = vmax.f32 %v2219, 0.0
  %v2630 = vmax.f32 %v2224, 0.0
  %v2631 = vmax.f32 %v2229, 0.0
  %v2632 = vmax.f32 %v2234, 0.0
  %v2633 = vmax.f32 %v2239, 0.0
  %v2634 = vmax.f32 %v2244, 0.0
  %v2635 = vmax.f32 %v2249, 0.0
  %v2636 = vmax.f32 %v2254, 0.0
  %v2637 = vmax.f32 %v2259, 0.0
  %v2638 = vmax.f32 %v2264, 0.0
  %v2639 = vmax.f32 %v2269, 0.0
  %v2640 = vmax.f32 %v2274, 0.0
  %v2641 = vmax.f32 %v2279, 0.0
  %v2642 = vmax.f32 %v2284, 0.0
  %v2643 = vmax.f32 %v2289, 0.0
  %v2644 = vmax.f32 %v2294, 0.0
  %v2645 = vmax.f32 %v2299, 0.0
  %v2646 = vmax.f32 %v2304, 0.0
  %v2647 = vmax.f32 %v2309, 0.0
  %v2648 = vmax.f32 %v2314, 0.0
  %v2649 = vmax.f32 %v2319, 0.0
  %v2650 = vmax.f32 %v2324, 0.0
  %v2651 = vmax.f32 %v2329, 0.0
  %v2652 = vmax.f32 %v2334, 0.0
  %v2653 = vmax.f32 %v2339, 0.0
  %v2654 = vmax.f32 %v2344, 0.0
  %v2655 = vmax.f32 %v2349, 0.0
  %v2656 = vmax.f32 %v2354, 0.0
  %v2657 = vmax.f32 %v2359, 0.0
  %v2658 = vmax.f32 %v2364, 0.0
  %v2659 = vmax.f32 %v2369, 0.0
  %v2660 = vmax.f32 %v2374, 0.0
  %v2661 = vmax.f32 %v2379, 0.0
  %v2662 = vmax.f32 %v2384, 0.0
  %v2663 = vmax.f32 %v2389, 0.0
  %v2664 = vmax.f32 %v2394, 0.0
  %v2665 = vmax.f32 %v2399, 0.0
  %v2666 = vmax.f32 %v2404, 0.0
  %v2667 = vmax.f32 %v2409, 0.0
  %v2668 = vld [vmem:[%s1] sm:$0xff]
  %v2669 = vld [vmem:[%s1 + $0x8] sm:$0xff]
  %v2670 = vld [vmem:[%s1 + $0x10] sm:$0xff]
  %v2671 = vld [vmem:[%s1 + $0x18] sm:$0xff]
  %v2672 = vld [vmem:[%s1 + $0x20] sm:$0xff]
  %v2673 = vld [vmem:[%s1 + $0x28] sm:$0xff]
  %v2674 = vld [vmem:[%s1 + $0x30] sm:$0xff]
  %v2675 = vld [vmem:[%s1 + $0x38] sm:$0xff]
  %v2676 = vld [vmem:[%s1 + $0x40] sm:$0xff]
  %v2677 = vld [vmem:[%s1 + $0x48] sm:$0xff]
  %v2678 = vld [vmem:[%s1 + $0x50] sm:$0xff]
  %v2679 = vld [vmem:[%s1 + $0x58] sm:$0xff]
  %v2680 = vld [vmem:[%s1 + $0x60] sm:$0xff]
  %v2681 = vld [vmem:[%s1 + $0x68] sm:$0xff]
  %v2682 = vld [vmem:[%s1 + $0x70] sm:$0xff]
  %v2683 = vld [vmem:[%s1 + $0x78] sm:$0xff]
  %v2684 = vld [vmem:[%s1 + $0x80] sm:$0xff]
  %v2685 = vld [vmem:[%s1 + $0x88] sm:$0xff]
  %v2686 = vld [vmem:[%s1 + $0x90] sm:$0xff]
  %v2687 = vld [vmem:[%s1 + $0x98] sm:$0xff]
  %v2688 = vld [vmem:[%s1 + $0xa0] sm:$0xff]
  %v2689 = vld [vmem:[%s1 + $0xa8] sm:$0xff]
  %v2690 = vld [vmem:[%s1 + $0xb0] sm:$0xff]
  %v2691 = vld [vmem:[%s1 + $0xb8] sm:$0xff]
  %v2692 = vld [vmem:[%s1 + $0xc0] sm:$0xff]
  %v2693 = vld [vmem:[%s1 + $0xc8] sm:$0xff]
  %v2694 = vld [vmem:[%s1 + $0xd0] sm:$0xff]
  %v2695 = vld [vmem:[%s1 + $0xd8] sm:$0xff]
  %v2696 = vld [vmem:[%s1 + $0xe0] sm:$0xff]
  %v2697 = vld [vmem:[%s1 + $0xe8] sm:$0xff]
  %v2698 = vld [vmem:[%s1 + $0xf0] sm:$0xff]
  %v2699 = vld [vmem:[%s1 + $0xf8] sm:$0xff]
  %v2700 = vld [vmem:[%s1 + $0x100] sm:$0xff]
  %v2701 = vld [vmem:[%s1 + $0x108] sm:$0xff]
  %v2702 = vld [vmem:[%s1 + $0x110] sm:$0xff]
  %v2703 = vld [vmem:[%s1 + $0x118] sm:$0xff]
  %v2704 = vld [vmem:[%s1 + $0x120] sm:$0xff]
  %v2705 = vld [vmem:[%s1 + $0x128] sm:$0xff]
  %v2706 = vld [vmem:[%s1 + $0x130] sm:$0xff]
  %v2707 = vld [vmem:[%s1 + $0x138] sm:$0xff]
  %v2708 = vld [vmem:[%s1 + $0x140] sm:$0xff]
  %v2709 = vld [vmem:[%s1 + $0x148] sm:$0xff]
  %v2710 = vld [vmem:[%s1 + $0x150] sm:$0xff]
  %v2711 = vld [vmem:[%s1 + $0x158] sm:$0xff]
  %v2712 = vld [vmem:[%s1 + $0x160] sm:$0xff]
  %v2713 = vld [vmem:[%s1 + $0x168] sm:$0xff]
  %v2714 = vld [vmem:[%s1 + $0x170] sm:$0xff]
  %v2715 = vld [vmem:[%s1 + $0x178] sm:$0xff]
  %v2716 = vld [vmem:[%s1 + $0x180] sm:$0xff]
  %v2717 = vld [vmem:[%s1 + $0x188] sm:$0xff]
  %v2718 = vld [vmem:[%s1 + $0x190] sm:$0xff]
  %v2719 = vld [vmem:[%s1 + $0x198] sm:$0xff]
  %v2720 = vld [vmem:[%s1 + $0x1a0] sm:$0xff]
  %v2721 = vld [vmem:[%s1 + $0x1a8] sm:$0xff]
  %v2722 = vld [vmem:[%s1 + $0x1b0] sm:$0xff]
  %v2723 = vld [vmem:[%s1 + $0x1b8] sm:$0xff]
  %v2724 = vld [vmem:[%s1 + $0x1c0] sm:$0xff]
  %v2725 = vld [vmem:[%s1 + $0x1c8] sm:$0xff]
  %v2726 = vld [vmem:[%s1 + $0x1d0] sm:$0xff]
  %v2727 = vld [vmem:[%s1 + $0x1d8] sm:$0xff]
  %v2728 = vld [vmem:[%s1 + $0x1e0] sm:$0xff]
  %v2729 = vld [vmem:[%s1 + $0x1e8] sm:$0xff]
  %v2730 = vld [vmem:[%s1 + $0x1f0] sm:$0xff]
  %v2731 = vld [vmem:[%s1 + $0x1f8] sm:$0xff]
  %v2732 = vld [vmem:[%s1 + $0x200] sm:$0xff]
  %v2733 = vld [vmem:[%s1 + $0x208] sm:$0xff]
  %v2734 = vld [vmem:[%s1 + $0x210] sm:$0xff]
  %v2735 = vld [vmem:[%s1 + $0x218] sm:$0xff]
  %v2736 = vld [vmem:[%s1 + $0x220] sm:$0xff]
  %v2737 = vld [vmem:[%s1 + $0x228] sm:$0xff]
  %v2738 = vld [vmem:[%s1 + $0x230] sm:$0xff]
  %v2739 = vld [vmem:[%s1 + $0x238] sm:$0xff]
  %v2740 = vld [vmem:[%s1 + $0x240] sm:$0xff]
  %v2741 = vld [vmem:[%s1 + $0x248] sm:$0xff]
  %v2742 = vld [vmem:[%s1 + $0x250] sm:$0xff]
  %v2743 = vld [vmem:[%s1 + $0x258] sm:$0xff]
  %v2744 = vld [vmem:[%s1 + $0x260] sm:$0xff]
  %v2745 = vld [vmem:[%s1 + $0x268] sm:$0xff]
  %v2746 = vld [vmem:[%s1 + $0x270] sm:$0xff]
  %v2747 = vld [vmem:[%s1 + $0x278] sm:$0xff]
  %v2748 = vld [vmem:[%s1 + $0x280] sm:$0xff]
  %v2749 = vld [vmem:[%s1 + $0x288] sm:$0xff]
  %v2750 = vld [vmem:[%s1 + $0x290] sm:$0xff]
  %v2751 = vld [vmem:[%s1 + $0x298] sm:$0xff]
  %v2752 = vld [vmem:[%s1 + $0x2a0] sm:$0xff]
  %v2753 = vld [vmem:[%s1 + $0x2a8] sm:$0xff]
  %v2754 = vld [vmem:[%s1 + $0x2b0] sm:$0xff]
  %v2755 = vld [vmem:[%s1 + $0x2b8] sm:$0xff]
  %v2756 = vld [vmem:[%s1 + $0x2c0] sm:$0xff]
  %v2757 = vld [vmem:[%s1 + $0x2c8] sm:$0xff]
  %v2758 = vld [vmem:[%s1 + $0x2d0] sm:$0xff]
  %v2759 = vld [vmem:[%s1 + $0x2d8] sm:$0xff]
  %v2760 = vld [vmem:[%s1 + $0x2e0] sm:$0xff]
  %v2761 = vld [vmem:[%s1 + $0x2e8] sm:$0xff]
  %v2762 = vld [vmem:[%s1 + $0x2f0] sm:$0xff]
  %v2763 = vld [vmem:[%s1 + $0x2f8] sm:$0xff]
  %v2764 = vld [vmem:[%s1 + $0x300] sm:$0xff]
  %v2765 = vld [vmem:[%s1 + $0x308] sm:$0xff]
  %v2766 = vld [vmem:[%s1 + $0x310] sm:$0xff]
  %v2767 = vld [vmem:[%s1 + $0x318] sm:$0xff]
  %v2768 = vld [vmem:[%s1 + $0x320] sm:$0xff]
  %v2769 = vld [vmem:[%s1 + $0x328] sm:$0xff]
  %v2770 = vld [vmem:[%s1 + $0x330] sm:$0xff]
  %v2771 = vld [vmem:[%s1 + $0x338] sm:$0xff]
  %v2772 = vld [vmem:[%s1 + $0x340] sm:$0xff]
  %v2773 = vld [vmem:[%s1 + $0x348] sm:$0xff]
  %v2774 = vld [vmem:[%s1 + $0x350] sm:$0xff]
  %v2775 = vld [vmem:[%s1 + $0x358] sm:$0xff]
  %v2776 = vld [vmem:[%s1 + $0x360] sm:$0xff]
  %v2777 = vld [vmem:[%s1 + $0x368] sm:$0xff]
  %v2778 = vld [vmem:[%s1 + $0x370] sm:$0xff]
  %v2779 = vld [vmem:[%s1 + $0x378] sm:$0xff]
  %2780 = vmatprep.subr.mxu0 0.0
  %2781 = vmatpush1.msra.mxu0 %v2427
  %2782 = vmatprep.subr.mxu0 0.0
  %2783 = vmatpush1.msra.mxu0 %v2426
  %2784 = vmatprep.subr.mxu0 0.0
  %2785 = vmatpush1.msra.mxu0 %v2425
  %2786 = vmatprep.subr.mxu0 0.0
  %2787 = vmatpush1.msra.mxu0 %v2424
  %2788 = vmatprep.subr.mxu0 0.0
  %2789 = vmatpush1.msra.mxu0 %v2423
  %2790 = vmatprep.subr.mxu0 0.0
  %2791 = vmatpush1.msra.mxu0 %v2422
  %2792 = vmatprep.subr.mxu0 0.0
  %2793 = vmatpush1.msra.mxu0 %v2421
  %2794 = vmatprep.subr.mxu0 0.0
  %2795 = vmatpush1.msra.mxu0 %v2420
  %2796 = vmatprep.subr.mxu0 0.0
  %2797 = vmatpush1.msra.mxu0 %v2419
  %2798 = vmatprep.subr.mxu0 0.0
  %2799 = vmatpush1.msra.mxu0 %v2418
  %2800 = vmatprep.subr.mxu0 0.0
  %2801 = vmatpush1.msra.mxu0 %v2417
  %2802 = vmatprep.subr.mxu0 0.0
  %2803 = vmatpush1.msra.mxu0 %v2416
  %2804 = vmatprep.subr.mxu0 0.0
  %2805 = vmatpush1.msra.mxu0 %v2415
  %2806 = vmatprep.subr.mxu0 0.0
  %2807 = vmatpush1.msra.mxu0 %v2414
  %2808 = vmatprep.subr.mxu0 0.0
  %2809 = vmatpush1.msra.mxu0 %v2413
  %2810 = vmatprep.subr.mxu0 0.0
  %2811 = vmatpush1.msra.mxu0 %v2412
  %2812 = vmatprep.subr.mxu0 0.0
  %2813 = vmatpush2.msra.mxu0 %v2443
  %2814 = vmatprep.subr.mxu0 0.0
  %2815 = vmatpush2.msra.mxu0 %v2442
  %2816 = vmatprep.subr.mxu0 0.0
  %2817 = vmatpush2.msra.mxu0 %v2441
  %2818 = vmatprep.subr.mxu0 0.0
  %2819 = vmatpush2.msra.mxu0 %v2440
  %2820 = vmatprep.subr.mxu0 0.0
  %2821 = vmatpush2.msra.mxu0 %v2439
  %2822 = vmatprep.subr.mxu0 0.0
  %2823 = vmatpush2.msra.mxu0 %v2438
  %2824 = vmatprep.subr.mxu0 0.0
  %2825 = vmatpush2.msra.mxu0 %v2437
  %2826 = vmatprep.subr.mxu0 0.0
  %2827 = vmatpush2.msra.mxu0 %v2436
  %2828 = vmatprep.subr.mxu0 0.0
  %2829 = vmatpush2.msra.mxu0 %v2435
  %2830 = vmatprep.subr.mxu0 0.0
  %2831 = vmatpush2.msra.mxu0 %v2434
  %2832 = vmatprep.subr.mxu0 0.0
  %2833 = vmatpush2.msra.mxu0 %v2433
  %2834 = vmatprep.subr.mxu0 0.0
  %2835 = vmatpush2.msra.mxu0 %v2432
  %2836 = vmatprep.subr.mxu0 0.0
  %2837 = vmatpush2.msra.mxu0 %v2431
  %2838 = vmatprep.subr.mxu0 0.0
  %2839 = vmatpush2.msra.mxu0 %v2430
  %2840 = vmatprep.subr.mxu0 0.0
  %2841 = vmatpush2.msra.mxu0 %v2429
  %2842 = vmatprep.subr.mxu0 0.0
  %2843 = vmatpush2.msra.mxu0 %v2428
  %2844 = vmatprep.mubr.f32.mxu0 %v2669
  %2845 = vmatmul.mubr.f32.gmra.mxu0 %v2668
  %v2846 = vpop.f32.mrf.mxu0
  %v2847 = vadd.f32 0.0, %v2846
  %v2848 = vpop.f32.mrf.mxu0
  %2849 = vmatprep.mubr.f32.mxu0 %v2685
  %2850 = vmatmul.mubr.f32.gmra.mxu0 %v2684
  %v2851 = vpop.f32.mrf.mxu0
  %v2852 = vadd.f32 0.0, %v2851
  %v2853 = vpop.f32.mrf.mxu0
  %2854 = vmatprep.mubr.f32.mxu0 %v2701
  %2855 = vmatmul.mubr.f32.gmra.mxu0 %v2700
  %v2856 = vpop.f32.mrf.mxu0
  %v2857 = vadd.f32 0.0, %v2856
  %v2858 = vpop.f32.mrf.mxu0
  %2859 = vmatprep.mubr.f32.mxu0 %v2717
  %2860 = vmatmul.mubr.f32.gmra.mxu0 %v2716
  %v2861 = vpop.f32.mrf.mxu0
  %v2862 = vadd.f32 0.0, %v2861
  %v2863 = vpop.f32.mrf.mxu0
  %2864 = vmatprep.mubr.f32.mxu0 %v2733
  %2865 = vmatmul.mubr.f32.gmra.mxu0 %v2732
  %v2866 = vpop.f32.mrf.mxu0
  %v2867 = vadd.f32 0.0, %v2866
  %v2868 = vpop.f32.mrf.mxu0
  %2869 = vmatprep.mubr.f32.mxu0 %v2749
  %2870 = vmatmul.mubr.f32.gmra.mxu0 %v2748
  %v2871 = vpop.f32.mrf.mxu0
  %v2872 = vadd.f32 0.0, %v2871
  %v2873 = vpop.f32.mrf.mxu0
  %2874 = vmatprep.mubr.f32.mxu0 %v2765
  %2875 = vmatmul.mubr.f32.gmra.mxu0 %v2764
  %v2876 = vpop.f32.mrf.mxu0
  %v2877 = vadd.f32 0.0, %v2876
  %v2878 = vpop.f32.mrf.mxu0
  %2879 = vdwg.mxu0
  %2880 = vmatprep.subr.mxu0 0.0
  %2881 = vmatpush1.msra.mxu0 %v2459
  %2882 = vmatprep.subr.mxu0 0.0
  %2883 = vmatpush1.msra.mxu0 %v2458
  %2884 = vmatprep.subr.mxu0 0.0
  %2885 = vmatpush1.msra.mxu0 %v2457
  %2886 = vmatprep.subr.mxu0 0.0
  %2887 = vmatpush1.msra.mxu0 %v2456
  %2888 = vmatprep.subr.mxu0 0.0
  %2889 = vmatpush1.msra.mxu0 %v2455
  %2890 = vmatprep.subr.mxu0 0.0
  %2891 = vmatpush1.msra.mxu0 %v2454
  %2892 = vmatprep.subr.mxu0 0.0
  %2893 = vmatpush1.msra.mxu0 %v2453
  %2894 = vmatprep.subr.mxu0 0.0
  %2895 = vmatpush1.msra.mxu0 %v2452
  %2896 = vmatprep.subr.mxu0 0.0
  %2897 = vmatpush1.msra.mxu0 %v2451
  %2898 = vmatprep.subr.mxu0 0.0
  %2899 = vmatpush1.msra.mxu0 %v2450
  %2900 = vmatprep.subr.mxu0 0.0
  %2901 = vmatpush1.msra.mxu0 %v2449
  %2902 = vmatprep.subr.mxu0 0.0
  %2903 = vmatpush1.msra.mxu0 %v2448
  %2904 = vmatprep.subr.mxu0 0.0
  %2905 = vmatpush1.msra.mxu0 %v2447
  %2906 = vmatprep.subr.mxu0 0.0
  %2907 = vmatpush1.msra.mxu0 %v2446
  %2908 = vmatprep.subr.mxu0 0.0
  %2909 = vmatpush1.msra.mxu0 %v2445
  %2910 = vmatprep.subr.mxu0 0.0
  %2911 = vmatpush1.msra.mxu0 %v2444
  %2912 = vmatprep.subr.mxu0 0.0
  %2913 = vmatpush2.msra.mxu0 %v2475
  %2914 = vmatprep.subr.mxu0 0.0
  %2915 = vmatpush2.msra.mxu0 %v2474
  %2916 = vmatprep.subr.mxu0 0.0
  %2917 = vmatpush2.msra.mxu0 %v2473
  %2918 = vmatprep.subr.mxu0 0.0
  %2919 = vmatpush2.msra.mxu0 %v2472
  %2920 = vmatprep.subr.mxu0 0.0
  %2921 = vmatpush2.msra.mxu0 %v2471
  %2922 = vmatprep.subr.mxu0 0.0
  %2923 = vmatpush2.msra.mxu0 %v2470
  %2924 = vmatprep.subr.mxu0 0.0
  %2925 = vmatpush2.msra.mxu0 %v2469
  %2926 = vmatprep.subr.mxu0 0.0
  %2927 = vmatpush2.msra.mxu0 %v2468
  %2928 = vmatprep.subr.mxu0 0.0
  %2929 = vmatpush2.msra.mxu0 %v2467
  %2930 = vmatprep.subr.mxu0 0.0
  %2931 = vmatpush2.msra.mxu0 %v2466
  %2932 = vmatprep.subr.mxu0 0.0
  %2933 = vmatpush2.msra.mxu0 %v2465
  %2934 = vmatprep.subr.mxu0 0.0
  %2935 = vmatpush2.msra.mxu0 %v2464
  %2936 = vmatprep.subr.mxu0 0.0
  %2937 = vmatpush2.msra.mxu0 %v2463
  %2938 = vmatprep.subr.mxu0 0.0
  %2939 = vmatpush2.msra.mxu0 %v2462
  %2940 = vmatprep.subr.mxu0 0.0
  %2941 = vmatpush2.msra.mxu0 %v2461
  %2942 = vmatprep.subr.mxu0 0.0
  %2943 = vmatpush2.msra.mxu0 %v2460
  %2944 = vmatprep.mubr.f32.mxu0 %v2671
  %2945 = vmatmul.mubr.f32.gmra.mxu0 %v2670
  %v2946 = vpop.f32.mrf.mxu0
  %v2947 = vadd.f32 %v2847, %v2946
  %v2948 = vpop.f32.mrf.mxu0
  %2949 = vmatprep.mubr.f32.mxu0 %v2687
  %2950 = vmatmul.mubr.f32.gmra.mxu0 %v2686
  %v2951 = vpop.f32.mrf.mxu0
  %v2952 = vadd.f32 %v2852, %v2951
  %v2953 = vpop.f32.mrf.mxu0
  %2954 = vmatprep.mubr.f32.mxu0 %v2703
  %2955 = vmatmul.mubr.f32.gmra.mxu0 %v2702
  %v2956 = vpop.f32.mrf.mxu0
  %v2957 = vadd.f32 %v2857, %v2956
  %v2958 = vpop.f32.mrf.mxu0
  %2959 = vmatprep.mubr.f32.mxu0 %v2719
  %2960 = vmatmul.mubr.f32.gmra.mxu0 %v2718
  %v2961 = vpop.f32.mrf.mxu0
  %v2962 = vadd.f32 %v2862, %v2961
  %v2963 = vpop.f32.mrf.mxu0
  %2964 = vmatprep.mubr.f32.mxu0 %v2735
  %2965 = vmatmul.mubr.f32.gmra.mxu0 %v2734
  %v2966 = vpop.f32.mrf.mxu0
  %v2967 = vadd.f32 %v2867, %v2966
  %v2968 = vpop.f32.mrf.mxu0
  %2969 = vmatprep.mubr.f32.mxu0 %v2751
  %2970 = vmatmul.mubr.f32.gmra.mxu0 %v2750
  %v2971 = vpop.f32.mrf.mxu0
  %v2972 = vadd.f32 %v2872, %v2971
  %v2973 = vpop.f32.mrf.mxu0
  %2974 = vmatprep.mubr.f32.mxu0 %v2767
  %2975 = vmatmul.mubr.f32.gmra.mxu0 %v2766
  %v2976 = vpop.f32.mrf.mxu0
  %v2977 = vadd.f32 %v2877, %v2976
  %v2978 = vpop.f32.mrf.mxu0
  %2979 = vdwg.mxu0
  %2980 = vmatprep.subr.mxu0 0.0
  %2981 = vmatpush1.msra.mxu0 %v2491
  %2982 = vmatprep.subr.mxu0 0.0
  %2983 = vmatpush1.msra.mxu0 %v2490
  %2984 = vmatprep.subr.mxu0 0.0
  %2985 = vmatpush1.msra.mxu0 %v2489
  %2986 = vmatprep.subr.mxu0 0.0
  %2987 = vmatpush1.msra.mxu0 %v2488
  %2988 = vmatprep.subr.mxu0 0.0
  %2989 = vmatpush1.msra.mxu0 %v2487
  %2990 = vmatprep.subr.mxu0 0.0
  %2991 = vmatpush1.msra.mxu0 %v2486
  %2992 = vmatprep.subr.mxu0 0.0
  %2993 = vmatpush1.msra.mxu0 %v2485
  %2994 = vmatprep.subr.mxu0 0.0
  %2995 = vmatpush1.msra.mxu0 %v2484
  %2996 = vmatprep.subr.mxu0 0.0
  %2997 = vmatpush1.msra.mxu0 %v2483
  %2998 = vmatprep.subr.mxu0 0.0
  %2999 = vmatpush1.msra.mxu0 %v2482
  %3000 = vmatprep.subr.mxu0 0.0
  %3001 = vmatpush1.msra.mxu0 %v2481
  %3002 = vmatprep.subr.mxu0 0.0
  %3003 = vmatpush1.msra.mxu0 %v2480
  %3004 = vmatprep.subr.mxu0 0.0
  %3005 = vmatpush1.msra.mxu0 %v2479
  %3006 = vmatprep.subr.mxu0 0.0
  %3007 = vmatpush1.msra.mxu0 %v2478
  %3008 = vmatprep.subr.mxu0 0.0
  %3009 = vmatpush1.msra.mxu0 %v2477
  %3010 = vmatprep.subr.mxu0 0.0
  %3011 = vmatpush1.msra.mxu0 %v2476
  %3012 = vmatprep.subr.mxu0 0.0
  %3013 = vmatpush2.msra.mxu0 %v2507
  %3014 = vmatprep.subr.mxu0 0.0
  %3015 = vmatpush2.msra.mxu0 %v2506
  %3016 = vmatprep.subr.mxu0 0.0
  %3017 = vmatpush2.msra.mxu0 %v2505
  %3018 = vmatprep.subr.mxu0 0.0
  %3019 = vmatpush2.msra.mxu0 %v2504
  %3020 = vmatprep.subr.mxu0 0.0
  %3021 = vmatpush2.msra.mxu0 %v2503
  %3022 = vmatprep.subr.mxu0 0.0
  %3023 = vmatpush2.msra.mxu0 %v2502
  %3024 = vmatprep.subr.mxu0 0.0
  %3025 = vmatpush2.msra.mxu0 %v2501
  %3026 = vmatprep.subr.mxu0 0.0
  %3027 = vmatpush2.msra.mxu0 %v2500
  %3028 = vmatprep.subr.mxu0 0.0
  %3029 = vmatpush2.msra.mxu0 %v2499
  %3030 = vmatprep.subr.mxu0 0.0
  %3031 = vmatpush2.msra.mxu0 %v2498
  %3032 = vmatprep.subr.mxu0 0.0
  %3033 = vmatpush2.msra.mxu0 %v2497
  %3034 = vmatprep.subr.mxu0 0.0
  %3035 = vmatpush2.msra.mxu0 %v2496
  %3036 = vmatprep.subr.mxu0 0.0
  %3037 = vmatpush2.msra.mxu0 %v2495
  %3038 = vmatprep.subr.mxu0 0.0
  %3039 = vmatpush2.msra.mxu0 %v2494
  %3040 = vmatprep.subr.mxu0 0.0
  %3041 = vmatpush2.msra.mxu0 %v2493
  %3042 = vmatprep.subr.mxu0 0.0
  %3043 = vmatpush2.msra.mxu0 %v2492
  %3044 = vmatprep.mubr.f32.mxu0 %v2673
  %3045 = vmatmul.mubr.f32.gmra.mxu0 %v2672
  %v3046 = vpop.f32.mrf.mxu0
  %v3047 = vadd.f32 %v2947, %v3046
  %v3048 = vpop.f32.mrf.mxu0
  %3049 = vmatprep.mubr.f32.mxu0 %v2689
  %3050 = vmatmul.mubr.f32.gmra.mxu0 %v2688
  %v3051 = vpop.f32.mrf.mxu0
  %v3052 = vadd.f32 %v2952, %v3051
  %v3053 = vpop.f32.mrf.mxu0
  %3054 = vmatprep.mubr.f32.mxu0 %v2705
  %3055 = vmatmul.mubr.f32.gmra.mxu0 %v2704
  %v3056 = vpop.f32.mrf.mxu0
  %v3057 = vadd.f32 %v2957, %v3056
  %v3058 = vpop.f32.mrf.mxu0
  %3059 = vmatprep.mubr.f32.mxu0 %v2721
  %3060 = vmatmul.mubr.f32.gmra.mxu0 %v2720
  %v3061 = vpop.f32.mrf.mxu0
  %v3062 = vadd.f32 %v2962, %v3061
  %v3063 = vpop.f32.mrf.mxu0
  %3064 = vmatprep.mubr.f32.mxu0 %v2737
  %3065 = vmatmul.mubr.f32.gmra.mxu0 %v2736
  %v3066 = vpop.f32.mrf.mxu0
  %v3067 = vadd.f32 %v2967, %v3066
  %v3068 = vpop.f32.mrf.mxu0
  %3069 = vmatprep.mubr.f32.mxu0 %v2753
  %3070 = vmatmul.mubr.f32.gmra.mxu0 %v2752
  %v3071 = vpop.f32.mrf.mxu0
  %v3072 = vadd.f32 %v2972, %v3071
  %v3073 = vpop.f32.mrf.mxu0
  %3074 = vmatprep.mubr.f32.mxu0 %v2769
  %3075 = vmatmul.mubr.f32.gmra.mxu0 %v2768
  %v3076 = vpop.f32.mrf.mxu0
  %v3077 = vadd.f32 %v2977, %v3076
  %v3078 = vpop.f32.mrf.mxu0
  %3079 = vdwg.mxu0
  %3080 = vmatprep.subr.mxu0 0.0
  %3081 = vmatpush1.msra.mxu0 %v2523
  %3082 = vmatprep.subr.mxu0 0.0
  %3083 = vmatpush1.msra.mxu0 %v2522
  %3084 = vmatprep.subr.mxu0 0.0
  %3085 = vmatpush1.msra.mxu0 %v2521
  %3086 = vmatprep.subr.mxu0 0.0
  %3087 = vmatpush1.msra.mxu0 %v2520
  %3088 = vmatprep.subr.mxu0 0.0
  %3089 = vmatpush1.msra.mxu0 %v2519
  %3090 = vmatprep.subr.mxu0 0.0
  %3091 = vmatpush1.msra.mxu0 %v2518
  %3092 = vmatprep.subr.mxu0 0.0
  %3093 = vmatpush1.msra.mxu0 %v2517
  %3094 = vmatprep.subr.mxu0 0.0
  %3095 = vmatpush1.msra.mxu0 %v2516
  %3096 = vmatprep.subr.mxu0 0.0
  %3097 = vmatpush1.msra.mxu0 %v2515
  %3098 = vmatprep.subr.mxu0 0.0
  %3099 = vmatpush1.msra.mxu0 %v2514
  %3100 = vmatprep.subr.mxu0 0.0
  %3101 = vmatpush1.msra.mxu0 %v2513
  %3102 = vmatprep.subr.mxu0 0.0
  %3103 = vmatpush1.msra.mxu0 %v2512
  %3104 = vmatprep.subr.mxu0 0.0
  %3105 = vmatpush1.msra.mxu0 %v2511
  %3106 = vmatprep.subr.mxu0 0.0
  %3107 = vmatpush1.msra.mxu0 %v2510
  %3108 = vmatprep.subr.mxu0 0.0
  %3109 = vmatpush1.msra.mxu0 %v2509
  %3110 = vmatprep.subr.mxu0 0.0
  %3111 = vmatpush1.msra.mxu0 %v2508
  %3112 = vmatprep.subr.mxu0 0.0
  %3113 = vmatpush2.msra.mxu0 %v2539
  %3114 = vmatprep.subr.mxu0 0.0
  %3115 = vmatpush2.msra.mxu0 %v2538
  %3116 = vmatprep.subr.mxu0 0.0
  %3117 = vmatpush2.msra.mxu0 %v2537
  %3118 = vmatprep.subr.mxu0 0.0
  %3119 = vmatpush2.msra.mxu0 %v2536
  %3120 = vmatprep.subr.mxu0 0.0
  %3121 = vmatpush2.msra.mxu0 %v2535
  %3122 = vmatprep.subr.mxu0 0.0
  %3123 = vmatpush2.msra.mxu0 %v2534
  %3124 = vmatprep.subr.mxu0 0.0
  %3125 = vmatpush2.msra.mxu0 %v2533
  %3126 = vmatprep.subr.mxu0 0.0
  %3127 = vmatpush2.msra.mxu0 %v2532
  %3128 = vmatprep.subr.mxu0 0.0
  %3129 = vmatpush2.msra.mxu0 %v2531
  %3130 = vmatprep.subr.mxu0 0.0
  %3131 = vmatpush2.msra.mxu0 %v2530
  %3132 = vmatprep.subr.mxu0 0.0
  %3133 = vmatpush2.msra.mxu0 %v2529
  %3134 = vmatprep.subr.mxu0 0.0
  %3135 = vmatpush2.msra.mxu0 %v2528
  %3136 = vmatprep.subr.mxu0 0.0
  %3137 = vmatpush2.msra.mxu0 %v2527
  %3138 = vmatprep.subr.mxu0 0.0
  %3139 = vmatpush2.msra.mxu0 %v2526
  %3140 = vmatprep.subr.mxu0 0.0
  %3141 = vmatpush2.msra.mxu0 %v2525
  %3142 = vmatprep.subr.mxu0 0.0
  %3143 = vmatpush2.msra.mxu0 %v2524
  %3144 = vmatprep.mubr.f32.mxu0 %v2675
  %3145 = vmatmul.mubr.f32.gmra.mxu0 %v2674
  %v3146 = vpop.f32.mrf.mxu0
  %v3147 = vadd.f32 %v3047, %v3146
  %v3148 = vpop.f32.mrf.mxu0
  %3149 = vmatprep.mubr.f32.mxu0 %v2691
  %3150 = vmatmul.mubr.f32.gmra.mxu0 %v2690
  %v3151 = vpop.f32.mrf.mxu0
  %v3152 = vadd.f32 %v3052, %v3151
  %v3153 = vpop.f32.mrf.mxu0
  %3154 = vmatprep.mubr.f32.mxu0 %v2707
  %3155 = vmatmul.mubr.f32.gmra.mxu0 %v2706
  %v3156 = vpop.f32.mrf.mxu0
  %v3157 = vadd.f32 %v3057, %v3156
  %v3158 = vpop.f32.mrf.mxu0
  %3159 = vmatprep.mubr.f32.mxu0 %v2723
  %3160 = vmatmul.mubr.f32.gmra.mxu0 %v2722
  %v3161 = vpop.f32.mrf.mxu0
  %v3162 = vadd.f32 %v3062, %v3161
  %v3163 = vpop.f32.mrf.mxu0
  %3164 = vmatprep.mubr.f32.mxu0 %v2739
  %3165 = vmatmul.mubr.f32.gmra.mxu0 %v2738
  %v3166 = vpop.f32.mrf.mxu0
  %v3167 = vadd.f32 %v3067, %v3166
  %v3168 = vpop.f32.mrf.mxu0
  %3169 = vmatprep.mubr.f32.mxu0 %v2755
  %3170 = vmatmul.mubr.f32.gmra.mxu0 %v2754
  %v3171 = vpop.f32.mrf.mxu0
  %v3172 = vadd.f32 %v3072, %v3171
  %v3173 = vpop.f32.mrf.mxu0
  %3174 = vmatprep.mubr.f32.mxu0 %v2771
  %3175 = vmatmul.mubr.f32.gmra.mxu0 %v2770
  %v3176 = vpop.f32.mrf.mxu0
  %v3177 = vadd.f32 %v3077, %v3176
  %v3178 = vpop.f32.mrf.mxu0
  %3179 = vdwg.mxu0
  %3180 = vmatprep.subr.mxu0 0.0
  %3181 = vmatpush1.msra.mxu0 %v2555
  %3182 = vmatprep.subr.mxu0 0.0
  %3183 = vmatpush1.msra.mxu0 %v2554
  %3184 = vmatprep.subr.mxu0 0.0
  %3185 = vmatpush1.msra.mxu0 %v2553
  %3186 = vmatprep.subr.mxu0 0.0
  %3187 = vmatpush1.msra.mxu0 %v2552
  %3188 = vmatprep.subr.mxu0 0.0
  %3189 = vmatpush1.msra.mxu0 %v2551
  %3190 = vmatprep.subr.mxu0 0.0
  %3191 = vmatpush1.msra.mxu0 %v2550
  %3192 = vmatprep.subr.mxu0 0.0
  %3193 = vmatpush1.msra.mxu0 %v2549
  %3194 = vmatprep.subr.mxu0 0.0
  %3195 = vmatpush1.msra.mxu0 %v2548
  %3196 = vmatprep.subr.mxu0 0.0
  %3197 = vmatpush1.msra.mxu0 %v2547
  %3198 = vmatprep.subr.mxu0 0.0
  %3199 = vmatpush1.msra.mxu0 %v2546
  %3200 = vmatprep.subr.mxu0 0.0
  %3201 = vmatpush1.msra.mxu0 %v2545
  %3202 = vmatprep.subr.mxu0 0.0
  %3203 = vmatpush1.msra.mxu0 %v2544
  %3204 = vmatprep.subr.mxu0 0.0
  %3205 = vmatpush1.msra.mxu0 %v2543
  %3206 = vmatprep.subr.mxu0 0.0
  %3207 = vmatpush1.msra.mxu0 %v2542
  %3208 = vmatprep.subr.mxu0 0.0
  %3209 = vmatpush1.msra.mxu0 %v2541
  %3210 = vmatprep.subr.mxu0 0.0
  %3211 = vmatpush1.msra.mxu0 %v2540
  %3212 = vmatprep.subr.mxu0 0.0
  %3213 = vmatpush2.msra.mxu0 %v2571
  %3214 = vmatprep.subr.mxu0 0.0
  %3215 = vmatpush2.msra.mxu0 %v2570
  %3216 = vmatprep.subr.mxu0 0.0
  %3217 = vmatpush2.msra.mxu0 %v2569
  %3218 = vmatprep.subr.mxu0 0.0
  %3219 = vmatpush2.msra.mxu0 %v2568
  %3220 = vmatprep.subr.mxu0 0.0
  %3221 = vmatpush2.msra.mxu0 %v2567
  %3222 = vmatprep.subr.mxu0 0.0
  %3223 = vmatpush2.msra.mxu0 %v2566
  %3224 = vmatprep.subr.mxu0 0.0
  %3225 = vmatpush2.msra.mxu0 %v2565
  %3226 = vmatprep.subr.mxu0 0.0
  %3227 = vmatpush2.msra.mxu0 %v2564
  %3228 = vmatprep.subr.mxu0 0.0
  %3229 = vmatpush2.msra.mxu0 %v2563
  %3230 = vmatprep.subr.mxu0 0.0
  %3231 = vmatpush2.msra.mxu0 %v2562
  %3232 = vmatprep.subr.mxu0 0.0
  %3233 = vmatpush2.msra.mxu0 %v2561
  %3234 = vmatprep.subr.mxu0 0.0
  %3235 = vmatpush2.msra.mxu0 %v2560
  %3236 = vmatprep.subr.mxu0 0.0
  %3237 = vmatpush2.msra.mxu0 %v2559
  %3238 = vmatprep.subr.mxu0 0.0
  %3239 = vmatpush2.msra.mxu0 %v2558
  %3240 = vmatprep.subr.mxu0 0.0
  %3241 = vmatpush2.msra.mxu0 %v2557
  %3242 = vmatprep.subr.mxu0 0.0
  %3243 = vmatpush2.msra.mxu0 %v2556
  %3244 = vmatprep.mubr.f32.mxu0 %v2677
  %3245 = vmatmul.mubr.f32.gmra.mxu0 %v2676
  %v3246 = vpop.f32.mrf.mxu0
  %v3247 = vadd.f32 %v3147, %v3246
  %v3248 = vpop.f32.mrf.mxu0
  %3249 = vmatprep.mubr.f32.mxu0 %v2693
  %3250 = vmatmul.mubr.f32.gmra.mxu0 %v2692
  %v3251 = vpop.f32.mrf.mxu0
  %v3252 = vadd.f32 %v3152, %v3251
  %v3253 = vpop.f32.mrf.mxu0
  %3254 = vmatprep.mubr.f32.mxu0 %v2709
  %3255 = vmatmul.mubr.f32.gmra.mxu0 %v2708
  %v3256 = vpop.f32.mrf.mxu0
  %v3257 = vadd.f32 %v3157, %v3256
  %v3258 = vpop.f32.mrf.mxu0
  %3259 = vmatprep.mubr.f32.mxu0 %v2725
  %3260 = vmatmul.mubr.f32.gmra.mxu0 %v2724
  %v3261 = vpop.f32.mrf.mxu0
  %v3262 = vadd.f32 %v3162, %v3261
  %v3263 = vpop.f32.mrf.mxu0
  %3264 = vmatprep.mubr.f32.mxu0 %v2741
  %3265 = vmatmul.mubr.f32.gmra.mxu0 %v2740
  %v3266 = vpop.f32.mrf.mxu0
  %v3267 = vadd.f32 %v3167, %v3266
  %v3268 = vpop.f32.mrf.mxu0
  %3269 = vmatprep.mubr.f32.mxu0 %v2757
  %3270 = vmatmul.mubr.f32.gmra.mxu0 %v2756
  %v3271 = vpop.f32.mrf.mxu0
  %v3272 = vadd.f32 %v3172, %v3271
  %v3273 = vpop.f32.mrf.mxu0
  %3274 = vmatprep.mubr.f32.mxu0 %v2773
  %3275 = vmatmul.mubr.f32.gmra.mxu0 %v2772
  %v3276 = vpop.f32.mrf.mxu0
  %v3277 = vadd.f32 %v3177, %v3276
  %v3278 = vpop.f32.mrf.mxu0
  %3279 = vdwg.mxu0
  %3280 = vmatprep.subr.mxu0 0.0
  %3281 = vmatpush1.msra.mxu0 %v2587
  %3282 = vmatprep.subr.mxu0 0.0
  %3283 = vmatpush1.msra.mxu0 %v2586
  %3284 = vmatprep.subr.mxu0 0.0
  %3285 = vmatpush1.msra.mxu0 %v2585
  %3286 = vmatprep.subr.mxu0 0.0
  %3287 = vmatpush1.msra.mxu0 %v2584
  %3288 = vmatprep.subr.mxu0 0.0
  %3289 = vmatpush1.msra.mxu0 %v2583
  %3290 = vmatprep.subr.mxu0 0.0
  %3291 = vmatpush1.msra.mxu0 %v2582
  %3292 = vmatprep.subr.mxu0 0.0
  %3293 = vmatpush1.msra.mxu0 %v2581
  %3294 = vmatprep.subr.mxu0 0.0
  %3295 = vmatpush1.msra.mxu0 %v2580
  %3296 = vmatprep.subr.mxu0 0.0
  %3297 = vmatpush1.msra.mxu0 %v2579
  %3298 = vmatprep.subr.mxu0 0.0
  %3299 = vmatpush1.msra.mxu0 %v2578
  %3300 = vmatprep.subr.mxu0 0.0
  %3301 = vmatpush1.msra.mxu0 %v2577
  %3302 = vmatprep.subr.mxu0 0.0
  %3303 = vmatpush1.msra.mxu0 %v2576
  %3304 = vmatprep.subr.mxu0 0.0
  %3305 = vmatpush1.msra.mxu0 %v2575
  %3306 = vmatprep.subr.mxu0 0.0
  %3307 = vmatpush1.msra.mxu0 %v2574
  %3308 = vmatprep.subr.mxu0 0.0
  %3309 = vmatpush1.msra.mxu0 %v2573
  %3310 = vmatprep.subr.mxu0 0.0
  %3311 = vmatpush1.msra.mxu0 %v2572
  %3312 = vmatprep.subr.mxu0 0.0
  %3313 = vmatpush2.msra.mxu0 %v2603
  %3314 = vmatprep.subr.mxu0 0.0
  %3315 = vmatpush2.msra.mxu0 %v2602
  %3316 = vmatprep.subr.mxu0 0.0
  %3317 = vmatpush2.msra.mxu0 %v2601
  %3318 = vmatprep.subr.mxu0 0.0
  %3319 = vmatpush2.msra.mxu0 %v2600
  %3320 = vmatprep.subr.mxu0 0.0
  %3321 = vmatpush2.msra.mxu0 %v2599
  %3322 = vmatprep.subr.mxu0 0.0
  %3323 = vmatpush2.msra.mxu0 %v2598
  %3324 = vmatprep.subr.mxu0 0.0
  %3325 = vmatpush2.msra.mxu0 %v2597
  %3326 = vmatprep.subr.mxu0 0.0
  %3327 = vmatpush2.msra.mxu0 %v2596
  %3328 = vmatprep.subr.mxu0 0.0
  %3329 = vmatpush2.msra.mxu0 %v2595
  %3330 = vmatprep.subr.mxu0 0.0
  %3331 = vmatpush2.msra.mxu0 %v2594
  %3332 = vmatprep.subr.mxu0 0.0
  %3333 = vmatpush2.msra.mxu0 %v2593
  %3334 = vmatprep.subr.mxu0 0.0
  %3335 = vmatpush2.msra.mxu0 %v2592
  %3336 = vmatprep.subr.mxu0 0.0
  %3337 = vmatpush2.msra.mxu0 %v2591
  %3338 = vmatprep.subr.mxu0 0.0
  %3339 = vmatpush2.msra.mxu0 %v2590
  %3340 = vmatprep.subr.mxu0 0.0
  %3341 = vmatpush2.msra.mxu0 %v2589
  %3342 = vmatprep.subr.mxu0 0.0
  %3343 = vmatpush2.msra.mxu0 %v2588
  %3344 = vmatprep.mubr.f32.mxu0 %v2679
  %3345 = vmatmul.mubr.f32.gmra.mxu0 %v2678
  %v3346 = vpop.f32.mrf.mxu0
  %v3347 = vadd.f32 %v3247, %v3346
  %v3348 = vpop.f32.mrf.mxu0
  %3349 = vmatprep.mubr.f32.mxu0 %v2695
  %3350 = vmatmul.mubr.f32.gmra.mxu0 %v2694
  %v3351 = vpop.f32.mrf.mxu0
  %v3352 = vadd.f32 %v3252, %v3351
  %v3353 = vpop.f32.mrf.mxu0
  %3354 = vmatprep.mubr.f32.mxu0 %v2711
  %3355 = vmatmul.mubr.f32.gmra.mxu0 %v2710
  %v3356 = vpop.f32.mrf.mxu0
  %v3357 = vadd.f32 %v3257, %v3356
  %v3358 = vpop.f32.mrf.mxu0
  %3359 = vmatprep.mubr.f32.mxu0 %v2727
  %3360 = vmatmul.mubr.f32.gmra.mxu0 %v2726
  %v3361 = vpop.f32.mrf.mxu0
  %v3362 = vadd.f32 %v3262, %v3361
  %v3363 = vpop.f32.mrf.mxu0
  %3364 = vmatprep.mubr.f32.mxu0 %v2743
  %3365 = vmatmul.mubr.f32.gmra.mxu0 %v2742
  %v3366 = vpop.f32.mrf.mxu0
  %v3367 = vadd.f32 %v3267, %v3366
  %v3368 = vpop.f32.mrf.mxu0
  %3369 = vmatprep.mubr.f32.mxu0 %v2759
  %3370 = vmatmul.mubr.f32.gmra.mxu0 %v2758
  %v3371 = vpop.f32.mrf.mxu0
  %v3372 = vadd.f32 %v3272, %v3371
  %v3373 = vpop.f32.mrf.mxu0
  %3374 = vmatprep.mubr.f32.mxu0 %v2775
  %3375 = vmatmul.mubr.f32.gmra.mxu0 %v2774
  %v3376 = vpop.f32.mrf.mxu0
  %v3377 = vadd.f32 %v3277, %v3376
  %v3378 = vpop.f32.mrf.mxu0
  %3379 = vdwg.mxu0
  %3380 = vmatprep.subr.mxu0 0.0
  %3381 = vmatpush1.msra.mxu0 %v2619
  %3382 = vmatprep.subr.mxu0 0.0
  %3383 = vmatpush1.msra.mxu0 %v2618
  %3384 = vmatprep.subr.mxu0 0.0
  %3385 = vmatpush1.msra.mxu0 %v2617
  %3386 = vmatprep.subr.mxu0 0.0
  %3387 = vmatpush1.msra.mxu0 %v2616
  %3388 = vmatprep.subr.mxu0 0.0
  %3389 = vmatpush1.msra.mxu0 %v2615
  %3390 = vmatprep.subr.mxu0 0.0
  %3391 = vmatpush1.msra.mxu0 %v2614
  %3392 = vmatprep.subr.mxu0 0.0
  %3393 = vmatpush1.msra.mxu0 %v2613
  %3394 = vmatprep.subr.mxu0 0.0
  %3395 = vmatpush1.msra.mxu0 %v2612
  %3396 = vmatprep.subr.mxu0 0.0
  %3397 = vmatpush1.msra.mxu0 %v2611
  %3398 = vmatprep.subr.mxu0 0.0
  %3399 = vmatpush1.msra.mxu0 %v2610
  %3400 = vmatprep.subr.mxu0 0.0
  %3401 = vmatpush1.msra.mxu0 %v2609
  %3402 = vmatprep.subr.mxu0 0.0
  %3403 = vmatpush1.msra.mxu0 %v2608
  %3404 = vmatprep.subr.mxu0 0.0
  %3405 = vmatpush1.msra.mxu0 %v2607
  %3406 = vmatprep.subr.mxu0 0.0
  %3407 = vmatpush1.msra.mxu0 %v2606
  %3408 = vmatprep.subr.mxu0 0.0
  %3409 = vmatpush1.msra.mxu0 %v2605
  %3410 = vmatprep.subr.mxu0 0.0
  %3411 = vmatpush1.msra.mxu0 %v2604
  %3412 = vmatprep.subr.mxu0 0.0
  %3413 = vmatpush2.msra.mxu0 %v2635
  %3414 = vmatprep.subr.mxu0 0.0
  %3415 = vmatpush2.msra.mxu0 %v2634
  %3416 = vmatprep.subr.mxu0 0.0
  %3417 = vmatpush2.msra.mxu0 %v2633
  %3418 = vmatprep.subr.mxu0 0.0
  %3419 = vmatpush2.msra.mxu0 %v2632
  %3420 = vmatprep.subr.mxu0 0.0
  %3421 = vmatpush2.msra.mxu0 %v2631
  %3422 = vmatprep.subr.mxu0 0.0
  %3423 = vmatpush2.msra.mxu0 %v2630
  %3424 = vmatprep.subr.mxu0 0.0
  %3425 = vmatpush2.msra.mxu0 %v2629
  %3426 = vmatprep.subr.mxu0 0.0
  %3427 = vmatpush2.msra.mxu0 %v2628
  %3428 = vmatprep.subr.mxu0 0.0
  %3429 = vmatpush2.msra.mxu0 %v2627
  %3430 = vmatprep.subr.mxu0 0.0
  %3431 = vmatpush2.msra.mxu0 %v2626
  %3432 = vmatprep.subr.mxu0 0.0
  %3433 = vmatpush2.msra.mxu0 %v2625
  %3434 = vmatprep.subr.mxu0 0.0
  %3435 = vmatpush2.msra.mxu0 %v2624
  %3436 = vmatprep.subr.mxu0 0.0
  %3437 = vmatpush2.msra.mxu0 %v2623
  %3438 = vmatprep.subr.mxu0 0.0
  %3439 = vmatpush2.msra.mxu0 %v2622
  %3440 = vmatprep.subr.mxu0 0.0
  %3441 = vmatpush2.msra.mxu0 %v2621
  %3442 = vmatprep.subr.mxu0 0.0
  %3443 = vmatpush2.msra.mxu0 %v2620
  %3444 = vmatprep.mubr.f32.mxu0 %v2681
  %3445 = vmatmul.mubr.f32.gmra.mxu0 %v2680
  %v3446 = vpop.f32.mrf.mxu0
  %v3447 = vadd.f32 %v3347, %v3446
  %v3448 = vpop.f32.mrf.mxu0
  %3449 = vmatprep.mubr.f32.mxu0 %v2697
  %3450 = vmatmul.mubr.f32.gmra.mxu0 %v2696
  %v3451 = vpop.f32.mrf.mxu0
  %v3452 = vadd.f32 %v3352, %v3451
  %v3453 = vpop.f32.mrf.mxu0
  %3454 = vmatprep.mubr.f32.mxu0 %v2713
  %3455 = vmatmul.mubr.f32.gmra.mxu0 %v2712
  %v3456 = vpop.f32.mrf.mxu0
  %v3457 = vadd.f32 %v3357, %v3456
  %v3458 = vpop.f32.mrf.mxu0
  %3459 = vmatprep.mubr.f32.mxu0 %v2729
  %3460 = vmatmul.mubr.f32.gmra.mxu0 %v2728
  %v3461 = vpop.f32.mrf.mxu0
  %v3462 = vadd.f32 %v3362, %v3461
  %v3463 = vpop.f32.mrf.mxu0
  %3464 = vmatprep.mubr.f32.mxu0 %v2745
  %3465 = vmatmul.mubr.f32.gmra.mxu0 %v2744
  %v3466 = vpop.f32.mrf.mxu0
  %v3467 = vadd.f32 %v3367, %v3466
  %v3468 = vpop.f32.mrf.mxu0
  %3469 = vmatprep.mubr.f32.mxu0 %v2761
  %3470 = vmatmul.mubr.f32.gmra.mxu0 %v2760
  %v3471 = vpop.f32.mrf.mxu0
  %v3472 = vadd.f32 %v3372, %v3471
  %v3473 = vpop.f32.mrf.mxu0
  %3474 = vmatprep.mubr.f32.mxu0 %v2777
  %3475 = vmatmul.mubr.f32.gmra.mxu0 %v2776
  %v3476 = vpop.f32.mrf.mxu0
  %v3477 = vadd.f32 %v3377, %v3476
  %v3478 = vpop.f32.mrf.mxu0
  %3479 = vdwg.mxu0
  %3480 = vmatprep.subr.mxu0 0.0
  %3481 = vmatpush1.msra.mxu0 %v2651
  %3482 = vmatprep.subr.mxu0 0.0
  %3483 = vmatpush1.msra.mxu0 %v2650
  %3484 = vmatprep.subr.mxu0 0.0
  %3485 = vmatpush1.msra.mxu0 %v2649
  %3486 = vmatprep.subr.mxu0 0.0
  %3487 = vmatpush1.msra.mxu0 %v2648
  %3488 = vmatprep.subr.mxu0 0.0
  %3489 = vmatpush1.msra.mxu0 %v2647
  %3490 = vmatprep.subr.mxu0 0.0
  %3491 = vmatpush1.msra.mxu0 %v2646
  %3492 = vmatprep.subr.mxu0 0.0
  %3493 = vmatpush1.msra.mxu0 %v2645
  %3494 = vmatprep.subr.mxu0 0.0
  %3495 = vmatpush1.msra.mxu0 %v2644
  %3496 = vmatprep.subr.mxu0 0.0
  %3497 = vmatpush1.msra.mxu0 %v2643
  %3498 = vmatprep.subr.mxu0 0.0
  %3499 = vmatpush1.msra.mxu0 %v2642
  %3500 = vmatprep.subr.mxu0 0.0
  %3501 = vmatpush1.msra.mxu0 %v2641
  %3502 = vmatprep.subr.mxu0 0.0
  %3503 = vmatpush1.msra.mxu0 %v2640
  %3504 = vmatprep.subr.mxu0 0.0
  %3505 = vmatpush1.msra.mxu0 %v2639
  %3506 = vmatprep.subr.mxu0 0.0
  %3507 = vmatpush1.msra.mxu0 %v2638
  %3508 = vmatprep.subr.mxu0 0.0
  %3509 = vmatpush1.msra.mxu0 %v2637
  %3510 = vmatprep.subr.mxu0 0.0
  %3511 = vmatpush1.msra.mxu0 %v2636
  %3512 = vmatprep.subr.mxu0 0.0
  %3513 = vmatpush2.msra.mxu0 %v2667
  %3514 = vmatprep.subr.mxu0 0.0
  %3515 = vmatpush2.msra.mxu0 %v2666
  %3516 = vmatprep.subr.mxu0 0.0
  %3517 = vmatpush2.msra.mxu0 %v2665
  %3518 = vmatprep.subr.mxu0 0.0
  %3519 = vmatpush2.msra.mxu0 %v2664
  %3520 = vmatprep.subr.mxu0 0.0
  %3521 = vmatpush2.msra.mxu0 %v2663
  %3522 = vmatprep.subr.mxu0 0.0
  %3523 = vmatpush2.msra.mxu0 %v2662
  %3524 = vmatprep.subr.mxu0 0.0
  %3525 = vmatpush2.msra.mxu0 %v2661
  %3526 = vmatprep.subr.mxu0 0.0
  %3527 = vmatpush2.msra.mxu0 %v2660
  %3528 = vmatprep.subr.mxu0 0.0
  %3529 = vmatpush2.msra.mxu0 %v2659
  %3530 = vmatprep.subr.mxu0 0.0
  %3531 = vmatpush2.msra.mxu0 %v2658
  %3532 = vmatprep.subr.mxu0 0.0
  %3533 = vmatpush2.msra.mxu0 %v2657
  %3534 = vmatprep.subr.mxu0 0.0
  %3535 = vmatpush2.msra.mxu0 %v2656
  %3536 = vmatprep.subr.mxu0 0.0
  %3537 = vmatpush2.msra.mxu0 %v2655
  %3538 = vmatprep.subr.mxu0 0.0
  %3539 = vmatpush2.msra.mxu0 %v2654
  %3540 = vmatprep.subr.mxu0 0.0
  %3541 = vmatpush2.msra.mxu0 %v2653
  %3542 = vmatprep.subr.mxu0 0.0
  %3543 = vmatpush2.msra.mxu0 %v2652
  %3544 = vmatprep.mubr.f32.mxu0 %v2683
  %3545 = vmatmul.mubr.f32.gmra.mxu0 %v2682
  %v3546 = vpop.f32.mrf.mxu0
  %v3547 = vadd.f32 %v3447, %v3546
  %v3548 = vpop.f32.mrf.mxu0
  %3549 = vmatprep.mubr.f32.mxu0 %v2699
  %3550 = vmatmul.mubr.f32.gmra.mxu0 %v2698
  %v3551 = vpop.f32.mrf.mxu0
  %v3552 = vadd.f32 %v3452, %v3551
  %v3553 = vpop.f32.mrf.mxu0
  %3554 = vmatprep.mubr.f32.mxu0 %v2715
  %3555 = vmatmul.mubr.f32.gmra.mxu0 %v2714
  %v3556 = vpop.f32.mrf.mxu0
  %v3557 = vadd.f32 %v3457, %v3556
  %v3558 = vpop.f32.mrf.mxu0
  %3559 = vmatprep.mubr.f32.mxu0 %v2731
  %3560 = vmatmul.mubr.f32.gmra.mxu0 %v2730
  %v3561 = vpop.f32.mrf.mxu0
  %v3562 = vadd.f32 %v3462, %v3561
  %v3563 = vpop.f32.mrf.mxu0
  %3564 = vmatprep.mubr.f32.mxu0 %v2747
  %3565 = vmatmul.mubr.f32.gmra.mxu0 %v2746
  %v3566 = vpop.f32.mrf.mxu0
  %v3567 = vadd.f32 %v3467, %v3566
  %v3568 = vpop.f32.mrf.mxu0
  %3569 = vmatprep.mubr.f32.mxu0 %v2763
  %3570 = vmatmul.mubr.f32.gmra.mxu0 %v2762
  %v3571 = vpop.f32.mrf.mxu0
  %v3572 = vadd.f32 %v3472, %v3571
  %v3573 = vpop.f32.mrf.mxu0
  %3574 = vmatprep.mubr.f32.mxu0 %v2779
  %3575 = vmatmul.mubr.f32.gmra.mxu0 %v2778
  %v3576 = vpop.f32.mrf.mxu0
  %v3577 = vadd.f32 %v3477, %v3576
  %v3578 = vpop.f32.mrf.mxu0
  %3579 = vdwg.mxu0
  %v3580 = vld [vmem:[%s6] sm:$0xff]
  %v3581 = vld [vmem:[%s6 + $0x8] sm:$0xff]
  %v3582 = vld [vmem:[%s6 + $0x10] sm:$0xff]
  %v3583 = vld [vmem:[%s6 + $0x18] sm:$0xff]
  %v3584 = vld [vmem:[%s7] sm:$0x1]
  %v3586 = vlaneseq
  %v3587 = vshrl.u32 %v3586, 7
  %v3588 = vsub.s32 0, %v3587
  %v3589 = vrot.slane %v3584, %v3588
  %v3592 = vsel %vm298, %v3552, 0
  %v3595 = vsel %vm298, %v3557, 0
  %v3598 = vsel %vm298, %v3562, 0
  %v3601 = vsel %vm298, %v3567, 0
  %v3604 = vsel %vm298, %v3572, 0
  %v3607 = vsel %vm298, %v3577, 0
  %3609 = vmatprep.subr.mxu0 0.0
  %3610 = vmatpush1.msra.mxu0 0.0
  %3611 = vmatprep.subr.mxu0 0.0
  %3612 = vmatpush1.msra.mxu0 0.0
  %3613 = vmatprep.subr.mxu0 0.0
  %3614 = vmatpush1.msra.mxu0 0.0
  %3615 = vmatprep.subr.mxu0 0.0
  %3616 = vmatpush1.msra.mxu0 0.0
  %3617 = vmatprep.subr.mxu0 0.0
  %3618 = vmatpush1.msra.mxu0 0.0
  %3619 = vmatprep.subr.mxu0 0.0
  %3620 = vmatpush1.msra.mxu0 0.0
  %3621 = vmatprep.subr.mxu0 0.0
  %3622 = vmatpush1.msra.mxu0 0.0
  %3623 = vmatprep.subr.mxu0 0.0
  %3624 = vmatpush1.msra.mxu0 0.0
  %3625 = vmatprep.subr.mxu0 0.0
  %3626 = vmatpush1.msra.mxu0 0.0
  %3627 = vmatprep.subr.mxu0 0.0
  %3628 = vmatpush1.msra.mxu0 0.0
  %3629 = vmatprep.subr.mxu0 0.0
  %3630 = vmatpush1.msra.mxu0 0.0
  %3631 = vmatprep.subr.mxu0 0.0
  %3632 = vmatpush1.msra.mxu0 0.0
  %3633 = vmatprep.subr.mxu0 0.0
  %3634 = vmatpush1.msra.mxu0 %v3583
  %3635 = vmatprep.subr.mxu0 0.0
  %3636 = vmatpush1.msra.mxu0 %v3582
  %3637 = vmatprep.subr.mxu0 0.0
  %3638 = vmatpush1.msra.mxu0 %v3581
  %3639 = vmatprep.subr.mxu0 0.0
  %3640 = vmatpush1.msra.mxu0 %v3580
  %3641 = vmatprep.subr.mxu0 0.0
  %3642 = vmatpush2.msra.mxu0 0.0
  %3643 = vmatprep.subr.mxu0 0.0
  %3644 = vmatpush2.msra.mxu0 0.0
  %3645 = vmatprep.subr.mxu0 0.0
  %3646 = vmatpush2.msra.mxu0 0.0
  %3647 = vmatprep.subr.mxu0 0.0
  %3648 = vmatpush2.msra.mxu0 0.0
  %3649 = vmatprep.subr.mxu0 0.0
  %3650 = vmatpush2.msra.mxu0 0.0
  %3651 = vmatprep.subr.mxu0 0.0
  %3652 = vmatpush2.msra.mxu0 0.0
  %3653 = vmatprep.subr.mxu0 0.0
  %3654 = vmatpush2.msra.mxu0 0.0
  %3655 = vmatprep.subr.mxu0 0.0
  %3656 = vmatpush2.msra.mxu0 0.0
  %3657 = vmatprep.subr.mxu0 0.0
  %3658 = vmatpush2.msra.mxu0 0.0
  %3659 = vmatprep.subr.mxu0 0.0
  %3660 = vmatpush2.msra.mxu0 0.0
  %3661 = vmatprep.subr.mxu0 0.0
  %3662 = vmatpush2.msra.mxu0 0.0
  %3663 = vmatprep.subr.mxu0 0.0
  %3664 = vmatpush2.msra.mxu0 0.0
  %3665 = vmatprep.subr.mxu0 0.0
  %3666 = vmatpush2.msra.mxu0 0.0
  %3667 = vmatprep.subr.mxu0 0.0
  %3668 = vmatpush2.msra.mxu0 0.0
  %3669 = vmatprep.subr.mxu0 0.0
  %3670 = vmatpush2.msra.mxu0 0.0
  %3671 = vmatprep.subr.mxu0 0.0
  %3672 = vmatpush2.msra.mxu0 0.0
  %3673 = vmatprep.mubr.f32.mxu0 0.0
  %3674 = vmatmul.mubr.f32.gmra.mxu0 %v3592
  %v3675 = vpop.f32.mrf.mxu0
  %v3676 = vadd.f32 %v3589, %v3675
  %v3677 = vpop.f32.mrf.mxu0
  %3678 = vmatprep.mubr.f32.mxu0 0.0
  %3679 = vmatmul.mubr.f32.gmra.mxu0 %v3595
  %v3680 = vpop.f32.mrf.mxu0
  %v3681 = vadd.f32 %v3589, %v3680
  %v3682 = vpop.f32.mrf.mxu0
  %3683 = vmatprep.mubr.f32.mxu0 0.0
  %3684 = vmatmul.mubr.f32.gmra.mxu0 %v3598
  %v3685 = vpop.f32.mrf.mxu0
  %v3686 = vadd.f32 %v3589, %v3685
  %v3687 = vpop.f32.mrf.mxu0
  %3688 = vmatprep.mubr.f32.mxu0 0.0
  %3689 = vmatmul.mubr.f32.gmra.mxu0 %v3601
  %v3690 = vpop.f32.mrf.mxu0
  %v3691 = vadd.f32 %v3589, %v3690
  %v3692 = vpop.f32.mrf.mxu0
  %3693 = vmatprep.mubr.f32.mxu0 0.0
  %3694 = vmatmul.mubr.f32.gmra.mxu0 %v3604
  %v3695 = vpop.f32.mrf.mxu0
  %v3696 = vadd.f32 %v3589, %v3695
  %v3697 = vpop.f32.mrf.mxu0
  %3698 = vmatprep.mubr.f32.mxu0 0.0
  %3699 = vmatmul.mubr.f32.gmra.mxu0 %v3607
  %v3700 = vpop.f32.mrf.mxu0
  %v3701 = vadd.f32 %v3589, %v3700
  %v3702 = vpop.f32.mrf.mxu0
  %3703 = vdwg.mxu0
  %3704 = vst [vmem:[%s9] sm:$0xff] %v3676
  %3705 = vst [vmem:[%s9 + $0x8] sm:$0xff] %v3681
  %3706 = vst [vmem:[%s9 + $0x10] sm:$0xff] %v3686
  %3707 = vst [vmem:[%s9 + $0x18] sm:$0xff] %v3691
  %3708 = vst [vmem:[%s9 + $0x20] sm:$0xff] %v3696
  %3709 = vst [vmem:[%s9 + $0x28] sm:$0xff] %v3701
  %v3710 = vld [vmem:[%s4] sm:$0xff]
  %v3711 = vld [vmem:[%s4 + $0x8] sm:$0xff]
  %v3712 = vld [vmem:[%s4 + $0x10] sm:$0xff]
  %v3713 = vld [vmem:[%s4 + $0x18] sm:$0xff]
  %v3714 = vld [vmem:[%s4 + $0x20] sm:$0xff]
  %v3715 = vld [vmem:[%s4 + $0x28] sm:$0xff]
  %v3716 = vld [vmem:[%s4 + $0x30] sm:$0xff]
  %v3717 = vld [vmem:[%s4 + $0x38] sm:$0xff]
  %v3718 = vld [vmem:[%s4 + $0x40] sm:$0xff]
  %v3719 = vld [vmem:[%s4 + $0x48] sm:$0xff]
  %v3720 = vld [vmem:[%s4 + $0x50] sm:$0xff]
  %v3721 = vld [vmem:[%s4 + $0x58] sm:$0xff]
  %v3722 = vld [vmem:[%s4 + $0x60] sm:$0xff]
  %v3723 = vld [vmem:[%s4 + $0x68] sm:$0xff]
  %v3724 = vld [vmem:[%s4 + $0x70] sm:$0xff]
  %v3725 = vld [vmem:[%s4 + $0x78] sm:$0xff]
  %v3726 = vld [vmem:[%s4 + $0x80] sm:$0xff]
  %v3727 = vld [vmem:[%s4 + $0x88] sm:$0xff]
  %v3728 = vld [vmem:[%s4 + $0x90] sm:$0xff]
  %v3729 = vld [vmem:[%s4 + $0x98] sm:$0xff]
  %v3730 = vld [vmem:[%s4 + $0xa0] sm:$0xff]
  %v3731 = vld [vmem:[%s4 + $0xa8] sm:$0xff]
  %v3732 = vld [vmem:[%s4 + $0xb0] sm:$0xff]
  %v3733 = vld [vmem:[%s4 + $0xb8] sm:$0xff]
  %v3734 = vld [vmem:[%s4 + $0xc0] sm:$0xff]
  %v3735 = vld [vmem:[%s4 + $0xc8] sm:$0xff]
  %v3736 = vld [vmem:[%s4 + $0xd0] sm:$0xff]
  %v3737 = vld [vmem:[%s4 + $0xd8] sm:$0xff]
  %v3738 = vld [vmem:[%s4 + $0xe0] sm:$0xff]
  %v3739 = vld [vmem:[%s4 + $0xe8] sm:$0xff]
  %v3740 = vld [vmem:[%s4 + $0xf0] sm:$0xff]
  %v3741 = vld [vmem:[%s4 + $0xf8] sm:$0xff]
  %v3742 = vld [vmem:[%s4 + $0x100] sm:$0xff]
  %v3743 = vld [vmem:[%s4 + $0x108] sm:$0xff]
  %v3744 = vld [vmem:[%s4 + $0x110] sm:$0xff]
  %v3745 = vld [vmem:[%s4 + $0x118] sm:$0xff]
  %v3746 = vld [vmem:[%s4 + $0x120] sm:$0xff]
  %v3747 = vld [vmem:[%s4 + $0x128] sm:$0xff]
  %v3748 = vld [vmem:[%s4 + $0x130] sm:$0xff]
  %v3749 = vld [vmem:[%s4 + $0x138] sm:$0xff]
  %v3750 = vld [vmem:[%s4 + $0x140] sm:$0xff]
  %v3751 = vld [vmem:[%s4 + $0x148] sm:$0xff]
  %v3752 = vld [vmem:[%s4 + $0x150] sm:$0xff]
  %v3753 = vld [vmem:[%s4 + $0x158] sm:$0xff]
  %v3754 = vld [vmem:[%s4 + $0x160] sm:$0xff]
  %v3755 = vld [vmem:[%s4 + $0x168] sm:$0xff]
  %v3756 = vld [vmem:[%s4 + $0x170] sm:$0xff]
  %v3757 = vld [vmem:[%s4 + $0x178] sm:$0xff]
  %v3758 = vld [vmem:[%s4 + $0x180] sm:$0xff]
  %v3759 = vld [vmem:[%s4 + $0x188] sm:$0xff]
  %v3760 = vld [vmem:[%s4 + $0x190] sm:$0xff]
  %v3761 = vld [vmem:[%s4 + $0x198] sm:$0xff]
  %v3762 = vld [vmem:[%s4 + $0x1a0] sm:$0xff]
  %v3763 = vld [vmem:[%s4 + $0x1a8] sm:$0xff]
  %v3764 = vld [vmem:[%s4 + $0x1b0] sm:$0xff]
  %v3765 = vld [vmem:[%s4 + $0x1b8] sm:$0xff]
  %v3766 = vld [vmem:[%s4 + $0x1c0] sm:$0xff]
  %v3767 = vld [vmem:[%s4 + $0x1c8] sm:$0xff]
  %v3768 = vld [vmem:[%s4 + $0x1d0] sm:$0xff]
  %v3769 = vld [vmem:[%s4 + $0x1d8] sm:$0xff]
  %v3770 = vld [vmem:[%s4 + $0x1e0] sm:$0xff]
  %v3771 = vld [vmem:[%s4 + $0x1e8] sm:$0xff]
  %v3772 = vld [vmem:[%s4 + $0x1f0] sm:$0xff]
  %v3773 = vld [vmem:[%s4 + $0x1f8] sm:$0xff]
  %v3774 = vld [vmem:[%s4 + $0x200] sm:$0xff]
  %v3775 = vld [vmem:[%s4 + $0x208] sm:$0xff]
  %v3776 = vld [vmem:[%s4 + $0x210] sm:$0xff]
  %v3777 = vld [vmem:[%s4 + $0x218] sm:$0xff]
  %v3778 = vld [vmem:[%s4 + $0x220] sm:$0xff]
  %v3779 = vld [vmem:[%s4 + $0x228] sm:$0xff]
  %v3780 = vld [vmem:[%s4 + $0x230] sm:$0xff]
  %v3781 = vld [vmem:[%s4 + $0x238] sm:$0xff]
  %v3782 = vld [vmem:[%s4 + $0x240] sm:$0xff]
  %v3783 = vld [vmem:[%s4 + $0x248] sm:$0xff]
  %v3784 = vld [vmem:[%s4 + $0x250] sm:$0xff]
  %v3785 = vld [vmem:[%s4 + $0x258] sm:$0xff]
  %v3786 = vld [vmem:[%s4 + $0x260] sm:$0xff]
  %v3787 = vld [vmem:[%s4 + $0x268] sm:$0xff]
  %v3788 = vld [vmem:[%s4 + $0x270] sm:$0xff]
  %v3789 = vld [vmem:[%s4 + $0x278] sm:$0xff]
  %v3790 = vld [vmem:[%s4 + $0x280] sm:$0xff]
  %v3791 = vld [vmem:[%s4 + $0x288] sm:$0xff]
  %v3792 = vld [vmem:[%s4 + $0x290] sm:$0xff]
  %v3793 = vld [vmem:[%s4 + $0x298] sm:$0xff]
  %v3794 = vld [vmem:[%s4 + $0x2a0] sm:$0xff]
  %v3795 = vld [vmem:[%s4 + $0x2a8] sm:$0xff]
  %v3796 = vld [vmem:[%s4 + $0x2b0] sm:$0xff]
  %v3797 = vld [vmem:[%s4 + $0x2b8] sm:$0xff]
  %v3798 = vld [vmem:[%s4 + $0x2c0] sm:$0xff]
  %v3799 = vld [vmem:[%s4 + $0x2c8] sm:$0xff]
  %v3800 = vld [vmem:[%s4 + $0x2d0] sm:$0xff]
  %v3801 = vld [vmem:[%s4 + $0x2d8] sm:$0xff]
  %v3802 = vld [vmem:[%s4 + $0x2e0] sm:$0xff]
  %v3803 = vld [vmem:[%s4 + $0x2e8] sm:$0xff]
  %v3804 = vld [vmem:[%s4 + $0x2f0] sm:$0xff]
  %v3805 = vld [vmem:[%s4 + $0x2f8] sm:$0xff]
  %v3806 = vld [vmem:[%s4 + $0x300] sm:$0xff]
  %v3807 = vld [vmem:[%s4 + $0x308] sm:$0xff]
  %v3808 = vld [vmem:[%s4 + $0x310] sm:$0xff]
  %v3809 = vld [vmem:[%s4 + $0x318] sm:$0xff]
  %v3810 = vld [vmem:[%s4 + $0x320] sm:$0xff]
  %v3811 = vld [vmem:[%s4 + $0x328] sm:$0xff]
  %v3812 = vld [vmem:[%s4 + $0x330] sm:$0xff]
  %v3813 = vld [vmem:[%s4 + $0x338] sm:$0xff]
  %v3814 = vld [vmem:[%s4 + $0x340] sm:$0xff]
  %v3815 = vld [vmem:[%s4 + $0x348] sm:$0xff]
  %v3816 = vld [vmem:[%s4 + $0x350] sm:$0xff]
  %v3817 = vld [vmem:[%s4 + $0x358] sm:$0xff]
  %v3818 = vld [vmem:[%s4 + $0x360] sm:$0xff]
  %v3819 = vld [vmem:[%s4 + $0x368] sm:$0xff]
  %v3820 = vld [vmem:[%s4 + $0x370] sm:$0xff]
  %v3821 = vld [vmem:[%s4 + $0x378] sm:$0xff]
  %3822 = vmatprep.subr.mxu0 0.0
  %3823 = vmatpush1.msra.mxu0 0.0
  %3824 = vmatprep.subr.mxu0 0.0
  %3825 = vmatpush1.msra.mxu0 0.0
  %3826 = vmatprep.subr.mxu0 0.0
  %3827 = vmatpush1.msra.mxu0 0.0
  %3828 = vmatprep.subr.mxu0 0.0
  %3829 = vmatpush1.msra.mxu0 0.0
  %3830 = vmatprep.subr.mxu0 0.0
  %3831 = vmatpush1.msra.mxu0 0.0
  %3832 = vmatprep.subr.mxu0 0.0
  %3833 = vmatpush1.msra.mxu0 0.0
  %3834 = vmatprep.subr.mxu0 0.0
  %3835 = vmatpush1.msra.mxu0 0.0
  %3836 = vmatprep.subr.mxu0 0.0
  %3837 = vmatpush1.msra.mxu0 0.0
  %3838 = vmatprep.subr.mxu0 0.0
  %3839 = vmatpush1.msra.mxu0 0.0
  %3840 = vmatprep.subr.mxu0 0.0
  %3841 = vmatpush1.msra.mxu0 0.0
  %3842 = vmatprep.subr.mxu0 0.0
  %3843 = vmatpush1.msra.mxu0 0.0
  %3844 = vmatprep.subr.mxu0 0.0
  %3845 = vmatpush1.msra.mxu0 0.0
  %3846 = vmatprep.subr.mxu0 %v3723
  %3847 = vmatpush1.msra.mxu0 %v3722
  %3848 = vmatprep.subr.mxu0 %v3719
  %3849 = vmatpush1.msra.mxu0 %v3718
  %3850 = vmatprep.subr.mxu0 %v3715
  %3851 = vmatpush1.msra.mxu0 %v3714
  %3852 = vmatprep.subr.mxu0 %v3711
  %3853 = vmatpush1.msra.mxu0 %v3710
  %3854 = vmatprep.subr.mxu0 0.0
  %3855 = vmatpush2.msra.mxu0 0.0
  %3856 = vmatprep.subr.mxu0 0.0
  %3857 = vmatpush2.msra.mxu0 0.0
  %3858 = vmatprep.subr.mxu0 0.0
  %3859 = vmatpush2.msra.mxu0 0.0
  %3860 = vmatprep.subr.mxu0 0.0
  %3861 = vmatpush2.msra.mxu0 0.0
  %3862 = vmatprep.subr.mxu0 0.0
  %3863 = vmatpush2.msra.mxu0 0.0
  %3864 = vmatprep.subr.mxu0 0.0
  %3865 = vmatpush2.msra.mxu0 0.0
  %3866 = vmatprep.subr.mxu0 0.0
  %3867 = vmatpush2.msra.mxu0 0.0
  %3868 = vmatprep.subr.mxu0 0.0
  %3869 = vmatpush2.msra.mxu0 0.0
  %3870 = vmatprep.subr.mxu0 0.0
  %3871 = vmatpush2.msra.mxu0 0.0
  %3872 = vmatprep.subr.mxu0 0.0
  %3873 = vmatpush2.msra.mxu0 0.0
  %3874 = vmatprep.subr.mxu0 0.0
  %3875 = vmatpush2.msra.mxu0 0.0
  %3876 = vmatprep.subr.mxu0 0.0
  %3877 = vmatpush2.msra.mxu0 0.0
  %3878 = vmatprep.subr.mxu0 0.0
  %3879 = vmatpush2.msra.mxu0 0.0
  %3880 = vmatprep.subr.mxu0 0.0
  %3881 = vmatpush2.msra.mxu0 0.0
  %3882 = vmatprep.subr.mxu0 0.0
  %3883 = vmatpush2.msra.mxu0 0.0
  %3884 = vmatprep.subr.mxu0 0.0
  %3885 = vmatpush2.msra.mxu0 0.0
  %3886 = vmatprep.mubr.f32.mxu0 0.0
  %3887 = vmatmul.mubr.f32.gmra.mxu0 %v3592
  %v3888 = vpop.f32.mrf.mxu0
  %v3889 = vadd.f32 0.0, %v3888
  %v3890 = vpop.f32.mrf.mxu0
  %v3891 = vadd.f32 0.0, %v3890
  %3892 = vdwg.mxu0
  %3893 = vmatprep.subr.mxu0 0.0
  %3894 = vmatpush1.msra.mxu0 0.0
  %3895 = vmatprep.subr.mxu0 0.0
  %3896 = vmatpush1.msra.mxu0 0.0
  %3897 = vmatprep.subr.mxu0 0.0
  %3898 = vmatpush1.msra.mxu0 0.0
  %3899 = vmatprep.subr.mxu0 0.0
  %3900 = vmatpush1.msra.mxu0 0.0
  %3901 = vmatprep.subr.mxu0 0.0
  %3902 = vmatpush1.msra.mxu0 0.0
  %3903 = vmatprep.subr.mxu0 0.0
  %3904 = vmatpush1.msra.mxu0 0.0
  %3905 = vmatprep.subr.mxu0 0.0
  %3906 = vmatpush1.msra.mxu0 0.0
  %3907 = vmatprep.subr.mxu0 0.0
  %3908 = vmatpush1.msra.mxu0 0.0
  %3909 = vmatprep.subr.mxu0 0.0
  %3910 = vmatpush1.msra.mxu0 0.0
  %3911 = vmatprep.subr.mxu0 0.0
  %3912 = vmatpush1.msra.mxu0 0.0
  %3913 = vmatprep.subr.mxu0 0.0
  %3914 = vmatpush1.msra.mxu0 0.0
  %3915 = vmatprep.subr.mxu0 0.0
  %3916 = vmatpush1.msra.mxu0 0.0
  %3917 = vmatprep.subr.mxu0 %v3725
  %3918 = vmatpush1.msra.mxu0 %v3724
  %3919 = vmatprep.subr.mxu0 %v3721
  %3920 = vmatpush1.msra.mxu0 %v3720
  %3921 = vmatprep.subr.mxu0 %v3717
  %3922 = vmatpush1.msra.mxu0 %v3716
  %3923 = vmatprep.subr.mxu0 %v3713
  %3924 = vmatpush1.msra.mxu0 %v3712
  %3925 = vmatprep.subr.mxu0 0.0
  %3926 = vmatpush2.msra.mxu0 0.0
  %3927 = vmatprep.subr.mxu0 0.0
  %3928 = vmatpush2.msra.mxu0 0.0
  %3929 = vmatprep.subr.mxu0 0.0
  %3930 = vmatpush2.msra.mxu0 0.0
  %3931 = vmatprep.subr.mxu0 0.0
  %3932 = vmatpush2.msra.mxu0 0.0
  %3933 = vmatprep.subr.mxu0 0.0
  %3934 = vmatpush2.msra.mxu0 0.0
  %3935 = vmatprep.subr.mxu0 0.0
  %3936 = vmatpush2.msra.mxu0 0.0
  %3937 = vmatprep.subr.mxu0 0.0
  %3938 = vmatpush2.msra.mxu0 0.0
  %3939 = vmatprep.subr.mxu0 0.0
  %3940 = vmatpush2.msra.mxu0 0.0
  %3941 = vmatprep.subr.mxu0 0.0
  %3942 = vmatpush2.msra.mxu0 0.0
  %3943 = vmatprep.subr.mxu0 0.0
  %3944 = vmatpush2.msra.mxu0 0.0
  %3945 = vmatprep.subr.mxu0 0.0
  %3946 = vmatpush2.msra.mxu0 0.0
  %3947 = vmatprep.subr.mxu0 0.0
  %3948 = vmatpush2.msra.mxu0 0.0
  %3949 = vmatprep.subr.mxu0 0.0
  %3950 = vmatpush2.msra.mxu0 0.0
  %3951 = vmatprep.subr.mxu0 0.0
  %3952 = vmatpush2.msra.mxu0 0.0
  %3953 = vmatprep.subr.mxu0 0.0
  %3954 = vmatpush2.msra.mxu0 0.0
  %3955 = vmatprep.subr.mxu0 0.0
  %3956 = vmatpush2.msra.mxu0 0.0
  %3957 = vmatprep.mubr.f32.mxu0 0.0
  %3958 = vmatmul.mubr.f32.gmra.mxu0 %v3592
  %v3959 = vpop.f32.mrf.mxu0
  %v3960 = vadd.f32 0.0, %v3959
  %v3961 = vpop.f32.mrf.mxu0
  %v3962 = vadd.f32 0.0, %v3961
  %3963 = vdwg.mxu0
  %v3965 = vsel %vm298, %v3547, 0
  %3967 = vmatprep.subr.mxu0 0.0
  %3968 = vmatpush1.msra.mxu0 0.0
  %3969 = vmatprep.subr.mxu0 0.0
  %3970 = vmatpush1.msra.mxu0 0.0
  %3971 = vmatprep.subr.mxu0 0.0
  %3972 = vmatpush1.msra.mxu0 0.0
  %3973 = vmatprep.subr.mxu0 0.0
  %3974 = vmatpush1.msra.mxu0 0.0
  %3975 = vmatprep.subr.mxu0 0.0
  %3976 = vmatpush1.msra.mxu0 0.0
  %3977 = vmatprep.subr.mxu0 0.0
  %3978 = vmatpush1.msra.mxu0 0.0
  %3979 = vmatprep.subr.mxu0 0.0
  %3980 = vmatpush1.msra.mxu0 0.0
  %3981 = vmatprep.subr.mxu0 0.0
  %3982 = vmatpush1.msra.mxu0 0.0
  %3983 = vmatprep.subr.mxu0 0.0
  %3984 = vmatpush1.msra.mxu0 0.0
  %3985 = vmatprep.subr.mxu0 0.0
  %3986 = vmatpush1.msra.mxu0 0.0
  %3987 = vmatprep.subr.mxu0 0.0
  %3988 = vmatpush1.msra.mxu0 0.0
  %3989 = vmatprep.subr.mxu0 0.0
  %3990 = vmatpush1.msra.mxu0 0.0
  %3991 = vmatprep.subr.mxu0 %v3819
  %3992 = vmatpush1.msra.mxu0 %v3818
  %3993 = vmatprep.subr.mxu0 %v3815
  %3994 = vmatpush1.msra.mxu0 %v3814
  %3995 = vmatprep.subr.mxu0 %v3811
  %3996 = vmatpush1.msra.mxu0 %v3810
  %3997 = vmatprep.subr.mxu0 %v3807
  %3998 = vmatpush1.msra.mxu0 %v3806
  %3999 = vmatprep.subr.mxu0 0.0
  %4000 = vmatpush2.msra.mxu0 0.0
  %4001 = vmatprep.subr.mxu0 0.0
  %4002 = vmatpush2.msra.mxu0 0.0
  %4003 = vmatprep.subr.mxu0 0.0
  %4004 = vmatpush2.msra.mxu0 0.0
  %4005 = vmatprep.subr.mxu0 0.0
  %4006 = vmatpush2.msra.mxu0 0.0
  %4007 = vmatprep.subr.mxu0 0.0
  %4008 = vmatpush2.msra.mxu0 0.0
  %4009 = vmatprep.subr.mxu0 0.0
  %4010 = vmatpush2.msra.mxu0 0.0
  %4011 = vmatprep.subr.mxu0 0.0
  %4012 = vmatpush2.msra.mxu0 0.0
  %4013 = vmatprep.subr.mxu0 0.0
  %4014 = vmatpush2.msra.mxu0 0.0
  %4015 = vmatprep.subr.mxu0 0.0
  %4016 = vmatpush2.msra.mxu0 0.0
  %4017 = vmatprep.subr.mxu0 0.0
  %4018 = vmatpush2.msra.mxu0 0.0
  %4019 = vmatprep.subr.mxu0 0.0
  %4020 = vmatpush2.msra.mxu0 0.0
  %4021 = vmatprep.subr.mxu0 0.0
  %4022 = vmatpush2.msra.mxu0 0.0
  %4023 = vmatprep.subr.mxu0 0.0
  %4024 = vmatpush2.msra.mxu0 0.0
  %4025 = vmatprep.subr.mxu0 0.0
  %4026 = vmatpush2.msra.mxu0 0.0
  %4027 = vmatprep.subr.mxu0 0.0
  %4028 = vmatpush2.msra.mxu0 0.0
  %4029 = vmatprep.subr.mxu0 0.0
  %4030 = vmatpush2.msra.mxu0 0.0
  %4031 = vmatprep.mubr.f32.mxu0 0.0
  %4032 = vmatmul.mubr.f32.gmra.mxu0 %v3965
  %v4033 = vpop.f32.mrf.mxu0
  %v4034 = vadd.f32 %v3889, %v4033
  %v4035 = vpop.f32.mrf.mxu0
  %v4036 = vadd.f32 %v3891, %v4035
  %4037 = vdwg.mxu0
  %4038 = vmatprep.subr.mxu0 0.0
  %4039 = vmatpush1.msra.mxu0 0.0
  %4040 = vmatprep.subr.mxu0 0.0
  %4041 = vmatpush1.msra.mxu0 0.0
  %4042 = vmatprep.subr.mxu0 0.0
  %4043 = vmatpush1.msra.mxu0 0.0
  %4044 = vmatprep.subr.mxu0 0.0
  %4045 = vmatpush1.msra.mxu0 0.0
  %4046 = vmatprep.subr.mxu0 0.0
  %4047 = vmatpush1.msra.mxu0 0.0
  %4048 = vmatprep.subr.mxu0 0.0
  %4049 = vmatpush1.msra.mxu0 0.0
  %4050 = vmatprep.subr.mxu0 0.0
  %4051 = vmatpush1.msra.mxu0 0.0
  %4052 = vmatprep.subr.mxu0 0.0
  %4053 = vmatpush1.msra.mxu0 0.0
  %4054 = vmatprep.subr.mxu0 0.0
  %4055 = vmatpush1.msra.mxu0 0.0
  %4056 = vmatprep.subr.mxu0 0.0
  %4057 = vmatpush1.msra.mxu0 0.0
  %4058 = vmatprep.subr.mxu0 0.0
  %4059 = vmatpush1.msra.mxu0 0.0
  %4060 = vmatprep.subr.mxu0 0.0
  %4061 = vmatpush1.msra.mxu0 0.0
  %4062 = vmatprep.subr.mxu0 %v3821
  %4063 = vmatpush1.msra.mxu0 %v3820
  %4064 = vmatprep.subr.mxu0 %v3817
  %4065 = vmatpush1.msra.mxu0 %v3816
  %4066 = vmatprep.subr.mxu0 %v3813
  %4067 = vmatpush1.msra.mxu0 %v3812
  %4068 = vmatprep.subr.mxu0 %v3809
  %4069 = vmatpush1.msra.mxu0 %v3808
  %4070 = vmatprep.subr.mxu0 0.0
  %4071 = vmatpush2.msra.mxu0 0.0
  %4072 = vmatprep.subr.mxu0 0.0
  %4073 = vmatpush2.msra.mxu0 0.0
  %4074 = vmatprep.subr.mxu0 0.0
  %4075 = vmatpush2.msra.mxu0 0.0
  %4076 = vmatprep.subr.mxu0 0.0
  %4077 = vmatpush2.msra.mxu0 0.0
  %4078 = vmatprep.subr.mxu0 0.0
  %4079 = vmatpush2.msra.mxu0 0.0
  %4080 = vmatprep.subr.mxu0 0.0
  %4081 = vmatpush2.msra.mxu0 0.0
  %4082 = vmatprep.subr.mxu0 0.0
  %4083 = vmatpush2.msra.mxu0 0.0
  %4084 = vmatprep.subr.mxu0 0.0
  %4085 = vmatpush2.msra.mxu0 0.0
  %4086 = vmatprep.subr.mxu0 0.0
  %4087 = vmatpush2.msra.mxu0 0.0
  %4088 = vmatprep.subr.mxu0 0.0
  %4089 = vmatpush2.msra.mxu0 0.0
  %4090 = vmatprep.subr.mxu0 0.0
  %4091 = vmatpush2.msra.mxu0 0.0
  %4092 = vmatprep.subr.mxu0 0.0
  %4093 = vmatpush2.msra.mxu0 0.0
  %4094 = vmatprep.subr.mxu0 0.0
  %4095 = vmatpush2.msra.mxu0 0.0
  %4096 = vmatprep.subr.mxu0 0.0
  %4097 = vmatpush2.msra.mxu0 0.0
  %4098 = vmatprep.subr.mxu0 0.0
  %4099 = vmatpush2.msra.mxu0 0.0
  %4100 = vmatprep.subr.mxu0 0.0
  %4101 = vmatpush2.msra.mxu0 0.0
  %4102 = vmatprep.mubr.f32.mxu0 0.0
  %4103 = vmatmul.mubr.f32.gmra.mxu0 %v3965
  %v4104 = vpop.f32.mrf.mxu0
  %v4105 = vadd.f32 %v3960, %v4104
  %v4106 = vpop.f32.mrf.mxu0
  %v4107 = vadd.f32 %v3962, %v4106
  %4108 = vdwg.mxu0
  %4109 = vmatprep.subr.mxu0 0.0
  %4110 = vmatpush1.msra.mxu0 0.0
  %4111 = vmatprep.subr.mxu0 0.0
  %4112 = vmatpush1.msra.mxu0 0.0
  %4113 = vmatprep.subr.mxu0 0.0
  %4114 = vmatpush1.msra.mxu0 0.0
  %4115 = vmatprep.subr.mxu0 0.0
  %4116 = vmatpush1.msra.mxu0 0.0
  %4117 = vmatprep.subr.mxu0 0.0
  %4118 = vmatpush1.msra.mxu0 0.0
  %4119 = vmatprep.subr.mxu0 0.0
  %4120 = vmatpush1.msra.mxu0 0.0
  %4121 = vmatprep.subr.mxu0 0.0
  %4122 = vmatpush1.msra.mxu0 0.0
  %4123 = vmatprep.subr.mxu0 0.0
  %4124 = vmatpush1.msra.mxu0 0.0
  %4125 = vmatprep.subr.mxu0 0.0
  %4126 = vmatpush1.msra.mxu0 0.0
  %4127 = vmatprep.subr.mxu0 0.0
  %4128 = vmatpush1.msra.mxu0 0.0
  %4129 = vmatprep.subr.mxu0 0.0
  %4130 = vmatpush1.msra.mxu0 0.0
  %4131 = vmatprep.subr.mxu0 0.0
  %4132 = vmatpush1.msra.mxu0 0.0
  %4133 = vmatprep.subr.mxu0 %v3739
  %4134 = vmatpush1.msra.mxu0 %v3738
  %4135 = vmatprep.subr.mxu0 %v3735
  %4136 = vmatpush1.msra.mxu0 %v3734
  %4137 = vmatprep.subr.mxu0 %v3731
  %4138 = vmatpush1.msra.mxu0 %v3730
  %4139 = vmatprep.subr.mxu0 %v3727
  %4140 = vmatpush1.msra.mxu0 %v3726
  %4141 = vmatprep.subr.mxu0 0.0
  %4142 = vmatpush2.msra.mxu0 0.0
  %4143 = vmatprep.subr.mxu0 0.0
  %4144 = vmatpush2.msra.mxu0 0.0
  %4145 = vmatprep.subr.mxu0 0.0
  %4146 = vmatpush2.msra.mxu0 0.0
  %4147 = vmatprep.subr.mxu0 0.0
  %4148 = vmatpush2.msra.mxu0 0.0
  %4149 = vmatprep.subr.mxu0 0.0
  %4150 = vmatpush2.msra.mxu0 0.0
  %4151 = vmatprep.subr.mxu0 0.0
  %4152 = vmatpush2.msra.mxu0 0.0
  %4153 = vmatprep.subr.mxu0 0.0
  %4154 = vmatpush2.msra.mxu0 0.0
  %4155 = vmatprep.subr.mxu0 0.0
  %4156 = vmatpush2.msra.mxu0 0.0
  %4157 = vmatprep.subr.mxu0 0.0
  %4158 = vmatpush2.msra.mxu0 0.0
  %4159 = vmatprep.subr.mxu0 0.0
  %4160 = vmatpush2.msra.mxu0 0.0
  %4161 = vmatprep.subr.mxu0 0.0
  %4162 = vmatpush2.msra.mxu0 0.0
  %4163 = vmatprep.subr.mxu0 0.0
  %4164 = vmatpush2.msra.mxu0 0.0
  %4165 = vmatprep.subr.mxu0 0.0
  %4166 = vmatpush2.msra.mxu0 0.0
  %4167 = vmatprep.subr.mxu0 0.0
  %4168 = vmatpush2.msra.mxu0 0.0
  %4169 = vmatprep.subr.mxu0 0.0
  %4170 = vmatpush2.msra.mxu0 0.0
  %4171 = vmatprep.subr.mxu0 0.0
  %4172 = vmatpush2.msra.mxu0 0.0
  %4173 = vmatprep.mubr.f32.mxu0 0.0
  %4174 = vmatmul.mubr.f32.gmra.mxu0 %v3595
  %v4175 = vpop.f32.mrf.mxu0
  %v4176 = vadd.f32 0.0, %v4175
  %v4177 = vpop.f32.mrf.mxu0
  %v4178 = vadd.f32 0.0, %v4177
  %4179 = vdwg.mxu0
  %4180 = vmatprep.subr.mxu0 0.0
  %4181 = vmatpush1.msra.mxu0 0.0
  %4182 = vmatprep.subr.mxu0 0.0
  %4183 = vmatpush1.msra.mxu0 0.0
  %4184 = vmatprep.subr.mxu0 0.0
  %4185 = vmatpush1.msra.mxu0 0.0
  %4186 = vmatprep.subr.mxu0 0.0
  %4187 = vmatpush1.msra.mxu0 0.0
  %4188 = vmatprep.subr.mxu0 0.0
  %4189 = vmatpush1.msra.mxu0 0.0
  %4190 = vmatprep.subr.mxu0 0.0
  %4191 = vmatpush1.msra.mxu0 0.0
  %4192 = vmatprep.subr.mxu0 0.0
  %4193 = vmatpush1.msra.mxu0 0.0
  %4194 = vmatprep.subr.mxu0 0.0
  %4195 = vmatpush1.msra.mxu0 0.0
  %4196 = vmatprep.subr.mxu0 0.0
  %4197 = vmatpush1.msra.mxu0 0.0
  %4198 = vmatprep.subr.mxu0 0.0
  %4199 = vmatpush1.msra.mxu0 0.0
  %4200 = vmatprep.subr.mxu0 0.0
  %4201 = vmatpush1.msra.mxu0 0.0
  %4202 = vmatprep.subr.mxu0 0.0
  %4203 = vmatpush1.msra.mxu0 0.0
  %4204 = vmatprep.subr.mxu0 %v3741
  %4205 = vmatpush1.msra.mxu0 %v3740
  %4206 = vmatprep.subr.mxu0 %v3737
  %4207 = vmatpush1.msra.mxu0 %v3736
  %4208 = vmatprep.subr.mxu0 %v3733
  %4209 = vmatpush1.msra.mxu0 %v3732
  %4210 = vmatprep.subr.mxu0 %v3729
  %4211 = vmatpush1.msra.mxu0 %v3728
  %4212 = vmatprep.subr.mxu0 0.0
  %4213 = vmatpush2.msra.mxu0 0.0
  %4214 = vmatprep.subr.mxu0 0.0
  %4215 = vmatpush2.msra.mxu0 0.0
  %4216 = vmatprep.subr.mxu0 0.0
  %4217 = vmatpush2.msra.mxu0 0.0
  %4218 = vmatprep.subr.mxu0 0.0
  %4219 = vmatpush2.msra.mxu0 0.0
  %4220 = vmatprep.subr.mxu0 0.0
  %4221 = vmatpush2.msra.mxu0 0.0
  %4222 = vmatprep.subr.mxu0 0.0
  %4223 = vmatpush2.msra.mxu0 0.0
  %4224 = vmatprep.subr.mxu0 0.0
  %4225 = vmatpush2.msra.mxu0 0.0
  %4226 = vmatprep.subr.mxu0 0.0
  %4227 = vmatpush2.msra.mxu0 0.0
  %4228 = vmatprep.subr.mxu0 0.0
  %4229 = vmatpush2.msra.mxu0 0.0
  %4230 = vmatprep.subr.mxu0 0.0
  %4231 = vmatpush2.msra.mxu0 0.0
  %4232 = vmatprep.subr.mxu0 0.0
  %4233 = vmatpush2.msra.mxu0 0.0
  %4234 = vmatprep.subr.mxu0 0.0
  %4235 = vmatpush2.msra.mxu0 0.0
  %4236 = vmatprep.subr.mxu0 0.0
  %4237 = vmatpush2.msra.mxu0 0.0
  %4238 = vmatprep.subr.mxu0 0.0
  %4239 = vmatpush2.msra.mxu0 0.0
  %4240 = vmatprep.subr.mxu0 0.0
  %4241 = vmatpush2.msra.mxu0 0.0
  %4242 = vmatprep.subr.mxu0 0.0
  %4243 = vmatpush2.msra.mxu0 0.0
  %4244 = vmatprep.mubr.f32.mxu0 0.0
  %4245 = vmatmul.mubr.f32.gmra.mxu0 %v3595
  %v4246 = vpop.f32.mrf.mxu0
  %v4247 = vadd.f32 0.0, %v4246
  %v4248 = vpop.f32.mrf.mxu0
  %v4249 = vadd.f32 0.0, %v4248
  %4250 = vdwg.mxu0
  %v4251 = vadd.f32 %v4034, %v4176
  %v4252 = vadd.f32 %v4036, %v4178
  %v4253 = vadd.f32 %v4105, %v4247
  %v4254 = vadd.f32 %v4107, %v4249
  %4255 = vmatprep.subr.mxu0 0.0
  %4256 = vmatpush1.msra.mxu0 0.0
  %4257 = vmatprep.subr.mxu0 0.0
  %4258 = vmatpush1.msra.mxu0 0.0
  %4259 = vmatprep.subr.mxu0 0.0
  %4260 = vmatpush1.msra.mxu0 0.0
  %4261 = vmatprep.subr.mxu0 0.0
  %4262 = vmatpush1.msra.mxu0 0.0
  %4263 = vmatprep.subr.mxu0 0.0
  %4264 = vmatpush1.msra.mxu0 0.0
  %4265 = vmatprep.subr.mxu0 0.0
  %4266 = vmatpush1.msra.mxu0 0.0
  %4267 = vmatprep.subr.mxu0 0.0
  %4268 = vmatpush1.msra.mxu0 0.0
  %4269 = vmatprep.subr.mxu0 0.0
  %4270 = vmatpush1.msra.mxu0 0.0
  %4271 = vmatprep.subr.mxu0 0.0
  %4272 = vmatpush1.msra.mxu0 0.0
  %4273 = vmatprep.subr.mxu0 0.0
  %4274 = vmatpush1.msra.mxu0 0.0
  %4275 = vmatprep.subr.mxu0 0.0
  %4276 = vmatpush1.msra.mxu0 0.0
  %4277 = vmatprep.subr.mxu0 0.0
  %4278 = vmatpush1.msra.mxu0 0.0
  %4279 = vmatprep.subr.mxu0 %v3755
  %4280 = vmatpush1.msra.mxu0 %v3754
  %4281 = vmatprep.subr.mxu0 %v3751
  %4282 = vmatpush1.msra.mxu0 %v3750
  %4283 = vmatprep.subr.mxu0 %v3747
  %4284 = vmatpush1.msra.mxu0 %v3746
  %4285 = vmatprep.subr.mxu0 %v3743
  %4286 = vmatpush1.msra.mxu0 %v3742
  %4287 = vmatprep.subr.mxu0 0.0
  %4288 = vmatpush2.msra.mxu0 0.0
  %4289 = vmatprep.subr.mxu0 0.0
  %4290 = vmatpush2.msra.mxu0 0.0
  %4291 = vmatprep.subr.mxu0 0.0
  %4292 = vmatpush2.msra.mxu0 0.0
  %4293 = vmatprep.subr.mxu0 0.0
  %4294 = vmatpush2.msra.mxu0 0.0
  %4295 = vmatprep.subr.mxu0 0.0
  %4296 = vmatpush2.msra.mxu0 0.0
  %4297 = vmatprep.subr.mxu0 0.0
  %4298 = vmatpush2.msra.mxu0 0.0
  %4299 = vmatprep.subr.mxu0 0.0
  %4300 = vmatpush2.msra.mxu0 0.0
  %4301 = vmatprep.subr.mxu0 0.0
  %4302 = vmatpush2.msra.mxu0 0.0
  %4303 = vmatprep.subr.mxu0 0.0
  %4304 = vmatpush2.msra.mxu0 0.0
  %4305 = vmatprep.subr.mxu0 0.0
  %4306 = vmatpush2.msra.mxu0 0.0
  %4307 = vmatprep.subr.mxu0 0.0
  %4308 = vmatpush2.msra.mxu0 0.0
  %4309 = vmatprep.subr.mxu0 0.0
  %4310 = vmatpush2.msra.mxu0 0.0
  %4311 = vmatprep.subr.mxu0 0.0
  %4312 = vmatpush2.msra.mxu0 0.0
  %4313 = vmatprep.subr.mxu0 0.0
  %4314 = vmatpush2.msra.mxu0 0.0
  %4315 = vmatprep.subr.mxu0 0.0
  %4316 = vmatpush2.msra.mxu0 0.0
  %4317 = vmatprep.subr.mxu0 0.0
  %4318 = vmatpush2.msra.mxu0 0.0
  %4319 = vmatprep.mubr.f32.mxu0 0.0
  %4320 = vmatmul.mubr.f32.gmra.mxu0 %v3598
  %v4321 = vpop.f32.mrf.mxu0
  %v4322 = vadd.f32 0.0, %v4321
  %v4323 = vpop.f32.mrf.mxu0
  %v4324 = vadd.f32 0.0, %v4323
  %4325 = vdwg.mxu0
  %4326 = vmatprep.subr.mxu0 0.0
  %4327 = vmatpush1.msra.mxu0 0.0
  %4328 = vmatprep.subr.mxu0 0.0
  %4329 = vmatpush1.msra.mxu0 0.0
  %4330 = vmatprep.subr.mxu0 0.0
  %4331 = vmatpush1.msra.mxu0 0.0
  %4332 = vmatprep.subr.mxu0 0.0
  %4333 = vmatpush1.msra.mxu0 0.0
  %4334 = vmatprep.subr.mxu0 0.0
  %4335 = vmatpush1.msra.mxu0 0.0
  %4336 = vmatprep.subr.mxu0 0.0
  %4337 = vmatpush1.msra.mxu0 0.0
  %4338 = vmatprep.subr.mxu0 0.0
  %4339 = vmatpush1.msra.mxu0 0.0
  %4340 = vmatprep.subr.mxu0 0.0
  %4341 = vmatpush1.msra.mxu0 0.0
  %4342 = vmatprep.subr.mxu0 0.0
  %4343 = vmatpush1.msra.mxu0 0.0
  %4344 = vmatprep.subr.mxu0 0.0
  %4345 = vmatpush1.msra.mxu0 0.0
  %4346 = vmatprep.subr.mxu0 0.0
  %4347 = vmatpush1.msra.mxu0 0.0
  %4348 = vmatprep.subr.mxu0 0.0
  %4349 = vmatpush1.msra.mxu0 0.0
  %4350 = vmatprep.subr.mxu0 %v3757
  %4351 = vmatpush1.msra.mxu0 %v3756
  %4352 = vmatprep.subr.mxu0 %v3753
  %4353 = vmatpush1.msra.mxu0 %v3752
  %4354 = vmatprep.subr.mxu0 %v3749
  %4355 = vmatpush1.msra.mxu0 %v3748
  %4356 = vmatprep.subr.mxu0 %v3745
  %4357 = vmatpush1.msra.mxu0 %v3744
  %4358 = vmatprep.subr.mxu0 0.0
  %4359 = vmatpush2.msra.mxu0 0.0
  %4360 = vmatprep.subr.mxu0 0.0
  %4361 = vmatpush2.msra.mxu0 0.0
  %4362 = vmatprep.subr.mxu0 0.0
  %4363 = vmatpush2.msra.mxu0 0.0
  %4364 = vmatprep.subr.mxu0 0.0
  %4365 = vmatpush2.msra.mxu0 0.0
  %4366 = vmatprep.subr.mxu0 0.0
  %4367 = vmatpush2.msra.mxu0 0.0
  %4368 = vmatprep.subr.mxu0 0.0
  %4369 = vmatpush2.msra.mxu0 0.0
  %4370 = vmatprep.subr.mxu0 0.0
  %4371 = vmatpush2.msra.mxu0 0.0
  %4372 = vmatprep.subr.mxu0 0.0
  %4373 = vmatpush2.msra.mxu0 0.0
  %4374 = vmatprep.subr.mxu0 0.0
  %4375 = vmatpush2.msra.mxu0 0.0
  %4376 = vmatprep.subr.mxu0 0.0
  %4377 = vmatpush2.msra.mxu0 0.0
  %4378 = vmatprep.subr.mxu0 0.0
  %4379 = vmatpush2.msra.mxu0 0.0
  %4380 = vmatprep.subr.mxu0 0.0
  %4381 = vmatpush2.msra.mxu0 0.0
  %4382 = vmatprep.subr.mxu0 0.0
  %4383 = vmatpush2.msra.mxu0 0.0
  %4384 = vmatprep.subr.mxu0 0.0
  %4385 = vmatpush2.msra.mxu0 0.0
  %4386 = vmatprep.subr.mxu0 0.0
  %4387 = vmatpush2.msra.mxu0 0.0
  %4388 = vmatprep.subr.mxu0 0.0
  %4389 = vmatpush2.msra.mxu0 0.0
  %4390 = vmatprep.mubr.f32.mxu0 0.0
  %4391 = vmatmul.mubr.f32.gmra.mxu0 %v3598
  %v4392 = vpop.f32.mrf.mxu0
  %v4393 = vadd.f32 0.0, %v4392
  %v4394 = vpop.f32.mrf.mxu0
  %v4395 = vadd.f32 0.0, %v4394
  %4396 = vdwg.mxu0
  %v4397 = vadd.f32 %v4251, %v4322
  %v4398 = vadd.f32 %v4252, %v4324
  %v4399 = vadd.f32 %v4253, %v4393
  %v4400 = vadd.f32 %v4254, %v4395
  %4401 = vmatprep.subr.mxu0 0.0
  %4402 = vmatpush1.msra.mxu0 0.0
  %4403 = vmatprep.subr.mxu0 0.0
  %4404 = vmatpush1.msra.mxu0 0.0
  %4405 = vmatprep.subr.mxu0 0.0
  %4406 = vmatpush1.msra.mxu0 0.0
  %4407 = vmatprep.subr.mxu0 0.0
  %4408 = vmatpush1.msra.mxu0 0.0
  %4409 = vmatprep.subr.mxu0 0.0
  %4410 = vmatpush1.msra.mxu0 0.0
  %4411 = vmatprep.subr.mxu0 0.0
  %4412 = vmatpush1.msra.mxu0 0.0
  %4413 = vmatprep.subr.mxu0 0.0
  %4414 = vmatpush1.msra.mxu0 0.0
  %4415 = vmatprep.subr.mxu0 0.0
  %4416 = vmatpush1.msra.mxu0 0.0
  %4417 = vmatprep.subr.mxu0 0.0
  %4418 = vmatpush1.msra.mxu0 0.0
  %4419 = vmatprep.subr.mxu0 0.0
  %4420 = vmatpush1.msra.mxu0 0.0
  %4421 = vmatprep.subr.mxu0 0.0
  %4422 = vmatpush1.msra.mxu0 0.0
  %4423 = vmatprep.subr.mxu0 0.0
  %4424 = vmatpush1.msra.mxu0 0.0
  %4425 = vmatprep.subr.mxu0 %v3771
  %4426 = vmatpush1.msra.mxu0 %v3770
  %4427 = vmatprep.subr.mxu0 %v3767
  %4428 = vmatpush1.msra.mxu0 %v3766
  %4429 = vmatprep.subr.mxu0 %v3763
  %4430 = vmatpush1.msra.mxu0 %v3762
  %4431 = vmatprep.subr.mxu0 %v3759
  %4432 = vmatpush1.msra.mxu0 %v3758
  %4433 = vmatprep.subr.mxu0 0.0
  %4434 = vmatpush2.msra.mxu0 0.0
  %4435 = vmatprep.subr.mxu0 0.0
  %4436 = vmatpush2.msra.mxu0 0.0
  %4437 = vmatprep.subr.mxu0 0.0
  %4438 = vmatpush2.msra.mxu0 0.0
  %4439 = vmatprep.subr.mxu0 0.0
  %4440 = vmatpush2.msra.mxu0 0.0
  %4441 = vmatprep.subr.mxu0 0.0
  %4442 = vmatpush2.msra.mxu0 0.0
  %4443 = vmatprep.subr.mxu0 0.0
  %4444 = vmatpush2.msra.mxu0 0.0
  %4445 = vmatprep.subr.mxu0 0.0
  %4446 = vmatpush2.msra.mxu0 0.0
  %4447 = vmatprep.subr.mxu0 0.0
  %4448 = vmatpush2.msra.mxu0 0.0
  %4449 = vmatprep.subr.mxu0 0.0
  %4450 = vmatpush2.msra.mxu0 0.0
  %4451 = vmatprep.subr.mxu0 0.0
  %4452 = vmatpush2.msra.mxu0 0.0
  %4453 = vmatprep.subr.mxu0 0.0
  %4454 = vmatpush2.msra.mxu0 0.0
  %4455 = vmatprep.subr.mxu0 0.0
  %4456 = vmatpush2.msra.mxu0 0.0
  %4457 = vmatprep.subr.mxu0 0.0
  %4458 = vmatpush2.msra.mxu0 0.0
  %4459 = vmatprep.subr.mxu0 0.0
  %4460 = vmatpush2.msra.mxu0 0.0
  %4461 = vmatprep.subr.mxu0 0.0
  %4462 = vmatpush2.msra.mxu0 0.0
  %4463 = vmatprep.subr.mxu0 0.0
  %4464 = vmatpush2.msra.mxu0 0.0
  %4465 = vmatprep.mubr.f32.mxu0 0.0
  %4466 = vmatmul.mubr.f32.gmra.mxu0 %v3601
  %v4467 = vpop.f32.mrf.mxu0
  %v4468 = vadd.f32 0.0, %v4467
  %v4469 = vpop.f32.mrf.mxu0
  %v4470 = vadd.f32 0.0, %v4469
  %4471 = vdwg.mxu0
  %4472 = vmatprep.subr.mxu0 0.0
  %4473 = vmatpush1.msra.mxu0 0.0
  %4474 = vmatprep.subr.mxu0 0.0
  %4475 = vmatpush1.msra.mxu0 0.0
  %4476 = vmatprep.subr.mxu0 0.0
  %4477 = vmatpush1.msra.mxu0 0.0
  %4478 = vmatprep.subr.mxu0 0.0
  %4479 = vmatpush1.msra.mxu0 0.0
  %4480 = vmatprep.subr.mxu0 0.0
  %4481 = vmatpush1.msra.mxu0 0.0
  %4482 = vmatprep.subr.mxu0 0.0
  %4483 = vmatpush1.msra.mxu0 0.0
  %4484 = vmatprep.subr.mxu0 0.0
  %4485 = vmatpush1.msra.mxu0 0.0
  %4486 = vmatprep.subr.mxu0 0.0
  %4487 = vmatpush1.msra.mxu0 0.0
  %4488 = vmatprep.subr.mxu0 0.0
  %4489 = vmatpush1.msra.mxu0 0.0
  %4490 = vmatprep.subr.mxu0 0.0
  %4491 = vmatpush1.msra.mxu0 0.0
  %4492 = vmatprep.subr.mxu0 0.0
  %4493 = vmatpush1.msra.mxu0 0.0
  %4494 = vmatprep.subr.mxu0 0.0
  %4495 = vmatpush1.msra.mxu0 0.0
  %4496 = vmatprep.subr.mxu0 %v3773
  %4497 = vmatpush1.msra.mxu0 %v3772
  %4498 = vmatprep.subr.mxu0 %v3769
  %4499 = vmatpush1.msra.mxu0 %v3768
  %4500 = vmatprep.subr.mxu0 %v3765
  %4501 = vmatpush1.msra.mxu0 %v3764
  %4502 = vmatprep.subr.mxu0 %v3761
  %4503 = vmatpush1.msra.mxu0 %v3760
  %4504 = vmatprep.subr.mxu0 0.0
  %4505 = vmatpush2.msra.mxu0 0.0
  %4506 = vmatprep.subr.mxu0 0.0
  %4507 = vmatpush2.msra.mxu0 0.0
  %4508 = vmatprep.subr.mxu0 0.0
  %4509 = vmatpush2.msra.mxu0 0.0
  %4510 = vmatprep.subr.mxu0 0.0
  %4511 = vmatpush2.msra.mxu0 0.0
  %4512 = vmatprep.subr.mxu0 0.0
  %4513 = vmatpush2.msra.mxu0 0.0
  %4514 = vmatprep.subr.mxu0 0.0
  %4515 = vmatpush2.msra.mxu0 0.0
  %4516 = vmatprep.subr.mxu0 0.0
  %4517 = vmatpush2.msra.mxu0 0.0
  %4518 = vmatprep.subr.mxu0 0.0
  %4519 = vmatpush2.msra.mxu0 0.0
  %4520 = vmatprep.subr.mxu0 0.0
  %4521 = vmatpush2.msra.mxu0 0.0
  %4522 = vmatprep.subr.mxu0 0.0
  %4523 = vmatpush2.msra.mxu0 0.0
  %4524 = vmatprep.subr.mxu0 0.0
  %4525 = vmatpush2.msra.mxu0 0.0
  %4526 = vmatprep.subr.mxu0 0.0
  %4527 = vmatpush2.msra.mxu0 0.0
  %4528 = vmatprep.subr.mxu0 0.0
  %4529 = vmatpush2.msra.mxu0 0.0
  %4530 = vmatprep.subr.mxu0 0.0
  %4531 = vmatpush2.msra.mxu0 0.0
  %4532 = vmatprep.subr.mxu0 0.0
  %4533 = vmatpush2.msra.mxu0 0.0
  %4534 = vmatprep.subr.mxu0 0.0
  %4535 = vmatpush2.msra.mxu0 0.0
  %4536 = vmatprep.mubr.f32.mxu0 0.0
  %4537 = vmatmul.mubr.f32.gmra.mxu0 %v3601
  %v4538 = vpop.f32.mrf.mxu0
  %v4539 = vadd.f32 0.0, %v4538
  %v4540 = vpop.f32.mrf.mxu0
  %v4541 = vadd.f32 0.0, %v4540
  %4542 = vdwg.mxu0
  %v4543 = vadd.f32 %v4397, %v4468
  %v4544 = vadd.f32 %v4398, %v4470
  %v4545 = vadd.f32 %v4399, %v4539
  %v4546 = vadd.f32 %v4400, %v4541
  %4547 = vmatprep.subr.mxu0 0.0
  %4548 = vmatpush1.msra.mxu0 0.0
  %4549 = vmatprep.subr.mxu0 0.0
  %4550 = vmatpush1.msra.mxu0 0.0
  %4551 = vmatprep.subr.mxu0 0.0
  %4552 = vmatpush1.msra.mxu0 0.0
  %4553 = vmatprep.subr.mxu0 0.0
  %4554 = vmatpush1.msra.mxu0 0.0
  %4555 = vmatprep.subr.mxu0 0.0
  %4556 = vmatpush1.msra.mxu0 0.0
  %4557 = vmatprep.subr.mxu0 0.0
  %4558 = vmatpush1.msra.mxu0 0.0
  %4559 = vmatprep.subr.mxu0 0.0
  %4560 = vmatpush1.msra.mxu0 0.0
  %4561 = vmatprep.subr.mxu0 0.0
  %4562 = vmatpush1.msra.mxu0 0.0
  %4563 = vmatprep.subr.mxu0 0.0
  %4564 = vmatpush1.msra.mxu0 0.0
  %4565 = vmatprep.subr.mxu0 0.0
  %4566 = vmatpush1.msra.mxu0 0.0
  %4567 = vmatprep.subr.mxu0 0.0
  %4568 = vmatpush1.msra.mxu0 0.0
  %4569 = vmatprep.subr.mxu0 0.0
  %4570 = vmatpush1.msra.mxu0 0.0
  %4571 = vmatprep.subr.mxu0 %v3787
  %4572 = vmatpush1.msra.mxu0 %v3786
  %4573 = vmatprep.subr.mxu0 %v3783
  %4574 = vmatpush1.msra.mxu0 %v3782
  %4575 = vmatprep.subr.mxu0 %v3779
  %4576 = vmatpush1.msra.mxu0 %v3778
  %4577 = vmatprep.subr.mxu0 %v3775
  %4578 = vmatpush1.msra.mxu0 %v3774
  %4579 = vmatprep.subr.mxu0 0.0
  %4580 = vmatpush2.msra.mxu0 0.0
  %4581 = vmatprep.subr.mxu0 0.0
  %4582 = vmatpush2.msra.mxu0 0.0
  %4583 = vmatprep.subr.mxu0 0.0
  %4584 = vmatpush2.msra.mxu0 0.0
  %4585 = vmatprep.subr.mxu0 0.0
  %4586 = vmatpush2.msra.mxu0 0.0
  %4587 = vmatprep.subr.mxu0 0.0
  %4588 = vmatpush2.msra.mxu0 0.0
  %4589 = vmatprep.subr.mxu0 0.0
  %4590 = vmatpush2.msra.mxu0 0.0
  %4591 = vmatprep.subr.mxu0 0.0
  %4592 = vmatpush2.msra.mxu0 0.0
  %4593 = vmatprep.subr.mxu0 0.0
  %4594 = vmatpush2.msra.mxu0 0.0
  %4595 = vmatprep.subr.mxu0 0.0
  %4596 = vmatpush2.msra.mxu0 0.0
  %4597 = vmatprep.subr.mxu0 0.0
  %4598 = vmatpush2.msra.mxu0 0.0
  %4599 = vmatprep.subr.mxu0 0.0
  %4600 = vmatpush2.msra.mxu0 0.0
  %4601 = vmatprep.subr.mxu0 0.0
  %4602 = vmatpush2.msra.mxu0 0.0
  %4603 = vmatprep.subr.mxu0 0.0
  %4604 = vmatpush2.msra.mxu0 0.0
  %4605 = vmatprep.subr.mxu0 0.0
  %4606 = vmatpush2.msra.mxu0 0.0
  %4607 = vmatprep.subr.mxu0 0.0
  %4608 = vmatpush2.msra.mxu0 0.0
  %4609 = vmatprep.subr.mxu0 0.0
  %4610 = vmatpush2.msra.mxu0 0.0
  %4611 = vmatprep.mubr.f32.mxu0 0.0
  %4612 = vmatmul.mubr.f32.gmra.mxu0 %v3604
  %v4613 = vpop.f32.mrf.mxu0
  %v4614 = vadd.f32 0.0, %v4613
  %v4615 = vpop.f32.mrf.mxu0
  %v4616 = vadd.f32 0.0, %v4615
  %4617 = vdwg.mxu0
  %4618 = vmatprep.subr.mxu0 0.0
  %4619 = vmatpush1.msra.mxu0 0.0
  %4620 = vmatprep.subr.mxu0 0.0
  %4621 = vmatpush1.msra.mxu0 0.0
  %4622 = vmatprep.subr.mxu0 0.0
  %4623 = vmatpush1.msra.mxu0 0.0
  %4624 = vmatprep.subr.mxu0 0.0
  %4625 = vmatpush1.msra.mxu0 0.0
  %4626 = vmatprep.subr.mxu0 0.0
  %4627 = vmatpush1.msra.mxu0 0.0
  %4628 = vmatprep.subr.mxu0 0.0
  %4629 = vmatpush1.msra.mxu0 0.0
  %4630 = vmatprep.subr.mxu0 0.0
  %4631 = vmatpush1.msra.mxu0 0.0
  %4632 = vmatprep.subr.mxu0 0.0
  %4633 = vmatpush1.msra.mxu0 0.0
  %4634 = vmatprep.subr.mxu0 0.0
  %4635 = vmatpush1.msra.mxu0 0.0
  %4636 = vmatprep.subr.mxu0 0.0
  %4637 = vmatpush1.msra.mxu0 0.0
  %4638 = vmatprep.subr.mxu0 0.0
  %4639 = vmatpush1.msra.mxu0 0.0
  %4640 = vmatprep.subr.mxu0 0.0
  %4641 = vmatpush1.msra.mxu0 0.0
  %4642 = vmatprep.subr.mxu0 %v3789
  %4643 = vmatpush1.msra.mxu0 %v3788
  %4644 = vmatprep.subr.mxu0 %v3785
  %4645 = vmatpush1.msra.mxu0 %v3784
  %4646 = vmatprep.subr.mxu0 %v3781
  %4647 = vmatpush1.msra.mxu0 %v3780
  %4648 = vmatprep.subr.mxu0 %v3777
  %4649 = vmatpush1.msra.mxu0 %v3776
  %4650 = vmatprep.subr.mxu0 0.0
  %4651 = vmatpush2.msra.mxu0 0.0
  %4652 = vmatprep.subr.mxu0 0.0
  %4653 = vmatpush2.msra.mxu0 0.0
  %4654 = vmatprep.subr.mxu0 0.0
  %4655 = vmatpush2.msra.mxu0 0.0
  %4656 = vmatprep.subr.mxu0 0.0
  %4657 = vmatpush2.msra.mxu0 0.0
  %4658 = vmatprep.subr.mxu0 0.0
  %4659 = vmatpush2.msra.mxu0 0.0
  %4660 = vmatprep.subr.mxu0 0.0
  %4661 = vmatpush2.msra.mxu0 0.0
  %4662 = vmatprep.subr.mxu0 0.0
  %4663 = vmatpush2.msra.mxu0 0.0
  %4664 = vmatprep.subr.mxu0 0.0
  %4665 = vmatpush2.msra.mxu0 0.0
  %4666 = vmatprep.subr.mxu0 0.0
  %4667 = vmatpush2.msra.mxu0 0.0
  %4668 = vmatprep.subr.mxu0 0.0
  %4669 = vmatpush2.msra.mxu0 0.0
  %4670 = vmatprep.subr.mxu0 0.0
  %4671 = vmatpush2.msra.mxu0 0.0
  %4672 = vmatprep.subr.mxu0 0.0
  %4673 = vmatpush2.msra.mxu0 0.0
  %4674 = vmatprep.subr.mxu0 0.0
  %4675 = vmatpush2.msra.mxu0 0.0
  %4676 = vmatprep.subr.mxu0 0.0
  %4677 = vmatpush2.msra.mxu0 0.0
  %4678 = vmatprep.subr.mxu0 0.0
  %4679 = vmatpush2.msra.mxu0 0.0
  %4680 = vmatprep.subr.mxu0 0.0
  %4681 = vmatpush2.msra.mxu0 0.0
  %4682 = vmatprep.mubr.f32.mxu0 0.0
  %4683 = vmatmul.mubr.f32.gmra.mxu0 %v3604
  %v4684 = vpop.f32.mrf.mxu0
  %v4685 = vadd.f32 0.0, %v4684
  %v4686 = vpop.f32.mrf.mxu0
  %v4687 = vadd.f32 0.0, %v4686
  %4688 = vdwg.mxu0
  %v4689 = vadd.f32 %v4543, %v4614
  %v4690 = vadd.f32 %v4544, %v4616
  %v4691 = vadd.f32 %v4545, %v4685
  %v4692 = vadd.f32 %v4546, %v4687
  %4693 = vmatprep.subr.mxu0 0.0
  %4694 = vmatpush1.msra.mxu0 0.0
  %4695 = vmatprep.subr.mxu0 0.0
  %4696 = vmatpush1.msra.mxu0 0.0
  %4697 = vmatprep.subr.mxu0 0.0
  %4698 = vmatpush1.msra.mxu0 0.0
  %4699 = vmatprep.subr.mxu0 0.0
  %4700 = vmatpush1.msra.mxu0 0.0
  %4701 = vmatprep.subr.mxu0 0.0
  %4702 = vmatpush1.msra.mxu0 0.0
  %4703 = vmatprep.subr.mxu0 0.0
  %4704 = vmatpush1.msra.mxu0 0.0
  %4705 = vmatprep.subr.mxu0 0.0
  %4706 = vmatpush1.msra.mxu0 0.0
  %4707 = vmatprep.subr.mxu0 0.0
  %4708 = vmatpush1.msra.mxu0 0.0
  %4709 = vmatprep.subr.mxu0 0.0
  %4710 = vmatpush1.msra.mxu0 0.0
  %4711 = vmatprep.subr.mxu0 0.0
  %4712 = vmatpush1.msra.mxu0 0.0
  %4713 = vmatprep.subr.mxu0 0.0
  %4714 = vmatpush1.msra.mxu0 0.0
  %4715 = vmatprep.subr.mxu0 0.0
  %4716 = vmatpush1.msra.mxu0 0.0
  %4717 = vmatprep.subr.mxu0 %v3803
  %4718 = vmatpush1.msra.mxu0 %v3802
  %4719 = vmatprep.subr.mxu0 %v3799
  %4720 = vmatpush1.msra.mxu0 %v3798
  %4721 = vmatprep.subr.mxu0 %v3795
  %4722 = vmatpush1.msra.mxu0 %v3794
  %4723 = vmatprep.subr.mxu0 %v3791
  %4724 = vmatpush1.msra.mxu0 %v3790
  %4725 = vmatprep.subr.mxu0 0.0
  %4726 = vmatpush2.msra.mxu0 0.0
  %4727 = vmatprep.subr.mxu0 0.0
  %4728 = vmatpush2.msra.mxu0 0.0
  %4729 = vmatprep.subr.mxu0 0.0
  %4730 = vmatpush2.msra.mxu0 0.0
  %4731 = vmatprep.subr.mxu0 0.0
  %4732 = vmatpush2.msra.mxu0 0.0
  %4733 = vmatprep.subr.mxu0 0.0
  %4734 = vmatpush2.msra.mxu0 0.0
  %4735 = vmatprep.subr.mxu0 0.0
  %4736 = vmatpush2.msra.mxu0 0.0
  %4737 = vmatprep.subr.mxu0 0.0
  %4738 = vmatpush2.msra.mxu0 0.0
  %4739 = vmatprep.subr.mxu0 0.0
  %4740 = vmatpush2.msra.mxu0 0.0
  %4741 = vmatprep.subr.mxu0 0.0
  %4742 = vmatpush2.msra.mxu0 0.0
  %4743 = vmatprep.subr.mxu0 0.0
  %4744 = vmatpush2.msra.mxu0 0.0
  %4745 = vmatprep.subr.mxu0 0.0
  %4746 = vmatpush2.msra.mxu0 0.0
  %4747 = vmatprep.subr.mxu0 0.0
  %4748 = vmatpush2.msra.mxu0 0.0
  %4749 = vmatprep.subr.mxu0 0.0
  %4750 = vmatpush2.msra.mxu0 0.0
  %4751 = vmatprep.subr.mxu0 0.0
  %4752 = vmatpush2.msra.mxu0 0.0
  %4753 = vmatprep.subr.mxu0 0.0
  %4754 = vmatpush2.msra.mxu0 0.0
  %4755 = vmatprep.subr.mxu0 0.0
  %4756 = vmatpush2.msra.mxu0 0.0
  %4757 = vmatprep.mubr.f32.mxu0 0.0
  %4758 = vmatmul.mubr.f32.gmra.mxu0 %v3607
  %v4759 = vpop.f32.mrf.mxu0
  %v4760 = vadd.f32 0.0, %v4759
  %v4761 = vpop.f32.mrf.mxu0
  %v4762 = vadd.f32 0.0, %v4761
  %4763 = vdwg.mxu0
  %4764 = vmatprep.subr.mxu0 0.0
  %4765 = vmatpush1.msra.mxu0 0.0
  %4766 = vmatprep.subr.mxu0 0.0
  %4767 = vmatpush1.msra.mxu0 0.0
  %4768 = vmatprep.subr.mxu0 0.0
  %4769 = vmatpush1.msra.mxu0 0.0
  %4770 = vmatprep.subr.mxu0 0.0
  %4771 = vmatpush1.msra.mxu0 0.0
  %4772 = vmatprep.subr.mxu0 0.0
  %4773 = vmatpush1.msra.mxu0 0.0
  %4774 = vmatprep.subr.mxu0 0.0
  %4775 = vmatpush1.msra.mxu0 0.0
  %4776 = vmatprep.subr.mxu0 0.0
  %4777 = vmatpush1.msra.mxu0 0.0
  %4778 = vmatprep.subr.mxu0 0.0
  %4779 = vmatpush1.msra.mxu0 0.0
  %4780 = vmatprep.subr.mxu0 0.0
  %4781 = vmatpush1.msra.mxu0 0.0
  %4782 = vmatprep.subr.mxu0 0.0
  %4783 = vmatpush1.msra.mxu0 0.0
  %4784 = vmatprep.subr.mxu0 0.0
  %4785 = vmatpush1.msra.mxu0 0.0
  %4786 = vmatprep.subr.mxu0 0.0
  %4787 = vmatpush1.msra.mxu0 0.0
  %4788 = vmatprep.subr.mxu0 %v3805
  %4789 = vmatpush1.msra.mxu0 %v3804
  %4790 = vmatprep.subr.mxu0 %v3801
  %4791 = vmatpush1.msra.mxu0 %v3800
  %4792 = vmatprep.subr.mxu0 %v3797
  %4793 = vmatpush1.msra.mxu0 %v3796
  %4794 = vmatprep.subr.mxu0 %v3793
  %4795 = vmatpush1.msra.mxu0 %v3792
  %4796 = vmatprep.subr.mxu0 0.0
  %4797 = vmatpush2.msra.mxu0 0.0
  %4798 = vmatprep.subr.mxu0 0.0
  %4799 = vmatpush2.msra.mxu0 0.0
  %4800 = vmatprep.subr.mxu0 0.0
  %4801 = vmatpush2.msra.mxu0 0.0
  %4802 = vmatprep.subr.mxu0 0.0
  %4803 = vmatpush2.msra.mxu0 0.0
  %4804 = vmatprep.subr.mxu0 0.0
  %4805 = vmatpush2.msra.mxu0 0.0
  %4806 = vmatprep.subr.mxu0 0.0
  %4807 = vmatpush2.msra.mxu0 0.0
  %4808 = vmatprep.subr.mxu0 0.0
  %4809 = vmatpush2.msra.mxu0 0.0
  %4810 = vmatprep.subr.mxu0 0.0
  %4811 = vmatpush2.msra.mxu0 0.0
  %4812 = vmatprep.subr.mxu0 0.0
  %4813 = vmatpush2.msra.mxu0 0.0
  %4814 = vmatprep.subr.mxu0 0.0
  %4815 = vmatpush2.msra.mxu0 0.0
  %4816 = vmatprep.subr.mxu0 0.0
  %4817 = vmatpush2.msra.mxu0 0.0
  %4818 = vmatprep.subr.mxu0 0.0
  %4819 = vmatpush2.msra.mxu0 0.0
  %4820 = vmatprep.subr.mxu0 0.0
  %4821 = vmatpush2.msra.mxu0 0.0
  %4822 = vmatprep.subr.mxu0 0.0
  %4823 = vmatpush2.msra.mxu0 0.0
  %4824 = vmatprep.subr.mxu0 0.0
  %4825 = vmatpush2.msra.mxu0 0.0
  %4826 = vmatprep.subr.mxu0 0.0
  %4827 = vmatpush2.msra.mxu0 0.0
  %4828 = vmatprep.mubr.f32.mxu0 0.0
  %4829 = vmatmul.mubr.f32.gmra.mxu0 %v3607
  %v4830 = vpop.f32.mrf.mxu0
  %v4831 = vadd.f32 0.0, %v4830
  %v4832 = vpop.f32.mrf.mxu0
  %v4833 = vadd.f32 0.0, %v4832
  %4834 = vdwg.mxu0
  %v4835 = vadd.f32 %v4689, %v4760
  %v4836 = vadd.f32 %v4690, %v4762
  %v4837 = vadd.f32 %v4691, %v4831
  %v4838 = vadd.f32 %v4692, %v4833
  %v4839 = vld [vmem:[%s5] sm:$0xf]
  %v4841 = vlaneseq
  %v4842 = vshrl.u32 %v4841, 7
  %v4843 = vsub.s32 0, %v4842
  %v4844 = vrot.slane %v4839, %v4843
  %v4845 = vlaneseq
  %v4846 = vshrl.u32 %v4845, 7
  %v4847 = vsub.s32 1, %v4846
  %v4848 = vrot.slane %v4839, %v4847
  %v4849 = vlaneseq
  %v4850 = vshrl.u32 %v4849, 7
  %v4851 = vsub.s32 2, %v4850
  %v4852 = vrot.slane %v4839, %v4851
  %v4853 = vlaneseq
  %v4854 = vshrl.u32 %v4853, 7
  %v4855 = vsub.s32 3, %v4854
  %v4856 = vrot.slane %v4839, %v4855
  %v4861 = vadd.f32 %v4835, %v4844
  %v4862 = vadd.f32 %v4836, %v4848
  %v4863 = vadd.f32 %v4837, %v4852
  %v4864 = vadd.f32 %v4838, %v4856
  %4865 = vst [vmem:[%s8] sm:$0xff] %v4861
  %4866 = vst [vmem:[%s8 + $0x8] sm:$0xff] %v4862
  %4867 = vst [vmem:[%s8 + $0x10] sm:$0xff] %v4863
  %4868 = vst [vmem:[%s8 + $0x18] sm:$0xff] %v4864
  // Predicated region
  $region34: #{fine_grained_cnn_rnn_forward.2} parent=0 // pred_check
    _
  $region35: #{fine_grained_cnn_rnn_forward.2} parent=0 // pred_check_branch
    %4870 = sbr.rel (0) target = $region37
  $region36: #{fine_grained_cnn_rnn_forward.2} parent=0 // pred_region
    _
  $region37: #{fine_grained_cnn_rnn_forward.2} parent=0 // pred_fallthru
    _
  // Predicated region
  $region38: #{fine_grained_cnn_rnn_forward.2} parent=0 // pred_check
    _
  $region39: #{fine_grained_cnn_rnn_forward.2} parent=0 // pred_check_branch
    %4872 = sbr.rel (0) target = $region41
  $region40: #{fine_grained_cnn_rnn_forward.2} parent=0 // pred_region
    _
  $region41: #{fine_grained_cnn_rnn_forward.2} parent=0 // pred_fallthru
    _
  // Predicated region
  $region42: #{fine_grained_cnn_rnn_forward.2} parent=0 // pred_check
    _
  $region43: #{fine_grained_cnn_rnn_forward.2} parent=0 // pred_check_branch
    %4874 = sbr.rel (0) target = $region45
  $region44: #{fine_grained_cnn_rnn_forward.2} parent=0 // pred_region
    _
  $region45: #{fine_grained_cnn_rnn_forward.2} parent=0 // pred_fallthru
    _
  // Predicated region
  $region46: #{fine_grained_cnn_rnn_forward.2} parent=0 // pred_check
    _
  $region47: #{fine_grained_cnn_rnn_forward.2} parent=0 // pred_check_branch
    %4876 = sbr.rel (0) target = $region49
  $region48: #{fine_grained_cnn_rnn_forward.2} parent=0 // pred_region
    _
  $region49: #{fine_grained_cnn_rnn_forward.2} parent=0 // pred_fallthru
    _

</llo_original>
